<compile_context>
chip_gen: v6e
topology: v6e:2x2x1
jax: 0.10.0
libtpu: 0.0.40
codegen_flags: <defaults>
</compile_context>

<pallas_src>
import functools
import math

import jax
import jax.numpy as jnp
from jax.experimental import pallas as pl
from jax.experimental.pallas import tpu as pltpu

# Full-precision f32 matmuls for the XLA reference and the f32 kernel path.
jax.config.update("jax_default_matmul_precision", "highest")

MATMUL_INPUT_DTYPE = jnp.bfloat16     # MXU operand dtype (accumulation is f32)
MAX_TILE = 2048                       # rows per tile (~1 MiB/buffer at G=128)
VMEM_LIMIT = 48 * 1024 * 1024         # < v7x 64 MiB physical VMEM


# ----------------------------------------------------------------------------
# small math helpers (shared by kernels and reference)
# ----------------------------------------------------------------------------
def _leaky_relu(x, slope=0.01):
    return jnp.where(x > 0, x, slope * x)


def _elu(x):
    # exp only on the clamped negative branch -> no inf in the dead lane.
    return jnp.where(x > 0, x, jnp.exp(jnp.minimum(x, 0.0)) - 1.0)


def _sigmoid(x):
    return 1.0 / (1.0 + jnp.exp(-x))


def _round_up(x, m):
    return ((x + m - 1) // m) * m


def _grid_1d(rows, max_tile=MAX_TILE):
    """Pick (tile, grid) for a row-tiled kernel.

    Aim for >=2 grid steps (v7x megacore sharding via dimension_semantics) with
    tiles that are multiples of 8, so a ragged last block is still a legal TPU
    block shape. Tiny inputs get one full-extent block (no padding needed)."""
    if rows <= 8:
        return rows, 1
    tile = min(max_tile, _round_up(pl.cdiv(rows, 2), 8))
    return tile, pl.cdiv(rows, tile)


def _compiler_params():
    return pltpu.CompilerParams(dimension_semantics=("parallel",),
                                vmem_limit_bytes=VMEM_LIMIT)


# ----------------------------------------------------------------------------
# Pallas kernels
# ----------------------------------------------------------------------------
def _ctx_node_kernel(hv_ref, w01_ref, bpn_ref, w2n_ref,
                     hvnew_ref, pnode_ref, q_ref, *, gfs, compute_dtype):
    """GetContext node-side projections, fused (one read of hv per tile).

    hv_new = LeakyReLU(hv @ Wpn + bpn)
    p_node = hv @ We1_node                  (node half of project_edge1)
    q_node = hv_new . we2_node              (node half of project_edge2; VPU)
    Wpn and We1_node are stacked into one (nd, 2G) weight -> single matmul.
    """
    cd = compute_dtype
    hv = hv_ref[...].astype(cd)
    h01 = jnp.dot(hv, w01_ref[...].astype(cd),
                  preferred_element_type=jnp.float32)
    hv_new = _leaky_relu(h01[:, :gfs] + bpn_ref[...])
    pnode_ref[...] = h01[:, gfs:].astype(pnode_ref.dtype)
    hvnew_ref[...] = hv_new.astype(hvnew_ref.dtype)
    # N=1 matvec on the VPU + lane reduction instead of a 1-column MXU matmul.
    q_ref[...] = jnp.sum(hv_new * w2n_ref[...], axis=-1,
                         keepdims=True).astype(q_ref.dtype)


def _edge_ctx_kernel(psrc_ref, e_ref, qdst_ref,
                     w1e_ref, b1_ref, w2e_ref, b2_ref, wt_ref, bt_ref,
                     logit_ref, et_ref, *, compute_dtype):
    """Fused GetContext edge compute for one edge tile.

    he1   = LeakyReLU(p_src + e @ We1_edge + b1)   (p_src = (hv @ We1_node)[src])
    logit = LeakyReLU(q_dst + he1 . we2_edge + b2) (q_dst gathered per edge)
    et    = he1 @ Wet + bet                        (AttentiveGRU1.edge_transform)
    """
    cd = compute_dtype
    he1 = jnp.dot(e_ref[...].astype(cd), w1e_ref[...].astype(cd),
                  preferred_element_type=jnp.float32)
    he1 = _leaky_relu(he1 + psrc_ref[...] + b1_ref[...])

    # logit matvec stays on the VPU/XLU (free slots next to the MXU matmuls).
    logit = jnp.sum(he1 * w2e_ref[...], axis=-1, keepdims=True)
    logit = _leaky_relu(logit + qdst_ref[...] + b2_ref[...])

    et = jnp.dot(he1.astype(cd), wt_ref[...].astype(cd),
                 preferred_element_type=jnp.float32) + bt_ref[...]

    logit_ref[...] = logit.astype(logit_ref.dtype)
    et_ref[...] = et.astype(et_ref.dtype)


def _gru_kernel(c_ref, h_ref, w_ref, b_ref, o_ref, *, hidden, compute_dtype):
    """o = ReLU(GRUCell(ELU(c), h)) over one node tile (PyTorch gate formulas).

    Single K=2H matmul over [ELU(c) | h] against a packed (2H, 4H) weight:
      cols [0:2H]  -> gi_rz + gh_rz        (r, z pre-activations summed)
      cols [2H:3H] -> gi_n                 (input half of n gate)
      cols [3H:4H] -> gh_n                 (hidden half of n gate)
    """
    cd = compute_dtype
    H = hidden
    x = _elu(c_ref[...])
    h = h_ref[...]
    xh = jnp.concatenate([x, h], axis=-1).astype(cd)
    g = jnp.dot(xh, w_ref[...].astype(cd),
                preferred_element_type=jnp.float32) + b_ref[...]
    r = _sigmoid(g[:, 0:H])
    z = _sigmoid(g[:, H:2 * H])
    n = jnp.tanh(g[:, 2 * H:3 * H] + r * g[:, 3 * H:4 * H])
    new_h = (1.0 - z) * n + z * h
    o_ref[...] = jnp.maximum(new_h, 0.0).astype(o_ref.dtype)


def _layer_node_kernel(x_ref, wp_ref, bp_ref, wd_ref, ws_ref,
                       proj_ref, d_ref, s_ref, *, compute_dtype):
    """GNNLayer node-side compute, fused (one read of node_now per tile).

    hv_proj = x @ Wp + bp                    (AttentiveGRU2.project_node)
    d       = x . wpe_dst,  s = x . wpe_src  (halves of project_edge; VPU)
    """
    cd = compute_dtype
    x = x_ref[...]
    proj = jnp.dot(x.astype(cd), wp_ref[...].astype(cd),
                   preferred_element_type=jnp.float32) + bp_ref[...]
    proj_ref[...] = proj.astype(proj_ref.dtype)
    d_ref[...] = jnp.sum(x * wd_ref[...], axis=-1,
                         keepdims=True).astype(d_ref.dtype)
    s_ref[...] = jnp.sum(x * ws_ref[...], axis=-1,
                         keepdims=True).astype(s_ref.dtype)


# ----------------------------------------------------------------------------
# Pallas wrappers (no pad / slice round trips)
# ----------------------------------------------------------------------------
def ctx_node_pallas(hv, w01, bpn, w2n_row, *, gfs, compute_dtype):
    V, nd = hv.shape
    tile, grid = _grid_1d(V)
    return pl.pallas_call(
        functools.partial(_ctx_node_kernel, gfs=gfs, compute_dtype=compute_dtype),
        out_shape=(jax.ShapeDtypeStruct((V, gfs), jnp.float32),
                   jax.ShapeDtypeStruct((V, gfs), jnp.float32),
                   jax.ShapeDtypeStruct((V, 1), jnp.float32)),
        grid_spec=pltpu.PrefetchScalarGridSpec(
            num_scalar_prefetch=0,
            grid=(grid,),
            in_specs=[
                pl.BlockSpec((tile, nd), lambda i: (i, 0)),        # hv
                pl.BlockSpec((nd, 2 * gfs), lambda i: (0, 0)),     # [Wpn | We1_node]
                pl.BlockSpec((1, gfs), lambda i: (0, 0)),          # bpn
                pl.BlockSpec((1, gfs), lambda i: (0, 0)),          # we2_node row
            ],
            out_specs=(pl.BlockSpec((tile, gfs), lambda i: (i, 0)),
                       pl.BlockSpec((tile, gfs), lambda i: (i, 0)),
                       pl.BlockSpec((tile, 1), lambda i: (i, 0))),
        ),
        compiler_params=_compiler_params(),
    )(hv, w01, bpn.reshape(1, -1), w2n_row)


def edge_context_pallas(p_src, efeat, q_dst, w1e, b1, w2e_row, b2, wt, bt,
                        *, compute_dtype):
    E, G = p_src.shape
    ed = efeat.shape[1]
    tile, grid = _grid_1d(E)
    return pl.pallas_call(
        functools.partial(_edge_ctx_kernel, compute_dtype=compute_dtype),
        out_shape=(jax.ShapeDtypeStruct((E, 1), jnp.float32),
                   jax.ShapeDtypeStruct((E, G), jnp.float32)),
        grid_spec=pltpu.PrefetchScalarGridSpec(
            num_scalar_prefetch=0,
            grid=(grid,),
            in_specs=[
                pl.BlockSpec((tile, G), lambda i: (i, 0)),     # p_node[src]
                pl.BlockSpec((tile, ed), lambda i: (i, 0)),    # edge feats
                pl.BlockSpec((tile, 1), lambda i: (i, 0)),     # q_node[dst]
                pl.BlockSpec((ed, G), lambda i: (0, 0)),       # We1_edge
                pl.BlockSpec((1, G), lambda i: (0, 0)),        # b1
                pl.BlockSpec((1, G), lambda i: (0, 0)),        # we2_edge row
                pl.BlockSpec((1, 1), lambda i: (0, 0)),        # b2
                pl.BlockSpec((G, G), lambda i: (0, 0)),        # Wet
                pl.BlockSpec((1, G), lambda i: (0, 0)),        # bet
            ],
            out_specs=(pl.BlockSpec((tile, 1), lambda i: (i, 0)),
                       pl.BlockSpec((tile, G), lambda i: (i, 0))),
        ),
        compiler_params=_compiler_params(),
    )(p_src, efeat, q_dst, w1e, b1.reshape(1, -1), w2e_row,
      b2.reshape(1, -1), wt, bt.reshape(1, -1))


def gru_rows(c, h, w_packed, b_packed, *, compute_dtype):
    V, G_in = c.shape
    H = h.shape[1]
    tile, grid = _grid_1d(V)
    return pl.pallas_call(
        functools.partial(_gru_kernel, hidden=H, compute_dtype=compute_dtype),
        out_shape=jax.ShapeDtypeStruct((V, H), jnp.float32),
        grid_spec=pltpu.PrefetchScalarGridSpec(
            num_scalar_prefetch=0,
            grid=(grid,),
            in_specs=[
                pl.BlockSpec((tile, G_in), lambda i: (i, 0)),        # c
                pl.BlockSpec((tile, H), lambda i: (i, 0)),           # h
                pl.BlockSpec((G_in + H, 4 * H), lambda i: (0, 0)),   # packed W
                pl.BlockSpec((1, 4 * H), lambda i: (0, 0)),          # packed b
            ],
            out_specs=pl.BlockSpec((tile, H), lambda i: (i, 0)),
        ),
        compiler_params=_compiler_params(),
    )(c, h, w_packed, b_packed.reshape(1, -1))


def layer_node_pallas(x, pn_w, pn_b, wd_row, ws_row, *, compute_dtype):
    V, G = x.shape
    tile, grid = _grid_1d(V)
    return pl.pallas_call(
        functools.partial(_layer_node_kernel, compute_dtype=compute_dtype),
        out_shape=(jax.ShapeDtypeStruct((V, G), jnp.float32),
                   jax.ShapeDtypeStruct((V, 1), jnp.float32),
                   jax.ShapeDtypeStruct((V, 1), jnp.float32)),
        grid_spec=pltpu.PrefetchScalarGridSpec(
            num_scalar_prefetch=0,
            grid=(grid,),
            in_specs=[
                pl.BlockSpec((tile, G), lambda i: (i, 0)),     # node_now
                pl.BlockSpec((G, G), lambda i: (0, 0)),        # Wp
                pl.BlockSpec((1, G), lambda i: (0, 0)),        # bp
                pl.BlockSpec((1, G), lambda i: (0, 0)),        # wpe_dst row
                pl.BlockSpec((1, G), lambda i: (0, 0)),        # wpe_src row
            ],
            out_specs=(pl.BlockSpec((tile, G), lambda i: (i, 0)),
                       pl.BlockSpec((tile, 1), lambda i: (i, 0)),
                       pl.BlockSpec((tile, 1), lambda i: (i, 0))),
        ),
        compiler_params=_compiler_params(),
    )(x, pn_w, pn_b.reshape(1, -1), wd_row, ws_row)


# ----------------------------------------------------------------------------
# Plain-JAX glue (segment ops, gathers, batchnorm)
# ----------------------------------------------------------------------------
def _segment_softmax(logits, seg, num_segments):
    """DGL edge_softmax: softmax over edges grouped by destination node."""
    m = jax.ops.segment_max(logits, seg, num_segments=num_segments)
    m = jnp.where(jnp.isneginf(m), 0.0, m)
    ex = jnp.exp(logits - m[seg])
    s = jax.ops.segment_sum(ex, seg, num_segments=num_segments)
    return ex / s[seg]


def _batchnorm_train(x, gamma, beta, eps=1e-5):
    mean = jnp.mean(x, axis=0, keepdims=True)
    var = jnp.mean((x - mean) ** 2, axis=0, keepdims=True)
    return gamma * (x - mean) / jnp.sqrt(var + eps) + beta


def _pack_gru(gp, H):
    """Pack GRUCell weights into one (in+H, 4H) matrix: [rz | gi_n | gh_n]."""
    w_ih, w_hh = gp["w_ih"], gp["w_hh"]
    G_in = w_ih.shape[0]
    top = jnp.concatenate(
        [w_ih[:, :2 * H], w_ih[:, 2 * H:], jnp.zeros((G_in, H), jnp.float32)], axis=1)
    bot = jnp.concatenate(
        [w_hh[:, :2 * H], jnp.zeros((H, H), jnp.float32), w_hh[:, 2 * H:]], axis=1)
    w_packed = jnp.concatenate([top, bot], axis=0)
    b_packed = jnp.concatenate(
        [gp["b_ih"][:2 * H] + gp["b_hh"][:2 * H], gp["b_ih"][2 * H:], gp["b_hh"][2 * H:]])
    return w_packed, b_packed


# ----------------------------------------------------------------------------
# Full forward (Pallas path)
# ----------------------------------------------------------------------------
@functools.partial(jax.jit, static_argnames=("compute_dtype",))
def attentive_fp_forward(src, dst, node_feats, edge_feats, params,
                         compute_dtype=MATMUL_INPUT_DTYPE):
    V = node_feats.shape[0]
    pc = params["ctx"]
    G = pc["pn_w"].shape[1]

    # ---- GetContext: fused node-side projections (one read of hv) ----
    w01 = jnp.concatenate([pc["pn_w"], pc["e1_w_node"]], axis=1)          # (nd, 2G)
    hv_new, p_node, q_node = ctx_node_pallas(
        node_feats, w01, pc["pn_b"], pc["e2_w_node"].reshape(1, -1),
        gfs=G, compute_dtype=compute_dtype)

    # TODO(synk): src/dst gathers + edge_softmax + segment_sum are data-dependent
    # scatters and remain in XLA; a CSR (sort-by-dst) layout with scalar-prefetched
    # row offsets would fuse a*et + the dst-sum into a Pallas scatter-accumulate.
    logits, et = edge_context_pallas(
        p_node[src], edge_feats, q_node[dst],
        pc["e1_w_edge"], pc["e1_b"], pc["e2_w_edge"].reshape(1, -1), pc["e2_b"],
        pc["et_w"], pc["et_b"], compute_dtype=compute_dtype)

    a = _segment_softmax(logits, dst, V)
    c = jax.ops.segment_sum(a * et, dst, num_segments=V)                  # (V,G)
    gw, gb = _pack_gru(pc["gru"], G)
    node_now = gru_rows(c, hv_new, gw, gb, compute_dtype=compute_dtype)   # (V,G)
    total = node_now

    # ---- GNN layers ----
    for lp in params["layers"]:
        hv_proj, d_part, s_part = layer_node_pallas(
            node_now, lp["pn_w"], lp["pn_b"],
            lp["pe_w_dst"].reshape(1, -1), lp["pe_w_src"].reshape(1, -1),
            compute_dtype=compute_dtype)
        logits = _leaky_relu(d_part[dst] + s_part[src] + lp["pe_b"])      # (E,1)
        a = _segment_softmax(logits, dst, V)
        c = jax.ops.segment_sum(hv_proj[src] * a, dst, num_segments=V)    # (V,G)
        gw, gb = _pack_gru(lp["gru"], G)
        h_upd = gru_rows(c, node_now, gw, gb, compute_dtype=compute_dtype)
        # TODO(synk): BatchNorm stats + residual stay as XLA-fused elementwise ops.
        h_upd = _batchnorm_train(h_upd, lp["bn_gamma"], lp["bn_beta"])
        node_now = h_upd
        total = total + h_upd
    return total


# ----------------------------------------------------------------------------
# Parameter init (PyTorch-like uniform +-1/sqrt(fan_in)), deterministic
# ----------------------------------------------------------------------------
def _linear_init(key, fan_in, fan_out):
    kw, kb = jax.random.split(key)
    bound = 1.0 / math.sqrt(fan_in)
    w = jax.random.uniform(kw, (fan_in, fan_out), jnp.float32, -bound, bound)
    b = jax.random.uniform(kb, (fan_out,), jnp.float32, -bound, bound)
    return w, b


def _gru_init(key, input_size, hidden):
    # NOTE: stored as (input, 3H) with r,z,n gate order; importing real PyTorch
    # GRUCell weights requires transposing weight_ih/weight_hh (keep gate order).
    k1, k2, k3, k4 = jax.random.split(key, 4)
    bound = 1.0 / math.sqrt(hidden)
    u = lambda k, shape: jax.random.uniform(k, shape, jnp.float32, -bound, bound)
    return {"w_ih": u(k1, (input_size, 3 * hidden)),
            "w_hh": u(k2, (hidden, 3 * hidden)),
            "b_ih": u(k3, (3 * hidden,)),
            "b_hh": u(k4, (3 * hidden,))}


def init_params(key, node_dim, edge_dim, G, num_layers):
    keys = jax.random.split(key, 6 + 5 * max(num_layers - 1, 0))
    pn_w, pn_b = _linear_init(keys[0], node_dim, G)
    e1_w, e1_b = _linear_init(keys[1], node_dim + edge_dim, G)
    e2_w, e2_b = _linear_init(keys[2], 2 * G, 1)
    et_w, et_b = _linear_init(keys[3], G, G)
    ctx = {"pn_w": pn_w, "pn_b": pn_b,
           "e1_w_node": e1_w[:node_dim], "e1_w_edge": e1_w[node_dim:], "e1_b": e1_b,
           "e2_w_node": e2_w[:G], "e2_w_edge": e2_w[G:], "e2_b": e2_b,
           "et_w": et_w, "et_b": et_b,
           "gru": _gru_init(keys[4], G, G)}
    layers = []
    idx = 5
    for _ in range(num_layers - 1):
        pe_w, pe_b = _linear_init(keys[idx], 2 * G, 1)
        pnl_w, pnl_b = _linear_init(keys[idx + 1], G, G)
        gru = _gru_init(keys[idx + 2], G, G)
        bn_gamma = jax.random.uniform(keys[idx + 3], (G,), jnp.float32, 0.5, 1.5)
        bn_beta = jax.random.uniform(keys[idx + 4], (G,), jnp.float32, -0.1, 0.1)
        layers.append({"pe_w_dst": pe_w[:G], "pe_w_src": pe_w[G:], "pe_b": pe_b,
                       "pn_w": pnl_w, "pn_b": pnl_b, "gru": gru,
                       "bn_gamma": bn_gamma, "bn_beta": bn_beta})
        idx += 5
    return {"ctx": ctx, "layers": layers}


# ----------------------------------------------------------------------------
# Pure-JAX f32 reference (mirrors the PyTorch module literally, with concats)
# ----------------------------------------------------------------------------
def _gru_ref(x, h, p):
    gi = x @ p["w_ih"] + p["b_ih"]
    gh = h @ p["w_hh"] + p["b_hh"]
    H = h.shape[1]
    r = _sigmoid(gi[:, :H] + gh[:, :H])
    z = _sigmoid(gi[:, H:2 * H] + gh[:, H:2 * H])
    n = jnp.tanh(gi[:, 2 * H:] + r * gh[:, 2 * H:])
    return (1.0 - z) * n + z * h


def reference_forward(src, dst, node_feats, edge_feats, params):
    V = node_feats.shape[0]
    pc = params["ctx"]
    hv = node_feats
    hv_new = _leaky_relu(hv @ pc["pn_w"] + pc["pn_b"])
    W_e1 = jnp.concatenate([pc["e1_w_node"], pc["e1_w_edge"]], axis=0)
    he1 = _leaky_relu(jnp.concatenate([hv[src], edge_feats], 1) @ W_e1 + pc["e1_b"])
    W_e2 = jnp.concatenate([pc["e2_w_node"], pc["e2_w_edge"]], axis=0)
    logits = _leaky_relu(jnp.concatenate([hv_new[dst], he1], 1) @ W_e2 + pc["e2_b"])
    a = _segment_softmax(logits, dst, V)
    et = he1 @ pc["et_w"] + pc["et_b"]
    c = jax.ops.segment_sum(a * et, dst, num_segments=V)
    node_now = jnp.maximum(_gru_ref(_elu(c), hv_new, pc["gru"]), 0.0)
    total = node_now
    for lp in params["layers"]:
        W_pe = jnp.concatenate([lp["pe_w_dst"], lp["pe_w_src"]], axis=0)
        logits = _leaky_relu(
            jnp.concatenate([node_now[dst], node_now[src]], 1) @ W_pe + lp["pe_b"])
        a = _segment_softmax(logits, dst, V)
        hv_proj = node_now @ lp["pn_w"] + lp["pn_b"]
        c = jax.ops.segment_sum(hv_proj[src] * a, dst, num_segments=V)
        h_upd = jnp.maximum(_gru_ref(_elu(c), node_now, lp["gru"]), 0.0)
        h_upd = _batchnorm_train(h_upd, lp["bn_gamma"], lp["bn_beta"])
        node_now = h_upd
        total = total + h_upd
    return total


# ----------------------------------------------------------------------------
if __name__ == "__main__":
    key = jax.random.PRNGKey(0)
    k_src, k_dst, k_node, k_edge, k_par = jax.random.split(key, 5)

    # Small synthetic batched molecular graph.
    V, E = 64, 256
    node_feat_size, edge_feat_size, graph_feat_size = 32, 16, 128
    num_layers = 2

    src = jax.random.randint(k_src, (E,), 0, V, dtype=jnp.int32)
    dst = jax.random.randint(k_dst, (E,), 0, V, dtype=jnp.int32)
    node_feats = jax.random.normal(k_node, (V, node_feat_size), jnp.float32)
    edge_feats = jax.random.normal(k_edge, (E, edge_feat_size), jnp.float32)

    params = init_params(k_par, node_feat_size, edge_feat_size,
                         graph_feat_size, num_layers)

    ref = jax.block_until_ready(
        reference_forward(src, dst, node_feats, edge_feats, params))

    # Correctness gate: f32 MXU operands against the literal f32 reference.
    out_f32 = jax.block_until_ready(
        attentive_fp_forward(src, dst, node_feats, edge_feats, params,
                             compute_dtype=jnp.float32))
    assert out_f32.shape == (V, graph_feat_size)
    max_err_f32 = float(jnp.max(jnp.abs(out_f32 - ref)))
    assert jnp.allclose(out_f32, ref, atol=5e-3, rtol=5e-3), \
        f"f32 max_err={max_err_f32}"

    # Performance configuration: bf16 MXU operands, f32 accumulation.
    out_bf16 = jax.block_until_ready(
        attentive_fp_forward(src, dst, node_feats, edge_feats, params))
    assert out_bf16.shape == (V, graph_feat_size)
    assert bool(jnp.all(jnp.isfinite(out_bf16)))

    print("KERNEL_OK")
</pallas_src>

<mosaic_0001>
module attributes {stable_mosaic.version = 11 : i64} {
  func.func private @main(%arg0: i32) attributes {dimension_semantics = [#tpu.dimension_semantics<core_parallel>], iteration_bounds = array<i64: 2>, tpu.core_type = #tpu.core_type<sc_scalar_subcore>, window_params = []} {
    return
  }
}

module attributes {stable_mosaic.version = 11 : i64} {
  func.func private @main(%arg0: i32) attributes {dimension_semantics = [#tpu.dimension_semantics<core_parallel>], iteration_bounds = array<i64: 2>, tpu.core_type = #tpu.core_type<sc_scalar_subcore>, window_params = []} {
    return
  }
}

module attributes {stable_mosaic.version = 11 : i64} {
  func.func @_ctx_node_kernel(%arg0: i32, %arg1: memref<32x32xf32, #tpu.memory_space<vmem>>, %arg2: memref<32x256xf32, #tpu.memory_space<vmem>>, %arg3: memref<1x128xf32, #tpu.memory_space<vmem>>, %arg4: memref<1x128xf32, #tpu.memory_space<vmem>>, %arg5: memref<32x128xf32, #tpu.memory_space<vmem>>, %arg6: memref<32x128xf32, #tpu.memory_space<vmem>>, %arg7: memref<32x1xf32, #tpu.memory_space<vmem>>) attributes {dimension_semantics = [#tpu.dimension_semantics<parallel>], iteration_bounds = array<i64: 2>, scalar_prefetch = 0 : i64, scratch_operands = 0 : i64, tpu.core_type = #tpu.core_type<tc>, window_params = [{transform_indices = @transform_0, window_bounds = array<i64: 32, 32>}, {pipeline_mode = #tpu.pipeline_mode<synchronous>, transform_indices = @transform_1, window_bounds = array<i64: 32, 256>}, {pipeline_mode = #tpu.pipeline_mode<synchronous>, transform_indices = @transform_2, window_bounds = array<i64: 1, 128>}, {pipeline_mode = #tpu.pipeline_mode<synchronous>, transform_indices = @transform_3, window_bounds = array<i64: 1, 128>}, {transform_indices = @transform_4, window_bounds = array<i64: 32, 128>}, {transform_indices = @transform_5, window_bounds = array<i64: 32, 128>}, {transform_indices = @transform_6, window_bounds = array<i64: 32, 1>}]} {
    %c0 = arith.constant 0 : index
    %c0_0 = arith.constant 0 : index
    %0 = vector.load %arg1[%c0, %c0_0] : memref<32x32xf32, #tpu.memory_space<vmem>>, vector<32x32xf32>
    %c0_1 = arith.constant 0 : index
    %c0_2 = arith.constant 0 : index
    %1 = vector.load %arg2[%c0_1, %c0_2] : memref<32x256xf32, #tpu.memory_space<vmem>>, vector<32x256xf32>
    %cst = arith.constant dense<0.000000e+00> : vector<32x256xf32>
    %2 = tpu.matmul %0, %1, %cst {dimension_numbers = #tpu.dot_dimension_numbers<[1], [0], [0], [1], [0, 0, 1, 1], [], []>, precision = #tpu.contract_precision<fp32>} : vector<32x32xf32>, vector<32x256xf32>, vector<32x256xf32> -> vector<32x256xf32>
    %3 = vector.extract_strided_slice %2 {offsets = [0, 0], sizes = [32, 128], strides = [1, 1]} : vector<32x256xf32> to vector<32x128xf32>
    %c0_3 = arith.constant 0 : index
    %c0_4 = arith.constant 0 : index
    %4 = vector.load %arg3[%c0_3, %c0_4] : memref<1x128xf32, #tpu.memory_space<vmem>>, vector<1x128xf32>
    %5 = vector.broadcast %4 : vector<1x128xf32> to vector<32x128xf32>
    %6 = arith.addf %3, %5 : vector<32x128xf32>
    %cst_5 = arith.constant 0.000000e+00 : f32
    %7 = vector.broadcast %cst_5 : f32 to vector<32x128xf32>
    %8 = arith.cmpf ogt, %6, %7 : vector<32x128xf32>
    %cst_6 = arith.constant 0.00999999977 : f32
    %9 = vector.broadcast %cst_6 : f32 to vector<32x128xf32>
    %10 = arith.mulf %9, %6 : vector<32x128xf32>
    %11 = arith.select %8, %6, %10 : vector<32x128xi1>, vector<32x128xf32>
    %12 = vector.extract_strided_slice %2 {offsets = [0, 128], sizes = [32, 128], strides = [1, 1]} : vector<32x256xf32> to vector<32x128xf32>
    %c0_7 = arith.constant 0 : index
    %c0_8 = arith.constant 0 : index
    %13 = vector.load %arg6[%c0_7, %c0_8] : memref<32x128xf32, #tpu.memory_space<vmem>>, vector<32x128xf32>
    tpu.vector_store %arg6[%c0_7, %c0_8], %12 {strides = array<i32>} : memref<32x128xf32, #tpu.memory_space<vmem>>, vector<32x128xf32>,
    %c0_9 = arith.constant 0 : index
    %c0_10 = arith.constant 0 : index
    %14 = vector.load %arg5[%c0_9, %c0_10] : memref<32x128xf32, #tpu.memory_space<vmem>>, vector<32x128xf32>
    tpu.vector_store %arg5[%c0_9, %c0_10], %11 {strides = array<i32>} : memref<32x128xf32, #tpu.memory_space<vmem>>, vector<32x128xf32>,
    %c0_11 = arith.constant 0 : index
    %c0_12 = arith.constant 0 : index
    %15 = vector.load %arg4[%c0_11, %c0_12] : memref<1x128xf32, #tpu.memory_space<vmem>>, vector<1x128xf32>
    %16 = vector.broadcast %15 : vector<1x128xf32> to vector<32x128xf32>
    %17 = arith.mulf %11, %16 : vector<32x128xf32>
    %cst_13 = arith.constant dense<0.000000e+00> : vector<32xf32>
    %18 = vector.multi_reduction <add>, %17, %cst_13 [1] : vector<32x128xf32> to vector<32xf32>
    %19 = vector.shape_cast %18 : vector<32xf32> to vector<32x1xf32>
    %c0_14 = arith.constant 0 : index
    %c0_15 = arith.constant 0 : index
    %20 = vector.load %arg7[%c0_14, %c0_15] : memref<32x1xf32, #tpu.memory_space<vmem>>, vector<32x1xf32>
    tpu.vector_store %arg7[%c0_14, %c0_15], %19 {strides = array<i32>} : memref<32x1xf32, #tpu.memory_space<vmem>>, vector<32x1xf32>,
    return
  }
  func.func @transform_0(%arg0: i32) -> (i32, i32) {
    %c0_i32 = arith.constant 0 : i32
    %c0_i32_0 = arith.constant 0 : i32
    return %arg0, %c0_i32 : i32, i32
  }
  func.func @transform_1(%arg0: i32) -> (i32, i32) {
    %c0_i32 = arith.constant 0 : i32
    %c0_i32_0 = arith.constant 0 : i32
    %c0_i32_1 = arith.constant 0 : i32
    return %c0_i32, %c0_i32_0 : i32, i32
  }
  func.func @transform_2(%arg0: i32) -> (i32, i32) {
    %c0_i32 = arith.constant 0 : i32
    %c0_i32_0 = arith.constant 0 : i32
    %c0_i32_1 = arith.constant 0 : i32
    return %c0_i32, %c0_i32_0 : i32, i32
  }
  func.func @transform_3(%arg0: i32) -> (i32, i32) {
    %c0_i32 = arith.constant 0 : i32
    %c0_i32_0 = arith.constant 0 : i32
    %c0_i32_1 = arith.constant 0 : i32
    return %c0_i32, %c0_i32_0 : i32, i32
  }
  func.func @transform_4(%arg0: i32) -> (i32, i32) {
    %c0_i32 = arith.constant 0 : i32
    %c0_i32_0 = arith.constant 0 : i32
    return %arg0, %c0_i32 : i32, i32
  }
  func.func @transform_5(%arg0: i32) -> (i32, i32) {
    %c0_i32 = arith.constant 0 : i32
    %c0_i32_0 = arith.constant 0 : i32
    return %arg0, %c0_i32 : i32, i32
  }
  func.func @transform_6(%arg0: i32) -> (i32, i32) {
    %c0_i32 = arith.constant 0 : i32
    %c0_i32_0 = arith.constant 0 : i32
    return %arg0, %c0_i32 : i32, i32
  }
}

module attributes {stable_mosaic.version = 11 : i64} {
  func.func @_edge_ctx_kernel(%arg0: i32, %arg1: memref<128x128xf32, #tpu.memory_space<vmem>>, %arg2: memref<128x16xf32, #tpu.memory_space<vmem>>, %arg3: memref<128x1xf32, #tpu.memory_space<vmem>>, %arg4: memref<16x128xf32, #tpu.memory_space<vmem>>, %arg5: memref<1x128xf32, #tpu.memory_space<vmem>>, %arg6: memref<1x128xf32, #tpu.memory_space<vmem>>, %arg7: memref<1x1xf32, #tpu.memory_space<vmem>>, %arg8: memref<128x128xf32, #tpu.memory_space<vmem>>, %arg9: memref<1x128xf32, #tpu.memory_space<vmem>>, %arg10: memref<128x1xf32, #tpu.memory_space<vmem>>, %arg11: memref<128x128xf32, #tpu.memory_space<vmem>>) attributes {dimension_semantics = [#tpu.dimension_semantics<parallel>], iteration_bounds = array<i64: 2>, scalar_prefetch = 0 : i64, scratch_operands = 0 : i64, tpu.core_type = #tpu.core_type<tc>, window_params = [{transform_indices = @transform_0, window_bounds = array<i64: 128, 128>}, {transform_indices = @transform_1, window_bounds = array<i64: 128, 16>}, {transform_indices = @transform_2, window_bounds = array<i64: 128, 1>}, {pipeline_mode = #tpu.pipeline_mode<synchronous>, transform_indices = @transform_3, window_bounds = array<i64: 16, 128>}, {pipeline_mode = #tpu.pipeline_mode<synchronous>, transform_indices = @transform_4, window_bounds = array<i64: 1, 128>}, {pipeline_mode = #tpu.pipeline_mode<synchronous>, transform_indices = @transform_5, window_bounds = array<i64: 1, 128>}, {pipeline_mode = #tpu.pipeline_mode<synchronous>, transform_indices = @transform_6, window_bounds = array<i64: 1, 1>}, {pipeline_mode = #tpu.pipeline_mode<synchronous>, transform_indices = @transform_7, window_bounds = array<i64: 128, 128>}, {pipeline_mode = #tpu.pipeline_mode<synchronous>, transform_indices = @transform_8, window_bounds = array<i64: 1, 128>}, {transform_indices = @transform_9, window_bounds = array<i64: 128, 1>}, {transform_indices = @transform_10, window_bounds = array<i64: 128, 128>}]} {
    %c0 = arith.constant 0 : index
    %c0_0 = arith.constant 0 : index
    %0 = vector.load %arg2[%c0, %c0_0] : memref<128x16xf32, #tpu.memory_space<vmem>>, vector<128x16xf32>
    %c0_1 = arith.constant 0 : index
    %c0_2 = arith.constant 0 : index
    %1 = vector.load %arg4[%c0_1, %c0_2] : memref<16x128xf32, #tpu.memory_space<vmem>>, vector<16x128xf32>
    %cst = arith.constant dense<0.000000e+00> : vector<128x128xf32>
    %2 = tpu.matmul %0, %1, %cst {dimension_numbers = #tpu.dot_dimension_numbers<[1], [0], [0], [1], [0, 0, 1, 1], [], []>, precision = #tpu.contract_precision<fp32>} : vector<128x16xf32>, vector<16x128xf32>, vector<128x128xf32> -> vector<128x128xf32>
    %c0_3 = arith.constant 0 : index
    %c0_4 = arith.constant 0 : index
    %3 = vector.load %arg1[%c0_3, %c0_4] : memref<128x128xf32, #tpu.memory_space<vmem>>, vector<128x128xf32>
    %4 = arith.addf %2, %3 : vector<128x128xf32>
    %c0_5 = arith.constant 0 : index
    %c0_6 = arith.constant 0 : index
    %5 = vector.load %arg5[%c0_5, %c0_6] : memref<1x128xf32, #tpu.memory_space<vmem>>, vector<1x128xf32>
    %6 = vector.broadcast %5 : vector<1x128xf32> to vector<128x128xf32>
    %7 = arith.addf %4, %6 : vector<128x128xf32>
    %cst_7 = arith.constant 0.000000e+00 : f32
    %8 = vector.broadcast %cst_7 : f32 to vector<128x128xf32>
    %9 = arith.cmpf ogt, %7, %8 : vector<128x128xf32>
    %cst_8 = arith.constant 0.00999999977 : f32
    %10 = vector.broadcast %cst_8 : f32 to vector<128x128xf32>
    %11 = arith.mulf %10, %7 : vector<128x128xf32>
    %12 = arith.select %9, %7, %11 : vector<128x128xi1>, vector<128x128xf32>
    %c0_9 = arith.constant 0 : index
    %c0_10 = arith.constant 0 : index
    %13 = vector.load %arg6[%c0_9, %c0_10] : memref<1x128xf32, #tpu.memory_space<vmem>>, vector<1x128xf32>
    %14 = vector.broadcast %13 : vector<1x128xf32> to vector<128x128xf32>
    %15 = arith.mulf %12, %14 : vector<128x128xf32>
    %cst_11 = arith.constant dense<0.000000e+00> : vector<128xf32>
    %16 = vector.multi_reduction <add>, %15, %cst_11 [1] : vector<128x128xf32> to vector<128xf32>
    %17 = vector.shape_cast %16 : vector<128xf32> to vector<128x1xf32>
    %c0_12 = arith.constant 0 : index
    %c0_13 = arith.constant 0 : index
    %18 = vector.load %arg3[%c0_12, %c0_13] : memref<128x1xf32, #tpu.memory_space<vmem>>, vector<128x1xf32>
    %19 = arith.addf %17, %18 : vector<128x1xf32>
    %c0_14 = arith.constant 0 : index
    %c0_15 = arith.constant 0 : index
    %20 = vector.load %arg7[%c0_14, %c0_15] : memref<1x1xf32, #tpu.memory_space<vmem>>, vector<1x1xf32>
    %21 = vector.broadcast %20 : vector<1x1xf32> to vector<128x1xf32>
    %22 = arith.addf %19, %21 : vector<128x1xf32>
    %cst_16 = arith.constant 0.000000e+00 : f32
    %23 = vector.broadcast %cst_16 : f32 to vector<128x1xf32>
    %24 = arith.cmpf ogt, %22, %23 : vector<128x1xf32>
    %cst_17 = arith.constant 0.00999999977 : f32
    %25 = vector.broadcast %cst_17 : f32 to vector<128x1xf32>
    %26 = arith.mulf %25, %22 : vector<128x1xf32>
    %27 = arith.select %24, %22, %26 : vector<128x1xi1>, vector<128x1xf32>
    %c0_18 = arith.constant 0 : index
    %c0_19 = arith.constant 0 : index
    %28 = vector.load %arg8[%c0_18, %c0_19] : memref<128x128xf32, #tpu.memory_space<vmem>>, vector<128x128xf32>
    %cst_20 = arith.constant dense<0.000000e+00> : vector<128x128xf32>
    %29 = tpu.matmul %12, %28, %cst_20 {dimension_numbers = #tpu.dot_dimension_numbers<[1], [0], [0], [1], [0, 0, 1, 1], [], []>, precision = #tpu.contract_precision<fp32>} : vector<128x128xf32>, vector<128x128xf32>, vector<128x128xf32> -> vector<128x128xf32>
    %c0_21 = arith.constant 0 : index
    %c0_22 = arith.constant 0 : index
    %30 = vector.load %arg9[%c0_21, %c0_22] : memref<1x128xf32, #tpu.memory_space<vmem>>, vector<1x128xf32>
    %31 = vector.broadcast %30 : vector<1x128xf32> to vector<128x128xf32>
    %32 = arith.addf %29, %31 : vector<128x128xf32>
    %c0_23 = arith.constant 0 : index
    %c0_24 = arith.constant 0 : index
    %33 = vector.load %arg10[%c0_23, %c0_24] : memref<128x1xf32, #tpu.memory_space<vmem>>, vector<128x1xf32>
    tpu.vector_store %arg10[%c0_23, %c0_24], %27 {strides = array<i32>} : memref<128x1xf32, #tpu.memory_space<vmem>>, vector<128x1xf32>,
    %c0_25 = arith.constant 0 : index
    %c0_26 = arith.constant 0 : index
    %34 = vector.load %arg11[%c0_25, %c0_26] : memref<128x128xf32, #tpu.memory_space<vmem>>, vector<128x128xf32>
    tpu.vector_store %arg11[%c0_25, %c0_26], %32 {strides = array<i32>} : memref<128x128xf32, #tpu.memory_space<vmem>>, vector<128x128xf32>,
    return
  }
  func.func @transform_0(%arg0: i32) -> (i32, i32) {
    %c0_i32 = arith.constant 0 : i32
    %c0_i32_0 = arith.constant 0 : i32
    return %arg0, %c0_i32 : i32, i32
  }
  func.func @transform_1(%arg0: i32) -> (i32, i32) {
    %c0_i32 = arith.constant 0 : i32
    %c0_i32_0 = arith.constant 0 : i32
    return %arg0, %c0_i32 : i32, i32
  }
  func.func @transform_2(%arg0: i32) -> (i32, i32) {
    %c0_i32 = arith.constant 0 : i32
    %c0_i32_0 = arith.constant 0 : i32
    return %arg0, %c0_i32 : i32, i32
  }
  func.func @transform_3(%arg0: i32) -> (i32, i32) {
    %c0_i32 = arith.constant 0 : i32
    %c0_i32_0 = arith.constant 0 : i32
    %c0_i32_1 = arith.constant 0 : i32
    return %c0_i32, %c0_i32_0 : i32, i32
  }
  func.func @transform_4(%arg0: i32) -> (i32, i32) {
    %c0_i32 = arith.constant 0 : i32
    %c0_i32_0 = arith.constant 0 : i32
    %c0_i32_1 = arith.constant 0 : i32
    return %c0_i32, %c0_i32_0 : i32, i32
  }
  func.func @transform_5(%arg0: i32) -> (i32, i32) {
    %c0_i32 = arith.constant 0 : i32
    %c0_i32_0 = arith.constant 0 : i32
    %c0_i32_1 = arith.constant 0 : i32
    return %c0_i32, %c0_i32_0 : i32, i32
  }
  func.func @transform_6(%arg0: i32) -> (i32, i32) {
    %c0_i32 = arith.constant 0 : i32
    %c0_i32_0 = arith.constant 0 : i32
    %c0_i32_1 = arith.constant 0 : i32
    return %c0_i32, %c0_i32_0 : i32, i32
  }
  func.func @transform_7(%arg0: i32) -> (i32, i32) {
    %c0_i32 = arith.constant 0 : i32
    %c0_i32_0 = arith.constant 0 : i32
    %c0_i32_1 = arith.constant 0 : i32
    return %c0_i32, %c0_i32_0 : i32, i32
  }
  func.func @transform_8(%arg0: i32) -> (i32, i32) {
    %c0_i32 = arith.constant 0 : i32
    %c0_i32_0 = arith.constant 0 : i32
    %c0_i32_1 = arith.constant 0 : i32
    return %c0_i32, %c0_i32_0 : i32, i32
  }
  func.func @transform_9(%arg0: i32) -> (i32, i32) {
    %c0_i32 = arith.constant 0 : i32
    %c0_i32_0 = arith.constant 0 : i32
    return %arg0, %c0_i32 : i32, i32
  }
  func.func @transform_10(%arg0: i32) -> (i32, i32) {
    %c0_i32 = arith.constant 0 : i32
    %c0_i32_0 = arith.constant 0 : i32
    return %arg0, %c0_i32 : i32, i32
  }
}

module attributes {stable_mosaic.version = 11 : i64} {
  func.func @_gru_kernel(%arg0: i32, %arg1: memref<32x128xf32, #tpu.memory_space<vmem>>, %arg2: memref<32x128xf32, #tpu.memory_space<vmem>>, %arg3: memref<256x512xf32, #tpu.memory_space<vmem>>, %arg4: memref<1x512xf32, #tpu.memory_space<vmem>>, %arg5: memref<32x128xf32, #tpu.memory_space<vmem>>) attributes {dimension_semantics = [#tpu.dimension_semantics<parallel>], iteration_bounds = array<i64: 2>, scalar_prefetch = 0 : i64, scratch_operands = 0 : i64, tpu.core_type = #tpu.core_type<tc>, window_params = [{transform_indices = @transform_0, window_bounds = array<i64: 32, 128>}, {transform_indices = @transform_1, window_bounds = array<i64: 32, 128>}, {pipeline_mode = #tpu.pipeline_mode<synchronous>, transform_indices = @transform_2, window_bounds = array<i64: 256, 512>}, {pipeline_mode = #tpu.pipeline_mode<synchronous>, transform_indices = @transform_3, window_bounds = array<i64: 1, 512>}, {transform_indices = @transform_4, window_bounds = array<i64: 32, 128>}]} {
    %c0 = arith.constant 0 : index
    %c0_0 = arith.constant 0 : index
    %0 = vector.load %arg1[%c0, %c0_0] : memref<32x128xf32, #tpu.memory_space<vmem>>, vector<32x128xf32>
    %cst = arith.constant 0.000000e+00 : f32
    %1 = vector.broadcast %cst : f32 to vector<32x128xf32>
    %2 = arith.cmpf ogt, %0, %1 : vector<32x128xf32>
    %cst_1 = arith.constant 0.000000e+00 : f32
    %3 = vector.broadcast %cst_1 : f32 to vector<32x128xf32>
    %4 = arith.minimumf %0, %3 : vector<32x128xf32>
    %5 = math.exp %4 : vector<32x128xf32>
    %cst_2 = arith.constant 1.000000e+00 : f32
    %6 = vector.broadcast %cst_2 : f32 to vector<32x128xf32>
    %7 = arith.subf %5, %6 : vector<32x128xf32>
    %8 = arith.select %2, %0, %7 : vector<32x128xi1>, vector<32x128xf32>
    %c0_3 = arith.constant 0 : index
    %c0_4 = arith.constant 0 : index
    %9 = vector.load %arg2[%c0_3, %c0_4] : memref<32x128xf32, #tpu.memory_space<vmem>>, vector<32x128xf32>
    %10 = tpu.concatenate %8, %9 in 1 : vector<32x128xf32>, vector<32x128xf32> -> vector<32x256xf32>
    %c0_5 = arith.constant 0 : index
    %c0_6 = arith.constant 0 : index
    %11 = vector.load %arg3[%c0_5, %c0_6] : memref<256x512xf32, #tpu.memory_space<vmem>>, vector<256x512xf32>
    %cst_7 = arith.constant dense<0.000000e+00> : vector<32x512xf32>
    %12 = tpu.matmul %10, %11, %cst_7 {dimension_numbers = #tpu.dot_dimension_numbers<[1], [0], [0], [1], [0, 0, 1, 1], [], []>, precision = #tpu.contract_precision<fp32>} : vector<32x256xf32>, vector<256x512xf32>, vector<32x512xf32> -> vector<32x512xf32>
    %c0_8 = arith.constant 0 : index
    %c0_9 = arith.constant 0 : index
    %13 = vector.load %arg4[%c0_8, %c0_9] : memref<1x512xf32, #tpu.memory_space<vmem>>, vector<1x512xf32>
    %14 = vector.broadcast %13 : vector<1x512xf32> to vector<32x512xf32>
    %15 = arith.addf %12, %14 : vector<32x512xf32>
    %16 = vector.extract_strided_slice %15 {offsets = [0, 0], sizes = [32, 128], strides = [1, 1]} : vector<32x512xf32> to vector<32x128xf32>
    %cst_10 = arith.constant 0.000000e+00 : f32
    %17 = vector.broadcast %cst_10 : f32 to vector<32x128xf32>
    %18 = arith.subf %17, %16 : vector<32x128xf32>
    %19 = math.exp %18 : vector<32x128xf32>
    %cst_11 = arith.constant 1.000000e+00 : f32
    %20 = vector.broadcast %cst_11 : f32 to vector<32x128xf32>
    %21 = arith.addf %20, %19 : vector<32x128xf32>
    %cst_12 = arith.constant 1.000000e+00 : f32
    %22 = vector.broadcast %cst_12 : f32 to vector<32x128xf32>
    %23 = arith.divf %22, %21 : vector<32x128xf32>
    %24 = vector.extract_strided_slice %15 {offsets = [0, 128], sizes = [32, 128], strides = [1, 1]} : vector<32x512xf32> to vector<32x128xf32>
    %cst_13 = arith.constant 0.000000e+00 : f32
    %25 = vector.broadcast %cst_13 : f32 to vector<32x128xf32>
    %26 = arith.subf %25, %24 : vector<32x128xf32>
    %27 = math.exp %26 : vector<32x128xf32>
    %cst_14 = arith.constant 1.000000e+00 : f32
    %28 = vector.broadcast %cst_14 : f32 to vector<32x128xf32>
    %29 = arith.addf %28, %27 : vector<32x128xf32>
    %cst_15 = arith.constant 1.000000e+00 : f32
    %30 = vector.broadcast %cst_15 : f32 to vector<32x128xf32>
    %31 = arith.divf %30, %29 : vector<32x128xf32>
    %32 = vector.extract_strided_slice %15 {offsets = [0, 256], sizes = [32, 128], strides = [1, 1]} : vector<32x512xf32> to vector<32x128xf32>
    %33 = vector.extract_strided_slice %15 {offsets = [0, 384], sizes = [32, 128], strides = [1, 1]} : vector<32x512xf32> to vector<32x128xf32>
    %34 = arith.mulf %23, %33 : vector<32x128xf32>
    %35 = arith.addf %32, %34 : vector<32x128xf32>
    %36 = math.tanh %35 : vector<32x128xf32>
    %cst_16 = arith.constant 1.000000e+00 : f32
    %37 = vector.broadcast %cst_16 : f32 to vector<32x128xf32>
    %38 = arith.subf %37, %31 : vector<32x128xf32>
    %39 = arith.mulf %38, %36 : vector<32x128xf32>
    %40 = arith.mulf %31, %9 : vector<32x128xf32>
    %41 = arith.addf %39, %40 : vector<32x128xf32>
    %cst_17 = arith.constant 0.000000e+00 : f32
    %42 = vector.broadcast %cst_17 : f32 to vector<32x128xf32>
    %43 = arith.maximumf %41, %42 : vector<32x128xf32>
    %c0_18 = arith.constant 0 : index
    %c0_19 = arith.constant 0 : index
    %44 = vector.load %arg5[%c0_18, %c0_19] : memref<32x128xf32, #tpu.memory_space<vmem>>, vector<32x128xf32>
    tpu.vector_store %arg5[%c0_18, %c0_19], %43 {strides = array<i32>} : memref<32x128xf32, #tpu.memory_space<vmem>>, vector<32x128xf32>,
    return
  }
  func.func @transform_0(%arg0: i32) -> (i32, i32) {
    %c0_i32 = arith.constant 0 : i32
    %c0_i32_0 = arith.constant 0 : i32
    return %arg0, %c0_i32 : i32, i32
  }
  func.func @transform_1(%arg0: i32) -> (i32, i32) {
    %c0_i32 = arith.constant 0 : i32
    %c0_i32_0 = arith.constant 0 : i32
    return %arg0, %c0_i32 : i32, i32
  }
  func.func @transform_2(%arg0: i32) -> (i32, i32) {
    %c0_i32 = arith.constant 0 : i32
    %c0_i32_0 = arith.constant 0 : i32
    %c0_i32_1 = arith.constant 0 : i32
    return %c0_i32, %c0_i32_0 : i32, i32
  }
  func.func @transform_3(%arg0: i32) -> (i32, i32) {
    %c0_i32 = arith.constant 0 : i32
    %c0_i32_0 = arith.constant 0 : i32
    %c0_i32_1 = arith.constant 0 : i32
    return %c0_i32, %c0_i32_0 : i32, i32
  }
  func.func @transform_4(%arg0: i32) -> (i32, i32) {
    %c0_i32 = arith.constant 0 : i32
    %c0_i32_0 = arith.constant 0 : i32
    return %arg0, %c0_i32 : i32, i32
  }
}

module attributes {stable_mosaic.version = 11 : i64} {
  func.func @_layer_node_kernel(%arg0: i32, %arg1: memref<32x128xf32, #tpu.memory_space<vmem>>, %arg2: memref<128x128xf32, #tpu.memory_space<vmem>>, %arg3: memref<1x128xf32, #tpu.memory_space<vmem>>, %arg4: memref<1x128xf32, #tpu.memory_space<vmem>>, %arg5: memref<1x128xf32, #tpu.memory_space<vmem>>, %arg6: memref<32x128xf32, #tpu.memory_space<vmem>>, %arg7: memref<32x1xf32, #tpu.memory_space<vmem>>, %arg8: memref<32x1xf32, #tpu.memory_space<vmem>>) attributes {dimension_semantics = [#tpu.dimension_semantics<parallel>], iteration_bounds = array<i64: 2>, scalar_prefetch = 0 : i64, scratch_operands = 0 : i64, tpu.core_type = #tpu.core_type<tc>, window_params = [{transform_indices = @transform_0, window_bounds = array<i64: 32, 128>}, {pipeline_mode = #tpu.pipeline_mode<synchronous>, transform_indices = @transform_1, window_bounds = array<i64: 128, 128>}, {pipeline_mode = #tpu.pipeline_mode<synchronous>, transform_indices = @transform_2, window_bounds = array<i64: 1, 128>}, {pipeline_mode = #tpu.pipeline_mode<synchronous>, transform_indices = @transform_3, window_bounds = array<i64: 1, 128>}, {pipeline_mode = #tpu.pipeline_mode<synchronous>, transform_indices = @transform_4, window_bounds = array<i64: 1, 128>}, {transform_indices = @transform_5, window_bounds = array<i64: 32, 128>}, {transform_indices = @transform_6, window_bounds = array<i64: 32, 1>}, {transform_indices = @transform_7, window_bounds = array<i64: 32, 1>}]} {
    %c0 = arith.constant 0 : index
    %c0_0 = arith.constant 0 : index
    %0 = vector.load %arg1[%c0, %c0_0] : memref<32x128xf32, #tpu.memory_space<vmem>>, vector<32x128xf32>
    %c0_1 = arith.constant 0 : index
    %c0_2 = arith.constant 0 : index
    %1 = vector.load %arg2[%c0_1, %c0_2] : memref<128x128xf32, #tpu.memory_space<vmem>>, vector<128x128xf32>
    %cst = arith.constant dense<0.000000e+00> : vector<32x128xf32>
    %2 = tpu.matmul %0, %1, %cst {dimension_numbers = #tpu.dot_dimension_numbers<[1], [0], [0], [1], [0, 0, 1, 1], [], []>, precision = #tpu.contract_precision<fp32>} : vector<32x128xf32>, vector<128x128xf32>, vector<32x128xf32> -> vector<32x128xf32>
    %c0_3 = arith.constant 0 : index
    %c0_4 = arith.constant 0 : index
    %3 = vector.load %arg3[%c0_3, %c0_4] : memref<1x128xf32, #tpu.memory_space<vmem>>, vector<1x128xf32>
    %4 = vector.broadcast %3 : vector<1x128xf32> to vector<32x128xf32>
    %5 = arith.addf %2, %4 : vector<32x128xf32>
    %c0_5 = arith.constant 0 : index
    %c0_6 = arith.constant 0 : index
    %6 = vector.load %arg6[%c0_5, %c0_6] : memref<32x128xf32, #tpu.memory_space<vmem>>, vector<32x128xf32>
    tpu.vector_store %arg6[%c0_5, %c0_6], %5 {strides = array<i32>} : memref<32x128xf32, #tpu.memory_space<vmem>>, vector<32x128xf32>,
    %c0_7 = arith.constant 0 : index
    %c0_8 = arith.constant 0 : index
    %7 = vector.load %arg4[%c0_7, %c0_8] : memref<1x128xf32, #tpu.memory_space<vmem>>, vector<1x128xf32>
    %8 = vector.broadcast %7 : vector<1x128xf32> to vector<32x128xf32>
    %9 = arith.mulf %0, %8 : vector<32x128xf32>
    %cst_9 = arith.constant dense<0.000000e+00> : vector<32xf32>
    %10 = vector.multi_reduction <add>, %9, %cst_9 [1] : vector<32x128xf32> to vector<32xf32>
    %11 = vector.shape_cast %10 : vector<32xf32> to vector<32x1xf32>
    %c0_10 = arith.constant 0 : index
    %c0_11 = arith.constant 0 : index
    %12 = vector.load %arg7[%c0_10, %c0_11] : memref<32x1xf32, #tpu.memory_space<vmem>>, vector<32x1xf32>
    tpu.vector_store %arg7[%c0_10, %c0_11], %11 {strides = array<i32>} : memref<32x1xf32, #tpu.memory_space<vmem>>, vector<32x1xf32>,
    %c0_12 = arith.constant 0 : index
    %c0_13 = arith.constant 0 : index
    %13 = vector.load %arg5[%c0_12, %c0_13] : memref<1x128xf32, #tpu.memory_space<vmem>>, vector<1x128xf32>
    %14 = vector.broadcast %13 : vector<1x128xf32> to vector<32x128xf32>
    %15 = arith.mulf %0, %14 : vector<32x128xf32>
    %cst_14 = arith.constant dense<0.000000e+00> : vector<32xf32>
    %16 = vector.multi_reduction <add>, %15, %cst_14 [1] : vector<32x128xf32> to vector<32xf32>
    %17 = vector.shape_cast %16 : vector<32xf32> to vector<32x1xf32>
    %c0_15 = arith.constant 0 : index
    %c0_16 = arith.constant 0 : index
    %18 = vector.load %arg8[%c0_15, %c0_16] : memref<32x1xf32, #tpu.memory_space<vmem>>, vector<32x1xf32>
    tpu.vector_store %arg8[%c0_15, %c0_16], %17 {strides = array<i32>} : memref<32x1xf32, #tpu.memory_space<vmem>>, vector<32x1xf32>,
    return
  }
  func.func @transform_0(%arg0: i32) -> (i32, i32) {
    %c0_i32 = arith.constant 0 : i32
    %c0_i32_0 = arith.constant 0 : i32
    return %arg0, %c0_i32 : i32, i32
  }
  func.func @transform_1(%arg0: i32) -> (i32, i32) {
    %c0_i32 = arith.constant 0 : i32
    %c0_i32_0 = arith.constant 0 : i32
    %c0_i32_1 = arith.constant 0 : i32
    return %c0_i32, %c0_i32_0 : i32, i32
  }
  func.func @transform_2(%arg0: i32) -> (i32, i32) {
    %c0_i32 = arith.constant 0 : i32
    %c0_i32_0 = arith.constant 0 : i32
    %c0_i32_1 = arith.constant 0 : i32
    return %c0_i32, %c0_i32_0 : i32, i32
  }
  func.func @transform_3(%arg0: i32) -> (i32, i32) {
    %c0_i32 = arith.constant 0 : i32
    %c0_i32_0 = arith.constant 0 : i32
    %c0_i32_1 = arith.constant 0 : i32
    return %c0_i32, %c0_i32_0 : i32, i32
  }
  func.func @transform_4(%arg0: i32) -> (i32, i32) {
    %c0_i32 = arith.constant 0 : i32
    %c0_i32_0 = arith.constant 0 : i32
    %c0_i32_1 = arith.constant 0 : i32
    return %c0_i32, %c0_i32_0 : i32, i32
  }
  func.func @transform_5(%arg0: i32) -> (i32, i32) {
    %c0_i32 = arith.constant 0 : i32
    %c0_i32_0 = arith.constant 0 : i32
    return %arg0, %c0_i32 : i32, i32
  }
  func.func @transform_6(%arg0: i32) -> (i32, i32) {
    %c0_i32 = arith.constant 0 : i32
    %c0_i32_0 = arith.constant 0 : i32
    return %arg0, %c0_i32 : i32, i32
  }
  func.func @transform_7(%arg0: i32) -> (i32, i32) {
    %c0_i32 = arith.constant 0 : i32
    %c0_i32_0 = arith.constant 0 : i32
    return %arg0, %c0_i32 : i32, i32
  }
}

</mosaic_0001>

<llo_original>
// kernel: attentive_fp_forward.5
$region0: #{attentive_fp_forward.5}
  #allocation0 [shape = 'u32[]', space=smem, size = 0x4, offset = 0x4, fixed_abs, tag = 'smem constant byte address 0x4 - core index']
  #allocation1 [shape = 'u32[144,128]{1,0:T(1,128)}', space=vmem, size = 0x12000, scoped, tag = 'internal scratch']
  %s0 = inlined_call_operand.vmem [shape: f32[64,32], index: 0, kind: input, shape index: {}]
  %s1 = inlined_call_operand.vmem [shape: f32[32,256], index: 1, kind: input, shape index: {}]
  %s2 = inlined_call_operand.vmem [shape: f32[1,128], index: 2, kind: input, shape index: {}]
  %s3 = inlined_call_operand.vmem [shape: f32[1,128], index: 3, kind: input, shape index: {}]
  %s4 = inlined_call_operand.vmem [shape: f32[64,128], index: 4, kind: output, shape index: {0}]
  %s5 = inlined_call_operand.vmem [shape: f32[64,128], index: 5, kind: output, shape index: {1}]
  %s6 = inlined_call_operand.vmem [shape: f32[64,1], index: 6, kind: output, shape index: {2}]
  %7 = xla_tuple %s4, %s5, %s6
  %s8 = sld [smem:[#allocation0]]
  $region65: #{attentive_fp_forward.5} parent=0
    _
  %s10 = ssub.s32 1, %s8
  %s11 = scalar_select 0, %s10, %s8
  loop: start=0, step=1, limit=4
  $region2: #{attentive_fp_forward.5} parent=0 // loop_pre_header
    _
  $region3: #{attentive_fp_forward.5} parent=0 // loop_header
    %s13 = sphi 0, %s17
    %p14 = scmp.ge.s32.totalorder %s13, 4
    %s23 = sphi 0, %s25
    %s26 = sphi 0, %s23
    %s27 = sphi 0, %s26
    %s43 = sphi 0, %s27
    %s47 = sphi 0, %s47
    %s49 = sphi 0, %s47
    %s50 = sphi 0, %s49
    %s64 = sphi 0, %s50
    %s68 = sphi 0, %s68
    %s70 = sphi 0, %s68
    %s71 = sphi 0, %s70
    %s85 = sphi 0, %s71
    %s89 = sphi 0, %s89
    %s91 = sphi 0, %s89
    %s92 = sphi 0, %s91
    %s106 = sphi 0, %s92
    %s112 = sphi 0, %s114
    %s115 = sphi 0, %s112
    %s116 = sphi 0, %s115
    %s132 = sphi 0, %s116
    %s138 = sphi 0, %s140
    %s141 = sphi 0, %s138
    %s142 = sphi 0, %s141
    %s158 = sphi 0, %s142
    %s164 = sphi 0, %s166
    %s167 = sphi 0, %s164
    %s168 = sphi 0, %s167
    %s184 = sphi 0, %s168
  $region4: #{attentive_fp_forward.5} parent=0 // loop_header_branch
    %16 = sbr.rel (%p14) target = $region8
  $region5: #{attentive_fp_forward.5} parent=0 // loop_body
    %s18 = ssub.s32 %s13, 1
    %s19 = ssub.s32 %s13, 2
    %s20 = sadd.s32 %s13, 1
    %s21 = ssub.s32 %s13, %s20
    %p22 = scmp.eq.s32.totalorder %s21, 0
    %s24 = sadd.s32 %s23, 1
    %s25 = scalar_select %p22, %s23, %s24
    %p28 = pneg %p22
    %p29 = scmp.eq.s32.totalorder %s13, 1
    %p30 = por %p28, %p29
    %p31 = scmp.ne.s32.totalorder %s23, %s26
    %p32 = scmp.eq.s32.totalorder %s13, 0
    %p33 = por %p31, %p32
    %p34 = scmp.ne.s32.totalorder %s23, %s26
    %p35 = scmp.eq.s32.totalorder %s18, 1
    %p36 = por %p34, %p35
    %p37 = scmp.ne.s32.totalorder %s26, %s27
    %p38 = scmp.eq.s32.totalorder %s18, 0
    %p39 = por %p37, %p38
    %p40 = scmp.ne.s32.totalorder %s26, %s27
    %p41 = scmp.eq.s32.totalorder %s19, 1
    %p42 = por %p40, %p41
    %p44 = scmp.ne.s32.totalorder %s27, %s43
    %p45 = scmp.eq.s32.totalorder %s19, 0
    %p46 = por %p44, %p45
    %s48 = sadd.s32 %s47, 1
    %p51 = scmp.eq.s32.totalorder %s13, 1
    %p52 = scmp.ne.s32.totalorder %s47, %s49
    %p53 = scmp.eq.s32.totalorder %s13, 0
    %p54 = por %p52, %p53
    %p55 = scmp.ne.s32.totalorder %s47, %s49
    %p56 = scmp.eq.s32.totalorder %s18, 1
    %p57 = por %p55, %p56
    %p58 = scmp.ne.s32.totalorder %s49, %s50
    %p59 = scmp.eq.s32.totalorder %s18, 0
    %p60 = por %p58, %p59
    %p61 = scmp.ne.s32.totalorder %s49, %s50
    %p62 = scmp.eq.s32.totalorder %s19, 1
    %p63 = por %p61, %p62
    %p65 = scmp.ne.s32.totalorder %s50, %s64
    %p66 = scmp.eq.s32.totalorder %s19, 0
    %p67 = por %p65, %p66
    %s69 = sadd.s32 %s68, 1
    %p72 = scmp.eq.s32.totalorder %s13, 1
    %p73 = scmp.ne.s32.totalorder %s68, %s70
    %p74 = scmp.eq.s32.totalorder %s13, 0
    %p75 = por %p73, %p74
    %p76 = scmp.ne.s32.totalorder %s68, %s70
    %p77 = scmp.eq.s32.totalorder %s18, 1
    %p78 = por %p76, %p77
    %p79 = scmp.ne.s32.totalorder %s70, %s71
    %p80 = scmp.eq.s32.totalorder %s18, 0
    %p81 = por %p79, %p80
    %p82 = scmp.ne.s32.totalorder %s70, %s71
    %p83 = scmp.eq.s32.totalorder %s19, 1
    %p84 = por %p82, %p83
    %p86 = scmp.ne.s32.totalorder %s71, %s85
    %p87 = scmp.eq.s32.totalorder %s19, 0
    %p88 = por %p86, %p87
    %s90 = sadd.s32 %s89, 1
    %p93 = scmp.eq.s32.totalorder %s13, 1
    %p94 = scmp.ne.s32.totalorder %s89, %s91
    %p95 = scmp.eq.s32.totalorder %s13, 0
    %p96 = por %p94, %p95
    %p97 = scmp.ne.s32.totalorder %s89, %s91
    %p98 = scmp.eq.s32.totalorder %s18, 1
    %p99 = por %p97, %p98
    %p100 = scmp.ne.s32.totalorder %s91, %s92
    %p101 = scmp.eq.s32.totalorder %s18, 0
    %p102 = por %p100, %p101
    %p103 = scmp.ne.s32.totalorder %s91, %s92
    %p104 = scmp.eq.s32.totalorder %s19, 1
    %p105 = por %p103, %p104
    %p107 = scmp.ne.s32.totalorder %s92, %s106
    %p108 = scmp.eq.s32.totalorder %s19, 0
    %p109 = por %p107, %p108
    %s110 = ssub.s32 %s13, %s20
    %p111 = scmp.eq.s32.totalorder %s110, 0
    %s113 = sadd.s32 %s112, 1
    %s114 = scalar_select %p111, %s112, %s113
    %p117 = pneg %p111
    %p118 = scmp.eq.s32.totalorder %s13, 1
    %p119 = por %p117, %p118
    %p120 = scmp.ne.s32.totalorder %s112, %s115
    %p121 = scmp.eq.s32.totalorder %s13, 0
    %p122 = por %p120, %p121
    %p123 = scmp.ne.s32.totalorder %s112, %s115
    %p124 = scmp.eq.s32.totalorder %s18, 1
    %p125 = por %p123, %p124
    %p126 = scmp.ne.s32.totalorder %s115, %s116
    %p127 = scmp.eq.s32.totalorder %s18, 0
    %p128 = por %p126, %p127
    %p129 = scmp.ne.s32.totalorder %s115, %s116
    %p130 = scmp.eq.s32.totalorder %s19, 1
    %p131 = por %p129, %p130
    %p133 = scmp.ne.s32.totalorder %s116, %s132
    %p134 = scmp.eq.s32.totalorder %s19, 0
    %p135 = por %p133, %p134
    %s136 = ssub.s32 %s13, %s20
    %p137 = scmp.eq.s32.totalorder %s136, 0
    %s139 = sadd.s32 %s138, 1
    %s140 = scalar_select %p137, %s138, %s139
    %p143 = pneg %p137
    %p144 = scmp.eq.s32.totalorder %s13, 1
    %p145 = por %p143, %p144
    %p146 = scmp.ne.s32.totalorder %s138, %s141
    %p147 = scmp.eq.s32.totalorder %s13, 0
    %p148 = por %p146, %p147
    %p149 = scmp.ne.s32.totalorder %s138, %s141
    %p150 = scmp.eq.s32.totalorder %s18, 1
    %p151 = por %p149, %p150
    %p152 = scmp.ne.s32.totalorder %s141, %s142
    %p153 = scmp.eq.s32.totalorder %s18, 0
    %p154 = por %p152, %p153
    %p155 = scmp.ne.s32.totalorder %s141, %s142
    %p156 = scmp.eq.s32.totalorder %s19, 1
    %p157 = por %p155, %p156
    %p159 = scmp.ne.s32.totalorder %s142, %s158
    %p160 = scmp.eq.s32.totalorder %s19, 0
    %p161 = por %p159, %p160
    %s162 = ssub.s32 %s13, %s20
    %p163 = scmp.eq.s32.totalorder %s162, 0
    %s165 = sadd.s32 %s164, 1
    %s166 = scalar_select %p163, %s164, %s165
    %p169 = pneg %p163
    %p170 = scmp.eq.s32.totalorder %s13, 1
    %p171 = por %p169, %p170
    %p172 = scmp.ne.s32.totalorder %s164, %s167
    %p173 = scmp.eq.s32.totalorder %s13, 0
    %p174 = por %p172, %p173
    %p175 = scmp.ne.s32.totalorder %s164, %s167
    %p176 = scmp.eq.s32.totalorder %s18, 1
    %p177 = por %p175, %p176
    %p178 = scmp.ne.s32.totalorder %s167, %s168
    %p179 = scmp.eq.s32.totalorder %s18, 0
    %p180 = por %p178, %p179
    %p181 = scmp.ne.s32.totalorder %s167, %s168
    %p182 = scmp.eq.s32.totalorder %s19, 1
    %p183 = por %p181, %p182
    %p185 = scmp.ne.s32.totalorder %s168, %s184
    %p186 = scmp.eq.s32.totalorder %s19, 0
    %p187 = por %p185, %p186
    %p188 = scmp.le.s32.totalorder 1, %s13
    %p189 = scmp.lt.s32.totalorder %s13, 3
    %p190 = pnand %p188, %p189
    %p191 = pneg %p190
    // Predicated region
    $region9: #{attentive_fp_forward.5} parent=5 // pred_check
      _
    $region10: #{attentive_fp_forward.5} parent=5 // pred_check_branch
      %193 = sbr.rel (%p190) target = $region12
    $region11: #{attentive_fp_forward.5} parent=5 // pred_region
      %s194 = ssub.s32 %s13, 1
      // Predicated region
      $region13: #{attentive_fp_forward.5} parent=11 // pred_check
        %p195 = pneg %p60
      $region14: #{attentive_fp_forward.5} parent=11 // pred_check_branch
        %197 = sbr.rel (%p195) target = $region16
      $region15: #{attentive_fp_forward.5} parent=11 // pred_region
        _
      $region16: #{attentive_fp_forward.5} parent=11 // pred_fallthru
        _
      // Predicated region
      $region17: #{attentive_fp_forward.5} parent=11 // pred_check
        %p198 = pneg %p81
      $region18: #{attentive_fp_forward.5} parent=11 // pred_check_branch
        %200 = sbr.rel (%p198) target = $region20
      $region19: #{attentive_fp_forward.5} parent=11 // pred_region
        _
      $region20: #{attentive_fp_forward.5} parent=11 // pred_fallthru
        _
      // Predicated region
      $region21: #{attentive_fp_forward.5} parent=11 // pred_check
        %p201 = pneg %p102
      $region22: #{attentive_fp_forward.5} parent=11 // pred_check_branch
        %203 = sbr.rel (%p201) target = $region24
      $region23: #{attentive_fp_forward.5} parent=11 // pred_region
        _
      $region24: #{attentive_fp_forward.5} parent=11 // pred_fallthru
        _
    $region12: #{attentive_fp_forward.5} parent=5 // pred_fallthru
      _
    %p204 = scmp.lt.s32.totalorder %s13, 2
    // Predicated region
    $region25: #{attentive_fp_forward.5} parent=5 // pred_check
      %p205 = pneg %p204
    $region26: #{attentive_fp_forward.5} parent=5 // pred_check_branch
      %207 = sbr.rel (%p205) target = $region28
    $region27: #{attentive_fp_forward.5} parent=5 // pred_region
      // Predicated region
      $region29: #{attentive_fp_forward.5} parent=27 // pred_check
        %p208 = pneg %p33
      $region30: #{attentive_fp_forward.5} parent=27 // pred_check_branch
        %210 = sbr.rel (%p208) target = $region32
      $region31: #{attentive_fp_forward.5} parent=27 // pred_region
        %s211 = smul.u32 4, %s13
        %p212 = scmp.lt.s32.totalorder %s211, 7
        %s213 = scalar_select %p212, %s211, 7
        %s214 = smul.addr %s213, 8
        %s215 = scalar_lea.vmem %s0, %s214
        %s216 = smul.u32 4, %s13
      $region32: #{attentive_fp_forward.5} parent=27 // pred_fallthru
        _
    $region28: #{attentive_fp_forward.5} parent=5 // pred_fallthru
      _
    %p217 = scmp.le.s32.totalorder 1, %s13
    %p218 = scmp.lt.s32.totalorder %s13, 3
    %p219 = pnand %p217, %p218
    %p220 = pneg %p219
    // Predicated region
    $region33: #{attentive_fp_forward.5} parent=5 // pred_check
      _
    $region34: #{attentive_fp_forward.5} parent=5 // pred_check_branch
      %222 = sbr.rel (%p219) target = $region36
    $region35: #{attentive_fp_forward.5} parent=5 // pred_region
      %s223 = ssub.s32 %s13, 1
      %s224 = smul.u32 4, %s18
      %p225 = scmp.lt.s32.totalorder %s224, 7
      %s226 = scalar_select %p225, %s224, 7
      %s227 = smul.addr %s226, 8
      %s228 = scalar_lea.vmem %s0, %s227
      %p229 = pneg %p39
      %p230 = pneg %p36
      %p231 = pneg %p60
      %p232 = pneg %p57
      %p233 = pneg %p81
      %p234 = pneg %p78
      %p235 = pneg %p102
      %p236 = pneg %p99
      %p237 = pneg %p128
      %p238 = pneg %p125
      %s239 = smul.u32 4, %s18
      %p240 = scmp.lt.s32.totalorder %s239, 7
      %s241 = scalar_select %p240, %s239, 7
      %s242 = smul.addr %s241, 8
      %s243 = scalar_lea.vmem %s4, %s242
      %p244 = pneg %p154
      %p245 = pneg %p151
      %s246 = smul.u32 4, %s18
      %p247 = scmp.lt.s32.totalorder %s246, 7
      %s248 = scalar_select %p247, %s246, 7
      %s249 = smul.addr %s248, 8
      %s250 = scalar_lea.vmem %s5, %s249
      %p251 = pneg %p180
      %p252 = pneg %p177
      %s253 = smul.u32 4, %s18
      %p254 = scmp.lt.s32.totalorder %s253, 7
      %s255 = scalar_select %p254, %s253, 7
      %s256 = smul.addr %s255, 8
      %s257 = scalar_lea.vmem %s6, %s256
      %s258 = smul.u32 4, %s18
      %p259 = scmp.lt.s32.totalorder %s258, 7
      %s260 = scalar_select %p259, %s258, 7
      %s261 = smul.addr %s260, 8
      %s262 = scalar_lea.vmem %s0, %s261
      %s263 = smul.u32 4, %s18
      %s264 = smul.u32 4, %s18
      %p265 = scmp.lt.s32.totalorder %s264, 7
      %s266 = scalar_select %p265, %s264, 7
      %s267 = smul.addr %s266, 8
      %s268 = scalar_lea.vmem %s4, %s267
      %s269 = smul.u32 4, %s18
      %s270 = smul.u32 4, %s18
      %p271 = scmp.lt.s32.totalorder %s270, 7
      %s272 = scalar_select %p271, %s270, 7
      %s273 = smul.addr %s272, 8
      %s274 = scalar_lea.vmem %s5, %s273
      %s275 = smul.u32 4, %s18
      %s276 = smul.u32 4, %s18
      %p277 = scmp.lt.s32.totalorder %s276, 7
      %s278 = scalar_select %p277, %s276, 7
      %s279 = smul.addr %s278, 8
      %s280 = scalar_lea.vmem %s6, %s279
      %s281 = smul.u32 4, %s18
      %v282 = vld [vmem:[%s262] sm:$0xff]
      %v283 = vld [vmem:[%s262 + $0x8] sm:$0xff]
      %v284 = vld [vmem:[%s262 + $0x10] sm:$0xff]
      %v285 = vld [vmem:[%s262 + $0x18] sm:$0xff]
      %v286 = vld [vmem:[%s1] sm:$0xff]
      %v287 = vld [vmem:[%s1 + $0x8] sm:$0xff]
      %v288 = vld [vmem:[%s1 + $0x10] sm:$0xff]
      %v289 = vld [vmem:[%s1 + $0x18] sm:$0xff]
      %v290 = vld [vmem:[%s1 + $0x20] sm:$0xff]
      %v291 = vld [vmem:[%s1 + $0x28] sm:$0xff]
      %v292 = vld [vmem:[%s1 + $0x30] sm:$0xff]
      %v293 = vld [vmem:[%s1 + $0x38] sm:$0xff]
      %vm294 = vcmask 261120
      %v296 = vsel %vm294, %v282, 0
      %v299 = vsel %vm294, %v283, 0
      %v302 = vsel %vm294, %v284, 0
      %v305 = vsel %vm294, %v285, 0
      %307 = vmatprep.subr.mxu0 0.0
      %308 = vmatpush1.msra.mxu0 0.0
      %309 = vmatprep.subr.mxu0 0.0
      %310 = vmatpush1.msra.mxu0 0.0
      %311 = vmatprep.subr.mxu0 0.0
      %312 = vmatpush1.msra.mxu0 0.0
      %313 = vmatprep.subr.mxu0 0.0
      %314 = vmatpush1.msra.mxu0 0.0
      %315 = vmatprep.subr.mxu0 0.0
      %316 = vmatpush1.msra.mxu0 0.0
      %317 = vmatprep.subr.mxu0 0.0
      %318 = vmatpush1.msra.mxu0 0.0
      %319 = vmatprep.subr.mxu0 0.0
      %320 = vmatpush1.msra.mxu0 0.0
      %321 = vmatprep.subr.mxu0 0.0
      %322 = vmatpush1.msra.mxu0 0.0
      %323 = vmatprep.subr.mxu0 0.0
      %324 = vmatpush1.msra.mxu0 0.0
      %325 = vmatprep.subr.mxu0 0.0
      %326 = vmatpush1.msra.mxu0 0.0
      %327 = vmatprep.subr.mxu0 0.0
      %328 = vmatpush1.msra.mxu0 0.0
      %329 = vmatprep.subr.mxu0 0.0
      %330 = vmatpush1.msra.mxu0 0.0
      %v331 = vand.u32 %v293, 4294901760
      %332 = vmatprep.subr.mxu0 %v331
      %v333 = vand.u32 %v292, 4294901760
      %334 = vmatpush1.msra.mxu0 %v333
      %v335 = vand.u32 %v291, 4294901760
      %336 = vmatprep.subr.mxu0 %v335
      %v337 = vand.u32 %v290, 4294901760
      %338 = vmatpush1.msra.mxu0 %v337
      %v339 = vand.u32 %v289, 4294901760
      %340 = vmatprep.subr.mxu0 %v339
      %v341 = vand.u32 %v288, 4294901760
      %342 = vmatpush1.msra.mxu0 %v341
      %v343 = vand.u32 %v287, 4294901760
      %344 = vmatprep.subr.mxu0 %v343
      %v345 = vand.u32 %v286, 4294901760
      %346 = vmatpush1.msra.mxu0 %v345
      %347 = vmatprep.subr.mxu0 0.0
      %348 = vmatpush2.msra.mxu0 0.0
      %349 = vmatprep.subr.mxu0 0.0
      %350 = vmatpush2.msra.mxu0 0.0
      %351 = vmatprep.subr.mxu0 0.0
      %352 = vmatpush2.msra.mxu0 0.0
      %353 = vmatprep.subr.mxu0 0.0
      %354 = vmatpush2.msra.mxu0 0.0
      %355 = vmatprep.subr.mxu0 0.0
      %356 = vmatpush2.msra.mxu0 0.0
      %357 = vmatprep.subr.mxu0 0.0
      %358 = vmatpush2.msra.mxu0 0.0
      %359 = vmatprep.subr.mxu0 0.0
      %360 = vmatpush2.msra.mxu0 0.0
      %361 = vmatprep.subr.mxu0 0.0
      %362 = vmatpush2.msra.mxu0 0.0
      %363 = vmatprep.subr.mxu0 0.0
      %364 = vmatpush2.msra.mxu0 0.0
      %365 = vmatprep.subr.mxu0 0.0
      %366 = vmatpush2.msra.mxu0 0.0
      %367 = vmatprep.subr.mxu0 0.0
      %368 = vmatpush2.msra.mxu0 0.0
      %369 = vmatprep.subr.mxu0 0.0
      %370 = vmatpush2.msra.mxu0 0.0
      %371 = vmatprep.subr.mxu0 0.0
      %372 = vmatpush2.msra.mxu0 0.0
      %373 = vmatprep.subr.mxu0 0.0
      %374 = vmatpush2.msra.mxu0 0.0
      %375 = vmatprep.subr.mxu0 0.0
      %376 = vmatpush2.msra.mxu0 0.0
      %377 = vmatprep.subr.mxu0 0.0
      %378 = vmatpush2.msra.mxu0 0.0
      %379 = vmatprep.mubr.f32.mxu0 0.0
      %v380 = vand.u32 %v296, 4294901760
      %v381 = vsub.f32 %v296, %v380
      %v382 = vand.u32 %v381, 4294901760
      %v383 = vsub.f32 %v381, %v382
      %v384 = vand.u32 %v383, 4294901760
      %385 = vmatmul.mubr.f32.gmra.mxu0 %v384
      %v386 = vpop.f32.mrf.mxu0
      %v387 = vadd.f32 0.0, %v386
      %v388 = vpop.f32.mrf.mxu0
      %v389 = vadd.f32 0.0, %v388
      %390 = vmatprep.mubr.f32.mxu0 0.0
      %v391 = vand.u32 %v299, 4294901760
      %v392 = vsub.f32 %v299, %v391
      %v393 = vand.u32 %v392, 4294901760
      %v394 = vsub.f32 %v392, %v393
      %v395 = vand.u32 %v394, 4294901760
      %396 = vmatmul.mubr.f32.gmra.mxu0 %v395
      %v397 = vpop.f32.mrf.mxu0
      %v398 = vadd.f32 0.0, %v397
      %v399 = vpop.f32.mrf.mxu0
      %v400 = vadd.f32 0.0, %v399
      %401 = vmatprep.mubr.f32.mxu0 0.0
      %v402 = vand.u32 %v302, 4294901760
      %v403 = vsub.f32 %v302, %v402
      %v404 = vand.u32 %v403, 4294901760
      %v405 = vsub.f32 %v403, %v404
      %v406 = vand.u32 %v405, 4294901760
      %407 = vmatmul.mubr.f32.gmra.mxu0 %v406
      %v408 = vpop.f32.mrf.mxu0
      %v409 = vadd.f32 0.0, %v408
      %v410 = vpop.f32.mrf.mxu0
      %v411 = vadd.f32 0.0, %v410
      %412 = vmatprep.mubr.f32.mxu0 0.0
      %v413 = vand.u32 %v305, 4294901760
      %v414 = vsub.f32 %v305, %v413
      %v415 = vand.u32 %v414, 4294901760
      %v416 = vsub.f32 %v414, %v415
      %v417 = vand.u32 %v416, 4294901760
      %418 = vmatmul.mubr.f32.gmra.mxu0 %v417
      %v419 = vpop.f32.mrf.mxu0
      %v420 = vadd.f32 0.0, %v419
      %v421 = vpop.f32.mrf.mxu0
      %v422 = vadd.f32 0.0, %v421
      %423 = vdwg.mxu0
      %424 = vmatprep.subr.mxu0 0.0
      %425 = vmatpush1.msra.mxu0 0.0
      %426 = vmatprep.subr.mxu0 0.0
      %427 = vmatpush1.msra.mxu0 0.0
      %428 = vmatprep.subr.mxu0 0.0
      %429 = vmatpush1.msra.mxu0 0.0
      %430 = vmatprep.subr.mxu0 0.0
      %431 = vmatpush1.msra.mxu0 0.0
      %432 = vmatprep.subr.mxu0 0.0
      %433 = vmatpush1.msra.mxu0 0.0
      %434 = vmatprep.subr.mxu0 0.0
      %435 = vmatpush1.msra.mxu0 0.0
      %436 = vmatprep.subr.mxu0 0.0
      %437 = vmatpush1.msra.mxu0 0.0
      %438 = vmatprep.subr.mxu0 0.0
      %439 = vmatpush1.msra.mxu0 0.0
      %440 = vmatprep.subr.mxu0 0.0
      %441 = vmatpush1.msra.mxu0 0.0
      %442 = vmatprep.subr.mxu0 0.0
      %443 = vmatpush1.msra.mxu0 0.0
      %444 = vmatprep.subr.mxu0 0.0
      %445 = vmatpush1.msra.mxu0 0.0
      %446 = vmatprep.subr.mxu0 0.0
      %447 = vmatpush1.msra.mxu0 0.0
      %v448 = vand.u32 %v293, 4294901760
      %v449 = vsub.f32 %v293, %v448
      %v450 = vand.u32 %v449, 4294901760
      %v451 = vsub.f32 %v449, %v450
      %v452 = vand.u32 %v451, 4294901760
      %453 = vmatprep.subr.mxu0 %v452
      %v454 = vand.u32 %v292, 4294901760
      %v455 = vsub.f32 %v292, %v454
      %v456 = vand.u32 %v455, 4294901760
      %v457 = vsub.f32 %v455, %v456
      %v458 = vand.u32 %v457, 4294901760
      %459 = vmatpush1.msra.mxu0 %v458
      %v460 = vand.u32 %v291, 4294901760
      %v461 = vsub.f32 %v291, %v460
      %v462 = vand.u32 %v461, 4294901760
      %v463 = vsub.f32 %v461, %v462
      %v464 = vand.u32 %v463, 4294901760
      %465 = vmatprep.subr.mxu0 %v464
      %v466 = vand.u32 %v290, 4294901760
      %v467 = vsub.f32 %v290, %v466
      %v468 = vand.u32 %v467, 4294901760
      %v469 = vsub.f32 %v467, %v468
      %v470 = vand.u32 %v469, 4294901760
      %471 = vmatpush1.msra.mxu0 %v470
      %v472 = vand.u32 %v289, 4294901760
      %v473 = vsub.f32 %v289, %v472
      %v474 = vand.u32 %v473, 4294901760
      %v475 = vsub.f32 %v473, %v474
      %v476 = vand.u32 %v475, 4294901760
      %477 = vmatprep.subr.mxu0 %v476
      %v478 = vand.u32 %v288, 4294901760
      %v479 = vsub.f32 %v288, %v478
      %v480 = vand.u32 %v479, 4294901760
      %v481 = vsub.f32 %v479, %v480
      %v482 = vand.u32 %v481, 4294901760
      %483 = vmatpush1.msra.mxu0 %v482
      %v484 = vand.u32 %v287, 4294901760
      %v485 = vsub.f32 %v287, %v484
      %v486 = vand.u32 %v485, 4294901760
      %v487 = vsub.f32 %v485, %v486
      %v488 = vand.u32 %v487, 4294901760
      %489 = vmatprep.subr.mxu0 %v488
      %v490 = vand.u32 %v286, 4294901760
      %v491 = vsub.f32 %v286, %v490
      %v492 = vand.u32 %v491, 4294901760
      %v493 = vsub.f32 %v491, %v492
      %v494 = vand.u32 %v493, 4294901760
      %495 = vmatpush1.msra.mxu0 %v494
      %496 = vmatprep.subr.mxu0 0.0
      %497 = vmatpush2.msra.mxu0 0.0
      %498 = vmatprep.subr.mxu0 0.0
      %499 = vmatpush2.msra.mxu0 0.0
      %500 = vmatprep.subr.mxu0 0.0
      %501 = vmatpush2.msra.mxu0 0.0
      %502 = vmatprep.subr.mxu0 0.0
      %503 = vmatpush2.msra.mxu0 0.0
      %504 = vmatprep.subr.mxu0 0.0
      %505 = vmatpush2.msra.mxu0 0.0
      %506 = vmatprep.subr.mxu0 0.0
      %507 = vmatpush2.msra.mxu0 0.0
      %508 = vmatprep.subr.mxu0 0.0
      %509 = vmatpush2.msra.mxu0 0.0
      %510 = vmatprep.subr.mxu0 0.0
      %511 = vmatpush2.msra.mxu0 0.0
      %512 = vmatprep.subr.mxu0 0.0
      %513 = vmatpush2.msra.mxu0 0.0
      %514 = vmatprep.subr.mxu0 0.0
      %515 = vmatpush2.msra.mxu0 0.0
      %516 = vmatprep.subr.mxu0 0.0
      %517 = vmatpush2.msra.mxu0 0.0
      %518 = vmatprep.subr.mxu0 0.0
      %519 = vmatpush2.msra.mxu0 0.0
      %520 = vmatprep.subr.mxu0 0.0
      %521 = vmatpush2.msra.mxu0 0.0
      %522 = vmatprep.subr.mxu0 0.0
      %523 = vmatpush2.msra.mxu0 0.0
      %524 = vmatprep.subr.mxu0 0.0
      %525 = vmatpush2.msra.mxu0 0.0
      %526 = vmatprep.subr.mxu0 0.0
      %527 = vmatpush2.msra.mxu0 0.0
      %528 = vmatprep.mubr.f32.mxu0 0.0
      %v529 = vand.u32 %v296, 4294901760
      %530 = vmatmul.mubr.f32.gmra.mxu0 %v529
      %v531 = vpop.f32.mrf.mxu0
      %v532 = vadd.f32 %v387, %v531
      %v533 = vpop.f32.mrf.mxu0
      %v534 = vadd.f32 %v389, %v533
      %535 = vmatprep.mubr.f32.mxu0 0.0
      %v536 = vand.u32 %v299, 4294901760
      %537 = vmatmul.mubr.f32.gmra.mxu0 %v536
      %v538 = vpop.f32.mrf.mxu0
      %v539 = vadd.f32 %v398, %v538
      %v540 = vpop.f32.mrf.mxu0
      %v541 = vadd.f32 %v400, %v540
      %542 = vmatprep.mubr.f32.mxu0 0.0
      %v543 = vand.u32 %v302, 4294901760
      %544 = vmatmul.mubr.f32.gmra.mxu0 %v543
      %v545 = vpop.f32.mrf.mxu0
      %v546 = vadd.f32 %v409, %v545
      %v547 = vpop.f32.mrf.mxu0
      %v548 = vadd.f32 %v411, %v547
      %549 = vmatprep.mubr.f32.mxu0 0.0
      %v550 = vand.u32 %v305, 4294901760
      %551 = vmatmul.mubr.f32.gmra.mxu0 %v550
      %v552 = vpop.f32.mrf.mxu0
      %v553 = vadd.f32 %v420, %v552
      %v554 = vpop.f32.mrf.mxu0
      %v555 = vadd.f32 %v422, %v554
      %556 = vdwg.mxu0
      %557 = vmatprep.subr.mxu0 0.0
      %558 = vmatpush1.msra.mxu0 0.0
      %559 = vmatprep.subr.mxu0 0.0
      %560 = vmatpush1.msra.mxu0 0.0
      %561 = vmatprep.subr.mxu0 0.0
      %562 = vmatpush1.msra.mxu0 0.0
      %563 = vmatprep.subr.mxu0 0.0
      %564 = vmatpush1.msra.mxu0 0.0
      %565 = vmatprep.subr.mxu0 0.0
      %566 = vmatpush1.msra.mxu0 0.0
      %567 = vmatprep.subr.mxu0 0.0
      %568 = vmatpush1.msra.mxu0 0.0
      %569 = vmatprep.subr.mxu0 0.0
      %570 = vmatpush1.msra.mxu0 0.0
      %571 = vmatprep.subr.mxu0 0.0
      %572 = vmatpush1.msra.mxu0 0.0
      %573 = vmatprep.subr.mxu0 0.0
      %574 = vmatpush1.msra.mxu0 0.0
      %575 = vmatprep.subr.mxu0 0.0
      %576 = vmatpush1.msra.mxu0 0.0
      %577 = vmatprep.subr.mxu0 0.0
      %578 = vmatpush1.msra.mxu0 0.0
      %579 = vmatprep.subr.mxu0 0.0
      %580 = vmatpush1.msra.mxu0 0.0
      %v581 = vand.u32 %v293, 4294901760
      %v582 = vsub.f32 %v293, %v581
      %583 = vmatprep.subr.mxu0 %v582
      %v584 = vand.u32 %v292, 4294901760
      %v585 = vsub.f32 %v292, %v584
      %586 = vmatpush1.msra.mxu0 %v585
      %v587 = vand.u32 %v291, 4294901760
      %v588 = vsub.f32 %v291, %v587
      %589 = vmatprep.subr.mxu0 %v588
      %v590 = vand.u32 %v290, 4294901760
      %v591 = vsub.f32 %v290, %v590
      %592 = vmatpush1.msra.mxu0 %v591
      %v593 = vand.u32 %v289, 4294901760
      %v594 = vsub.f32 %v289, %v593
      %595 = vmatprep.subr.mxu0 %v594
      %v596 = vand.u32 %v288, 4294901760
      %v597 = vsub.f32 %v288, %v596
      %598 = vmatpush1.msra.mxu0 %v597
      %v599 = vand.u32 %v287, 4294901760
      %v600 = vsub.f32 %v287, %v599
      %601 = vmatprep.subr.mxu0 %v600
      %v602 = vand.u32 %v286, 4294901760
      %v603 = vsub.f32 %v286, %v602
      %604 = vmatpush1.msra.mxu0 %v603
      %605 = vmatprep.subr.mxu0 0.0
      %606 = vmatpush2.msra.mxu0 0.0
      %607 = vmatprep.subr.mxu0 0.0
      %608 = vmatpush2.msra.mxu0 0.0
      %609 = vmatprep.subr.mxu0 0.0
      %610 = vmatpush2.msra.mxu0 0.0
      %611 = vmatprep.subr.mxu0 0.0
      %612 = vmatpush2.msra.mxu0 0.0
      %613 = vmatprep.subr.mxu0 0.0
      %614 = vmatpush2.msra.mxu0 0.0
      %615 = vmatprep.subr.mxu0 0.0
      %616 = vmatpush2.msra.mxu0 0.0
      %617 = vmatprep.subr.mxu0 0.0
      %618 = vmatpush2.msra.mxu0 0.0
      %619 = vmatprep.subr.mxu0 0.0
      %620 = vmatpush2.msra.mxu0 0.0
      %621 = vmatprep.subr.mxu0 0.0
      %622 = vmatpush2.msra.mxu0 0.0
      %623 = vmatprep.subr.mxu0 0.0
      %624 = vmatpush2.msra.mxu0 0.0
      %625 = vmatprep.subr.mxu0 0.0
      %626 = vmatpush2.msra.mxu0 0.0
      %627 = vmatprep.subr.mxu0 0.0
      %628 = vmatpush2.msra.mxu0 0.0
      %629 = vmatprep.subr.mxu0 0.0
      %630 = vmatpush2.msra.mxu0 0.0
      %631 = vmatprep.subr.mxu0 0.0
      %632 = vmatpush2.msra.mxu0 0.0
      %633 = vmatprep.subr.mxu0 0.0
      %634 = vmatpush2.msra.mxu0 0.0
      %635 = vmatprep.subr.mxu0 0.0
      %636 = vmatpush2.msra.mxu0 0.0
      %637 = vmatprep.mubr.f32.mxu0 0.0
      %v638 = vand.u32 %v296, 4294901760
      %v639 = vsub.f32 %v296, %v638
      %640 = vmatmul.mubr.f32.gmra.mxu0 %v639
      %v641 = vpop.f32.mrf.mxu0
      %v642 = vadd.f32 %v532, %v641
      %v643 = vpop.f32.mrf.mxu0
      %v644 = vadd.f32 %v534, %v643
      %645 = vmatprep.mubr.f32.mxu0 0.0
      %v646 = vand.u32 %v299, 4294901760
      %v647 = vsub.f32 %v299, %v646
      %648 = vmatmul.mubr.f32.gmra.mxu0 %v647
      %v649 = vpop.f32.mrf.mxu0
      %v650 = vadd.f32 %v539, %v649
      %v651 = vpop.f32.mrf.mxu0
      %v652 = vadd.f32 %v541, %v651
      %653 = vmatprep.mubr.f32.mxu0 0.0
      %v654 = vand.u32 %v302, 4294901760
      %v655 = vsub.f32 %v302, %v654
      %656 = vmatmul.mubr.f32.gmra.mxu0 %v655
      %v657 = vpop.f32.mrf.mxu0
      %v658 = vadd.f32 %v546, %v657
      %v659 = vpop.f32.mrf.mxu0
      %v660 = vadd.f32 %v548, %v659
      %661 = vmatprep.mubr.f32.mxu0 0.0
      %v662 = vand.u32 %v305, 4294901760
      %v663 = vsub.f32 %v305, %v662
      %664 = vmatmul.mubr.f32.gmra.mxu0 %v663
      %v665 = vpop.f32.mrf.mxu0
      %v666 = vadd.f32 %v553, %v665
      %v667 = vpop.f32.mrf.mxu0
      %v668 = vadd.f32 %v555, %v667
      %669 = vdwg.mxu0
      %670 = vmatprep.subr.mxu0 0.0
      %671 = vmatpush1.msra.mxu0 0.0
      %672 = vmatprep.subr.mxu0 0.0
      %673 = vmatpush1.msra.mxu0 0.0
      %674 = vmatprep.subr.mxu0 0.0
      %675 = vmatpush1.msra.mxu0 0.0
      %676 = vmatprep.subr.mxu0 0.0
      %677 = vmatpush1.msra.mxu0 0.0
      %678 = vmatprep.subr.mxu0 0.0
      %679 = vmatpush1.msra.mxu0 0.0
      %680 = vmatprep.subr.mxu0 0.0
      %681 = vmatpush1.msra.mxu0 0.0
      %682 = vmatprep.subr.mxu0 0.0
      %683 = vmatpush1.msra.mxu0 0.0
      %684 = vmatprep.subr.mxu0 0.0
      %685 = vmatpush1.msra.mxu0 0.0
      %686 = vmatprep.subr.mxu0 0.0
      %687 = vmatpush1.msra.mxu0 0.0
      %688 = vmatprep.subr.mxu0 0.0
      %689 = vmatpush1.msra.mxu0 0.0
      %690 = vmatprep.subr.mxu0 0.0
      %691 = vmatpush1.msra.mxu0 0.0
      %692 = vmatprep.subr.mxu0 0.0
      %693 = vmatpush1.msra.mxu0 0.0
      %v694 = vand.u32 %v293, 4294901760
      %695 = vmatprep.subr.mxu0 %v694
      %v696 = vand.u32 %v292, 4294901760
      %697 = vmatpush1.msra.mxu0 %v696
      %v698 = vand.u32 %v291, 4294901760
      %699 = vmatprep.subr.mxu0 %v698
      %v700 = vand.u32 %v290, 4294901760
      %701 = vmatpush1.msra.mxu0 %v700
      %v702 = vand.u32 %v289, 4294901760
      %703 = vmatprep.subr.mxu0 %v702
      %v704 = vand.u32 %v288, 4294901760
      %705 = vmatpush1.msra.mxu0 %v704
      %v706 = vand.u32 %v287, 4294901760
      %707 = vmatprep.subr.mxu0 %v706
      %v708 = vand.u32 %v286, 4294901760
      %709 = vmatpush1.msra.mxu0 %v708
      %710 = vmatprep.subr.mxu0 0.0
      %711 = vmatpush2.msra.mxu0 0.0
      %712 = vmatprep.subr.mxu0 0.0
      %713 = vmatpush2.msra.mxu0 0.0
      %714 = vmatprep.subr.mxu0 0.0
      %715 = vmatpush2.msra.mxu0 0.0
      %716 = vmatprep.subr.mxu0 0.0
      %717 = vmatpush2.msra.mxu0 0.0
      %718 = vmatprep.subr.mxu0 0.0
      %719 = vmatpush2.msra.mxu0 0.0
      %720 = vmatprep.subr.mxu0 0.0
      %721 = vmatpush2.msra.mxu0 0.0
      %722 = vmatprep.subr.mxu0 0.0
      %723 = vmatpush2.msra.mxu0 0.0
      %724 = vmatprep.subr.mxu0 0.0
      %725 = vmatpush2.msra.mxu0 0.0
      %726 = vmatprep.subr.mxu0 0.0
      %727 = vmatpush2.msra.mxu0 0.0
      %728 = vmatprep.subr.mxu0 0.0
      %729 = vmatpush2.msra.mxu0 0.0
      %730 = vmatprep.subr.mxu0 0.0
      %731 = vmatpush2.msra.mxu0 0.0
      %732 = vmatprep.subr.mxu0 0.0
      %733 = vmatpush2.msra.mxu0 0.0
      %734 = vmatprep.subr.mxu0 0.0
      %735 = vmatpush2.msra.mxu0 0.0
      %736 = vmatprep.subr.mxu0 0.0
      %737 = vmatpush2.msra.mxu0 0.0
      %738 = vmatprep.subr.mxu0 0.0
      %739 = vmatpush2.msra.mxu0 0.0
      %740 = vmatprep.subr.mxu0 0.0
      %741 = vmatpush2.msra.mxu0 0.0
      %742 = vmatprep.mubr.f32.mxu0 0.0
      %v743 = vand.u32 %v296, 4294901760
      %v744 = vsub.f32 %v296, %v743
      %v745 = vand.u32 %v744, 4294901760
      %746 = vmatmul.mubr.f32.gmra.mxu0 %v745
      %v747 = vpop.f32.mrf.mxu0
      %v748 = vadd.f32 %v642, %v747
      %v749 = vpop.f32.mrf.mxu0
      %v750 = vadd.f32 %v644, %v749
      %751 = vmatprep.mubr.f32.mxu0 0.0
      %v752 = vand.u32 %v299, 4294901760
      %v753 = vsub.f32 %v299, %v752
      %v754 = vand.u32 %v753, 4294901760
      %755 = vmatmul.mubr.f32.gmra.mxu0 %v754
      %v756 = vpop.f32.mrf.mxu0
      %v757 = vadd.f32 %v650, %v756
      %v758 = vpop.f32.mrf.mxu0
      %v759 = vadd.f32 %v652, %v758
      %760 = vmatprep.mubr.f32.mxu0 0.0
      %v761 = vand.u32 %v302, 4294901760
      %v762 = vsub.f32 %v302, %v761
      %v763 = vand.u32 %v762, 4294901760
      %764 = vmatmul.mubr.f32.gmra.mxu0 %v763
      %v765 = vpop.f32.mrf.mxu0
      %v766 = vadd.f32 %v658, %v765
      %v767 = vpop.f32.mrf.mxu0
      %v768 = vadd.f32 %v660, %v767
      %769 = vmatprep.mubr.f32.mxu0 0.0
      %v770 = vand.u32 %v305, 4294901760
      %v771 = vsub.f32 %v305, %v770
      %v772 = vand.u32 %v771, 4294901760
      %773 = vmatmul.mubr.f32.gmra.mxu0 %v772
      %v774 = vpop.f32.mrf.mxu0
      %v775 = vadd.f32 %v666, %v774
      %v776 = vpop.f32.mrf.mxu0
      %v777 = vadd.f32 %v668, %v776
      %778 = vdwg.mxu0
      %779 = vmatprep.subr.mxu0 0.0
      %780 = vmatpush1.msra.mxu0 0.0
      %781 = vmatprep.subr.mxu0 0.0
      %782 = vmatpush1.msra.mxu0 0.0
      %783 = vmatprep.subr.mxu0 0.0
      %784 = vmatpush1.msra.mxu0 0.0
      %785 = vmatprep.subr.mxu0 0.0
      %786 = vmatpush1.msra.mxu0 0.0
      %787 = vmatprep.subr.mxu0 0.0
      %788 = vmatpush1.msra.mxu0 0.0
      %789 = vmatprep.subr.mxu0 0.0
      %790 = vmatpush1.msra.mxu0 0.0
      %791 = vmatprep.subr.mxu0 0.0
      %792 = vmatpush1.msra.mxu0 0.0
      %793 = vmatprep.subr.mxu0 0.0
      %794 = vmatpush1.msra.mxu0 0.0
      %795 = vmatprep.subr.mxu0 0.0
      %796 = vmatpush1.msra.mxu0 0.0
      %797 = vmatprep.subr.mxu0 0.0
      %798 = vmatpush1.msra.mxu0 0.0
      %799 = vmatprep.subr.mxu0 0.0
      %800 = vmatpush1.msra.mxu0 0.0
      %801 = vmatprep.subr.mxu0 0.0
      %802 = vmatpush1.msra.mxu0 0.0
      %v803 = vand.u32 %v293, 4294901760
      %v804 = vsub.f32 %v293, %v803
      %v805 = vand.u32 %v804, 4294901760
      %806 = vmatprep.subr.mxu0 %v805
      %v807 = vand.u32 %v292, 4294901760
      %v808 = vsub.f32 %v292, %v807
      %v809 = vand.u32 %v808, 4294901760
      %810 = vmatpush1.msra.mxu0 %v809
      %v811 = vand.u32 %v291, 4294901760
      %v812 = vsub.f32 %v291, %v811
      %v813 = vand.u32 %v812, 4294901760
      %814 = vmatprep.subr.mxu0 %v813
      %v815 = vand.u32 %v290, 4294901760
      %v816 = vsub.f32 %v290, %v815
      %v817 = vand.u32 %v816, 4294901760
      %818 = vmatpush1.msra.mxu0 %v817
      %v819 = vand.u32 %v289, 4294901760
      %v820 = vsub.f32 %v289, %v819
      %v821 = vand.u32 %v820, 4294901760
      %822 = vmatprep.subr.mxu0 %v821
      %v823 = vand.u32 %v288, 4294901760
      %v824 = vsub.f32 %v288, %v823
      %v825 = vand.u32 %v824, 4294901760
      %826 = vmatpush1.msra.mxu0 %v825
      %v827 = vand.u32 %v287, 4294901760
      %v828 = vsub.f32 %v287, %v827
      %v829 = vand.u32 %v828, 4294901760
      %830 = vmatprep.subr.mxu0 %v829
      %v831 = vand.u32 %v286, 4294901760
      %v832 = vsub.f32 %v286, %v831
      %v833 = vand.u32 %v832, 4294901760
      %834 = vmatpush1.msra.mxu0 %v833
      %835 = vmatprep.subr.mxu0 0.0
      %836 = vmatpush2.msra.mxu0 0.0
      %837 = vmatprep.subr.mxu0 0.0
      %838 = vmatpush2.msra.mxu0 0.0
      %839 = vmatprep.subr.mxu0 0.0
      %840 = vmatpush2.msra.mxu0 0.0
      %841 = vmatprep.subr.mxu0 0.0
      %842 = vmatpush2.msra.mxu0 0.0
      %843 = vmatprep.subr.mxu0 0.0
      %844 = vmatpush2.msra.mxu0 0.0
      %845 = vmatprep.subr.mxu0 0.0
      %846 = vmatpush2.msra.mxu0 0.0
      %847 = vmatprep.subr.mxu0 0.0
      %848 = vmatpush2.msra.mxu0 0.0
      %849 = vmatprep.subr.mxu0 0.0
      %850 = vmatpush2.msra.mxu0 0.0
      %851 = vmatprep.subr.mxu0 0.0
      %852 = vmatpush2.msra.mxu0 0.0
      %853 = vmatprep.subr.mxu0 0.0
      %854 = vmatpush2.msra.mxu0 0.0
      %855 = vmatprep.subr.mxu0 0.0
      %856 = vmatpush2.msra.mxu0 0.0
      %857 = vmatprep.subr.mxu0 0.0
      %858 = vmatpush2.msra.mxu0 0.0
      %859 = vmatprep.subr.mxu0 0.0
      %860 = vmatpush2.msra.mxu0 0.0
      %861 = vmatprep.subr.mxu0 0.0
      %862 = vmatpush2.msra.mxu0 0.0
      %863 = vmatprep.subr.mxu0 0.0
      %864 = vmatpush2.msra.mxu0 0.0
      %865 = vmatprep.subr.mxu0 0.0
      %866 = vmatpush2.msra.mxu0 0.0
      %867 = vmatprep.mubr.f32.mxu0 0.0
      %v868 = vand.u32 %v296, 4294901760
      %869 = vmatmul.mubr.f32.gmra.mxu0 %v868
      %v870 = vpop.f32.mrf.mxu0
      %v871 = vadd.f32 %v748, %v870
      %v872 = vpop.f32.mrf.mxu0
      %v873 = vadd.f32 %v750, %v872
      %874 = vmatprep.mubr.f32.mxu0 0.0
      %v875 = vand.u32 %v299, 4294901760
      %876 = vmatmul.mubr.f32.gmra.mxu0 %v875
      %v877 = vpop.f32.mrf.mxu0
      %v878 = vadd.f32 %v757, %v877
      %v879 = vpop.f32.mrf.mxu0
      %v880 = vadd.f32 %v759, %v879
      %881 = vmatprep.mubr.f32.mxu0 0.0
      %v882 = vand.u32 %v302, 4294901760
      %883 = vmatmul.mubr.f32.gmra.mxu0 %v882
      %v884 = vpop.f32.mrf.mxu0
      %v885 = vadd.f32 %v766, %v884
      %v886 = vpop.f32.mrf.mxu0
      %v887 = vadd.f32 %v768, %v886
      %888 = vmatprep.mubr.f32.mxu0 0.0
      %v889 = vand.u32 %v305, 4294901760
      %890 = vmatmul.mubr.f32.gmra.mxu0 %v889
      %v891 = vpop.f32.mrf.mxu0
      %v892 = vadd.f32 %v775, %v891
      %v893 = vpop.f32.mrf.mxu0
      %v894 = vadd.f32 %v777, %v893
      %895 = vdwg.mxu0
      %896 = vmatprep.subr.mxu0 0.0
      %897 = vmatpush1.msra.mxu0 0.0
      %898 = vmatprep.subr.mxu0 0.0
      %899 = vmatpush1.msra.mxu0 0.0
      %900 = vmatprep.subr.mxu0 0.0
      %901 = vmatpush1.msra.mxu0 0.0
      %902 = vmatprep.subr.mxu0 0.0
      %903 = vmatpush1.msra.mxu0 0.0
      %904 = vmatprep.subr.mxu0 0.0
      %905 = vmatpush1.msra.mxu0 0.0
      %906 = vmatprep.subr.mxu0 0.0
      %907 = vmatpush1.msra.mxu0 0.0
      %908 = vmatprep.subr.mxu0 0.0
      %909 = vmatpush1.msra.mxu0 0.0
      %910 = vmatprep.subr.mxu0 0.0
      %911 = vmatpush1.msra.mxu0 0.0
      %912 = vmatprep.subr.mxu0 0.0
      %913 = vmatpush1.msra.mxu0 0.0
      %914 = vmatprep.subr.mxu0 0.0
      %915 = vmatpush1.msra.mxu0 0.0
      %916 = vmatprep.subr.mxu0 0.0
      %917 = vmatpush1.msra.mxu0 0.0
      %918 = vmatprep.subr.mxu0 0.0
      %919 = vmatpush1.msra.mxu0 0.0
      %v920 = vand.u32 %v293, 4294901760
      %921 = vmatprep.subr.mxu0 %v920
      %v922 = vand.u32 %v292, 4294901760
      %923 = vmatpush1.msra.mxu0 %v922
      %v924 = vand.u32 %v291, 4294901760
      %925 = vmatprep.subr.mxu0 %v924
      %v926 = vand.u32 %v290, 4294901760
      %927 = vmatpush1.msra.mxu0 %v926
      %v928 = vand.u32 %v289, 4294901760
      %929 = vmatprep.subr.mxu0 %v928
      %v930 = vand.u32 %v288, 4294901760
      %931 = vmatpush1.msra.mxu0 %v930
      %v932 = vand.u32 %v287, 4294901760
      %933 = vmatprep.subr.mxu0 %v932
      %v934 = vand.u32 %v286, 4294901760
      %935 = vmatpush1.msra.mxu0 %v934
      %936 = vmatprep.subr.mxu0 0.0
      %937 = vmatpush2.msra.mxu0 0.0
      %938 = vmatprep.subr.mxu0 0.0
      %939 = vmatpush2.msra.mxu0 0.0
      %940 = vmatprep.subr.mxu0 0.0
      %941 = vmatpush2.msra.mxu0 0.0
      %942 = vmatprep.subr.mxu0 0.0
      %943 = vmatpush2.msra.mxu0 0.0
      %944 = vmatprep.subr.mxu0 0.0
      %945 = vmatpush2.msra.mxu0 0.0
      %946 = vmatprep.subr.mxu0 0.0
      %947 = vmatpush2.msra.mxu0 0.0
      %948 = vmatprep.subr.mxu0 0.0
      %949 = vmatpush2.msra.mxu0 0.0
      %950 = vmatprep.subr.mxu0 0.0
      %951 = vmatpush2.msra.mxu0 0.0
      %952 = vmatprep.subr.mxu0 0.0
      %953 = vmatpush2.msra.mxu0 0.0
      %954 = vmatprep.subr.mxu0 0.0
      %955 = vmatpush2.msra.mxu0 0.0
      %956 = vmatprep.subr.mxu0 0.0
      %957 = vmatpush2.msra.mxu0 0.0
      %958 = vmatprep.subr.mxu0 0.0
      %959 = vmatpush2.msra.mxu0 0.0
      %960 = vmatprep.subr.mxu0 0.0
      %961 = vmatpush2.msra.mxu0 0.0
      %962 = vmatprep.subr.mxu0 0.0
      %963 = vmatpush2.msra.mxu0 0.0
      %964 = vmatprep.subr.mxu0 0.0
      %965 = vmatpush2.msra.mxu0 0.0
      %966 = vmatprep.subr.mxu0 0.0
      %967 = vmatpush2.msra.mxu0 0.0
      %968 = vmatprep.mubr.f32.mxu0 0.0
      %v969 = vand.u32 %v296, 4294901760
      %970 = vmatmul.mubr.f32.gmra.mxu0 %v969
      %v971 = vpop.f32.mrf.mxu0
      %v972 = vadd.f32 %v871, %v971
      %v973 = vpop.f32.mrf.mxu0
      %v974 = vadd.f32 %v873, %v973
      %975 = vmatprep.mubr.f32.mxu0 0.0
      %v976 = vand.u32 %v299, 4294901760
      %977 = vmatmul.mubr.f32.gmra.mxu0 %v976
      %v978 = vpop.f32.mrf.mxu0
      %v979 = vadd.f32 %v878, %v978
      %v980 = vpop.f32.mrf.mxu0
      %v981 = vadd.f32 %v880, %v980
      %982 = vmatprep.mubr.f32.mxu0 0.0
      %v983 = vand.u32 %v302, 4294901760
      %984 = vmatmul.mubr.f32.gmra.mxu0 %v983
      %v985 = vpop.f32.mrf.mxu0
      %v986 = vadd.f32 %v885, %v985
      %v987 = vpop.f32.mrf.mxu0
      %v988 = vadd.f32 %v887, %v987
      %989 = vmatprep.mubr.f32.mxu0 0.0
      %v990 = vand.u32 %v305, 4294901760
      %991 = vmatmul.mubr.f32.gmra.mxu0 %v990
      %v992 = vpop.f32.mrf.mxu0
      %v993 = vadd.f32 %v892, %v992
      %v994 = vpop.f32.mrf.mxu0
      %v995 = vadd.f32 %v894, %v994
      %996 = vdwg.mxu0
      %v997 = vld [vmem:[%s2] sm:$0x1]
      %v999 = vlaneseq
      %v1000 = vshrl.u32 %v999, 7
      %v1001 = vsub.s32 0, %v1000
      %v1002 = vrot.slane %v997, %v1001
      %v1004 = vadd.f32 %v972, %v1002
      %v1005 = vadd.f32 %v979, %v1002
      %v1006 = vadd.f32 %v986, %v1002
      %v1007 = vadd.f32 %v993, %v1002
      %vm1008 = vcmp.gt.f32.partialorder %v1004, 0.0
      %vm1009 = vcmp.gt.f32.partialorder %v1005, 0.0
      %vm1010 = vcmp.gt.f32.partialorder %v1006, 0.0
      %vm1011 = vcmp.gt.f32.partialorder %v1007, 0.0
      %v1012 = vmul.f32 %v1004, 0.01
      %v1013 = vmul.f32 %v1005, 0.01
      %v1014 = vmul.f32 %v1006, 0.01
      %v1015 = vmul.f32 %v1007, 0.01
      %v1016 = vsel %vm1008, %v1004, %v1012
      %v1017 = vsel %vm1009, %v1005, %v1013
      %v1018 = vsel %vm1010, %v1006, %v1014
      %v1019 = vsel %vm1011, %v1007, %v1015
      %1020 = vst [vmem:[%s274] sm:$0xff] %v974
      %1021 = vst [vmem:[%s274 + $0x8] sm:$0xff] %v981
      %1022 = vst [vmem:[%s274 + $0x10] sm:$0xff] %v988
      %1023 = vst [vmem:[%s274 + $0x18] sm:$0xff] %v995
      %1024 = vst [vmem:[%s268] sm:$0xff] %v1016
      %1025 = vst [vmem:[%s268 + $0x8] sm:$0xff] %v1017
      %1026 = vst [vmem:[%s268 + $0x10] sm:$0xff] %v1018
      %1027 = vst [vmem:[%s268 + $0x18] sm:$0xff] %v1019
      %v1028 = vld [vmem:[%s3] sm:$0x1]
      %v1030 = vlaneseq
      %v1031 = vshrl.u32 %v1030, 7
      %v1032 = vsub.s32 0, %v1031
      %v1033 = vrot.slane %v1028, %v1032
      %v1035 = vmul.f32 %v1016, %v1033
      %v1036 = vmul.f32 %v1017, %v1033
      %v1037 = vmul.f32 %v1018, %v1033
      %v1038 = vmul.f32 %v1019, %v1033
      %1039 = vadd.xlane.f32.xlu0 %v1035
      %v1040 = vpop.xlane.xlu0 %1039
      %1041 = vadd.xlane.f32.xlu0 %v1036
      %v1042 = vpop.xlane.xlu0 %1041
      %1043 = vadd.xlane.f32.xlu0 %v1037
      %v1044 = vpop.xlane.xlu0 %1043
      %1045 = vadd.xlane.f32.xlu0 %v1038
      %v1046 = vpop.xlane.xlu0 %1045
      %vm1047 = vcmask 7168
      %1048 = vst.msk [vmem:[%s280] sm:$0xff] %vm1047, %v1040
      %1049 = vst.msk [vmem:[%s280 + $0x8] sm:$0xff] %vm1047, %v1042
      %1050 = vst.msk [vmem:[%s280 + $0x10] sm:$0xff] %vm1047, %v1044
      %1051 = vst.msk [vmem:[%s280 + $0x18] sm:$0xff] %vm1047, %v1046
      %s1052 = smul.u32 4, %s18
      %p1053 = scmp.lt.s32.totalorder %s1052, 7
      %s1054 = scalar_select %p1053, %s1052, 7
      %s1055 = smul.addr %s1054, 8
      %s1056 = scalar_lea.vmem %s4, %s1055
      %s1057 = smul.u32 4, %s18
      %p1058 = scmp.lt.s32.totalorder %s1057, 7
      %s1059 = scalar_select %p1058, %s1057, 7
      %s1060 = smul.addr %s1059, 8
      %s1061 = scalar_lea.vmem %s5, %s1060
      %s1062 = smul.u32 4, %s18
      %p1063 = scmp.lt.s32.totalorder %s1062, 7
      %s1064 = scalar_select %p1063, %s1062, 7
      %s1065 = smul.addr %s1064, 8
      %s1066 = scalar_lea.vmem %s6, %s1065
      // Predicated region
      $region37: #{attentive_fp_forward.5} parent=35 // pred_check
        %p1067 = pneg %p125
      $region38: #{attentive_fp_forward.5} parent=35 // pred_check_branch
        %1069 = sbr.rel (%p1067) target = $region40
      $region39: #{attentive_fp_forward.5} parent=35 // pred_region
        %s1070 = smul.u32 4, %s18
      $region40: #{attentive_fp_forward.5} parent=35 // pred_fallthru
        _
      // Predicated region
      $region41: #{attentive_fp_forward.5} parent=35 // pred_check
        %p1071 = pneg %p151
      $region42: #{attentive_fp_forward.5} parent=35 // pred_check_branch
        %1073 = sbr.rel (%p1071) target = $region44
      $region43: #{attentive_fp_forward.5} parent=35 // pred_region
        %s1074 = smul.u32 4, %s18
      $region44: #{attentive_fp_forward.5} parent=35 // pred_fallthru
        _
      // Predicated region
      $region45: #{attentive_fp_forward.5} parent=35 // pred_check
        %p1075 = pneg %p177
      $region46: #{attentive_fp_forward.5} parent=35 // pred_check_branch
        %1077 = sbr.rel (%p1075) target = $region48
      $region47: #{attentive_fp_forward.5} parent=35 // pred_region
        %s1078 = smul.u32 4, %s18
      $region48: #{attentive_fp_forward.5} parent=35 // pred_fallthru
        _
    $region36: #{attentive_fp_forward.5} parent=5 // pred_fallthru
      _
    %p1079 = scmp.le.s32.totalorder 2, %s13
    // Predicated region
    $region49: #{attentive_fp_forward.5} parent=5 // pred_check
      %p1080 = pneg %p1079
    $region50: #{attentive_fp_forward.5} parent=5 // pred_check_branch
      %1082 = sbr.rel (%p1080) target = $region52
    $region51: #{attentive_fp_forward.5} parent=5 // pred_region
      %s1083 = ssub.s32 %s13, 2
      // Predicated region
      $region53: #{attentive_fp_forward.5} parent=51 // pred_check
        %p1084 = pneg %p131
      $region54: #{attentive_fp_forward.5} parent=51 // pred_check_branch
        %1086 = sbr.rel (%p1084) target = $region56
      $region55: #{attentive_fp_forward.5} parent=51 // pred_region
        %s1087 = smul.u32 4, %s19
        %p1088 = scmp.lt.s32.totalorder %s1087, 7
        %s1089 = scalar_select %p1088, %s1087, 7
        %s1090 = smul.addr %s1089, 8
        %s1091 = scalar_lea.vmem %s4, %s1090
      $region56: #{attentive_fp_forward.5} parent=51 // pred_fallthru
        _
      // Predicated region
      $region57: #{attentive_fp_forward.5} parent=51 // pred_check
        %p1092 = pneg %p157
      $region58: #{attentive_fp_forward.5} parent=51 // pred_check_branch
        %1094 = sbr.rel (%p1092) target = $region60
      $region59: #{attentive_fp_forward.5} parent=51 // pred_region
        %s1095 = smul.u32 4, %s19
        %p1096 = scmp.lt.s32.totalorder %s1095, 7
        %s1097 = scalar_select %p1096, %s1095, 7
        %s1098 = smul.addr %s1097, 8
        %s1099 = scalar_lea.vmem %s5, %s1098
      $region60: #{attentive_fp_forward.5} parent=51 // pred_fallthru
        _
      // Predicated region
      $region61: #{attentive_fp_forward.5} parent=51 // pred_check
        %p1100 = pneg %p183
      $region62: #{attentive_fp_forward.5} parent=51 // pred_check_branch
        %1102 = sbr.rel (%p1100) target = $region64
      $region63: #{attentive_fp_forward.5} parent=51 // pred_region
        %s1103 = smul.u32 4, %s19
        %p1104 = scmp.lt.s32.totalorder %s1103, 7
        %s1105 = scalar_select %p1104, %s1103, 7
        %s1106 = smul.addr %s1105, 8
        %s1107 = scalar_lea.vmem %s6, %s1106
      $region64: #{attentive_fp_forward.5} parent=51 // pred_fallthru
        _
    $region52: #{attentive_fp_forward.5} parent=5 // pred_fallthru
      _
  $region6: #{attentive_fp_forward.5} parent=0 // loop_footer
    %s17 = sadd.s32 1, %s13
  $region7: #{attentive_fp_forward.5} parent=0 // loop_footer_branch
    %12 = sbr.rel target = $region3
  $region8: #{attentive_fp_forward.5} parent=0 // loop_exit
    _

// kernel: attentive_fp_forward.6
$region0: #{attentive_fp_forward.6}
  #allocation0 [shape = 'u32[]', space=smem, size = 0x4, offset = 0x4, fixed_abs, tag = 'smem constant byte address 0x4 - core index']
  #allocation1 [shape = 'u32[144,128]{1,0:T(1,128)}', space=vmem, size = 0x12000, scoped, tag = 'internal scratch']
  #allocation2 [shape = 'f32[1,1]{1,0:T(1,128)S(1)}', space=vmem, size = 0x200, scoped, tag = 'scoped memory for attentive_fp_forward.6']
  %s0 = inlined_call_operand.vmem [shape: f32[256,128], index: 0, kind: input, shape index: {}]
  %s1 = inlined_call_operand.vmem [shape: f32[256,16], index: 1, kind: input, shape index: {}]
  %s2 = inlined_call_operand.vmem [shape: f32[256,1], index: 2, kind: input, shape index: {}]
  %s3 = inlined_call_operand.vmem [shape: f32[16,128], index: 3, kind: input, shape index: {}]
  %s4 = inlined_call_operand.vmem [shape: f32[1,128], index: 4, kind: input, shape index: {}]
  %s5 = inlined_call_operand.vmem [shape: f32[1,128], index: 5, kind: input, shape index: {}]
  %s6 = inlined_call_operand.<no memory space> [shape: f32[1,1], index: 6, kind: input, shape index: {}]
  %s7 = inlined_call_operand.vmem [shape: f32[128,128], index: 7, kind: input, shape index: {}]
  %s8 = inlined_call_operand.vmem [shape: f32[1,128], index: 8, kind: input, shape index: {}]
  %s9 = inlined_call_operand.vmem [shape: f32[256,1], index: 9, kind: output, shape index: {0}]
  %s10 = inlined_call_operand.vmem [shape: f32[256,128], index: 10, kind: output, shape index: {1}]
  %11 = xla_tuple %s9, %s10
  %s12 = sld [smem:[#allocation0]]
  $region77: #{attentive_fp_forward.6} parent=0
    _
  %s14 = ssub.s32 1, %s12
  %s15 = scalar_select 0, %s14, %s12
  %v16 = vstv %s6
  %17 = vst [vmem:[#allocation2] sm:$0x1] %v16
  loop: start=0, step=1, limit=4
  $region2: #{attentive_fp_forward.6} parent=0 // loop_pre_header
    _
  $region3: #{attentive_fp_forward.6} parent=0 // loop_header
    %s19 = sphi 0, %s23
    %p20 = scmp.ge.s32.totalorder %s19, 4
    %s29 = sphi 0, %s31
    %s32 = sphi 0, %s29
    %s33 = sphi 0, %s32
    %s49 = sphi 0, %s33
    %s55 = sphi 0, %s57
    %s58 = sphi 0, %s55
    %s59 = sphi 0, %s58
    %s75 = sphi 0, %s59
    %s81 = sphi 0, %s83
    %s84 = sphi 0, %s81
    %s85 = sphi 0, %s84
    %s101 = sphi 0, %s85
    %s105 = sphi 0, %s105
    %s107 = sphi 0, %s105
    %s108 = sphi 0, %s107
    %s122 = sphi 0, %s108
    %s126 = sphi 0, %s126
    %s128 = sphi 0, %s126
    %s129 = sphi 0, %s128
    %s143 = sphi 0, %s129
    %s147 = sphi 0, %s147
    %s149 = sphi 0, %s147
    %s150 = sphi 0, %s149
    %s164 = sphi 0, %s150
    %s168 = sphi 0, %s168
    %s170 = sphi 0, %s168
    %s171 = sphi 0, %s170
    %s185 = sphi 0, %s171
    %s189 = sphi 0, %s189
    %s191 = sphi 0, %s189
    %s192 = sphi 0, %s191
    %s206 = sphi 0, %s192
    %s210 = sphi 0, %s210
    %s212 = sphi 0, %s210
    %s213 = sphi 0, %s212
    %s227 = sphi 0, %s213
    %s233 = sphi 0, %s235
    %s236 = sphi 0, %s233
    %s237 = sphi 0, %s236
    %s253 = sphi 0, %s237
    %s259 = sphi 0, %s261
    %s262 = sphi 0, %s259
    %s263 = sphi 0, %s262
    %s279 = sphi 0, %s263
  $region4: #{attentive_fp_forward.6} parent=0 // loop_header_branch
    %22 = sbr.rel (%p20) target = $region8
  $region5: #{attentive_fp_forward.6} parent=0 // loop_body
    %s24 = ssub.s32 %s19, 1
    %s25 = ssub.s32 %s19, 2
    %s26 = sadd.s32 %s19, 1
    %s27 = ssub.s32 %s19, %s26
    %p28 = scmp.eq.s32.totalorder %s27, 0
    %s30 = sadd.s32 %s29, 1
    %s31 = scalar_select %p28, %s29, %s30
    %p34 = pneg %p28
    %p35 = scmp.eq.s32.totalorder %s19, 1
    %p36 = por %p34, %p35
    %p37 = scmp.ne.s32.totalorder %s29, %s32
    %p38 = scmp.eq.s32.totalorder %s19, 0
    %p39 = por %p37, %p38
    %p40 = scmp.ne.s32.totalorder %s29, %s32
    %p41 = scmp.eq.s32.totalorder %s24, 1
    %p42 = por %p40, %p41
    %p43 = scmp.ne.s32.totalorder %s32, %s33
    %p44 = scmp.eq.s32.totalorder %s24, 0
    %p45 = por %p43, %p44
    %p46 = scmp.ne.s32.totalorder %s32, %s33
    %p47 = scmp.eq.s32.totalorder %s25, 1
    %p48 = por %p46, %p47
    %p50 = scmp.ne.s32.totalorder %s33, %s49
    %p51 = scmp.eq.s32.totalorder %s25, 0
    %p52 = por %p50, %p51
    %s53 = ssub.s32 %s19, %s26
    %p54 = scmp.eq.s32.totalorder %s53, 0
    %s56 = sadd.s32 %s55, 1
    %s57 = scalar_select %p54, %s55, %s56
    %p60 = pneg %p54
    %p61 = scmp.eq.s32.totalorder %s19, 1
    %p62 = por %p60, %p61
    %p63 = scmp.ne.s32.totalorder %s55, %s58
    %p64 = scmp.eq.s32.totalorder %s19, 0
    %p65 = por %p63, %p64
    %p66 = scmp.ne.s32.totalorder %s55, %s58
    %p67 = scmp.eq.s32.totalorder %s24, 1
    %p68 = por %p66, %p67
    %p69 = scmp.ne.s32.totalorder %s58, %s59
    %p70 = scmp.eq.s32.totalorder %s24, 0
    %p71 = por %p69, %p70
    %p72 = scmp.ne.s32.totalorder %s58, %s59
    %p73 = scmp.eq.s32.totalorder %s25, 1
    %p74 = por %p72, %p73
    %p76 = scmp.ne.s32.totalorder %s59, %s75
    %p77 = scmp.eq.s32.totalorder %s25, 0
    %p78 = por %p76, %p77
    %s79 = ssub.s32 %s19, %s26
    %p80 = scmp.eq.s32.totalorder %s79, 0
    %s82 = sadd.s32 %s81, 1
    %s83 = scalar_select %p80, %s81, %s82
    %p86 = pneg %p80
    %p87 = scmp.eq.s32.totalorder %s19, 1
    %p88 = por %p86, %p87
    %p89 = scmp.ne.s32.totalorder %s81, %s84
    %p90 = scmp.eq.s32.totalorder %s19, 0
    %p91 = por %p89, %p90
    %p92 = scmp.ne.s32.totalorder %s81, %s84
    %p93 = scmp.eq.s32.totalorder %s24, 1
    %p94 = por %p92, %p93
    %p95 = scmp.ne.s32.totalorder %s84, %s85
    %p96 = scmp.eq.s32.totalorder %s24, 0
    %p97 = por %p95, %p96
    %p98 = scmp.ne.s32.totalorder %s84, %s85
    %p99 = scmp.eq.s32.totalorder %s25, 1
    %p100 = por %p98, %p99
    %p102 = scmp.ne.s32.totalorder %s85, %s101
    %p103 = scmp.eq.s32.totalorder %s25, 0
    %p104 = por %p102, %p103
    %s106 = sadd.s32 %s105, 1
    %p109 = scmp.eq.s32.totalorder %s19, 1
    %p110 = scmp.ne.s32.totalorder %s105, %s107
    %p111 = scmp.eq.s32.totalorder %s19, 0
    %p112 = por %p110, %p111
    %p113 = scmp.ne.s32.totalorder %s105, %s107
    %p114 = scmp.eq.s32.totalorder %s24, 1
    %p115 = por %p113, %p114
    %p116 = scmp.ne.s32.totalorder %s107, %s108
    %p117 = scmp.eq.s32.totalorder %s24, 0
    %p118 = por %p116, %p117
    %p119 = scmp.ne.s32.totalorder %s107, %s108
    %p120 = scmp.eq.s32.totalorder %s25, 1
    %p121 = por %p119, %p120
    %p123 = scmp.ne.s32.totalorder %s108, %s122
    %p124 = scmp.eq.s32.totalorder %s25, 0
    %p125 = por %p123, %p124
    %s127 = sadd.s32 %s126, 1
    %p130 = scmp.eq.s32.totalorder %s19, 1
    %p131 = scmp.ne.s32.totalorder %s126, %s128
    %p132 = scmp.eq.s32.totalorder %s19, 0
    %p133 = por %p131, %p132
    %p134 = scmp.ne.s32.totalorder %s126, %s128
    %p135 = scmp.eq.s32.totalorder %s24, 1
    %p136 = por %p134, %p135
    %p137 = scmp.ne.s32.totalorder %s128, %s129
    %p138 = scmp.eq.s32.totalorder %s24, 0
    %p139 = por %p137, %p138
    %p140 = scmp.ne.s32.totalorder %s128, %s129
    %p141 = scmp.eq.s32.totalorder %s25, 1
    %p142 = por %p140, %p141
    %p144 = scmp.ne.s32.totalorder %s129, %s143
    %p145 = scmp.eq.s32.totalorder %s25, 0
    %p146 = por %p144, %p145
    %s148 = sadd.s32 %s147, 1
    %p151 = scmp.eq.s32.totalorder %s19, 1
    %p152 = scmp.ne.s32.totalorder %s147, %s149
    %p153 = scmp.eq.s32.totalorder %s19, 0
    %p154 = por %p152, %p153
    %p155 = scmp.ne.s32.totalorder %s147, %s149
    %p156 = scmp.eq.s32.totalorder %s24, 1
    %p157 = por %p155, %p156
    %p158 = scmp.ne.s32.totalorder %s149, %s150
    %p159 = scmp.eq.s32.totalorder %s24, 0
    %p160 = por %p158, %p159
    %p161 = scmp.ne.s32.totalorder %s149, %s150
    %p162 = scmp.eq.s32.totalorder %s25, 1
    %p163 = por %p161, %p162
    %p165 = scmp.ne.s32.totalorder %s150, %s164
    %p166 = scmp.eq.s32.totalorder %s25, 0
    %p167 = por %p165, %p166
    %s169 = sadd.s32 %s168, 1
    %p172 = scmp.eq.s32.totalorder %s19, 1
    %p173 = scmp.ne.s32.totalorder %s168, %s170
    %p174 = scmp.eq.s32.totalorder %s19, 0
    %p175 = por %p173, %p174
    %p176 = scmp.ne.s32.totalorder %s168, %s170
    %p177 = scmp.eq.s32.totalorder %s24, 1
    %p178 = por %p176, %p177
    %p179 = scmp.ne.s32.totalorder %s170, %s171
    %p180 = scmp.eq.s32.totalorder %s24, 0
    %p181 = por %p179, %p180
    %p182 = scmp.ne.s32.totalorder %s170, %s171
    %p183 = scmp.eq.s32.totalorder %s25, 1
    %p184 = por %p182, %p183
    %p186 = scmp.ne.s32.totalorder %s171, %s185
    %p187 = scmp.eq.s32.totalorder %s25, 0
    %p188 = por %p186, %p187
    %s190 = sadd.s32 %s189, 1
    %p193 = scmp.eq.s32.totalorder %s19, 1
    %p194 = scmp.ne.s32.totalorder %s189, %s191
    %p195 = scmp.eq.s32.totalorder %s19, 0
    %p196 = por %p194, %p195
    %p197 = scmp.ne.s32.totalorder %s189, %s191
    %p198 = scmp.eq.s32.totalorder %s24, 1
    %p199 = por %p197, %p198
    %p200 = scmp.ne.s32.totalorder %s191, %s192
    %p201 = scmp.eq.s32.totalorder %s24, 0
    %p202 = por %p200, %p201
    %p203 = scmp.ne.s32.totalorder %s191, %s192
    %p204 = scmp.eq.s32.totalorder %s25, 1
    %p205 = por %p203, %p204
    %p207 = scmp.ne.s32.totalorder %s192, %s206
    %p208 = scmp.eq.s32.totalorder %s25, 0
    %p209 = por %p207, %p208
    %s211 = sadd.s32 %s210, 1
    %p214 = scmp.eq.s32.totalorder %s19, 1
    %p215 = scmp.ne.s32.totalorder %s210, %s212
    %p216 = scmp.eq.s32.totalorder %s19, 0
    %p217 = por %p215, %p216
    %p218 = scmp.ne.s32.totalorder %s210, %s212
    %p219 = scmp.eq.s32.totalorder %s24, 1
    %p220 = por %p218, %p219
    %p221 = scmp.ne.s32.totalorder %s212, %s213
    %p222 = scmp.eq.s32.totalorder %s24, 0
    %p223 = por %p221, %p222
    %p224 = scmp.ne.s32.totalorder %s212, %s213
    %p225 = scmp.eq.s32.totalorder %s25, 1
    %p226 = por %p224, %p225
    %p228 = scmp.ne.s32.totalorder %s213, %s227
    %p229 = scmp.eq.s32.totalorder %s25, 0
    %p230 = por %p228, %p229
    %s231 = ssub.s32 %s19, %s26
    %p232 = scmp.eq.s32.totalorder %s231, 0
    %s234 = sadd.s32 %s233, 1
    %s235 = scalar_select %p232, %s233, %s234
    %p238 = pneg %p232
    %p239 = scmp.eq.s32.totalorder %s19, 1
    %p240 = por %p238, %p239
    %p241 = scmp.ne.s32.totalorder %s233, %s236
    %p242 = scmp.eq.s32.totalorder %s19, 0
    %p243 = por %p241, %p242
    %p244 = scmp.ne.s32.totalorder %s233, %s236
    %p245 = scmp.eq.s32.totalorder %s24, 1
    %p246 = por %p244, %p245
    %p247 = scmp.ne.s32.totalorder %s236, %s237
    %p248 = scmp.eq.s32.totalorder %s24, 0
    %p249 = por %p247, %p248
    %p250 = scmp.ne.s32.totalorder %s236, %s237
    %p251 = scmp.eq.s32.totalorder %s25, 1
    %p252 = por %p250, %p251
    %p254 = scmp.ne.s32.totalorder %s237, %s253
    %p255 = scmp.eq.s32.totalorder %s25, 0
    %p256 = por %p254, %p255
    %s257 = ssub.s32 %s19, %s26
    %p258 = scmp.eq.s32.totalorder %s257, 0
    %s260 = sadd.s32 %s259, 1
    %s261 = scalar_select %p258, %s259, %s260
    %p264 = pneg %p258
    %p265 = scmp.eq.s32.totalorder %s19, 1
    %p266 = por %p264, %p265
    %p267 = scmp.ne.s32.totalorder %s259, %s262
    %p268 = scmp.eq.s32.totalorder %s19, 0
    %p269 = por %p267, %p268
    %p270 = scmp.ne.s32.totalorder %s259, %s262
    %p271 = scmp.eq.s32.totalorder %s24, 1
    %p272 = por %p270, %p271
    %p273 = scmp.ne.s32.totalorder %s262, %s263
    %p274 = scmp.eq.s32.totalorder %s24, 0
    %p275 = por %p273, %p274
    %p276 = scmp.ne.s32.totalorder %s262, %s263
    %p277 = scmp.eq.s32.totalorder %s25, 1
    %p278 = por %p276, %p277
    %p280 = scmp.ne.s32.totalorder %s263, %s279
    %p281 = scmp.eq.s32.totalorder %s25, 0
    %p282 = por %p280, %p281
    %p283 = scmp.le.s32.totalorder 1, %s19
    %p284 = scmp.lt.s32.totalorder %s19, 3
    %p285 = pnand %p283, %p284
    %p286 = pneg %p285
    // Predicated region
    $region9: #{attentive_fp_forward.6} parent=5 // pred_check
      _
    $region10: #{attentive_fp_forward.6} parent=5 // pred_check_branch
      %288 = sbr.rel (%p285) target = $region12
    $region11: #{attentive_fp_forward.6} parent=5 // pred_region
      %s289 = ssub.s32 %s19, 1
      // Predicated region
      $region13: #{attentive_fp_forward.6} parent=11 // pred_check
        %p290 = pneg %p118
      $region14: #{attentive_fp_forward.6} parent=11 // pred_check_branch
        %292 = sbr.rel (%p290) target = $region16
      $region15: #{attentive_fp_forward.6} parent=11 // pred_region
        _
      $region16: #{attentive_fp_forward.6} parent=11 // pred_fallthru
        _
      // Predicated region
      $region17: #{attentive_fp_forward.6} parent=11 // pred_check
        %p293 = pneg %p139
      $region18: #{attentive_fp_forward.6} parent=11 // pred_check_branch
        %295 = sbr.rel (%p293) target = $region20
      $region19: #{attentive_fp_forward.6} parent=11 // pred_region
        _
      $region20: #{attentive_fp_forward.6} parent=11 // pred_fallthru
        _
      // Predicated region
      $region21: #{attentive_fp_forward.6} parent=11 // pred_check
        %p296 = pneg %p160
      $region22: #{attentive_fp_forward.6} parent=11 // pred_check_branch
        %298 = sbr.rel (%p296) target = $region24
      $region23: #{attentive_fp_forward.6} parent=11 // pred_region
        _
      $region24: #{attentive_fp_forward.6} parent=11 // pred_fallthru
        _
      // Predicated region
      $region25: #{attentive_fp_forward.6} parent=11 // pred_check
        %p299 = pneg %p181
      $region26: #{attentive_fp_forward.6} parent=11 // pred_check_branch
        %301 = sbr.rel (%p299) target = $region28
      $region27: #{attentive_fp_forward.6} parent=11 // pred_region
        _
      $region28: #{attentive_fp_forward.6} parent=11 // pred_fallthru
        _
      // Predicated region
      $region29: #{attentive_fp_forward.6} parent=11 // pred_check
        %p302 = pneg %p202
      $region30: #{attentive_fp_forward.6} parent=11 // pred_check_branch
        %304 = sbr.rel (%p302) target = $region32
      $region31: #{attentive_fp_forward.6} parent=11 // pred_region
        _
      $region32: #{attentive_fp_forward.6} parent=11 // pred_fallthru
        _
      // Predicated region
      $region33: #{attentive_fp_forward.6} parent=11 // pred_check
        %p305 = pneg %p223
      $region34: #{attentive_fp_forward.6} parent=11 // pred_check_branch
        %307 = sbr.rel (%p305) target = $region36
      $region35: #{attentive_fp_forward.6} parent=11 // pred_region
        _
      $region36: #{attentive_fp_forward.6} parent=11 // pred_fallthru
        _
    $region12: #{attentive_fp_forward.6} parent=5 // pred_fallthru
      _
    %p308 = scmp.lt.s32.totalorder %s19, 2
    // Predicated region
    $region37: #{attentive_fp_forward.6} parent=5 // pred_check
      %p309 = pneg %p308
    $region38: #{attentive_fp_forward.6} parent=5 // pred_check_branch
      %311 = sbr.rel (%p309) target = $region40
    $region39: #{attentive_fp_forward.6} parent=5 // pred_region
      // Predicated region
      $region41: #{attentive_fp_forward.6} parent=39 // pred_check
        %p312 = pneg %p39
      $region42: #{attentive_fp_forward.6} parent=39 // pred_check_branch
        %314 = sbr.rel (%p312) target = $region44
      $region43: #{attentive_fp_forward.6} parent=39 // pred_region
        %s315 = smul.u32 16, %s19
        %p316 = scmp.lt.s32.totalorder %s315, 31
        %s317 = scalar_select %p316, %s315, 31
        %s318 = smul.addr %s317, 8
        %s319 = scalar_lea.vmem %s0, %s318
        %s320 = smul.u32 16, %s19
      $region44: #{attentive_fp_forward.6} parent=39 // pred_fallthru
        _
      // Predicated region
      $region45: #{attentive_fp_forward.6} parent=39 // pred_check
        %p321 = pneg %p65
      $region46: #{attentive_fp_forward.6} parent=39 // pred_check_branch
        %323 = sbr.rel (%p321) target = $region48
      $region47: #{attentive_fp_forward.6} parent=39 // pred_region
        %s324 = smul.u32 16, %s19
        %p325 = scmp.lt.s32.totalorder %s324, 31
        %s326 = scalar_select %p325, %s324, 31
        %s327 = smul.addr %s326, 8
        %s328 = scalar_lea.vmem %s1, %s327
        %s329 = smul.u32 16, %s19
      $region48: #{attentive_fp_forward.6} parent=39 // pred_fallthru
        _
      // Predicated region
      $region49: #{attentive_fp_forward.6} parent=39 // pred_check
        %p330 = pneg %p91
      $region50: #{attentive_fp_forward.6} parent=39 // pred_check_branch
        %332 = sbr.rel (%p330) target = $region52
      $region51: #{attentive_fp_forward.6} parent=39 // pred_region
        %s333 = smul.u32 16, %s19
        %p334 = scmp.lt.s32.totalorder %s333, 31
        %s335 = scalar_select %p334, %s333, 31
        %s336 = smul.addr %s335, 8
        %s337 = scalar_lea.vmem %s2, %s336
        %s338 = smul.u32 16, %s19
      $region52: #{attentive_fp_forward.6} parent=39 // pred_fallthru
        _
    $region40: #{attentive_fp_forward.6} parent=5 // pred_fallthru
      _
    %p339 = scmp.le.s32.totalorder 1, %s19
    %p340 = scmp.lt.s32.totalorder %s19, 3
    %p341 = pnand %p339, %p340
    %p342 = pneg %p341
    // Predicated region
    $region53: #{attentive_fp_forward.6} parent=5 // pred_check
      _
    $region54: #{attentive_fp_forward.6} parent=5 // pred_check_branch
      %344 = sbr.rel (%p341) target = $region56
    $region55: #{attentive_fp_forward.6} parent=5 // pred_region
      %s345 = ssub.s32 %s19, 1
      %s346 = smul.u32 16, %s24
      %p347 = scmp.lt.s32.totalorder %s346, 31
      %s348 = scalar_select %p347, %s346, 31
      %s349 = smul.addr %s348, 8
      %s350 = scalar_lea.vmem %s0, %s349
      %p351 = pneg %p45
      %p352 = pneg %p42
      %s353 = smul.u32 16, %s24
      %p354 = scmp.lt.s32.totalorder %s353, 31
      %s355 = scalar_select %p354, %s353, 31
      %s356 = smul.addr %s355, 8
      %s357 = scalar_lea.vmem %s1, %s356
      %p358 = pneg %p71
      %p359 = pneg %p68
      %s360 = smul.u32 16, %s24
      %p361 = scmp.lt.s32.totalorder %s360, 31
      %s362 = scalar_select %p361, %s360, 31
      %s363 = smul.addr %s362, 8
      %s364 = scalar_lea.vmem %s2, %s363
      %p365 = pneg %p97
      %p366 = pneg %p94
      %p367 = pneg %p118
      %p368 = pneg %p115
      %p369 = pneg %p139
      %p370 = pneg %p136
      %p371 = pneg %p160
      %p372 = pneg %p157
      %p373 = pneg %p181
      %p374 = pneg %p178
      %p375 = pneg %p202
      %p376 = pneg %p199
      %p377 = pneg %p223
      %p378 = pneg %p220
      %p379 = pneg %p249
      %p380 = pneg %p246
      %s381 = smul.u32 16, %s24
      %p382 = scmp.lt.s32.totalorder %s381, 31
      %s383 = scalar_select %p382, %s381, 31
      %s384 = smul.addr %s383, 8
      %s385 = scalar_lea.vmem %s9, %s384
      %p386 = pneg %p275
      %p387 = pneg %p272
      %s388 = smul.u32 16, %s24
      %p389 = scmp.lt.s32.totalorder %s388, 31
      %s390 = scalar_select %p389, %s388, 31
      %s391 = smul.addr %s390, 8
      %s392 = scalar_lea.vmem %s10, %s391
      %s393 = smul.u32 16, %s24
      %p394 = scmp.lt.s32.totalorder %s393, 31
      %s395 = scalar_select %p394, %s393, 31
      %s396 = smul.addr %s395, 8
      %s397 = scalar_lea.vmem %s0, %s396
      %s398 = smul.u32 16, %s24
      %s399 = smul.u32 16, %s24
      %p400 = scmp.lt.s32.totalorder %s399, 31
      %s401 = scalar_select %p400, %s399, 31
      %s402 = smul.addr %s401, 8
      %s403 = scalar_lea.vmem %s1, %s402
      %s404 = smul.u32 16, %s24
      %s405 = smul.u32 16, %s24
      %p406 = scmp.lt.s32.totalorder %s405, 31
      %s407 = scalar_select %p406, %s405, 31
      %s408 = smul.addr %s407, 8
      %s409 = scalar_lea.vmem %s2, %s408
      %s410 = smul.u32 16, %s24
      %s411 = smul.u32 16, %s24
      %p412 = scmp.lt.s32.totalorder %s411, 31
      %s413 = scalar_select %p412, %s411, 31
      %s414 = smul.addr %s413, 8
      %s415 = scalar_lea.vmem %s9, %s414
      %s416 = smul.u32 16, %s24
      %s417 = smul.u32 16, %s24
      %p418 = scmp.lt.s32.totalorder %s417, 31
      %s419 = scalar_select %p418, %s417, 31
      %s420 = smul.addr %s419, 8
      %s421 = scalar_lea.vmem %s10, %s420
      %s422 = smul.u32 16, %s24
      %v423 = vld [vmem:[%s403] sm:$0xff]
      %v424 = vld [vmem:[%s403 + $0x8] sm:$0xff]
      %v425 = vld [vmem:[%s403 + $0x10] sm:$0xff]
      %v426 = vld [vmem:[%s403 + $0x18] sm:$0xff]
      %v427 = vld [vmem:[%s403 + $0x20] sm:$0xff]
      %v428 = vld [vmem:[%s403 + $0x28] sm:$0xff]
      %v429 = vld [vmem:[%s403 + $0x30] sm:$0xff]
      %v430 = vld [vmem:[%s403 + $0x38] sm:$0xff]
      %v431 = vld [vmem:[%s403 + $0x40] sm:$0xff]
      %v432 = vld [vmem:[%s403 + $0x48] sm:$0xff]
      %v433 = vld [vmem:[%s403 + $0x50] sm:$0xff]
      %v434 = vld [vmem:[%s403 + $0x58] sm:$0xff]
      %v435 = vld [vmem:[%s403 + $0x60] sm:$0xff]
      %v436 = vld [vmem:[%s403 + $0x68] sm:$0xff]
      %v437 = vld [vmem:[%s403 + $0x70] sm:$0xff]
      %v438 = vld [vmem:[%s403 + $0x78] sm:$0xff]
      %v439 = vld [vmem:[%s3] sm:$0xff]
      %v440 = vld [vmem:[%s3 + $0x8] sm:$0xff]
      %v441 = vld [vmem:[%s397] sm:$0xff]
      %v442 = vld [vmem:[%s397 + $0x8] sm:$0xff]
      %v443 = vld [vmem:[%s397 + $0x10] sm:$0xff]
      %v444 = vld [vmem:[%s397 + $0x18] sm:$0xff]
      %v445 = vld [vmem:[%s397 + $0x20] sm:$0xff]
      %v446 = vld [vmem:[%s397 + $0x28] sm:$0xff]
      %v447 = vld [vmem:[%s397 + $0x30] sm:$0xff]
      %v448 = vld [vmem:[%s397 + $0x38] sm:$0xff]
      %v449 = vld [vmem:[%s397 + $0x40] sm:$0xff]
      %v450 = vld [vmem:[%s397 + $0x48] sm:$0xff]
      %v451 = vld [vmem:[%s397 + $0x50] sm:$0xff]
      %v452 = vld [vmem:[%s397 + $0x58] sm:$0xff]
      %v453 = vld [vmem:[%s397 + $0x60] sm:$0xff]
      %v454 = vld [vmem:[%s397 + $0x68] sm:$0xff]
      %v455 = vld [vmem:[%s397 + $0x70] sm:$0xff]
      %v456 = vld [vmem:[%s397 + $0x78] sm:$0xff]
      %vm457 = vcmask 130048
      %v459 = vsel %vm457, %v423, 0
      %v462 = vsel %vm457, %v424, 0
      %v465 = vsel %vm457, %v425, 0
      %v468 = vsel %vm457, %v426, 0
      %v471 = vsel %vm457, %v427, 0
      %v474 = vsel %vm457, %v428, 0
      %v477 = vsel %vm457, %v429, 0
      %v480 = vsel %vm457, %v430, 0
      %v483 = vsel %vm457, %v431, 0
      %v486 = vsel %vm457, %v432, 0
      %v489 = vsel %vm457, %v433, 0
      %v492 = vsel %vm457, %v434, 0
      %v495 = vsel %vm457, %v435, 0
      %v498 = vsel %vm457, %v436, 0
      %v501 = vsel %vm457, %v437, 0
      %v504 = vsel %vm457, %v438, 0
      %506 = vmatprep.subr.mxu0 0.0
      %507 = vmatpush1.msra.mxu0 0.0
      %508 = vmatprep.subr.mxu0 0.0
      %509 = vmatpush1.msra.mxu0 0.0
      %510 = vmatprep.subr.mxu0 0.0
      %511 = vmatpush1.msra.mxu0 0.0
      %512 = vmatprep.subr.mxu0 0.0
      %513 = vmatpush1.msra.mxu0 0.0
      %514 = vmatprep.subr.mxu0 0.0
      %515 = vmatpush1.msra.mxu0 0.0
      %516 = vmatprep.subr.mxu0 0.0
      %517 = vmatpush1.msra.mxu0 0.0
      %518 = vmatprep.subr.mxu0 0.0
      %519 = vmatpush1.msra.mxu0 0.0
      %520 = vmatprep.subr.mxu0 0.0
      %521 = vmatpush1.msra.mxu0 0.0
      %522 = vmatprep.subr.mxu0 0.0
      %523 = vmatpush1.msra.mxu0 0.0
      %524 = vmatprep.subr.mxu0 0.0
      %525 = vmatpush1.msra.mxu0 0.0
      %526 = vmatprep.subr.mxu0 0.0
      %527 = vmatpush1.msra.mxu0 0.0
      %528 = vmatprep.subr.mxu0 0.0
      %529 = vmatpush1.msra.mxu0 0.0
      %530 = vmatprep.subr.mxu0 0.0
      %531 = vmatpush1.msra.mxu0 0.0
      %532 = vmatprep.subr.mxu0 0.0
      %533 = vmatpush1.msra.mxu0 0.0
      %534 = vmatprep.subr.mxu0 0.0
      %v535 = vand.u32 %v440, 4294901760
      %536 = vmatpush1.msra.mxu0 %v535
      %537 = vmatprep.subr.mxu0 0.0
      %v538 = vand.u32 %v439, 4294901760
      %539 = vmatpush1.msra.mxu0 %v538
      %540 = vmatprep.subr.mxu0 0.0
      %541 = vmatpush2.msra.mxu0 0.0
      %542 = vmatprep.subr.mxu0 0.0
      %543 = vmatpush2.msra.mxu0 0.0
      %544 = vmatprep.subr.mxu0 0.0
      %545 = vmatpush2.msra.mxu0 0.0
      %546 = vmatprep.subr.mxu0 0.0
      %547 = vmatpush2.msra.mxu0 0.0
      %548 = vmatprep.subr.mxu0 0.0
      %549 = vmatpush2.msra.mxu0 0.0
      %550 = vmatprep.subr.mxu0 0.0
      %551 = vmatpush2.msra.mxu0 0.0
      %552 = vmatprep.subr.mxu0 0.0
      %553 = vmatpush2.msra.mxu0 0.0
      %554 = vmatprep.subr.mxu0 0.0
      %555 = vmatpush2.msra.mxu0 0.0
      %556 = vmatprep.subr.mxu0 0.0
      %557 = vmatpush2.msra.mxu0 0.0
      %558 = vmatprep.subr.mxu0 0.0
      %559 = vmatpush2.msra.mxu0 0.0
      %560 = vmatprep.subr.mxu0 0.0
      %561 = vmatpush2.msra.mxu0 0.0
      %562 = vmatprep.subr.mxu0 0.0
      %563 = vmatpush2.msra.mxu0 0.0
      %564 = vmatprep.subr.mxu0 0.0
      %565 = vmatpush2.msra.mxu0 0.0
      %566 = vmatprep.subr.mxu0 0.0
      %567 = vmatpush2.msra.mxu0 0.0
      %568 = vmatprep.subr.mxu0 0.0
      %569 = vmatpush2.msra.mxu0 0.0
      %570 = vmatprep.subr.mxu0 0.0
      %571 = vmatpush2.msra.mxu0 0.0
      %572 = vmatprep.mubr.f32.mxu0 0.0
      %v573 = vand.u32 %v459, 4294901760
      %v574 = vsub.f32 %v459, %v573
      %v575 = vand.u32 %v574, 4294901760
      %v576 = vsub.f32 %v574, %v575
      %v577 = vand.u32 %v576, 4294901760
      %578 = vmatmul.mubr.f32.gmra.mxu0 %v577
      %v579 = vpop.f32.mrf.mxu0
      %v580 = vadd.f32 %v441, %v579
      %v581 = vpop.f32.mrf.mxu0
      %582 = vmatprep.mubr.f32.mxu0 0.0
      %v583 = vand.u32 %v462, 4294901760
      %v584 = vsub.f32 %v462, %v583
      %v585 = vand.u32 %v584, 4294901760
      %v586 = vsub.f32 %v584, %v585
      %v587 = vand.u32 %v586, 4294901760
      %588 = vmatmul.mubr.f32.gmra.mxu0 %v587
      %v589 = vpop.f32.mrf.mxu0
      %v590 = vadd.f32 %v442, %v589
      %v591 = vpop.f32.mrf.mxu0
      %592 = vmatprep.mubr.f32.mxu0 0.0
      %v593 = vand.u32 %v465, 4294901760
      %v594 = vsub.f32 %v465, %v593
      %v595 = vand.u32 %v594, 4294901760
      %v596 = vsub.f32 %v594, %v595
      %v597 = vand.u32 %v596, 4294901760
      %598 = vmatmul.mubr.f32.gmra.mxu0 %v597
      %v599 = vpop.f32.mrf.mxu0
      %v600 = vadd.f32 %v443, %v599
      %v601 = vpop.f32.mrf.mxu0
      %602 = vmatprep.mubr.f32.mxu0 0.0
      %v603 = vand.u32 %v468, 4294901760
      %v604 = vsub.f32 %v468, %v603
      %v605 = vand.u32 %v604, 4294901760
      %v606 = vsub.f32 %v604, %v605
      %v607 = vand.u32 %v606, 4294901760
      %608 = vmatmul.mubr.f32.gmra.mxu0 %v607
      %v609 = vpop.f32.mrf.mxu0
      %v610 = vadd.f32 %v444, %v609
      %v611 = vpop.f32.mrf.mxu0
      %612 = vmatprep.mubr.f32.mxu0 0.0
      %v613 = vand.u32 %v471, 4294901760
      %v614 = vsub.f32 %v471, %v613
      %v615 = vand.u32 %v614, 4294901760
      %v616 = vsub.f32 %v614, %v615
      %v617 = vand.u32 %v616, 4294901760
      %618 = vmatmul.mubr.f32.gmra.mxu0 %v617
      %v619 = vpop.f32.mrf.mxu0
      %v620 = vadd.f32 %v445, %v619
      %v621 = vpop.f32.mrf.mxu0
      %622 = vmatprep.mubr.f32.mxu0 0.0
      %v623 = vand.u32 %v474, 4294901760
      %v624 = vsub.f32 %v474, %v623
      %v625 = vand.u32 %v624, 4294901760
      %v626 = vsub.f32 %v624, %v625
      %v627 = vand.u32 %v626, 4294901760
      %628 = vmatmul.mubr.f32.gmra.mxu0 %v627
      %v629 = vpop.f32.mrf.mxu0
      %v630 = vadd.f32 %v446, %v629
      %v631 = vpop.f32.mrf.mxu0
      %632 = vmatprep.mubr.f32.mxu0 0.0
      %v633 = vand.u32 %v477, 4294901760
      %v634 = vsub.f32 %v477, %v633
      %v635 = vand.u32 %v634, 4294901760
      %v636 = vsub.f32 %v634, %v635
      %v637 = vand.u32 %v636, 4294901760
      %638 = vmatmul.mubr.f32.gmra.mxu0 %v637
      %v639 = vpop.f32.mrf.mxu0
      %v640 = vadd.f32 %v447, %v639
      %v641 = vpop.f32.mrf.mxu0
      %642 = vmatprep.mubr.f32.mxu0 0.0
      %v643 = vand.u32 %v480, 4294901760
      %v644 = vsub.f32 %v480, %v643
      %v645 = vand.u32 %v644, 4294901760
      %v646 = vsub.f32 %v644, %v645
      %v647 = vand.u32 %v646, 4294901760
      %648 = vmatmul.mubr.f32.gmra.mxu0 %v647
      %v649 = vpop.f32.mrf.mxu0
      %v650 = vadd.f32 %v448, %v649
      %v651 = vpop.f32.mrf.mxu0
      %652 = vmatprep.mubr.f32.mxu0 0.0
      %v653 = vand.u32 %v483, 4294901760
      %v654 = vsub.f32 %v483, %v653
      %v655 = vand.u32 %v654, 4294901760
      %v656 = vsub.f32 %v654, %v655
      %v657 = vand.u32 %v656, 4294901760
      %658 = vmatmul.mubr.f32.gmra.mxu0 %v657
      %v659 = vpop.f32.mrf.mxu0
      %v660 = vadd.f32 %v449, %v659
      %v661 = vpop.f32.mrf.mxu0
      %662 = vmatprep.mubr.f32.mxu0 0.0
      %v663 = vand.u32 %v486, 4294901760
      %v664 = vsub.f32 %v486, %v663
      %v665 = vand.u32 %v664, 4294901760
      %v666 = vsub.f32 %v664, %v665
      %v667 = vand.u32 %v666, 4294901760
      %668 = vmatmul.mubr.f32.gmra.mxu0 %v667
      %v669 = vpop.f32.mrf.mxu0
      %v670 = vadd.f32 %v450, %v669
      %v671 = vpop.f32.mrf.mxu0
      %672 = vmatprep.mubr.f32.mxu0 0.0
      %v673 = vand.u32 %v489, 4294901760
      %v674 = vsub.f32 %v489, %v673
      %v675 = vand.u32 %v674, 4294901760
      %v676 = vsub.f32 %v674, %v675
      %v677 = vand.u32 %v676, 4294901760
      %678 = vmatmul.mubr.f32.gmra.mxu0 %v677
      %v679 = vpop.f32.mrf.mxu0
      %v680 = vadd.f32 %v451, %v679
      %v681 = vpop.f32.mrf.mxu0
      %682 = vmatprep.mubr.f32.mxu0 0.0
      %v683 = vand.u32 %v492, 4294901760
      %v684 = vsub.f32 %v492, %v683
      %v685 = vand.u32 %v684, 4294901760
      %v686 = vsub.f32 %v684, %v685
      %v687 = vand.u32 %v686, 4294901760
      %688 = vmatmul.mubr.f32.gmra.mxu0 %v687
      %v689 = vpop.f32.mrf.mxu0
      %v690 = vadd.f32 %v452, %v689
      %v691 = vpop.f32.mrf.mxu0
      %692 = vmatprep.mubr.f32.mxu0 0.0
      %v693 = vand.u32 %v495, 4294901760
      %v694 = vsub.f32 %v495, %v693
      %v695 = vand.u32 %v694, 4294901760
      %v696 = vsub.f32 %v694, %v695
      %v697 = vand.u32 %v696, 4294901760
      %698 = vmatmul.mubr.f32.gmra.mxu0 %v697
      %v699 = vpop.f32.mrf.mxu0
      %v700 = vadd.f32 %v453, %v699
      %v701 = vpop.f32.mrf.mxu0
      %702 = vmatprep.mubr.f32.mxu0 0.0
      %v703 = vand.u32 %v498, 4294901760
      %v704 = vsub.f32 %v498, %v703
      %v705 = vand.u32 %v704, 4294901760
      %v706 = vsub.f32 %v704, %v705
      %v707 = vand.u32 %v706, 4294901760
      %708 = vmatmul.mubr.f32.gmra.mxu0 %v707
      %v709 = vpop.f32.mrf.mxu0
      %v710 = vadd.f32 %v454, %v709
      %v711 = vpop.f32.mrf.mxu0
      %712 = vmatprep.mubr.f32.mxu0 0.0
      %v713 = vand.u32 %v501, 4294901760
      %v714 = vsub.f32 %v501, %v713
      %v715 = vand.u32 %v714, 4294901760
      %v716 = vsub.f32 %v714, %v715
      %v717 = vand.u32 %v716, 4294901760
      %718 = vmatmul.mubr.f32.gmra.mxu0 %v717
      %v719 = vpop.f32.mrf.mxu0
      %v720 = vadd.f32 %v455, %v719
      %v721 = vpop.f32.mrf.mxu0
      %722 = vmatprep.mubr.f32.mxu0 0.0
      %v723 = vand.u32 %v504, 4294901760
      %v724 = vsub.f32 %v504, %v723
      %v725 = vand.u32 %v724, 4294901760
      %v726 = vsub.f32 %v724, %v725
      %v727 = vand.u32 %v726, 4294901760
      %728 = vmatmul.mubr.f32.gmra.mxu0 %v727
      %v729 = vpop.f32.mrf.mxu0
      %v730 = vadd.f32 %v456, %v729
      %v731 = vpop.f32.mrf.mxu0
      %732 = vdwg.mxu0
      %733 = vmatprep.subr.mxu0 0.0
      %734 = vmatpush1.msra.mxu0 0.0
      %735 = vmatprep.subr.mxu0 0.0
      %736 = vmatpush1.msra.mxu0 0.0
      %737 = vmatprep.subr.mxu0 0.0
      %738 = vmatpush1.msra.mxu0 0.0
      %739 = vmatprep.subr.mxu0 0.0
      %740 = vmatpush1.msra.mxu0 0.0
      %741 = vmatprep.subr.mxu0 0.0
      %742 = vmatpush1.msra.mxu0 0.0
      %743 = vmatprep.subr.mxu0 0.0
      %744 = vmatpush1.msra.mxu0 0.0
      %745 = vmatprep.subr.mxu0 0.0
      %746 = vmatpush1.msra.mxu0 0.0
      %747 = vmatprep.subr.mxu0 0.0
      %748 = vmatpush1.msra.mxu0 0.0
      %749 = vmatprep.subr.mxu0 0.0
      %750 = vmatpush1.msra.mxu0 0.0
      %751 = vmatprep.subr.mxu0 0.0
      %752 = vmatpush1.msra.mxu0 0.0
      %753 = vmatprep.subr.mxu0 0.0
      %754 = vmatpush1.msra.mxu0 0.0
      %755 = vmatprep.subr.mxu0 0.0
      %756 = vmatpush1.msra.mxu0 0.0
      %757 = vmatprep.subr.mxu0 0.0
      %758 = vmatpush1.msra.mxu0 0.0
      %759 = vmatprep.subr.mxu0 0.0
      %760 = vmatpush1.msra.mxu0 0.0
      %761 = vmatprep.subr.mxu0 0.0
      %v762 = vand.u32 %v440, 4294901760
      %v763 = vsub.f32 %v440, %v762
      %v764 = vand.u32 %v763, 4294901760
      %v765 = vsub.f32 %v763, %v764
      %v766 = vand.u32 %v765, 4294901760
      %767 = vmatpush1.msra.mxu0 %v766
      %768 = vmatprep.subr.mxu0 0.0
      %v769 = vand.u32 %v439, 4294901760
      %v770 = vsub.f32 %v439, %v769
      %v771 = vand.u32 %v770, 4294901760
      %v772 = vsub.f32 %v770, %v771
      %v773 = vand.u32 %v772, 4294901760
      %774 = vmatpush1.msra.mxu0 %v773
      %775 = vmatprep.subr.mxu0 0.0
      %776 = vmatpush2.msra.mxu0 0.0
      %777 = vmatprep.subr.mxu0 0.0
      %778 = vmatpush2.msra.mxu0 0.0
      %779 = vmatprep.subr.mxu0 0.0
      %780 = vmatpush2.msra.mxu0 0.0
      %781 = vmatprep.subr.mxu0 0.0
      %782 = vmatpush2.msra.mxu0 0.0
      %783 = vmatprep.subr.mxu0 0.0
      %784 = vmatpush2.msra.mxu0 0.0
      %785 = vmatprep.subr.mxu0 0.0
      %786 = vmatpush2.msra.mxu0 0.0
      %787 = vmatprep.subr.mxu0 0.0
      %788 = vmatpush2.msra.mxu0 0.0
      %789 = vmatprep.subr.mxu0 0.0
      %790 = vmatpush2.msra.mxu0 0.0
      %791 = vmatprep.subr.mxu0 0.0
      %792 = vmatpush2.msra.mxu0 0.0
      %793 = vmatprep.subr.mxu0 0.0
      %794 = vmatpush2.msra.mxu0 0.0
      %795 = vmatprep.subr.mxu0 0.0
      %796 = vmatpush2.msra.mxu0 0.0
      %797 = vmatprep.subr.mxu0 0.0
      %798 = vmatpush2.msra.mxu0 0.0
      %799 = vmatprep.subr.mxu0 0.0
      %800 = vmatpush2.msra.mxu0 0.0
      %801 = vmatprep.subr.mxu0 0.0
      %802 = vmatpush2.msra.mxu0 0.0
      %803 = vmatprep.subr.mxu0 0.0
      %804 = vmatpush2.msra.mxu0 0.0
      %805 = vmatprep.subr.mxu0 0.0
      %806 = vmatpush2.msra.mxu0 0.0
      %807 = vmatprep.mubr.f32.mxu0 0.0
      %v808 = vand.u32 %v459, 4294901760
      %809 = vmatmul.mubr.f32.gmra.mxu0 %v808
      %v810 = vpop.f32.mrf.mxu0
      %v811 = vadd.f32 %v580, %v810
      %v812 = vpop.f32.mrf.mxu0
      %813 = vmatprep.mubr.f32.mxu0 0.0
      %v814 = vand.u32 %v462, 4294901760
      %815 = vmatmul.mubr.f32.gmra.mxu0 %v814
      %v816 = vpop.f32.mrf.mxu0
      %v817 = vadd.f32 %v590, %v816
      %v818 = vpop.f32.mrf.mxu0
      %819 = vmatprep.mubr.f32.mxu0 0.0
      %v820 = vand.u32 %v465, 4294901760
      %821 = vmatmul.mubr.f32.gmra.mxu0 %v820
      %v822 = vpop.f32.mrf.mxu0
      %v823 = vadd.f32 %v600, %v822
      %v824 = vpop.f32.mrf.mxu0
      %825 = vmatprep.mubr.f32.mxu0 0.0
      %v826 = vand.u32 %v468, 4294901760
      %827 = vmatmul.mubr.f32.gmra.mxu0 %v826
      %v828 = vpop.f32.mrf.mxu0
      %v829 = vadd.f32 %v610, %v828
      %v830 = vpop.f32.mrf.mxu0
      %831 = vmatprep.mubr.f32.mxu0 0.0
      %v832 = vand.u32 %v471, 4294901760
      %833 = vmatmul.mubr.f32.gmra.mxu0 %v832
      %v834 = vpop.f32.mrf.mxu0
      %v835 = vadd.f32 %v620, %v834
      %v836 = vpop.f32.mrf.mxu0
      %837 = vmatprep.mubr.f32.mxu0 0.0
      %v838 = vand.u32 %v474, 4294901760
      %839 = vmatmul.mubr.f32.gmra.mxu0 %v838
      %v840 = vpop.f32.mrf.mxu0
      %v841 = vadd.f32 %v630, %v840
      %v842 = vpop.f32.mrf.mxu0
      %843 = vmatprep.mubr.f32.mxu0 0.0
      %v844 = vand.u32 %v477, 4294901760
      %845 = vmatmul.mubr.f32.gmra.mxu0 %v844
      %v846 = vpop.f32.mrf.mxu0
      %v847 = vadd.f32 %v640, %v846
      %v848 = vpop.f32.mrf.mxu0
      %849 = vmatprep.mubr.f32.mxu0 0.0
      %v850 = vand.u32 %v480, 4294901760
      %851 = vmatmul.mubr.f32.gmra.mxu0 %v850
      %v852 = vpop.f32.mrf.mxu0
      %v853 = vadd.f32 %v650, %v852
      %v854 = vpop.f32.mrf.mxu0
      %855 = vmatprep.mubr.f32.mxu0 0.0
      %v856 = vand.u32 %v483, 4294901760
      %857 = vmatmul.mubr.f32.gmra.mxu0 %v856
      %v858 = vpop.f32.mrf.mxu0
      %v859 = vadd.f32 %v660, %v858
      %v860 = vpop.f32.mrf.mxu0
      %861 = vmatprep.mubr.f32.mxu0 0.0
      %v862 = vand.u32 %v486, 4294901760
      %863 = vmatmul.mubr.f32.gmra.mxu0 %v862
      %v864 = vpop.f32.mrf.mxu0
      %v865 = vadd.f32 %v670, %v864
      %v866 = vpop.f32.mrf.mxu0
      %867 = vmatprep.mubr.f32.mxu0 0.0
      %v868 = vand.u32 %v489, 4294901760
      %869 = vmatmul.mubr.f32.gmra.mxu0 %v868
      %v870 = vpop.f32.mrf.mxu0
      %v871 = vadd.f32 %v680, %v870
      %v872 = vpop.f32.mrf.mxu0
      %873 = vmatprep.mubr.f32.mxu0 0.0
      %v874 = vand.u32 %v492, 4294901760
      %875 = vmatmul.mubr.f32.gmra.mxu0 %v874
      %v876 = vpop.f32.mrf.mxu0
      %v877 = vadd.f32 %v690, %v876
      %v878 = vpop.f32.mrf.mxu0
      %879 = vmatprep.mubr.f32.mxu0 0.0
      %v880 = vand.u32 %v495, 4294901760
      %881 = vmatmul.mubr.f32.gmra.mxu0 %v880
      %v882 = vpop.f32.mrf.mxu0
      %v883 = vadd.f32 %v700, %v882
      %v884 = vpop.f32.mrf.mxu0
      %885 = vmatprep.mubr.f32.mxu0 0.0
      %v886 = vand.u32 %v498, 4294901760
      %887 = vmatmul.mubr.f32.gmra.mxu0 %v886
      %v888 = vpop.f32.mrf.mxu0
      %v889 = vadd.f32 %v710, %v888
      %v890 = vpop.f32.mrf.mxu0
      %891 = vmatprep.mubr.f32.mxu0 0.0
      %v892 = vand.u32 %v501, 4294901760
      %893 = vmatmul.mubr.f32.gmra.mxu0 %v892
      %v894 = vpop.f32.mrf.mxu0
      %v895 = vadd.f32 %v720, %v894
      %v896 = vpop.f32.mrf.mxu0
      %897 = vmatprep.mubr.f32.mxu0 0.0
      %v898 = vand.u32 %v504, 4294901760
      %899 = vmatmul.mubr.f32.gmra.mxu0 %v898
      %v900 = vpop.f32.mrf.mxu0
      %v901 = vadd.f32 %v730, %v900
      %v902 = vpop.f32.mrf.mxu0
      %903 = vdwg.mxu0
      %904 = vmatprep.subr.mxu0 0.0
      %905 = vmatpush1.msra.mxu0 0.0
      %906 = vmatprep.subr.mxu0 0.0
      %907 = vmatpush1.msra.mxu0 0.0
      %908 = vmatprep.subr.mxu0 0.0
      %909 = vmatpush1.msra.mxu0 0.0
      %910 = vmatprep.subr.mxu0 0.0
      %911 = vmatpush1.msra.mxu0 0.0
      %912 = vmatprep.subr.mxu0 0.0
      %913 = vmatpush1.msra.mxu0 0.0
      %914 = vmatprep.subr.mxu0 0.0
      %915 = vmatpush1.msra.mxu0 0.0
      %916 = vmatprep.subr.mxu0 0.0
      %917 = vmatpush1.msra.mxu0 0.0
      %918 = vmatprep.subr.mxu0 0.0
      %919 = vmatpush1.msra.mxu0 0.0
      %920 = vmatprep.subr.mxu0 0.0
      %921 = vmatpush1.msra.mxu0 0.0
      %922 = vmatprep.subr.mxu0 0.0
      %923 = vmatpush1.msra.mxu0 0.0
      %924 = vmatprep.subr.mxu0 0.0
      %925 = vmatpush1.msra.mxu0 0.0
      %926 = vmatprep.subr.mxu0 0.0
      %927 = vmatpush1.msra.mxu0 0.0
      %928 = vmatprep.subr.mxu0 0.0
      %929 = vmatpush1.msra.mxu0 0.0
      %930 = vmatprep.subr.mxu0 0.0
      %931 = vmatpush1.msra.mxu0 0.0
      %932 = vmatprep.subr.mxu0 0.0
      %v933 = vand.u32 %v440, 4294901760
      %v934 = vsub.f32 %v440, %v933
      %935 = vmatpush1.msra.mxu0 %v934
      %936 = vmatprep.subr.mxu0 0.0
      %v937 = vand.u32 %v439, 4294901760
      %v938 = vsub.f32 %v439, %v937
      %939 = vmatpush1.msra.mxu0 %v938
      %940 = vmatprep.subr.mxu0 0.0
      %941 = vmatpush2.msra.mxu0 0.0
      %942 = vmatprep.subr.mxu0 0.0
      %943 = vmatpush2.msra.mxu0 0.0
      %944 = vmatprep.subr.mxu0 0.0
      %945 = vmatpush2.msra.mxu0 0.0
      %946 = vmatprep.subr.mxu0 0.0
      %947 = vmatpush2.msra.mxu0 0.0
      %948 = vmatprep.subr.mxu0 0.0
      %949 = vmatpush2.msra.mxu0 0.0
      %950 = vmatprep.subr.mxu0 0.0
      %951 = vmatpush2.msra.mxu0 0.0
      %952 = vmatprep.subr.mxu0 0.0
      %953 = vmatpush2.msra.mxu0 0.0
      %954 = vmatprep.subr.mxu0 0.0
      %955 = vmatpush2.msra.mxu0 0.0
      %956 = vmatprep.subr.mxu0 0.0
      %957 = vmatpush2.msra.mxu0 0.0
      %958 = vmatprep.subr.mxu0 0.0
      %959 = vmatpush2.msra.mxu0 0.0
      %960 = vmatprep.subr.mxu0 0.0
      %961 = vmatpush2.msra.mxu0 0.0
      %962 = vmatprep.subr.mxu0 0.0
      %963 = vmatpush2.msra.mxu0 0.0
      %964 = vmatprep.subr.mxu0 0.0
      %965 = vmatpush2.msra.mxu0 0.0
      %966 = vmatprep.subr.mxu0 0.0
      %967 = vmatpush2.msra.mxu0 0.0
      %968 = vmatprep.subr.mxu0 0.0
      %969 = vmatpush2.msra.mxu0 0.0
      %970 = vmatprep.subr.mxu0 0.0
      %971 = vmatpush2.msra.mxu0 0.0
      %972 = vmatprep.mubr.f32.mxu0 0.0
      %v973 = vand.u32 %v459, 4294901760
      %v974 = vsub.f32 %v459, %v973
      %975 = vmatmul.mubr.f32.gmra.mxu0 %v974
      %v976 = vpop.f32.mrf.mxu0
      %v977 = vadd.f32 %v811, %v976
      %v978 = vpop.f32.mrf.mxu0
      %979 = vmatprep.mubr.f32.mxu0 0.0
      %v980 = vand.u32 %v462, 4294901760
      %v981 = vsub.f32 %v462, %v980
      %982 = vmatmul.mubr.f32.gmra.mxu0 %v981
      %v983 = vpop.f32.mrf.mxu0
      %v984 = vadd.f32 %v817, %v983
      %v985 = vpop.f32.mrf.mxu0
      %986 = vmatprep.mubr.f32.mxu0 0.0
      %v987 = vand.u32 %v465, 4294901760
      %v988 = vsub.f32 %v465, %v987
      %989 = vmatmul.mubr.f32.gmra.mxu0 %v988
      %v990 = vpop.f32.mrf.mxu0
      %v991 = vadd.f32 %v823, %v990
      %v992 = vpop.f32.mrf.mxu0
      %993 = vmatprep.mubr.f32.mxu0 0.0
      %v994 = vand.u32 %v468, 4294901760
      %v995 = vsub.f32 %v468, %v994
      %996 = vmatmul.mubr.f32.gmra.mxu0 %v995
      %v997 = vpop.f32.mrf.mxu0
      %v998 = vadd.f32 %v829, %v997
      %v999 = vpop.f32.mrf.mxu0
      %1000 = vmatprep.mubr.f32.mxu0 0.0
      %v1001 = vand.u32 %v471, 4294901760
      %v1002 = vsub.f32 %v471, %v1001
      %1003 = vmatmul.mubr.f32.gmra.mxu0 %v1002
      %v1004 = vpop.f32.mrf.mxu0
      %v1005 = vadd.f32 %v835, %v1004
      %v1006 = vpop.f32.mrf.mxu0
      %1007 = vmatprep.mubr.f32.mxu0 0.0
      %v1008 = vand.u32 %v474, 4294901760
      %v1009 = vsub.f32 %v474, %v1008
      %1010 = vmatmul.mubr.f32.gmra.mxu0 %v1009
      %v1011 = vpop.f32.mrf.mxu0
      %v1012 = vadd.f32 %v841, %v1011
      %v1013 = vpop.f32.mrf.mxu0
      %1014 = vmatprep.mubr.f32.mxu0 0.0
      %v1015 = vand.u32 %v477, 4294901760
      %v1016 = vsub.f32 %v477, %v1015
      %1017 = vmatmul.mubr.f32.gmra.mxu0 %v1016
      %v1018 = vpop.f32.mrf.mxu0
      %v1019 = vadd.f32 %v847, %v1018
      %v1020 = vpop.f32.mrf.mxu0
      %1021 = vmatprep.mubr.f32.mxu0 0.0
      %v1022 = vand.u32 %v480, 4294901760
      %v1023 = vsub.f32 %v480, %v1022
      %1024 = vmatmul.mubr.f32.gmra.mxu0 %v1023
      %v1025 = vpop.f32.mrf.mxu0
      %v1026 = vadd.f32 %v853, %v1025
      %v1027 = vpop.f32.mrf.mxu0
      %1028 = vmatprep.mubr.f32.mxu0 0.0
      %v1029 = vand.u32 %v483, 4294901760
      %v1030 = vsub.f32 %v483, %v1029
      %1031 = vmatmul.mubr.f32.gmra.mxu0 %v1030
      %v1032 = vpop.f32.mrf.mxu0
      %v1033 = vadd.f32 %v859, %v1032
      %v1034 = vpop.f32.mrf.mxu0
      %1035 = vmatprep.mubr.f32.mxu0 0.0
      %v1036 = vand.u32 %v486, 4294901760
      %v1037 = vsub.f32 %v486, %v1036
      %1038 = vmatmul.mubr.f32.gmra.mxu0 %v1037
      %v1039 = vpop.f32.mrf.mxu0
      %v1040 = vadd.f32 %v865, %v1039
      %v1041 = vpop.f32.mrf.mxu0
      %1042 = vmatprep.mubr.f32.mxu0 0.0
      %v1043 = vand.u32 %v489, 4294901760
      %v1044 = vsub.f32 %v489, %v1043
      %1045 = vmatmul.mubr.f32.gmra.mxu0 %v1044
      %v1046 = vpop.f32.mrf.mxu0
      %v1047 = vadd.f32 %v871, %v1046
      %v1048 = vpop.f32.mrf.mxu0
      %1049 = vmatprep.mubr.f32.mxu0 0.0
      %v1050 = vand.u32 %v492, 4294901760
      %v1051 = vsub.f32 %v492, %v1050
      %1052 = vmatmul.mubr.f32.gmra.mxu0 %v1051
      %v1053 = vpop.f32.mrf.mxu0
      %v1054 = vadd.f32 %v877, %v1053
      %v1055 = vpop.f32.mrf.mxu0
      %1056 = vmatprep.mubr.f32.mxu0 0.0
      %v1057 = vand.u32 %v495, 4294901760
      %v1058 = vsub.f32 %v495, %v1057
      %1059 = vmatmul.mubr.f32.gmra.mxu0 %v1058
      %v1060 = vpop.f32.mrf.mxu0
      %v1061 = vadd.f32 %v883, %v1060
      %v1062 = vpop.f32.mrf.mxu0
      %1063 = vmatprep.mubr.f32.mxu0 0.0
      %v1064 = vand.u32 %v498, 4294901760
      %v1065 = vsub.f32 %v498, %v1064
      %1066 = vmatmul.mubr.f32.gmra.mxu0 %v1065
      %v1067 = vpop.f32.mrf.mxu0
      %v1068 = vadd.f32 %v889, %v1067
      %v1069 = vpop.f32.mrf.mxu0
      %1070 = vmatprep.mubr.f32.mxu0 0.0
      %v1071 = vand.u32 %v501, 4294901760
      %v1072 = vsub.f32 %v501, %v1071
      %1073 = vmatmul.mubr.f32.gmra.mxu0 %v1072
      %v1074 = vpop.f32.mrf.mxu0
      %v1075 = vadd.f32 %v895, %v1074
      %v1076 = vpop.f32.mrf.mxu0
      %1077 = vmatprep.mubr.f32.mxu0 0.0
      %v1078 = vand.u32 %v504, 4294901760
      %v1079 = vsub.f32 %v504, %v1078
      %1080 = vmatmul.mubr.f32.gmra.mxu0 %v1079
      %v1081 = vpop.f32.mrf.mxu0
      %v1082 = vadd.f32 %v901, %v1081
      %v1083 = vpop.f32.mrf.mxu0
      %1084 = vdwg.mxu0
      %1085 = vmatprep.subr.mxu0 0.0
      %1086 = vmatpush1.msra.mxu0 0.0
      %1087 = vmatprep.subr.mxu0 0.0
      %1088 = vmatpush1.msra.mxu0 0.0
      %1089 = vmatprep.subr.mxu0 0.0
      %1090 = vmatpush1.msra.mxu0 0.0
      %1091 = vmatprep.subr.mxu0 0.0
      %1092 = vmatpush1.msra.mxu0 0.0
      %1093 = vmatprep.subr.mxu0 0.0
      %1094 = vmatpush1.msra.mxu0 0.0
      %1095 = vmatprep.subr.mxu0 0.0
      %1096 = vmatpush1.msra.mxu0 0.0
      %1097 = vmatprep.subr.mxu0 0.0
      %1098 = vmatpush1.msra.mxu0 0.0
      %1099 = vmatprep.subr.mxu0 0.0
      %1100 = vmatpush1.msra.mxu0 0.0
      %1101 = vmatprep.subr.mxu0 0.0
      %1102 = vmatpush1.msra.mxu0 0.0
      %1103 = vmatprep.subr.mxu0 0.0
      %1104 = vmatpush1.msra.mxu0 0.0
      %1105 = vmatprep.subr.mxu0 0.0
      %1106 = vmatpush1.msra.mxu0 0.0
      %1107 = vmatprep.subr.mxu0 0.0
      %1108 = vmatpush1.msra.mxu0 0.0
      %1109 = vmatprep.subr.mxu0 0.0
      %1110 = vmatpush1.msra.mxu0 0.0
      %1111 = vmatprep.subr.mxu0 0.0
      %1112 = vmatpush1.msra.mxu0 0.0
      %1113 = vmatprep.subr.mxu0 0.0
      %v1114 = vand.u32 %v440, 4294901760
      %1115 = vmatpush1.msra.mxu0 %v1114
      %1116 = vmatprep.subr.mxu0 0.0
      %v1117 = vand.u32 %v439, 4294901760
      %1118 = vmatpush1.msra.mxu0 %v1117
      %1119 = vmatprep.subr.mxu0 0.0
      %1120 = vmatpush2.msra.mxu0 0.0
      %1121 = vmatprep.subr.mxu0 0.0
      %1122 = vmatpush2.msra.mxu0 0.0
      %1123 = vmatprep.subr.mxu0 0.0
      %1124 = vmatpush2.msra.mxu0 0.0
      %1125 = vmatprep.subr.mxu0 0.0
      %1126 = vmatpush2.msra.mxu0 0.0
      %1127 = vmatprep.subr.mxu0 0.0
      %1128 = vmatpush2.msra.mxu0 0.0
      %1129 = vmatprep.subr.mxu0 0.0
      %1130 = vmatpush2.msra.mxu0 0.0
      %1131 = vmatprep.subr.mxu0 0.0
      %1132 = vmatpush2.msra.mxu0 0.0
      %1133 = vmatprep.subr.mxu0 0.0
      %1134 = vmatpush2.msra.mxu0 0.0
      %1135 = vmatprep.subr.mxu0 0.0
      %1136 = vmatpush2.msra.mxu0 0.0
      %1137 = vmatprep.subr.mxu0 0.0
      %1138 = vmatpush2.msra.mxu0 0.0
      %1139 = vmatprep.subr.mxu0 0.0
      %1140 = vmatpush2.msra.mxu0 0.0
      %1141 = vmatprep.subr.mxu0 0.0
      %1142 = vmatpush2.msra.mxu0 0.0
      %1143 = vmatprep.subr.mxu0 0.0
      %1144 = vmatpush2.msra.mxu0 0.0
      %1145 = vmatprep.subr.mxu0 0.0
      %1146 = vmatpush2.msra.mxu0 0.0
      %1147 = vmatprep.subr.mxu0 0.0
      %1148 = vmatpush2.msra.mxu0 0.0
      %1149 = vmatprep.subr.mxu0 0.0
      %1150 = vmatpush2.msra.mxu0 0.0
      %1151 = vmatprep.mubr.f32.mxu0 0.0
      %v1152 = vand.u32 %v459, 4294901760
      %v1153 = vsub.f32 %v459, %v1152
      %v1154 = vand.u32 %v1153, 4294901760
      %1155 = vmatmul.mubr.f32.gmra.mxu0 %v1154
      %v1156 = vpop.f32.mrf.mxu0
      %v1157 = vadd.f32 %v977, %v1156
      %v1158 = vpop.f32.mrf.mxu0
      %1159 = vmatprep.mubr.f32.mxu0 0.0
      %v1160 = vand.u32 %v462, 4294901760
      %v1161 = vsub.f32 %v462, %v1160
      %v1162 = vand.u32 %v1161, 4294901760
      %1163 = vmatmul.mubr.f32.gmra.mxu0 %v1162
      %v1164 = vpop.f32.mrf.mxu0
      %v1165 = vadd.f32 %v984, %v1164
      %v1166 = vpop.f32.mrf.mxu0
      %1167 = vmatprep.mubr.f32.mxu0 0.0
      %v1168 = vand.u32 %v465, 4294901760
      %v1169 = vsub.f32 %v465, %v1168
      %v1170 = vand.u32 %v1169, 4294901760
      %1171 = vmatmul.mubr.f32.gmra.mxu0 %v1170
      %v1172 = vpop.f32.mrf.mxu0
      %v1173 = vadd.f32 %v991, %v1172
      %v1174 = vpop.f32.mrf.mxu0
      %1175 = vmatprep.mubr.f32.mxu0 0.0
      %v1176 = vand.u32 %v468, 4294901760
      %v1177 = vsub.f32 %v468, %v1176
      %v1178 = vand.u32 %v1177, 4294901760
      %1179 = vmatmul.mubr.f32.gmra.mxu0 %v1178
      %v1180 = vpop.f32.mrf.mxu0
      %v1181 = vadd.f32 %v998, %v1180
      %v1182 = vpop.f32.mrf.mxu0
      %1183 = vmatprep.mubr.f32.mxu0 0.0
      %v1184 = vand.u32 %v471, 4294901760
      %v1185 = vsub.f32 %v471, %v1184
      %v1186 = vand.u32 %v1185, 4294901760
      %1187 = vmatmul.mubr.f32.gmra.mxu0 %v1186
      %v1188 = vpop.f32.mrf.mxu0
      %v1189 = vadd.f32 %v1005, %v1188
      %v1190 = vpop.f32.mrf.mxu0
      %1191 = vmatprep.mubr.f32.mxu0 0.0
      %v1192 = vand.u32 %v474, 4294901760
      %v1193 = vsub.f32 %v474, %v1192
      %v1194 = vand.u32 %v1193, 4294901760
      %1195 = vmatmul.mubr.f32.gmra.mxu0 %v1194
      %v1196 = vpop.f32.mrf.mxu0
      %v1197 = vadd.f32 %v1012, %v1196
      %v1198 = vpop.f32.mrf.mxu0
      %1199 = vmatprep.mubr.f32.mxu0 0.0
      %v1200 = vand.u32 %v477, 4294901760
      %v1201 = vsub.f32 %v477, %v1200
      %v1202 = vand.u32 %v1201, 4294901760
      %1203 = vmatmul.mubr.f32.gmra.mxu0 %v1202
      %v1204 = vpop.f32.mrf.mxu0
      %v1205 = vadd.f32 %v1019, %v1204
      %v1206 = vpop.f32.mrf.mxu0
      %1207 = vmatprep.mubr.f32.mxu0 0.0
      %v1208 = vand.u32 %v480, 4294901760
      %v1209 = vsub.f32 %v480, %v1208
      %v1210 = vand.u32 %v1209, 4294901760
      %1211 = vmatmul.mubr.f32.gmra.mxu0 %v1210
      %v1212 = vpop.f32.mrf.mxu0
      %v1213 = vadd.f32 %v1026, %v1212
      %v1214 = vpop.f32.mrf.mxu0
      %1215 = vmatprep.mubr.f32.mxu0 0.0
      %v1216 = vand.u32 %v483, 4294901760
      %v1217 = vsub.f32 %v483, %v1216
      %v1218 = vand.u32 %v1217, 4294901760
      %1219 = vmatmul.mubr.f32.gmra.mxu0 %v1218
      %v1220 = vpop.f32.mrf.mxu0
      %v1221 = vadd.f32 %v1033, %v1220
      %v1222 = vpop.f32.mrf.mxu0
      %1223 = vmatprep.mubr.f32.mxu0 0.0
      %v1224 = vand.u32 %v486, 4294901760
      %v1225 = vsub.f32 %v486, %v1224
      %v1226 = vand.u32 %v1225, 4294901760
      %1227 = vmatmul.mubr.f32.gmra.mxu0 %v1226
      %v1228 = vpop.f32.mrf.mxu0
      %v1229 = vadd.f32 %v1040, %v1228
      %v1230 = vpop.f32.mrf.mxu0
      %1231 = vmatprep.mubr.f32.mxu0 0.0
      %v1232 = vand.u32 %v489, 4294901760
      %v1233 = vsub.f32 %v489, %v1232
      %v1234 = vand.u32 %v1233, 4294901760
      %1235 = vmatmul.mubr.f32.gmra.mxu0 %v1234
      %v1236 = vpop.f32.mrf.mxu0
      %v1237 = vadd.f32 %v1047, %v1236
      %v1238 = vpop.f32.mrf.mxu0
      %1239 = vmatprep.mubr.f32.mxu0 0.0
      %v1240 = vand.u32 %v492, 4294901760
      %v1241 = vsub.f32 %v492, %v1240
      %v1242 = vand.u32 %v1241, 4294901760
      %1243 = vmatmul.mubr.f32.gmra.mxu0 %v1242
      %v1244 = vpop.f32.mrf.mxu0
      %v1245 = vadd.f32 %v1054, %v1244
      %v1246 = vpop.f32.mrf.mxu0
      %1247 = vmatprep.mubr.f32.mxu0 0.0
      %v1248 = vand.u32 %v495, 4294901760
      %v1249 = vsub.f32 %v495, %v1248
      %v1250 = vand.u32 %v1249, 4294901760
      %1251 = vmatmul.mubr.f32.gmra.mxu0 %v1250
      %v1252 = vpop.f32.mrf.mxu0
      %v1253 = vadd.f32 %v1061, %v1252
      %v1254 = vpop.f32.mrf.mxu0
      %1255 = vmatprep.mubr.f32.mxu0 0.0
      %v1256 = vand.u32 %v498, 4294901760
      %v1257 = vsub.f32 %v498, %v1256
      %v1258 = vand.u32 %v1257, 4294901760
      %1259 = vmatmul.mubr.f32.gmra.mxu0 %v1258
      %v1260 = vpop.f32.mrf.mxu0
      %v1261 = vadd.f32 %v1068, %v1260
      %v1262 = vpop.f32.mrf.mxu0
      %1263 = vmatprep.mubr.f32.mxu0 0.0
      %v1264 = vand.u32 %v501, 4294901760
      %v1265 = vsub.f32 %v501, %v1264
      %v1266 = vand.u32 %v1265, 4294901760
      %1267 = vmatmul.mubr.f32.gmra.mxu0 %v1266
      %v1268 = vpop.f32.mrf.mxu0
      %v1269 = vadd.f32 %v1075, %v1268
      %v1270 = vpop.f32.mrf.mxu0
      %1271 = vmatprep.mubr.f32.mxu0 0.0
      %v1272 = vand.u32 %v504, 4294901760
      %v1273 = vsub.f32 %v504, %v1272
      %v1274 = vand.u32 %v1273, 4294901760
      %1275 = vmatmul.mubr.f32.gmra.mxu0 %v1274
      %v1276 = vpop.f32.mrf.mxu0
      %v1277 = vadd.f32 %v1082, %v1276
      %v1278 = vpop.f32.mrf.mxu0
      %1279 = vdwg.mxu0
      %1280 = vmatprep.subr.mxu0 0.0
      %1281 = vmatpush1.msra.mxu0 0.0
      %1282 = vmatprep.subr.mxu0 0.0
      %1283 = vmatpush1.msra.mxu0 0.0
      %1284 = vmatprep.subr.mxu0 0.0
      %1285 = vmatpush1.msra.mxu0 0.0
      %1286 = vmatprep.subr.mxu0 0.0
      %1287 = vmatpush1.msra.mxu0 0.0
      %1288 = vmatprep.subr.mxu0 0.0
      %1289 = vmatpush1.msra.mxu0 0.0
      %1290 = vmatprep.subr.mxu0 0.0
      %1291 = vmatpush1.msra.mxu0 0.0
      %1292 = vmatprep.subr.mxu0 0.0
      %1293 = vmatpush1.msra.mxu0 0.0
      %1294 = vmatprep.subr.mxu0 0.0
      %1295 = vmatpush1.msra.mxu0 0.0
      %1296 = vmatprep.subr.mxu0 0.0
      %1297 = vmatpush1.msra.mxu0 0.0
      %1298 = vmatprep.subr.mxu0 0.0
      %1299 = vmatpush1.msra.mxu0 0.0
      %1300 = vmatprep.subr.mxu0 0.0
      %1301 = vmatpush1.msra.mxu0 0.0
      %1302 = vmatprep.subr.mxu0 0.0
      %1303 = vmatpush1.msra.mxu0 0.0
      %1304 = vmatprep.subr.mxu0 0.0
      %1305 = vmatpush1.msra.mxu0 0.0
      %1306 = vmatprep.subr.mxu0 0.0
      %1307 = vmatpush1.msra.mxu0 0.0
      %1308 = vmatprep.subr.mxu0 0.0
      %v1309 = vand.u32 %v440, 4294901760
      %v1310 = vsub.f32 %v440, %v1309
      %v1311 = vand.u32 %v1310, 4294901760
      %1312 = vmatpush1.msra.mxu0 %v1311
      %1313 = vmatprep.subr.mxu0 0.0
      %v1314 = vand.u32 %v439, 4294901760
      %v1315 = vsub.f32 %v439, %v1314
      %v1316 = vand.u32 %v1315, 4294901760
      %1317 = vmatpush1.msra.mxu0 %v1316
      %1318 = vmatprep.subr.mxu0 0.0
      %1319 = vmatpush2.msra.mxu0 0.0
      %1320 = vmatprep.subr.mxu0 0.0
      %1321 = vmatpush2.msra.mxu0 0.0
      %1322 = vmatprep.subr.mxu0 0.0
      %1323 = vmatpush2.msra.mxu0 0.0
      %1324 = vmatprep.subr.mxu0 0.0
      %1325 = vmatpush2.msra.mxu0 0.0
      %1326 = vmatprep.subr.mxu0 0.0
      %1327 = vmatpush2.msra.mxu0 0.0
      %1328 = vmatprep.subr.mxu0 0.0
      %1329 = vmatpush2.msra.mxu0 0.0
      %1330 = vmatprep.subr.mxu0 0.0
      %1331 = vmatpush2.msra.mxu0 0.0
      %1332 = vmatprep.subr.mxu0 0.0
      %1333 = vmatpush2.msra.mxu0 0.0
      %1334 = vmatprep.subr.mxu0 0.0
      %1335 = vmatpush2.msra.mxu0 0.0
      %1336 = vmatprep.subr.mxu0 0.0
      %1337 = vmatpush2.msra.mxu0 0.0
      %1338 = vmatprep.subr.mxu0 0.0
      %1339 = vmatpush2.msra.mxu0 0.0
      %1340 = vmatprep.subr.mxu0 0.0
      %1341 = vmatpush2.msra.mxu0 0.0
      %1342 = vmatprep.subr.mxu0 0.0
      %1343 = vmatpush2.msra.mxu0 0.0
      %1344 = vmatprep.subr.mxu0 0.0
      %1345 = vmatpush2.msra.mxu0 0.0
      %1346 = vmatprep.subr.mxu0 0.0
      %1347 = vmatpush2.msra.mxu0 0.0
      %1348 = vmatprep.subr.mxu0 0.0
      %1349 = vmatpush2.msra.mxu0 0.0
      %1350 = vmatprep.mubr.f32.mxu0 0.0
      %v1351 = vand.u32 %v459, 4294901760
      %1352 = vmatmul.mubr.f32.gmra.mxu0 %v1351
      %v1353 = vpop.f32.mrf.mxu0
      %v1354 = vadd.f32 %v1157, %v1353
      %v1355 = vpop.f32.mrf.mxu0
      %1356 = vmatprep.mubr.f32.mxu0 0.0
      %v1357 = vand.u32 %v462, 4294901760
      %1358 = vmatmul.mubr.f32.gmra.mxu0 %v1357
      %v1359 = vpop.f32.mrf.mxu0
      %v1360 = vadd.f32 %v1165, %v1359
      %v1361 = vpop.f32.mrf.mxu0
      %1362 = vmatprep.mubr.f32.mxu0 0.0
      %v1363 = vand.u32 %v465, 4294901760
      %1364 = vmatmul.mubr.f32.gmra.mxu0 %v1363
      %v1365 = vpop.f32.mrf.mxu0
      %v1366 = vadd.f32 %v1173, %v1365
      %v1367 = vpop.f32.mrf.mxu0
      %1368 = vmatprep.mubr.f32.mxu0 0.0
      %v1369 = vand.u32 %v468, 4294901760
      %1370 = vmatmul.mubr.f32.gmra.mxu0 %v1369
      %v1371 = vpop.f32.mrf.mxu0
      %v1372 = vadd.f32 %v1181, %v1371
      %v1373 = vpop.f32.mrf.mxu0
      %1374 = vmatprep.mubr.f32.mxu0 0.0
      %v1375 = vand.u32 %v471, 4294901760
      %1376 = vmatmul.mubr.f32.gmra.mxu0 %v1375
      %v1377 = vpop.f32.mrf.mxu0
      %v1378 = vadd.f32 %v1189, %v1377
      %v1379 = vpop.f32.mrf.mxu0
      %1380 = vmatprep.mubr.f32.mxu0 0.0
      %v1381 = vand.u32 %v474, 4294901760
      %1382 = vmatmul.mubr.f32.gmra.mxu0 %v1381
      %v1383 = vpop.f32.mrf.mxu0
      %v1384 = vadd.f32 %v1197, %v1383
      %v1385 = vpop.f32.mrf.mxu0
      %1386 = vmatprep.mubr.f32.mxu0 0.0
      %v1387 = vand.u32 %v477, 4294901760
      %1388 = vmatmul.mubr.f32.gmra.mxu0 %v1387
      %v1389 = vpop.f32.mrf.mxu0
      %v1390 = vadd.f32 %v1205, %v1389
      %v1391 = vpop.f32.mrf.mxu0
      %1392 = vmatprep.mubr.f32.mxu0 0.0
      %v1393 = vand.u32 %v480, 4294901760
      %1394 = vmatmul.mubr.f32.gmra.mxu0 %v1393
      %v1395 = vpop.f32.mrf.mxu0
      %v1396 = vadd.f32 %v1213, %v1395
      %v1397 = vpop.f32.mrf.mxu0
      %1398 = vmatprep.mubr.f32.mxu0 0.0
      %v1399 = vand.u32 %v483, 4294901760
      %1400 = vmatmul.mubr.f32.gmra.mxu0 %v1399
      %v1401 = vpop.f32.mrf.mxu0
      %v1402 = vadd.f32 %v1221, %v1401
      %v1403 = vpop.f32.mrf.mxu0
      %1404 = vmatprep.mubr.f32.mxu0 0.0
      %v1405 = vand.u32 %v486, 4294901760
      %1406 = vmatmul.mubr.f32.gmra.mxu0 %v1405
      %v1407 = vpop.f32.mrf.mxu0
      %v1408 = vadd.f32 %v1229, %v1407
      %v1409 = vpop.f32.mrf.mxu0
      %1410 = vmatprep.mubr.f32.mxu0 0.0
      %v1411 = vand.u32 %v489, 4294901760
      %1412 = vmatmul.mubr.f32.gmra.mxu0 %v1411
      %v1413 = vpop.f32.mrf.mxu0
      %v1414 = vadd.f32 %v1237, %v1413
      %v1415 = vpop.f32.mrf.mxu0
      %1416 = vmatprep.mubr.f32.mxu0 0.0
      %v1417 = vand.u32 %v492, 4294901760
      %1418 = vmatmul.mubr.f32.gmra.mxu0 %v1417
      %v1419 = vpop.f32.mrf.mxu0
      %v1420 = vadd.f32 %v1245, %v1419
      %v1421 = vpop.f32.mrf.mxu0
      %1422 = vmatprep.mubr.f32.mxu0 0.0
      %v1423 = vand.u32 %v495, 4294901760
      %1424 = vmatmul.mubr.f32.gmra.mxu0 %v1423
      %v1425 = vpop.f32.mrf.mxu0
      %v1426 = vadd.f32 %v1253, %v1425
      %v1427 = vpop.f32.mrf.mxu0
      %1428 = vmatprep.mubr.f32.mxu0 0.0
      %v1429 = vand.u32 %v498, 4294901760
      %1430 = vmatmul.mubr.f32.gmra.mxu0 %v1429
      %v1431 = vpop.f32.mrf.mxu0
      %v1432 = vadd.f32 %v1261, %v1431
      %v1433 = vpop.f32.mrf.mxu0
      %1434 = vmatprep.mubr.f32.mxu0 0.0
      %v1435 = vand.u32 %v501, 4294901760
      %1436 = vmatmul.mubr.f32.gmra.mxu0 %v1435
      %v1437 = vpop.f32.mrf.mxu0
      %v1438 = vadd.f32 %v1269, %v1437
      %v1439 = vpop.f32.mrf.mxu0
      %1440 = vmatprep.mubr.f32.mxu0 0.0
      %v1441 = vand.u32 %v504, 4294901760
      %1442 = vmatmul.mubr.f32.gmra.mxu0 %v1441
      %v1443 = vpop.f32.mrf.mxu0
      %v1444 = vadd.f32 %v1277, %v1443
      %v1445 = vpop.f32.mrf.mxu0
      %1446 = vdwg.mxu0
      %1447 = vmatprep.subr.mxu0 0.0
      %1448 = vmatpush1.msra.mxu0 0.0
      %1449 = vmatprep.subr.mxu0 0.0
      %1450 = vmatpush1.msra.mxu0 0.0
      %1451 = vmatprep.subr.mxu0 0.0
      %1452 = vmatpush1.msra.mxu0 0.0
      %1453 = vmatprep.subr.mxu0 0.0
      %1454 = vmatpush1.msra.mxu0 0.0
      %1455 = vmatprep.subr.mxu0 0.0
      %1456 = vmatpush1.msra.mxu0 0.0
      %1457 = vmatprep.subr.mxu0 0.0
      %1458 = vmatpush1.msra.mxu0 0.0
      %1459 = vmatprep.subr.mxu0 0.0
      %1460 = vmatpush1.msra.mxu0 0.0
      %1461 = vmatprep.subr.mxu0 0.0
      %1462 = vmatpush1.msra.mxu0 0.0
      %1463 = vmatprep.subr.mxu0 0.0
      %1464 = vmatpush1.msra.mxu0 0.0
      %1465 = vmatprep.subr.mxu0 0.0
      %1466 = vmatpush1.msra.mxu0 0.0
      %1467 = vmatprep.subr.mxu0 0.0
      %1468 = vmatpush1.msra.mxu0 0.0
      %1469 = vmatprep.subr.mxu0 0.0
      %1470 = vmatpush1.msra.mxu0 0.0
      %1471 = vmatprep.subr.mxu0 0.0
      %1472 = vmatpush1.msra.mxu0 0.0
      %1473 = vmatprep.subr.mxu0 0.0
      %1474 = vmatpush1.msra.mxu0 0.0
      %1475 = vmatprep.subr.mxu0 0.0
      %v1476 = vand.u32 %v440, 4294901760
      %1477 = vmatpush1.msra.mxu0 %v1476
      %1478 = vmatprep.subr.mxu0 0.0
      %v1479 = vand.u32 %v439, 4294901760
      %1480 = vmatpush1.msra.mxu0 %v1479
      %1481 = vmatprep.subr.mxu0 0.0
      %1482 = vmatpush2.msra.mxu0 0.0
      %1483 = vmatprep.subr.mxu0 0.0
      %1484 = vmatpush2.msra.mxu0 0.0
      %1485 = vmatprep.subr.mxu0 0.0
      %1486 = vmatpush2.msra.mxu0 0.0
      %1487 = vmatprep.subr.mxu0 0.0
      %1488 = vmatpush2.msra.mxu0 0.0
      %1489 = vmatprep.subr.mxu0 0.0
      %1490 = vmatpush2.msra.mxu0 0.0
      %1491 = vmatprep.subr.mxu0 0.0
      %1492 = vmatpush2.msra.mxu0 0.0
      %1493 = vmatprep.subr.mxu0 0.0
      %1494 = vmatpush2.msra.mxu0 0.0
      %1495 = vmatprep.subr.mxu0 0.0
      %1496 = vmatpush2.msra.mxu0 0.0
      %1497 = vmatprep.subr.mxu0 0.0
      %1498 = vmatpush2.msra.mxu0 0.0
      %1499 = vmatprep.subr.mxu0 0.0
      %1500 = vmatpush2.msra.mxu0 0.0
      %1501 = vmatprep.subr.mxu0 0.0
      %1502 = vmatpush2.msra.mxu0 0.0
      %1503 = vmatprep.subr.mxu0 0.0
      %1504 = vmatpush2.msra.mxu0 0.0
      %1505 = vmatprep.subr.mxu0 0.0
      %1506 = vmatpush2.msra.mxu0 0.0
      %1507 = vmatprep.subr.mxu0 0.0
      %1508 = vmatpush2.msra.mxu0 0.0
      %1509 = vmatprep.subr.mxu0 0.0
      %1510 = vmatpush2.msra.mxu0 0.0
      %1511 = vmatprep.subr.mxu0 0.0
      %1512 = vmatpush2.msra.mxu0 0.0
      %1513 = vmatprep.mubr.f32.mxu0 0.0
      %v1514 = vand.u32 %v459, 4294901760
      %1515 = vmatmul.mubr.f32.gmra.mxu0 %v1514
      %v1516 = vpop.f32.mrf.mxu0
      %v1517 = vadd.f32 %v1354, %v1516
      %v1518 = vpop.f32.mrf.mxu0
      %1519 = vmatprep.mubr.f32.mxu0 0.0
      %v1520 = vand.u32 %v462, 4294901760
      %1521 = vmatmul.mubr.f32.gmra.mxu0 %v1520
      %v1522 = vpop.f32.mrf.mxu0
      %v1523 = vadd.f32 %v1360, %v1522
      %v1524 = vpop.f32.mrf.mxu0
      %1525 = vmatprep.mubr.f32.mxu0 0.0
      %v1526 = vand.u32 %v465, 4294901760
      %1527 = vmatmul.mubr.f32.gmra.mxu0 %v1526
      %v1528 = vpop.f32.mrf.mxu0
      %v1529 = vadd.f32 %v1366, %v1528
      %v1530 = vpop.f32.mrf.mxu0
      %1531 = vmatprep.mubr.f32.mxu0 0.0
      %v1532 = vand.u32 %v468, 4294901760
      %1533 = vmatmul.mubr.f32.gmra.mxu0 %v1532
      %v1534 = vpop.f32.mrf.mxu0
      %v1535 = vadd.f32 %v1372, %v1534
      %v1536 = vpop.f32.mrf.mxu0
      %1537 = vmatprep.mubr.f32.mxu0 0.0
      %v1538 = vand.u32 %v471, 4294901760
      %1539 = vmatmul.mubr.f32.gmra.mxu0 %v1538
      %v1540 = vpop.f32.mrf.mxu0
      %v1541 = vadd.f32 %v1378, %v1540
      %v1542 = vpop.f32.mrf.mxu0
      %1543 = vmatprep.mubr.f32.mxu0 0.0
      %v1544 = vand.u32 %v474, 4294901760
      %1545 = vmatmul.mubr.f32.gmra.mxu0 %v1544
      %v1546 = vpop.f32.mrf.mxu0
      %v1547 = vadd.f32 %v1384, %v1546
      %v1548 = vpop.f32.mrf.mxu0
      %1549 = vmatprep.mubr.f32.mxu0 0.0
      %v1550 = vand.u32 %v477, 4294901760
      %1551 = vmatmul.mubr.f32.gmra.mxu0 %v1550
      %v1552 = vpop.f32.mrf.mxu0
      %v1553 = vadd.f32 %v1390, %v1552
      %v1554 = vpop.f32.mrf.mxu0
      %1555 = vmatprep.mubr.f32.mxu0 0.0
      %v1556 = vand.u32 %v480, 4294901760
      %1557 = vmatmul.mubr.f32.gmra.mxu0 %v1556
      %v1558 = vpop.f32.mrf.mxu0
      %v1559 = vadd.f32 %v1396, %v1558
      %v1560 = vpop.f32.mrf.mxu0
      %1561 = vmatprep.mubr.f32.mxu0 0.0
      %v1562 = vand.u32 %v483, 4294901760
      %1563 = vmatmul.mubr.f32.gmra.mxu0 %v1562
      %v1564 = vpop.f32.mrf.mxu0
      %v1565 = vadd.f32 %v1402, %v1564
      %v1566 = vpop.f32.mrf.mxu0
      %1567 = vmatprep.mubr.f32.mxu0 0.0
      %v1568 = vand.u32 %v486, 4294901760
      %1569 = vmatmul.mubr.f32.gmra.mxu0 %v1568
      %v1570 = vpop.f32.mrf.mxu0
      %v1571 = vadd.f32 %v1408, %v1570
      %v1572 = vpop.f32.mrf.mxu0
      %1573 = vmatprep.mubr.f32.mxu0 0.0
      %v1574 = vand.u32 %v489, 4294901760
      %1575 = vmatmul.mubr.f32.gmra.mxu0 %v1574
      %v1576 = vpop.f32.mrf.mxu0
      %v1577 = vadd.f32 %v1414, %v1576
      %v1578 = vpop.f32.mrf.mxu0
      %1579 = vmatprep.mubr.f32.mxu0 0.0
      %v1580 = vand.u32 %v492, 4294901760
      %1581 = vmatmul.mubr.f32.gmra.mxu0 %v1580
      %v1582 = vpop.f32.mrf.mxu0
      %v1583 = vadd.f32 %v1420, %v1582
      %v1584 = vpop.f32.mrf.mxu0
      %1585 = vmatprep.mubr.f32.mxu0 0.0
      %v1586 = vand.u32 %v495, 4294901760
      %1587 = vmatmul.mubr.f32.gmra.mxu0 %v1586
      %v1588 = vpop.f32.mrf.mxu0
      %v1589 = vadd.f32 %v1426, %v1588
      %v1590 = vpop.f32.mrf.mxu0
      %1591 = vmatprep.mubr.f32.mxu0 0.0
      %v1592 = vand.u32 %v498, 4294901760
      %1593 = vmatmul.mubr.f32.gmra.mxu0 %v1592
      %v1594 = vpop.f32.mrf.mxu0
      %v1595 = vadd.f32 %v1432, %v1594
      %v1596 = vpop.f32.mrf.mxu0
      %1597 = vmatprep.mubr.f32.mxu0 0.0
      %v1598 = vand.u32 %v501, 4294901760
      %1599 = vmatmul.mubr.f32.gmra.mxu0 %v1598
      %v1600 = vpop.f32.mrf.mxu0
      %v1601 = vadd.f32 %v1438, %v1600
      %v1602 = vpop.f32.mrf.mxu0
      %1603 = vmatprep.mubr.f32.mxu0 0.0
      %v1604 = vand.u32 %v504, 4294901760
      %1605 = vmatmul.mubr.f32.gmra.mxu0 %v1604
      %v1606 = vpop.f32.mrf.mxu0
      %v1607 = vadd.f32 %v1444, %v1606
      %v1608 = vpop.f32.mrf.mxu0
      %1609 = vdwg.mxu0
      %v1610 = vld [vmem:[%s4] sm:$0x1]
      %v1612 = vlaneseq
      %v1613 = vshrl.u32 %v1612, 7
      %v1614 = vsub.s32 0, %v1613
      %v1615 = vrot.slane %v1610, %v1614
      %v1617 = vadd.f32 %v1517, %v1615
      %v1618 = vadd.f32 %v1523, %v1615
      %v1619 = vadd.f32 %v1529, %v1615
      %v1620 = vadd.f32 %v1535, %v1615
      %v1621 = vadd.f32 %v1541, %v1615
      %v1622 = vadd.f32 %v1547, %v1615
      %v1623 = vadd.f32 %v1553, %v1615
      %v1624 = vadd.f32 %v1559, %v1615
      %v1625 = vadd.f32 %v1565, %v1615
      %v1626 = vadd.f32 %v1571, %v1615
      %v1627 = vadd.f32 %v1577, %v1615
      %v1628 = vadd.f32 %v1583, %v1615
      %v1629 = vadd.f32 %v1589, %v1615
      %v1630 = vadd.f32 %v1595, %v1615
      %v1631 = vadd.f32 %v1601, %v1615
      %v1632 = vadd.f32 %v1607, %v1615
      %vm1633 = vcmp.gt.f32.partialorder %v1617, 0.0
      %vm1634 = vcmp.gt.f32.partialorder %v1618, 0.0
      %vm1635 = vcmp.gt.f32.partialorder %v1619, 0.0
      %vm1636 = vcmp.gt.f32.partialorder %v1620, 0.0
      %vm1637 = vcmp.gt.f32.partialorder %v1621, 0.0
      %vm1638 = vcmp.gt.f32.partialorder %v1622, 0.0
      %vm1639 = vcmp.gt.f32.partialorder %v1623, 0.0
      %vm1640 = vcmp.gt.f32.partialorder %v1624, 0.0
      %vm1641 = vcmp.gt.f32.partialorder %v1625, 0.0
      %vm1642 = vcmp.gt.f32.partialorder %v1626, 0.0
      %vm1643 = vcmp.gt.f32.partialorder %v1627, 0.0
      %vm1644 = vcmp.gt.f32.partialorder %v1628, 0.0
      %vm1645 = vcmp.gt.f32.partialorder %v1629, 0.0
      %vm1646 = vcmp.gt.f32.partialorder %v1630, 0.0
      %vm1647 = vcmp.gt.f32.partialorder %v1631, 0.0
      %vm1648 = vcmp.gt.f32.partialorder %v1632, 0.0
      %v1649 = vmul.f32 %v1617, 0.01
      %v1650 = vmul.f32 %v1618, 0.01
      %v1651 = vmul.f32 %v1619, 0.01
      %v1652 = vmul.f32 %v1620, 0.01
      %v1653 = vmul.f32 %v1621, 0.01
      %v1654 = vmul.f32 %v1622, 0.01
      %v1655 = vmul.f32 %v1623, 0.01
      %v1656 = vmul.f32 %v1624, 0.01
      %v1657 = vmul.f32 %v1625, 0.01
      %v1658 = vmul.f32 %v1626, 0.01
      %v1659 = vmul.f32 %v1627, 0.01
      %v1660 = vmul.f32 %v1628, 0.01
      %v1661 = vmul.f32 %v1629, 0.01
      %v1662 = vmul.f32 %v1630, 0.01
      %v1663 = vmul.f32 %v1631, 0.01
      %v1664 = vmul.f32 %v1632, 0.01
      %v1665 = vsel %vm1633, %v1617, %v1649
      %v1666 = vsel %vm1634, %v1618, %v1650
      %v1667 = vsel %vm1635, %v1619, %v1651
      %v1668 = vsel %vm1636, %v1620, %v1652
      %v1669 = vsel %vm1637, %v1621, %v1653
      %v1670 = vsel %vm1638, %v1622, %v1654
      %v1671 = vsel %vm1639, %v1623, %v1655
      %v1672 = vsel %vm1640, %v1624, %v1656
      %v1673 = vsel %vm1641, %v1625, %v1657
      %v1674 = vsel %vm1642, %v1626, %v1658
      %v1675 = vsel %vm1643, %v1627, %v1659
      %v1676 = vsel %vm1644, %v1628, %v1660
      %v1677 = vsel %vm1645, %v1629, %v1661
      %v1678 = vsel %vm1646, %v1630, %v1662
      %v1679 = vsel %vm1647, %v1631, %v1663
      %v1680 = vsel %vm1648, %v1632, %v1664
      %v1681 = vld [vmem:[%s5] sm:$0x1]
      %v1683 = vlaneseq
      %v1684 = vshrl.u32 %v1683, 7
      %v1685 = vsub.s32 0, %v1684
      %v1686 = vrot.slane %v1681, %v1685
      %v1688 = vmul.f32 %v1665, %v1686
      %v1689 = vmul.f32 %v1666, %v1686
      %v1690 = vmul.f32 %v1667, %v1686
      %v1691 = vmul.f32 %v1668, %v1686
      %v1692 = vmul.f32 %v1669, %v1686
      %v1693 = vmul.f32 %v1670, %v1686
      %v1694 = vmul.f32 %v1671, %v1686
      %v1695 = vmul.f32 %v1672, %v1686
      %v1696 = vmul.f32 %v1673, %v1686
      %v1697 = vmul.f32 %v1674, %v1686
      %v1698 = vmul.f32 %v1675, %v1686
      %v1699 = vmul.f32 %v1676, %v1686
      %v1700 = vmul.f32 %v1677, %v1686
      %v1701 = vmul.f32 %v1678, %v1686
      %v1702 = vmul.f32 %v1679, %v1686
      %v1703 = vmul.f32 %v1680, %v1686
      %1704 = vadd.xlane.f32.xlu0 %v1688
      %v1705 = vpop.xlane.xlu0 %1704
      %1706 = vadd.xlane.f32.xlu0 %v1689
      %v1707 = vpop.xlane.xlu0 %1706
      %1708 = vadd.xlane.f32.xlu0 %v1690
      %v1709 = vpop.xlane.xlu0 %1708
      %1710 = vadd.xlane.f32.xlu0 %v1691
      %v1711 = vpop.xlane.xlu0 %1710
      %1712 = vadd.xlane.f32.xlu0 %v1692
      %v1713 = vpop.xlane.xlu0 %1712
      %1714 = vadd.xlane.f32.xlu0 %v1693
      %v1715 = vpop.xlane.xlu0 %1714
      %1716 = vadd.xlane.f32.xlu0 %v1694
      %v1717 = vpop.xlane.xlu0 %1716
      %1718 = vadd.xlane.f32.xlu0 %v1695
      %v1719 = vpop.xlane.xlu0 %1718
      %1720 = vadd.xlane.f32.xlu0 %v1696
      %v1721 = vpop.xlane.xlu0 %1720
      %1722 = vadd.xlane.f32.xlu0 %v1697
      %v1723 = vpop.xlane.xlu0 %1722
      %1724 = vadd.xlane.f32.xlu0 %v1698
      %v1725 = vpop.xlane.xlu0 %1724
      %1726 = vadd.xlane.f32.xlu0 %v1699
      %v1727 = vpop.xlane.xlu0 %1726
      %1728 = vadd.xlane.f32.xlu0 %v1700
      %v1729 = vpop.xlane.xlu0 %1728
      %1730 = vadd.xlane.f32.xlu0 %v1701
      %v1731 = vpop.xlane.xlu0 %1730
      %1732 = vadd.xlane.f32.xlu0 %v1702
      %v1733 = vpop.xlane.xlu0 %1732
      %1734 = vadd.xlane.f32.xlu0 %v1703
      %v1735 = vpop.xlane.xlu0 %1734
      %v1736 = vld [vmem:[%s409] sm:$0xff]
      %v1737 = vld [vmem:[%s409 + $0x8] sm:$0xff]
      %v1738 = vld [vmem:[%s409 + $0x10] sm:$0xff]
      %v1739 = vld [vmem:[%s409 + $0x18] sm:$0xff]
      %v1740 = vld [vmem:[%s409 + $0x20] sm:$0xff]
      %v1741 = vld [vmem:[%s409 + $0x28] sm:$0xff]
      %v1742 = vld [vmem:[%s409 + $0x30] sm:$0xff]
      %v1743 = vld [vmem:[%s409 + $0x38] sm:$0xff]
      %v1744 = vld [vmem:[%s409 + $0x40] sm:$0xff]
      %v1745 = vld [vmem:[%s409 + $0x48] sm:$0xff]
      %v1746 = vld [vmem:[%s409 + $0x50] sm:$0xff]
      %v1747 = vld [vmem:[%s409 + $0x58] sm:$0xff]
      %v1748 = vld [vmem:[%s409 + $0x60] sm:$0xff]
      %v1749 = vld [vmem:[%s409 + $0x68] sm:$0xff]
      %v1750 = vld [vmem:[%s409 + $0x70] sm:$0xff]
      %v1751 = vld [vmem:[%s409 + $0x78] sm:$0xff]
      %v1752 = vadd.f32 %v1705, %v1736
      %v1753 = vadd.f32 %v1707, %v1737
      %v1754 = vadd.f32 %v1709, %v1738
      %v1755 = vadd.f32 %v1711, %v1739
      %v1756 = vadd.f32 %v1713, %v1740
      %v1757 = vadd.f32 %v1715, %v1741
      %v1758 = vadd.f32 %v1717, %v1742
      %v1759 = vadd.f32 %v1719, %v1743
      %v1760 = vadd.f32 %v1721, %v1744
      %v1761 = vadd.f32 %v1723, %v1745
      %v1762 = vadd.f32 %v1725, %v1746
      %v1763 = vadd.f32 %v1727, %v1747
      %v1764 = vadd.f32 %v1729, %v1748
      %v1765 = vadd.f32 %v1731, %v1749
      %v1766 = vadd.f32 %v1733, %v1750
      %v1767 = vadd.f32 %v1735, %v1751
      %v1768 = vld [vmem:[#allocation2] sm:$0x1]
      %v1770 = vlaneseq
      %v1771 = vshrl.u32 %v1770, 7
      %v1772 = vsub.s32 0, %v1771
      %v1773 = vrot.slane %v1768, %v1772
      %v1775 = vadd.f32 %v1752, %v1773
      %v1776 = vadd.f32 %v1753, %v1773
      %v1777 = vadd.f32 %v1754, %v1773
      %v1778 = vadd.f32 %v1755, %v1773
      %v1779 = vadd.f32 %v1756, %v1773
      %v1780 = vadd.f32 %v1757, %v1773
      %v1781 = vadd.f32 %v1758, %v1773
      %v1782 = vadd.f32 %v1759, %v1773
      %v1783 = vadd.f32 %v1760, %v1773
      %v1784 = vadd.f32 %v1761, %v1773
      %v1785 = vadd.f32 %v1762, %v1773
      %v1786 = vadd.f32 %v1763, %v1773
      %v1787 = vadd.f32 %v1764, %v1773
      %v1788 = vadd.f32 %v1765, %v1773
      %v1789 = vadd.f32 %v1766, %v1773
      %v1790 = vadd.f32 %v1767, %v1773
      %vm1791 = vcmp.gt.f32.partialorder %v1775, 0.0
      %vm1792 = vcmp.gt.f32.partialorder %v1776, 0.0
      %vm1793 = vcmp.gt.f32.partialorder %v1777, 0.0
      %vm1794 = vcmp.gt.f32.partialorder %v1778, 0.0
      %vm1795 = vcmp.gt.f32.partialorder %v1779, 0.0
      %vm1796 = vcmp.gt.f32.partialorder %v1780, 0.0
      %vm1797 = vcmp.gt.f32.partialorder %v1781, 0.0
      %vm1798 = vcmp.gt.f32.partialorder %v1782, 0.0
      %vm1799 = vcmp.gt.f32.partialorder %v1783, 0.0
      %vm1800 = vcmp.gt.f32.partialorder %v1784, 0.0
      %vm1801 = vcmp.gt.f32.partialorder %v1785, 0.0
      %vm1802 = vcmp.gt.f32.partialorder %v1786, 0.0
      %vm1803 = vcmp.gt.f32.partialorder %v1787, 0.0
      %vm1804 = vcmp.gt.f32.partialorder %v1788, 0.0
      %vm1805 = vcmp.gt.f32.partialorder %v1789, 0.0
      %vm1806 = vcmp.gt.f32.partialorder %v1790, 0.0
      %v1807 = vmul.f32 %v1775, 0.01
      %v1808 = vmul.f32 %v1776, 0.01
      %v1809 = vmul.f32 %v1777, 0.01
      %v1810 = vmul.f32 %v1778, 0.01
      %v1811 = vmul.f32 %v1779, 0.01
      %v1812 = vmul.f32 %v1780, 0.01
      %v1813 = vmul.f32 %v1781, 0.01
      %v1814 = vmul.f32 %v1782, 0.01
      %v1815 = vmul.f32 %v1783, 0.01
      %v1816 = vmul.f32 %v1784, 0.01
      %v1817 = vmul.f32 %v1785, 0.01
      %v1818 = vmul.f32 %v1786, 0.01
      %v1819 = vmul.f32 %v1787, 0.01
      %v1820 = vmul.f32 %v1788, 0.01
      %v1821 = vmul.f32 %v1789, 0.01
      %v1822 = vmul.f32 %v1790, 0.01
      %v1823 = vsel %vm1791, %v1775, %v1807
      %v1824 = vsel %vm1792, %v1776, %v1808
      %v1825 = vsel %vm1793, %v1777, %v1809
      %v1826 = vsel %vm1794, %v1778, %v1810
      %v1827 = vsel %vm1795, %v1779, %v1811
      %v1828 = vsel %vm1796, %v1780, %v1812
      %v1829 = vsel %vm1797, %v1781, %v1813
      %v1830 = vsel %vm1798, %v1782, %v1814
      %v1831 = vsel %vm1799, %v1783, %v1815
      %v1832 = vsel %vm1800, %v1784, %v1816
      %v1833 = vsel %vm1801, %v1785, %v1817
      %v1834 = vsel %vm1802, %v1786, %v1818
      %v1835 = vsel %vm1803, %v1787, %v1819
      %v1836 = vsel %vm1804, %v1788, %v1820
      %v1837 = vsel %vm1805, %v1789, %v1821
      %v1838 = vsel %vm1806, %v1790, %v1822
      %v1839 = vld [vmem:[%s7] sm:$0xff]
      %v1840 = vld [vmem:[%s7 + $0x8] sm:$0xff]
      %v1841 = vld [vmem:[%s7 + $0x10] sm:$0xff]
      %v1842 = vld [vmem:[%s7 + $0x18] sm:$0xff]
      %v1843 = vld [vmem:[%s7 + $0x20] sm:$0xff]
      %v1844 = vld [vmem:[%s7 + $0x28] sm:$0xff]
      %v1845 = vld [vmem:[%s7 + $0x30] sm:$0xff]
      %v1846 = vld [vmem:[%s7 + $0x38] sm:$0xff]
      %v1847 = vld [vmem:[%s7 + $0x40] sm:$0xff]
      %v1848 = vld [vmem:[%s7 + $0x48] sm:$0xff]
      %v1849 = vld [vmem:[%s7 + $0x50] sm:$0xff]
      %v1850 = vld [vmem:[%s7 + $0x58] sm:$0xff]
      %v1851 = vld [vmem:[%s7 + $0x60] sm:$0xff]
      %v1852 = vld [vmem:[%s7 + $0x68] sm:$0xff]
      %v1853 = vld [vmem:[%s7 + $0x70] sm:$0xff]
      %v1854 = vld [vmem:[%s7 + $0x78] sm:$0xff]
      %v1855 = vld [vmem:[%s8] sm:$0x1]
      %v1857 = vlaneseq
      %v1858 = vshrl.u32 %v1857, 7
      %v1859 = vsub.s32 0, %v1858
      %v1860 = vrot.slane %v1855, %v1859
      %1862 = vmatprep.subr.mxu0 0.0
      %v1863 = vand.u32 %v1854, 4294901760
      %1864 = vmatpush1.msra.mxu0 %v1863
      %1865 = vmatprep.subr.mxu0 0.0
      %v1866 = vand.u32 %v1853, 4294901760
      %1867 = vmatpush1.msra.mxu0 %v1866
      %1868 = vmatprep.subr.mxu0 0.0
      %v1869 = vand.u32 %v1852, 4294901760
      %1870 = vmatpush1.msra.mxu0 %v1869
      %1871 = vmatprep.subr.mxu0 0.0
      %v1872 = vand.u32 %v1851, 4294901760
      %1873 = vmatpush1.msra.mxu0 %v1872
      %1874 = vmatprep.subr.mxu0 0.0
      %v1875 = vand.u32 %v1850, 4294901760
      %1876 = vmatpush1.msra.mxu0 %v1875
      %1877 = vmatprep.subr.mxu0 0.0
      %v1878 = vand.u32 %v1849, 4294901760
      %1879 = vmatpush1.msra.mxu0 %v1878
      %1880 = vmatprep.subr.mxu0 0.0
      %v1881 = vand.u32 %v1848, 4294901760
      %1882 = vmatpush1.msra.mxu0 %v1881
      %1883 = vmatprep.subr.mxu0 0.0
      %v1884 = vand.u32 %v1847, 4294901760
      %1885 = vmatpush1.msra.mxu0 %v1884
      %1886 = vmatprep.subr.mxu0 0.0
      %v1887 = vand.u32 %v1846, 4294901760
      %1888 = vmatpush1.msra.mxu0 %v1887
      %1889 = vmatprep.subr.mxu0 0.0
      %v1890 = vand.u32 %v1845, 4294901760
      %1891 = vmatpush1.msra.mxu0 %v1890
      %1892 = vmatprep.subr.mxu0 0.0
      %v1893 = vand.u32 %v1844, 4294901760
      %1894 = vmatpush1.msra.mxu0 %v1893
      %1895 = vmatprep.subr.mxu0 0.0
      %v1896 = vand.u32 %v1843, 4294901760
      %1897 = vmatpush1.msra.mxu0 %v1896
      %1898 = vmatprep.subr.mxu0 0.0
      %v1899 = vand.u32 %v1842, 4294901760
      %1900 = vmatpush1.msra.mxu0 %v1899
      %1901 = vmatprep.subr.mxu0 0.0
      %v1902 = vand.u32 %v1841, 4294901760
      %1903 = vmatpush1.msra.mxu0 %v1902
      %1904 = vmatprep.subr.mxu0 0.0
      %v1905 = vand.u32 %v1840, 4294901760
      %1906 = vmatpush1.msra.mxu0 %v1905
      %1907 = vmatprep.subr.mxu0 0.0
      %v1908 = vand.u32 %v1839, 4294901760
      %1909 = vmatpush1.msra.mxu0 %v1908
      %1910 = vmatprep.subr.mxu0 0.0
      %1911 = vmatpush2.msra.mxu0 0.0
      %1912 = vmatprep.subr.mxu0 0.0
      %1913 = vmatpush2.msra.mxu0 0.0
      %1914 = vmatprep.subr.mxu0 0.0
      %1915 = vmatpush2.msra.mxu0 0.0
      %1916 = vmatprep.subr.mxu0 0.0
      %1917 = vmatpush2.msra.mxu0 0.0
      %1918 = vmatprep.subr.mxu0 0.0
      %1919 = vmatpush2.msra.mxu0 0.0
      %1920 = vmatprep.subr.mxu0 0.0
      %1921 = vmatpush2.msra.mxu0 0.0
      %1922 = vmatprep.subr.mxu0 0.0
      %1923 = vmatpush2.msra.mxu0 0.0
      %1924 = vmatprep.subr.mxu0 0.0
      %1925 = vmatpush2.msra.mxu0 0.0
      %1926 = vmatprep.subr.mxu0 0.0
      %1927 = vmatpush2.msra.mxu0 0.0
      %1928 = vmatprep.subr.mxu0 0.0
      %1929 = vmatpush2.msra.mxu0 0.0
      %1930 = vmatprep.subr.mxu0 0.0
      %1931 = vmatpush2.msra.mxu0 0.0
      %1932 = vmatprep.subr.mxu0 0.0
      %1933 = vmatpush2.msra.mxu0 0.0
      %1934 = vmatprep.subr.mxu0 0.0
      %1935 = vmatpush2.msra.mxu0 0.0
      %1936 = vmatprep.subr.mxu0 0.0
      %1937 = vmatpush2.msra.mxu0 0.0
      %1938 = vmatprep.subr.mxu0 0.0
      %1939 = vmatpush2.msra.mxu0 0.0
      %1940 = vmatprep.subr.mxu0 0.0
      %1941 = vmatpush2.msra.mxu0 0.0
      %1942 = vmatprep.mubr.f32.mxu0 0.0
      %v1943 = vand.u32 %v1665, 4294901760
      %v1944 = vsub.f32 %v1665, %v1943
      %v1945 = vand.u32 %v1944, 4294901760
      %v1946 = vsub.f32 %v1944, %v1945
      %v1947 = vand.u32 %v1946, 4294901760
      %1948 = vmatmul.mubr.f32.gmra.mxu0 %v1947
      %v1949 = vpop.f32.mrf.mxu0
      %v1950 = vadd.f32 %v1860, %v1949
      %v1951 = vpop.f32.mrf.mxu0
      %1952 = vmatprep.mubr.f32.mxu0 0.0
      %v1953 = vand.u32 %v1666, 4294901760
      %v1954 = vsub.f32 %v1666, %v1953
      %v1955 = vand.u32 %v1954, 4294901760
      %v1956 = vsub.f32 %v1954, %v1955
      %v1957 = vand.u32 %v1956, 4294901760
      %1958 = vmatmul.mubr.f32.gmra.mxu0 %v1957
      %v1959 = vpop.f32.mrf.mxu0
      %v1960 = vadd.f32 %v1860, %v1959
      %v1961 = vpop.f32.mrf.mxu0
      %1962 = vmatprep.mubr.f32.mxu0 0.0
      %v1963 = vand.u32 %v1667, 4294901760
      %v1964 = vsub.f32 %v1667, %v1963
      %v1965 = vand.u32 %v1964, 4294901760
      %v1966 = vsub.f32 %v1964, %v1965
      %v1967 = vand.u32 %v1966, 4294901760
      %1968 = vmatmul.mubr.f32.gmra.mxu0 %v1967
      %v1969 = vpop.f32.mrf.mxu0
      %v1970 = vadd.f32 %v1860, %v1969
      %v1971 = vpop.f32.mrf.mxu0
      %1972 = vmatprep.mubr.f32.mxu0 0.0
      %v1973 = vand.u32 %v1668, 4294901760
      %v1974 = vsub.f32 %v1668, %v1973
      %v1975 = vand.u32 %v1974, 4294901760
      %v1976 = vsub.f32 %v1974, %v1975
      %v1977 = vand.u32 %v1976, 4294901760
      %1978 = vmatmul.mubr.f32.gmra.mxu0 %v1977
      %v1979 = vpop.f32.mrf.mxu0
      %v1980 = vadd.f32 %v1860, %v1979
      %v1981 = vpop.f32.mrf.mxu0
      %1982 = vmatprep.mubr.f32.mxu0 0.0
      %v1983 = vand.u32 %v1669, 4294901760
      %v1984 = vsub.f32 %v1669, %v1983
      %v1985 = vand.u32 %v1984, 4294901760
      %v1986 = vsub.f32 %v1984, %v1985
      %v1987 = vand.u32 %v1986, 4294901760
      %1988 = vmatmul.mubr.f32.gmra.mxu0 %v1987
      %v1989 = vpop.f32.mrf.mxu0
      %v1990 = vadd.f32 %v1860, %v1989
      %v1991 = vpop.f32.mrf.mxu0
      %1992 = vmatprep.mubr.f32.mxu0 0.0
      %v1993 = vand.u32 %v1670, 4294901760
      %v1994 = vsub.f32 %v1670, %v1993
      %v1995 = vand.u32 %v1994, 4294901760
      %v1996 = vsub.f32 %v1994, %v1995
      %v1997 = vand.u32 %v1996, 4294901760
      %1998 = vmatmul.mubr.f32.gmra.mxu0 %v1997
      %v1999 = vpop.f32.mrf.mxu0
      %v2000 = vadd.f32 %v1860, %v1999
      %v2001 = vpop.f32.mrf.mxu0
      %2002 = vmatprep.mubr.f32.mxu0 0.0
      %v2003 = vand.u32 %v1671, 4294901760
      %v2004 = vsub.f32 %v1671, %v2003
      %v2005 = vand.u32 %v2004, 4294901760
      %v2006 = vsub.f32 %v2004, %v2005
      %v2007 = vand.u32 %v2006, 4294901760
      %2008 = vmatmul.mubr.f32.gmra.mxu0 %v2007
      %v2009 = vpop.f32.mrf.mxu0
      %v2010 = vadd.f32 %v1860, %v2009
      %v2011 = vpop.f32.mrf.mxu0
      %2012 = vmatprep.mubr.f32.mxu0 0.0
      %v2013 = vand.u32 %v1672, 4294901760
      %v2014 = vsub.f32 %v1672, %v2013
      %v2015 = vand.u32 %v2014, 4294901760
      %v2016 = vsub.f32 %v2014, %v2015
      %v2017 = vand.u32 %v2016, 4294901760
      %2018 = vmatmul.mubr.f32.gmra.mxu0 %v2017
      %v2019 = vpop.f32.mrf.mxu0
      %v2020 = vadd.f32 %v1860, %v2019
      %v2021 = vpop.f32.mrf.mxu0
      %2022 = vmatprep.mubr.f32.mxu0 0.0
      %v2023 = vand.u32 %v1673, 4294901760
      %v2024 = vsub.f32 %v1673, %v2023
      %v2025 = vand.u32 %v2024, 4294901760
      %v2026 = vsub.f32 %v2024, %v2025
      %v2027 = vand.u32 %v2026, 4294901760
      %2028 = vmatmul.mubr.f32.gmra.mxu0 %v2027
      %v2029 = vpop.f32.mrf.mxu0
      %v2030 = vadd.f32 %v1860, %v2029
      %v2031 = vpop.f32.mrf.mxu0
      %2032 = vmatprep.mubr.f32.mxu0 0.0
      %v2033 = vand.u32 %v1674, 4294901760
      %v2034 = vsub.f32 %v1674, %v2033
      %v2035 = vand.u32 %v2034, 4294901760
      %v2036 = vsub.f32 %v2034, %v2035
      %v2037 = vand.u32 %v2036, 4294901760
      %2038 = vmatmul.mubr.f32.gmra.mxu0 %v2037
      %v2039 = vpop.f32.mrf.mxu0
      %v2040 = vadd.f32 %v1860, %v2039
      %v2041 = vpop.f32.mrf.mxu0
      %2042 = vmatprep.mubr.f32.mxu0 0.0
      %v2043 = vand.u32 %v1675, 4294901760
      %v2044 = vsub.f32 %v1675, %v2043
      %v2045 = vand.u32 %v2044, 4294901760
      %v2046 = vsub.f32 %v2044, %v2045
      %v2047 = vand.u32 %v2046, 4294901760
      %2048 = vmatmul.mubr.f32.gmra.mxu0 %v2047
      %v2049 = vpop.f32.mrf.mxu0
      %v2050 = vadd.f32 %v1860, %v2049
      %v2051 = vpop.f32.mrf.mxu0
      %2052 = vmatprep.mubr.f32.mxu0 0.0
      %v2053 = vand.u32 %v1676, 4294901760
      %v2054 = vsub.f32 %v1676, %v2053
      %v2055 = vand.u32 %v2054, 4294901760
      %v2056 = vsub.f32 %v2054, %v2055
      %v2057 = vand.u32 %v2056, 4294901760
      %2058 = vmatmul.mubr.f32.gmra.mxu0 %v2057
      %v2059 = vpop.f32.mrf.mxu0
      %v2060 = vadd.f32 %v1860, %v2059
      %v2061 = vpop.f32.mrf.mxu0
      %2062 = vmatprep.mubr.f32.mxu0 0.0
      %v2063 = vand.u32 %v1677, 4294901760
      %v2064 = vsub.f32 %v1677, %v2063
      %v2065 = vand.u32 %v2064, 4294901760
      %v2066 = vsub.f32 %v2064, %v2065
      %v2067 = vand.u32 %v2066, 4294901760
      %2068 = vmatmul.mubr.f32.gmra.mxu0 %v2067
      %v2069 = vpop.f32.mrf.mxu0
      %v2070 = vadd.f32 %v1860, %v2069
      %v2071 = vpop.f32.mrf.mxu0
      %2072 = vmatprep.mubr.f32.mxu0 0.0
      %v2073 = vand.u32 %v1678, 4294901760
      %v2074 = vsub.f32 %v1678, %v2073
      %v2075 = vand.u32 %v2074, 4294901760
      %v2076 = vsub.f32 %v2074, %v2075
      %v2077 = vand.u32 %v2076, 4294901760
      %2078 = vmatmul.mubr.f32.gmra.mxu0 %v2077
      %v2079 = vpop.f32.mrf.mxu0
      %v2080 = vadd.f32 %v1860, %v2079
      %v2081 = vpop.f32.mrf.mxu0
      %2082 = vmatprep.mubr.f32.mxu0 0.0
      %v2083 = vand.u32 %v1679, 4294901760
      %v2084 = vsub.f32 %v1679, %v2083
      %v2085 = vand.u32 %v2084, 4294901760
      %v2086 = vsub.f32 %v2084, %v2085
      %v2087 = vand.u32 %v2086, 4294901760
      %2088 = vmatmul.mubr.f32.gmra.mxu0 %v2087
      %v2089 = vpop.f32.mrf.mxu0
      %v2090 = vadd.f32 %v1860, %v2089
      %v2091 = vpop.f32.mrf.mxu0
      %2092 = vmatprep.mubr.f32.mxu0 0.0
      %v2093 = vand.u32 %v1680, 4294901760
      %v2094 = vsub.f32 %v1680, %v2093
      %v2095 = vand.u32 %v2094, 4294901760
      %v2096 = vsub.f32 %v2094, %v2095
      %v2097 = vand.u32 %v2096, 4294901760
      %2098 = vmatmul.mubr.f32.gmra.mxu0 %v2097
      %v2099 = vpop.f32.mrf.mxu0
      %v2100 = vadd.f32 %v1860, %v2099
      %v2101 = vpop.f32.mrf.mxu0
      %2102 = vdwg.mxu0
      %2103 = vmatprep.subr.mxu0 0.0
      %v2104 = vand.u32 %v1854, 4294901760
      %v2105 = vsub.f32 %v1854, %v2104
      %v2106 = vand.u32 %v2105, 4294901760
      %v2107 = vsub.f32 %v2105, %v2106
      %v2108 = vand.u32 %v2107, 4294901760
      %2109 = vmatpush1.msra.mxu0 %v2108
      %2110 = vmatprep.subr.mxu0 0.0
      %v2111 = vand.u32 %v1853, 4294901760
      %v2112 = vsub.f32 %v1853, %v2111
      %v2113 = vand.u32 %v2112, 4294901760
      %v2114 = vsub.f32 %v2112, %v2113
      %v2115 = vand.u32 %v2114, 4294901760
      %2116 = vmatpush1.msra.mxu0 %v2115
      %2117 = vmatprep.subr.mxu0 0.0
      %v2118 = vand.u32 %v1852, 4294901760
      %v2119 = vsub.f32 %v1852, %v2118
      %v2120 = vand.u32 %v2119, 4294901760
      %v2121 = vsub.f32 %v2119, %v2120
      %v2122 = vand.u32 %v2121, 4294901760
      %2123 = vmatpush1.msra.mxu0 %v2122
      %2124 = vmatprep.subr.mxu0 0.0
      %v2125 = vand.u32 %v1851, 4294901760
      %v2126 = vsub.f32 %v1851, %v2125
      %v2127 = vand.u32 %v2126, 4294901760
      %v2128 = vsub.f32 %v2126, %v2127
      %v2129 = vand.u32 %v2128, 4294901760
      %2130 = vmatpush1.msra.mxu0 %v2129
      %2131 = vmatprep.subr.mxu0 0.0
      %v2132 = vand.u32 %v1850, 4294901760
      %v2133 = vsub.f32 %v1850, %v2132
      %v2134 = vand.u32 %v2133, 4294901760
      %v2135 = vsub.f32 %v2133, %v2134
      %v2136 = vand.u32 %v2135, 4294901760
      %2137 = vmatpush1.msra.mxu0 %v2136
      %2138 = vmatprep.subr.mxu0 0.0
      %v2139 = vand.u32 %v1849, 4294901760
      %v2140 = vsub.f32 %v1849, %v2139
      %v2141 = vand.u32 %v2140, 4294901760
      %v2142 = vsub.f32 %v2140, %v2141
      %v2143 = vand.u32 %v2142, 4294901760
      %2144 = vmatpush1.msra.mxu0 %v2143
      %2145 = vmatprep.subr.mxu0 0.0
      %v2146 = vand.u32 %v1848, 4294901760
      %v2147 = vsub.f32 %v1848, %v2146
      %v2148 = vand.u32 %v2147, 4294901760
      %v2149 = vsub.f32 %v2147, %v2148
      %v2150 = vand.u32 %v2149, 4294901760
      %2151 = vmatpush1.msra.mxu0 %v2150
      %2152 = vmatprep.subr.mxu0 0.0
      %v2153 = vand.u32 %v1847, 4294901760
      %v2154 = vsub.f32 %v1847, %v2153
      %v2155 = vand.u32 %v2154, 4294901760
      %v2156 = vsub.f32 %v2154, %v2155
      %v2157 = vand.u32 %v2156, 4294901760
      %2158 = vmatpush1.msra.mxu0 %v2157
      %2159 = vmatprep.subr.mxu0 0.0
      %v2160 = vand.u32 %v1846, 4294901760
      %v2161 = vsub.f32 %v1846, %v2160
      %v2162 = vand.u32 %v2161, 4294901760
      %v2163 = vsub.f32 %v2161, %v2162
      %v2164 = vand.u32 %v2163, 4294901760
      %2165 = vmatpush1.msra.mxu0 %v2164
      %2166 = vmatprep.subr.mxu0 0.0
      %v2167 = vand.u32 %v1845, 4294901760
      %v2168 = vsub.f32 %v1845, %v2167
      %v2169 = vand.u32 %v2168, 4294901760
      %v2170 = vsub.f32 %v2168, %v2169
      %v2171 = vand.u32 %v2170, 4294901760
      %2172 = vmatpush1.msra.mxu0 %v2171
      %2173 = vmatprep.subr.mxu0 0.0
      %v2174 = vand.u32 %v1844, 4294901760
      %v2175 = vsub.f32 %v1844, %v2174
      %v2176 = vand.u32 %v2175, 4294901760
      %v2177 = vsub.f32 %v2175, %v2176
      %v2178 = vand.u32 %v2177, 4294901760
      %2179 = vmatpush1.msra.mxu0 %v2178
      %2180 = vmatprep.subr.mxu0 0.0
      %v2181 = vand.u32 %v1843, 4294901760
      %v2182 = vsub.f32 %v1843, %v2181
      %v2183 = vand.u32 %v2182, 4294901760
      %v2184 = vsub.f32 %v2182, %v2183
      %v2185 = vand.u32 %v2184, 4294901760
      %2186 = vmatpush1.msra.mxu0 %v2185
      %2187 = vmatprep.subr.mxu0 0.0
      %v2188 = vand.u32 %v1842, 4294901760
      %v2189 = vsub.f32 %v1842, %v2188
      %v2190 = vand.u32 %v2189, 4294901760
      %v2191 = vsub.f32 %v2189, %v2190
      %v2192 = vand.u32 %v2191, 4294901760
      %2193 = vmatpush1.msra.mxu0 %v2192
      %2194 = vmatprep.subr.mxu0 0.0
      %v2195 = vand.u32 %v1841, 4294901760
      %v2196 = vsub.f32 %v1841, %v2195
      %v2197 = vand.u32 %v2196, 4294901760
      %v2198 = vsub.f32 %v2196, %v2197
      %v2199 = vand.u32 %v2198, 4294901760
      %2200 = vmatpush1.msra.mxu0 %v2199
      %2201 = vmatprep.subr.mxu0 0.0
      %v2202 = vand.u32 %v1840, 4294901760
      %v2203 = vsub.f32 %v1840, %v2202
      %v2204 = vand.u32 %v2203, 4294901760
      %v2205 = vsub.f32 %v2203, %v2204
      %v2206 = vand.u32 %v2205, 4294901760
      %2207 = vmatpush1.msra.mxu0 %v2206
      %2208 = vmatprep.subr.mxu0 0.0
      %v2209 = vand.u32 %v1839, 4294901760
      %v2210 = vsub.f32 %v1839, %v2209
      %v2211 = vand.u32 %v2210, 4294901760
      %v2212 = vsub.f32 %v2210, %v2211
      %v2213 = vand.u32 %v2212, 4294901760
      %2214 = vmatpush1.msra.mxu0 %v2213
      %2215 = vmatprep.subr.mxu0 0.0
      %2216 = vmatpush2.msra.mxu0 0.0
      %2217 = vmatprep.subr.mxu0 0.0
      %2218 = vmatpush2.msra.mxu0 0.0
      %2219 = vmatprep.subr.mxu0 0.0
      %2220 = vmatpush2.msra.mxu0 0.0
      %2221 = vmatprep.subr.mxu0 0.0
      %2222 = vmatpush2.msra.mxu0 0.0
      %2223 = vmatprep.subr.mxu0 0.0
      %2224 = vmatpush2.msra.mxu0 0.0
      %2225 = vmatprep.subr.mxu0 0.0
      %2226 = vmatpush2.msra.mxu0 0.0
      %2227 = vmatprep.subr.mxu0 0.0
      %2228 = vmatpush2.msra.mxu0 0.0
      %2229 = vmatprep.subr.mxu0 0.0
      %2230 = vmatpush2.msra.mxu0 0.0
      %2231 = vmatprep.subr.mxu0 0.0
      %2232 = vmatpush2.msra.mxu0 0.0
      %2233 = vmatprep.subr.mxu0 0.0
      %2234 = vmatpush2.msra.mxu0 0.0
      %2235 = vmatprep.subr.mxu0 0.0
      %2236 = vmatpush2.msra.mxu0 0.0
      %2237 = vmatprep.subr.mxu0 0.0
      %2238 = vmatpush2.msra.mxu0 0.0
      %2239 = vmatprep.subr.mxu0 0.0
      %2240 = vmatpush2.msra.mxu0 0.0
      %2241 = vmatprep.subr.mxu0 0.0
      %2242 = vmatpush2.msra.mxu0 0.0
      %2243 = vmatprep.subr.mxu0 0.0
      %2244 = vmatpush2.msra.mxu0 0.0
      %2245 = vmatprep.subr.mxu0 0.0
      %2246 = vmatpush2.msra.mxu0 0.0
      %2247 = vmatprep.mubr.f32.mxu0 0.0
      %v2248 = vand.u32 %v1665, 4294901760
      %2249 = vmatmul.mubr.f32.gmra.mxu0 %v2248
      %v2250 = vpop.f32.mrf.mxu0
      %v2251 = vadd.f32 %v1950, %v2250
      %v2252 = vpop.f32.mrf.mxu0
      %2253 = vmatprep.mubr.f32.mxu0 0.0
      %v2254 = vand.u32 %v1666, 4294901760
      %2255 = vmatmul.mubr.f32.gmra.mxu0 %v2254
      %v2256 = vpop.f32.mrf.mxu0
      %v2257 = vadd.f32 %v1960, %v2256
      %v2258 = vpop.f32.mrf.mxu0
      %2259 = vmatprep.mubr.f32.mxu0 0.0
      %v2260 = vand.u32 %v1667, 4294901760
      %2261 = vmatmul.mubr.f32.gmra.mxu0 %v2260
      %v2262 = vpop.f32.mrf.mxu0
      %v2263 = vadd.f32 %v1970, %v2262
      %v2264 = vpop.f32.mrf.mxu0
      %2265 = vmatprep.mubr.f32.mxu0 0.0
      %v2266 = vand.u32 %v1668, 4294901760
      %2267 = vmatmul.mubr.f32.gmra.mxu0 %v2266
      %v2268 = vpop.f32.mrf.mxu0
      %v2269 = vadd.f32 %v1980, %v2268
      %v2270 = vpop.f32.mrf.mxu0
      %2271 = vmatprep.mubr.f32.mxu0 0.0
      %v2272 = vand.u32 %v1669, 4294901760
      %2273 = vmatmul.mubr.f32.gmra.mxu0 %v2272
      %v2274 = vpop.f32.mrf.mxu0
      %v2275 = vadd.f32 %v1990, %v2274
      %v2276 = vpop.f32.mrf.mxu0
      %2277 = vmatprep.mubr.f32.mxu0 0.0
      %v2278 = vand.u32 %v1670, 4294901760
      %2279 = vmatmul.mubr.f32.gmra.mxu0 %v2278
      %v2280 = vpop.f32.mrf.mxu0
      %v2281 = vadd.f32 %v2000, %v2280
      %v2282 = vpop.f32.mrf.mxu0
      %2283 = vmatprep.mubr.f32.mxu0 0.0
      %v2284 = vand.u32 %v1671, 4294901760
      %2285 = vmatmul.mubr.f32.gmra.mxu0 %v2284
      %v2286 = vpop.f32.mrf.mxu0
      %v2287 = vadd.f32 %v2010, %v2286
      %v2288 = vpop.f32.mrf.mxu0
      %2289 = vmatprep.mubr.f32.mxu0 0.0
      %v2290 = vand.u32 %v1672, 4294901760
      %2291 = vmatmul.mubr.f32.gmra.mxu0 %v2290
      %v2292 = vpop.f32.mrf.mxu0
      %v2293 = vadd.f32 %v2020, %v2292
      %v2294 = vpop.f32.mrf.mxu0
      %2295 = vmatprep.mubr.f32.mxu0 0.0
      %v2296 = vand.u32 %v1673, 4294901760
      %2297 = vmatmul.mubr.f32.gmra.mxu0 %v2296
      %v2298 = vpop.f32.mrf.mxu0
      %v2299 = vadd.f32 %v2030, %v2298
      %v2300 = vpop.f32.mrf.mxu0
      %2301 = vmatprep.mubr.f32.mxu0 0.0
      %v2302 = vand.u32 %v1674, 4294901760
      %2303 = vmatmul.mubr.f32.gmra.mxu0 %v2302
      %v2304 = vpop.f32.mrf.mxu0
      %v2305 = vadd.f32 %v2040, %v2304
      %v2306 = vpop.f32.mrf.mxu0
      %2307 = vmatprep.mubr.f32.mxu0 0.0
      %v2308 = vand.u32 %v1675, 4294901760
      %2309 = vmatmul.mubr.f32.gmra.mxu0 %v2308
      %v2310 = vpop.f32.mrf.mxu0
      %v2311 = vadd.f32 %v2050, %v2310
      %v2312 = vpop.f32.mrf.mxu0
      %2313 = vmatprep.mubr.f32.mxu0 0.0
      %v2314 = vand.u32 %v1676, 4294901760
      %2315 = vmatmul.mubr.f32.gmra.mxu0 %v2314
      %v2316 = vpop.f32.mrf.mxu0
      %v2317 = vadd.f32 %v2060, %v2316
      %v2318 = vpop.f32.mrf.mxu0
      %2319 = vmatprep.mubr.f32.mxu0 0.0
      %v2320 = vand.u32 %v1677, 4294901760
      %2321 = vmatmul.mubr.f32.gmra.mxu0 %v2320
      %v2322 = vpop.f32.mrf.mxu0
      %v2323 = vadd.f32 %v2070, %v2322
      %v2324 = vpop.f32.mrf.mxu0
      %2325 = vmatprep.mubr.f32.mxu0 0.0
      %v2326 = vand.u32 %v1678, 4294901760
      %2327 = vmatmul.mubr.f32.gmra.mxu0 %v2326
      %v2328 = vpop.f32.mrf.mxu0
      %v2329 = vadd.f32 %v2080, %v2328
      %v2330 = vpop.f32.mrf.mxu0
      %2331 = vmatprep.mubr.f32.mxu0 0.0
      %v2332 = vand.u32 %v1679, 4294901760
      %2333 = vmatmul.mubr.f32.gmra.mxu0 %v2332
      %v2334 = vpop.f32.mrf.mxu0
      %v2335 = vadd.f32 %v2090, %v2334
      %v2336 = vpop.f32.mrf.mxu0
      %2337 = vmatprep.mubr.f32.mxu0 0.0
      %v2338 = vand.u32 %v1680, 4294901760
      %2339 = vmatmul.mubr.f32.gmra.mxu0 %v2338
      %v2340 = vpop.f32.mrf.mxu0
      %v2341 = vadd.f32 %v2100, %v2340
      %v2342 = vpop.f32.mrf.mxu0
      %2343 = vdwg.mxu0
      %2344 = vmatprep.subr.mxu0 0.0
      %v2345 = vand.u32 %v1854, 4294901760
      %v2346 = vsub.f32 %v1854, %v2345
      %2347 = vmatpush1.msra.mxu0 %v2346
      %2348 = vmatprep.subr.mxu0 0.0
      %v2349 = vand.u32 %v1853, 4294901760
      %v2350 = vsub.f32 %v1853, %v2349
      %2351 = vmatpush1.msra.mxu0 %v2350
      %2352 = vmatprep.subr.mxu0 0.0
      %v2353 = vand.u32 %v1852, 4294901760
      %v2354 = vsub.f32 %v1852, %v2353
      %2355 = vmatpush1.msra.mxu0 %v2354
      %2356 = vmatprep.subr.mxu0 0.0
      %v2357 = vand.u32 %v1851, 4294901760
      %v2358 = vsub.f32 %v1851, %v2357
      %2359 = vmatpush1.msra.mxu0 %v2358
      %2360 = vmatprep.subr.mxu0 0.0
      %v2361 = vand.u32 %v1850, 4294901760
      %v2362 = vsub.f32 %v1850, %v2361
      %2363 = vmatpush1.msra.mxu0 %v2362
      %2364 = vmatprep.subr.mxu0 0.0
      %v2365 = vand.u32 %v1849, 4294901760
      %v2366 = vsub.f32 %v1849, %v2365
      %2367 = vmatpush1.msra.mxu0 %v2366
      %2368 = vmatprep.subr.mxu0 0.0
      %v2369 = vand.u32 %v1848, 4294901760
      %v2370 = vsub.f32 %v1848, %v2369
      %2371 = vmatpush1.msra.mxu0 %v2370
      %2372 = vmatprep.subr.mxu0 0.0
      %v2373 = vand.u32 %v1847, 4294901760
      %v2374 = vsub.f32 %v1847, %v2373
      %2375 = vmatpush1.msra.mxu0 %v2374
      %2376 = vmatprep.subr.mxu0 0.0
      %v2377 = vand.u32 %v1846, 4294901760
      %v2378 = vsub.f32 %v1846, %v2377
      %2379 = vmatpush1.msra.mxu0 %v2378
      %2380 = vmatprep.subr.mxu0 0.0
      %v2381 = vand.u32 %v1845, 4294901760
      %v2382 = vsub.f32 %v1845, %v2381
      %2383 = vmatpush1.msra.mxu0 %v2382
      %2384 = vmatprep.subr.mxu0 0.0
      %v2385 = vand.u32 %v1844, 4294901760
      %v2386 = vsub.f32 %v1844, %v2385
      %2387 = vmatpush1.msra.mxu0 %v2386
      %2388 = vmatprep.subr.mxu0 0.0
      %v2389 = vand.u32 %v1843, 4294901760
      %v2390 = vsub.f32 %v1843, %v2389
      %2391 = vmatpush1.msra.mxu0 %v2390
      %2392 = vmatprep.subr.mxu0 0.0
      %v2393 = vand.u32 %v1842, 4294901760
      %v2394 = vsub.f32 %v1842, %v2393
      %2395 = vmatpush1.msra.mxu0 %v2394
      %2396 = vmatprep.subr.mxu0 0.0
      %v2397 = vand.u32 %v1841, 4294901760
      %v2398 = vsub.f32 %v1841, %v2397
      %2399 = vmatpush1.msra.mxu0 %v2398
      %2400 = vmatprep.subr.mxu0 0.0
      %v2401 = vand.u32 %v1840, 4294901760
      %v2402 = vsub.f32 %v1840, %v2401
      %2403 = vmatpush1.msra.mxu0 %v2402
      %2404 = vmatprep.subr.mxu0 0.0
      %v2405 = vand.u32 %v1839, 4294901760
      %v2406 = vsub.f32 %v1839, %v2405
      %2407 = vmatpush1.msra.mxu0 %v2406
      %2408 = vmatprep.subr.mxu0 0.0
      %2409 = vmatpush2.msra.mxu0 0.0
      %2410 = vmatprep.subr.mxu0 0.0
      %2411 = vmatpush2.msra.mxu0 0.0
      %2412 = vmatprep.subr.mxu0 0.0
      %2413 = vmatpush2.msra.mxu0 0.0
      %2414 = vmatprep.subr.mxu0 0.0
      %2415 = vmatpush2.msra.mxu0 0.0
      %2416 = vmatprep.subr.mxu0 0.0
      %2417 = vmatpush2.msra.mxu0 0.0
      %2418 = vmatprep.subr.mxu0 0.0
      %2419 = vmatpush2.msra.mxu0 0.0
      %2420 = vmatprep.subr.mxu0 0.0
      %2421 = vmatpush2.msra.mxu0 0.0
      %2422 = vmatprep.subr.mxu0 0.0
      %2423 = vmatpush2.msra.mxu0 0.0
      %2424 = vmatprep.subr.mxu0 0.0
      %2425 = vmatpush2.msra.mxu0 0.0
      %2426 = vmatprep.subr.mxu0 0.0
      %2427 = vmatpush2.msra.mxu0 0.0
      %2428 = vmatprep.subr.mxu0 0.0
      %2429 = vmatpush2.msra.mxu0 0.0
      %2430 = vmatprep.subr.mxu0 0.0
      %2431 = vmatpush2.msra.mxu0 0.0
      %2432 = vmatprep.subr.mxu0 0.0
      %2433 = vmatpush2.msra.mxu0 0.0
      %2434 = vmatprep.subr.mxu0 0.0
      %2435 = vmatpush2.msra.mxu0 0.0
      %2436 = vmatprep.subr.mxu0 0.0
      %2437 = vmatpush2.msra.mxu0 0.0
      %2438 = vmatprep.subr.mxu0 0.0
      %2439 = vmatpush2.msra.mxu0 0.0
      %2440 = vmatprep.mubr.f32.mxu0 0.0
      %v2441 = vand.u32 %v1665, 4294901760
      %v2442 = vsub.f32 %v1665, %v2441
      %2443 = vmatmul.mubr.f32.gmra.mxu0 %v2442
      %v2444 = vpop.f32.mrf.mxu0
      %v2445 = vadd.f32 %v2251, %v2444
      %v2446 = vpop.f32.mrf.mxu0
      %2447 = vmatprep.mubr.f32.mxu0 0.0
      %v2448 = vand.u32 %v1666, 4294901760
      %v2449 = vsub.f32 %v1666, %v2448
      %2450 = vmatmul.mubr.f32.gmra.mxu0 %v2449
      %v2451 = vpop.f32.mrf.mxu0
      %v2452 = vadd.f32 %v2257, %v2451
      %v2453 = vpop.f32.mrf.mxu0
      %2454 = vmatprep.mubr.f32.mxu0 0.0
      %v2455 = vand.u32 %v1667, 4294901760
      %v2456 = vsub.f32 %v1667, %v2455
      %2457 = vmatmul.mubr.f32.gmra.mxu0 %v2456
      %v2458 = vpop.f32.mrf.mxu0
      %v2459 = vadd.f32 %v2263, %v2458
      %v2460 = vpop.f32.mrf.mxu0
      %2461 = vmatprep.mubr.f32.mxu0 0.0
      %v2462 = vand.u32 %v1668, 4294901760
      %v2463 = vsub.f32 %v1668, %v2462
      %2464 = vmatmul.mubr.f32.gmra.mxu0 %v2463
      %v2465 = vpop.f32.mrf.mxu0
      %v2466 = vadd.f32 %v2269, %v2465
      %v2467 = vpop.f32.mrf.mxu0
      %2468 = vmatprep.mubr.f32.mxu0 0.0
      %v2469 = vand.u32 %v1669, 4294901760
      %v2470 = vsub.f32 %v1669, %v2469
      %2471 = vmatmul.mubr.f32.gmra.mxu0 %v2470
      %v2472 = vpop.f32.mrf.mxu0
      %v2473 = vadd.f32 %v2275, %v2472
      %v2474 = vpop.f32.mrf.mxu0
      %2475 = vmatprep.mubr.f32.mxu0 0.0
      %v2476 = vand.u32 %v1670, 4294901760
      %v2477 = vsub.f32 %v1670, %v2476
      %2478 = vmatmul.mubr.f32.gmra.mxu0 %v2477
      %v2479 = vpop.f32.mrf.mxu0
      %v2480 = vadd.f32 %v2281, %v2479
      %v2481 = vpop.f32.mrf.mxu0
      %2482 = vmatprep.mubr.f32.mxu0 0.0
      %v2483 = vand.u32 %v1671, 4294901760
      %v2484 = vsub.f32 %v1671, %v2483
      %2485 = vmatmul.mubr.f32.gmra.mxu0 %v2484
      %v2486 = vpop.f32.mrf.mxu0
      %v2487 = vadd.f32 %v2287, %v2486
      %v2488 = vpop.f32.mrf.mxu0
      %2489 = vmatprep.mubr.f32.mxu0 0.0
      %v2490 = vand.u32 %v1672, 4294901760
      %v2491 = vsub.f32 %v1672, %v2490
      %2492 = vmatmul.mubr.f32.gmra.mxu0 %v2491
      %v2493 = vpop.f32.mrf.mxu0
      %v2494 = vadd.f32 %v2293, %v2493
      %v2495 = vpop.f32.mrf.mxu0
      %2496 = vmatprep.mubr.f32.mxu0 0.0
      %v2497 = vand.u32 %v1673, 4294901760
      %v2498 = vsub.f32 %v1673, %v2497
      %2499 = vmatmul.mubr.f32.gmra.mxu0 %v2498
      %v2500 = vpop.f32.mrf.mxu0
      %v2501 = vadd.f32 %v2299, %v2500
      %v2502 = vpop.f32.mrf.mxu0
      %2503 = vmatprep.mubr.f32.mxu0 0.0
      %v2504 = vand.u32 %v1674, 4294901760
      %v2505 = vsub.f32 %v1674, %v2504
      %2506 = vmatmul.mubr.f32.gmra.mxu0 %v2505
      %v2507 = vpop.f32.mrf.mxu0
      %v2508 = vadd.f32 %v2305, %v2507
      %v2509 = vpop.f32.mrf.mxu0
      %2510 = vmatprep.mubr.f32.mxu0 0.0
      %v2511 = vand.u32 %v1675, 4294901760
      %v2512 = vsub.f32 %v1675, %v2511
      %2513 = vmatmul.mubr.f32.gmra.mxu0 %v2512
      %v2514 = vpop.f32.mrf.mxu0
      %v2515 = vadd.f32 %v2311, %v2514
      %v2516 = vpop.f32.mrf.mxu0
      %2517 = vmatprep.mubr.f32.mxu0 0.0
      %v2518 = vand.u32 %v1676, 4294901760
      %v2519 = vsub.f32 %v1676, %v2518
      %2520 = vmatmul.mubr.f32.gmra.mxu0 %v2519
      %v2521 = vpop.f32.mrf.mxu0
      %v2522 = vadd.f32 %v2317, %v2521
      %v2523 = vpop.f32.mrf.mxu0
      %2524 = vmatprep.mubr.f32.mxu0 0.0
      %v2525 = vand.u32 %v1677, 4294901760
      %v2526 = vsub.f32 %v1677, %v2525
      %2527 = vmatmul.mubr.f32.gmra.mxu0 %v2526
      %v2528 = vpop.f32.mrf.mxu0
      %v2529 = vadd.f32 %v2323, %v2528
      %v2530 = vpop.f32.mrf.mxu0
      %2531 = vmatprep.mubr.f32.mxu0 0.0
      %v2532 = vand.u32 %v1678, 4294901760
      %v2533 = vsub.f32 %v1678, %v2532
      %2534 = vmatmul.mubr.f32.gmra.mxu0 %v2533
      %v2535 = vpop.f32.mrf.mxu0
      %v2536 = vadd.f32 %v2329, %v2535
      %v2537 = vpop.f32.mrf.mxu0
      %2538 = vmatprep.mubr.f32.mxu0 0.0
      %v2539 = vand.u32 %v1679, 4294901760
      %v2540 = vsub.f32 %v1679, %v2539
      %2541 = vmatmul.mubr.f32.gmra.mxu0 %v2540
      %v2542 = vpop.f32.mrf.mxu0
      %v2543 = vadd.f32 %v2335, %v2542
      %v2544 = vpop.f32.mrf.mxu0
      %2545 = vmatprep.mubr.f32.mxu0 0.0
      %v2546 = vand.u32 %v1680, 4294901760
      %v2547 = vsub.f32 %v1680, %v2546
      %2548 = vmatmul.mubr.f32.gmra.mxu0 %v2547
      %v2549 = vpop.f32.mrf.mxu0
      %v2550 = vadd.f32 %v2341, %v2549
      %v2551 = vpop.f32.mrf.mxu0
      %2552 = vdwg.mxu0
      %2553 = vmatprep.subr.mxu0 0.0
      %v2554 = vand.u32 %v1854, 4294901760
      %2555 = vmatpush1.msra.mxu0 %v2554
      %2556 = vmatprep.subr.mxu0 0.0
      %v2557 = vand.u32 %v1853, 4294901760
      %2558 = vmatpush1.msra.mxu0 %v2557
      %2559 = vmatprep.subr.mxu0 0.0
      %v2560 = vand.u32 %v1852, 4294901760
      %2561 = vmatpush1.msra.mxu0 %v2560
      %2562 = vmatprep.subr.mxu0 0.0
      %v2563 = vand.u32 %v1851, 4294901760
      %2564 = vmatpush1.msra.mxu0 %v2563
      %2565 = vmatprep.subr.mxu0 0.0
      %v2566 = vand.u32 %v1850, 4294901760
      %2567 = vmatpush1.msra.mxu0 %v2566
      %2568 = vmatprep.subr.mxu0 0.0
      %v2569 = vand.u32 %v1849, 4294901760
      %2570 = vmatpush1.msra.mxu0 %v2569
      %2571 = vmatprep.subr.mxu0 0.0
      %v2572 = vand.u32 %v1848, 4294901760
      %2573 = vmatpush1.msra.mxu0 %v2572
      %2574 = vmatprep.subr.mxu0 0.0
      %v2575 = vand.u32 %v1847, 4294901760
      %2576 = vmatpush1.msra.mxu0 %v2575
      %2577 = vmatprep.subr.mxu0 0.0
      %v2578 = vand.u32 %v1846, 4294901760
      %2579 = vmatpush1.msra.mxu0 %v2578
      %2580 = vmatprep.subr.mxu0 0.0
      %v2581 = vand.u32 %v1845, 4294901760
      %2582 = vmatpush1.msra.mxu0 %v2581
      %2583 = vmatprep.subr.mxu0 0.0
      %v2584 = vand.u32 %v1844, 4294901760
      %2585 = vmatpush1.msra.mxu0 %v2584
      %2586 = vmatprep.subr.mxu0 0.0
      %v2587 = vand.u32 %v1843, 4294901760
      %2588 = vmatpush1.msra.mxu0 %v2587
      %2589 = vmatprep.subr.mxu0 0.0
      %v2590 = vand.u32 %v1842, 4294901760
      %2591 = vmatpush1.msra.mxu0 %v2590
      %2592 = vmatprep.subr.mxu0 0.0
      %v2593 = vand.u32 %v1841, 4294901760
      %2594 = vmatpush1.msra.mxu0 %v2593
      %2595 = vmatprep.subr.mxu0 0.0
      %v2596 = vand.u32 %v1840, 4294901760
      %2597 = vmatpush1.msra.mxu0 %v2596
      %2598 = vmatprep.subr.mxu0 0.0
      %v2599 = vand.u32 %v1839, 4294901760
      %2600 = vmatpush1.msra.mxu0 %v2599
      %2601 = vmatprep.subr.mxu0 0.0
      %2602 = vmatpush2.msra.mxu0 0.0
      %2603 = vmatprep.subr.mxu0 0.0
      %2604 = vmatpush2.msra.mxu0 0.0
      %2605 = vmatprep.subr.mxu0 0.0
      %2606 = vmatpush2.msra.mxu0 0.0
      %2607 = vmatprep.subr.mxu0 0.0
      %2608 = vmatpush2.msra.mxu0 0.0
      %2609 = vmatprep.subr.mxu0 0.0
      %2610 = vmatpush2.msra.mxu0 0.0
      %2611 = vmatprep.subr.mxu0 0.0
      %2612 = vmatpush2.msra.mxu0 0.0
      %2613 = vmatprep.subr.mxu0 0.0
      %2614 = vmatpush2.msra.mxu0 0.0
      %2615 = vmatprep.subr.mxu0 0.0
      %2616 = vmatpush2.msra.mxu0 0.0
      %2617 = vmatprep.subr.mxu0 0.0
      %2618 = vmatpush2.msra.mxu0 0.0
      %2619 = vmatprep.subr.mxu0 0.0
      %2620 = vmatpush2.msra.mxu0 0.0
      %2621 = vmatprep.subr.mxu0 0.0
      %2622 = vmatpush2.msra.mxu0 0.0
      %2623 = vmatprep.subr.mxu0 0.0
      %2624 = vmatpush2.msra.mxu0 0.0
      %2625 = vmatprep.subr.mxu0 0.0
      %2626 = vmatpush2.msra.mxu0 0.0
      %2627 = vmatprep.subr.mxu0 0.0
      %2628 = vmatpush2.msra.mxu0 0.0
      %2629 = vmatprep.subr.mxu0 0.0
      %2630 = vmatpush2.msra.mxu0 0.0
      %2631 = vmatprep.subr.mxu0 0.0
      %2632 = vmatpush2.msra.mxu0 0.0
      %2633 = vmatprep.mubr.f32.mxu0 0.0
      %v2634 = vand.u32 %v1665, 4294901760
      %v2635 = vsub.f32 %v1665, %v2634
      %v2636 = vand.u32 %v2635, 4294901760
      %2637 = vmatmul.mubr.f32.gmra.mxu0 %v2636
      %v2638 = vpop.f32.mrf.mxu0
      %v2639 = vadd.f32 %v2445, %v2638
      %v2640 = vpop.f32.mrf.mxu0
      %2641 = vmatprep.mubr.f32.mxu0 0.0
      %v2642 = vand.u32 %v1666, 4294901760
      %v2643 = vsub.f32 %v1666, %v2642
      %v2644 = vand.u32 %v2643, 4294901760
      %2645 = vmatmul.mubr.f32.gmra.mxu0 %v2644
      %v2646 = vpop.f32.mrf.mxu0
      %v2647 = vadd.f32 %v2452, %v2646
      %v2648 = vpop.f32.mrf.mxu0
      %2649 = vmatprep.mubr.f32.mxu0 0.0
      %v2650 = vand.u32 %v1667, 4294901760
      %v2651 = vsub.f32 %v1667, %v2650
      %v2652 = vand.u32 %v2651, 4294901760
      %2653 = vmatmul.mubr.f32.gmra.mxu0 %v2652
      %v2654 = vpop.f32.mrf.mxu0
      %v2655 = vadd.f32 %v2459, %v2654
      %v2656 = vpop.f32.mrf.mxu0
      %2657 = vmatprep.mubr.f32.mxu0 0.0
      %v2658 = vand.u32 %v1668, 4294901760
      %v2659 = vsub.f32 %v1668, %v2658
      %v2660 = vand.u32 %v2659, 4294901760
      %2661 = vmatmul.mubr.f32.gmra.mxu0 %v2660
      %v2662 = vpop.f32.mrf.mxu0
      %v2663 = vadd.f32 %v2466, %v2662
      %v2664 = vpop.f32.mrf.mxu0
      %2665 = vmatprep.mubr.f32.mxu0 0.0
      %v2666 = vand.u32 %v1669, 4294901760
      %v2667 = vsub.f32 %v1669, %v2666
      %v2668 = vand.u32 %v2667, 4294901760
      %2669 = vmatmul.mubr.f32.gmra.mxu0 %v2668
      %v2670 = vpop.f32.mrf.mxu0
      %v2671 = vadd.f32 %v2473, %v2670
      %v2672 = vpop.f32.mrf.mxu0
      %2673 = vmatprep.mubr.f32.mxu0 0.0
      %v2674 = vand.u32 %v1670, 4294901760
      %v2675 = vsub.f32 %v1670, %v2674
      %v2676 = vand.u32 %v2675, 4294901760
      %2677 = vmatmul.mubr.f32.gmra.mxu0 %v2676
      %v2678 = vpop.f32.mrf.mxu0
      %v2679 = vadd.f32 %v2480, %v2678
      %v2680 = vpop.f32.mrf.mxu0
      %2681 = vmatprep.mubr.f32.mxu0 0.0
      %v2682 = vand.u32 %v1671, 4294901760
      %v2683 = vsub.f32 %v1671, %v2682
      %v2684 = vand.u32 %v2683, 4294901760
      %2685 = vmatmul.mubr.f32.gmra.mxu0 %v2684
      %v2686 = vpop.f32.mrf.mxu0
      %v2687 = vadd.f32 %v2487, %v2686
      %v2688 = vpop.f32.mrf.mxu0
      %2689 = vmatprep.mubr.f32.mxu0 0.0
      %v2690 = vand.u32 %v1672, 4294901760
      %v2691 = vsub.f32 %v1672, %v2690
      %v2692 = vand.u32 %v2691, 4294901760
      %2693 = vmatmul.mubr.f32.gmra.mxu0 %v2692
      %v2694 = vpop.f32.mrf.mxu0
      %v2695 = vadd.f32 %v2494, %v2694
      %v2696 = vpop.f32.mrf.mxu0
      %2697 = vmatprep.mubr.f32.mxu0 0.0
      %v2698 = vand.u32 %v1673, 4294901760
      %v2699 = vsub.f32 %v1673, %v2698
      %v2700 = vand.u32 %v2699, 4294901760
      %2701 = vmatmul.mubr.f32.gmra.mxu0 %v2700
      %v2702 = vpop.f32.mrf.mxu0
      %v2703 = vadd.f32 %v2501, %v2702
      %v2704 = vpop.f32.mrf.mxu0
      %2705 = vmatprep.mubr.f32.mxu0 0.0
      %v2706 = vand.u32 %v1674, 4294901760
      %v2707 = vsub.f32 %v1674, %v2706
      %v2708 = vand.u32 %v2707, 4294901760
      %2709 = vmatmul.mubr.f32.gmra.mxu0 %v2708
      %v2710 = vpop.f32.mrf.mxu0
      %v2711 = vadd.f32 %v2508, %v2710
      %v2712 = vpop.f32.mrf.mxu0
      %2713 = vmatprep.mubr.f32.mxu0 0.0
      %v2714 = vand.u32 %v1675, 4294901760
      %v2715 = vsub.f32 %v1675, %v2714
      %v2716 = vand.u32 %v2715, 4294901760
      %2717 = vmatmul.mubr.f32.gmra.mxu0 %v2716
      %v2718 = vpop.f32.mrf.mxu0
      %v2719 = vadd.f32 %v2515, %v2718
      %v2720 = vpop.f32.mrf.mxu0
      %2721 = vmatprep.mubr.f32.mxu0 0.0
      %v2722 = vand.u32 %v1676, 4294901760
      %v2723 = vsub.f32 %v1676, %v2722
      %v2724 = vand.u32 %v2723, 4294901760
      %2725 = vmatmul.mubr.f32.gmra.mxu0 %v2724
      %v2726 = vpop.f32.mrf.mxu0
      %v2727 = vadd.f32 %v2522, %v2726
      %v2728 = vpop.f32.mrf.mxu0
      %2729 = vmatprep.mubr.f32.mxu0 0.0
      %v2730 = vand.u32 %v1677, 4294901760
      %v2731 = vsub.f32 %v1677, %v2730
      %v2732 = vand.u32 %v2731, 4294901760
      %2733 = vmatmul.mubr.f32.gmra.mxu0 %v2732
      %v2734 = vpop.f32.mrf.mxu0
      %v2735 = vadd.f32 %v2529, %v2734
      %v2736 = vpop.f32.mrf.mxu0
      %2737 = vmatprep.mubr.f32.mxu0 0.0
      %v2738 = vand.u32 %v1678, 4294901760
      %v2739 = vsub.f32 %v1678, %v2738
      %v2740 = vand.u32 %v2739, 4294901760
      %2741 = vmatmul.mubr.f32.gmra.mxu0 %v2740
      %v2742 = vpop.f32.mrf.mxu0
      %v2743 = vadd.f32 %v2536, %v2742
      %v2744 = vpop.f32.mrf.mxu0
      %2745 = vmatprep.mubr.f32.mxu0 0.0
      %v2746 = vand.u32 %v1679, 4294901760
      %v2747 = vsub.f32 %v1679, %v2746
      %v2748 = vand.u32 %v2747, 4294901760
      %2749 = vmatmul.mubr.f32.gmra.mxu0 %v2748
      %v2750 = vpop.f32.mrf.mxu0
      %v2751 = vadd.f32 %v2543, %v2750
      %v2752 = vpop.f32.mrf.mxu0
      %2753 = vmatprep.mubr.f32.mxu0 0.0
      %v2754 = vand.u32 %v1680, 4294901760
      %v2755 = vsub.f32 %v1680, %v2754
      %v2756 = vand.u32 %v2755, 4294901760
      %2757 = vmatmul.mubr.f32.gmra.mxu0 %v2756
      %v2758 = vpop.f32.mrf.mxu0
      %v2759 = vadd.f32 %v2550, %v2758
      %v2760 = vpop.f32.mrf.mxu0
      %2761 = vdwg.mxu0
      %2762 = vmatprep.subr.mxu0 0.0
      %v2763 = vand.u32 %v1854, 4294901760
      %v2764 = vsub.f32 %v1854, %v2763
      %v2765 = vand.u32 %v2764, 4294901760
      %2766 = vmatpush1.msra.mxu0 %v2765
      %2767 = vmatprep.subr.mxu0 0.0
      %v2768 = vand.u32 %v1853, 4294901760
      %v2769 = vsub.f32 %v1853, %v2768
      %v2770 = vand.u32 %v2769, 4294901760
      %2771 = vmatpush1.msra.mxu0 %v2770
      %2772 = vmatprep.subr.mxu0 0.0
      %v2773 = vand.u32 %v1852, 4294901760
      %v2774 = vsub.f32 %v1852, %v2773
      %v2775 = vand.u32 %v2774, 4294901760
      %2776 = vmatpush1.msra.mxu0 %v2775
      %2777 = vmatprep.subr.mxu0 0.0
      %v2778 = vand.u32 %v1851, 4294901760
      %v2779 = vsub.f32 %v1851, %v2778
      %v2780 = vand.u32 %v2779, 4294901760
      %2781 = vmatpush1.msra.mxu0 %v2780
      %2782 = vmatprep.subr.mxu0 0.0
      %v2783 = vand.u32 %v1850, 4294901760
      %v2784 = vsub.f32 %v1850, %v2783
      %v2785 = vand.u32 %v2784, 4294901760
      %2786 = vmatpush1.msra.mxu0 %v2785
      %2787 = vmatprep.subr.mxu0 0.0
      %v2788 = vand.u32 %v1849, 4294901760
      %v2789 = vsub.f32 %v1849, %v2788
      %v2790 = vand.u32 %v2789, 4294901760
      %2791 = vmatpush1.msra.mxu0 %v2790
      %2792 = vmatprep.subr.mxu0 0.0
      %v2793 = vand.u32 %v1848, 4294901760
      %v2794 = vsub.f32 %v1848, %v2793
      %v2795 = vand.u32 %v2794, 4294901760
      %2796 = vmatpush1.msra.mxu0 %v2795
      %2797 = vmatprep.subr.mxu0 0.0
      %v2798 = vand.u32 %v1847, 4294901760
      %v2799 = vsub.f32 %v1847, %v2798
      %v2800 = vand.u32 %v2799, 4294901760
      %2801 = vmatpush1.msra.mxu0 %v2800
      %2802 = vmatprep.subr.mxu0 0.0
      %v2803 = vand.u32 %v1846, 4294901760
      %v2804 = vsub.f32 %v1846, %v2803
      %v2805 = vand.u32 %v2804, 4294901760
      %2806 = vmatpush1.msra.mxu0 %v2805
      %2807 = vmatprep.subr.mxu0 0.0
      %v2808 = vand.u32 %v1845, 4294901760
      %v2809 = vsub.f32 %v1845, %v2808
      %v2810 = vand.u32 %v2809, 4294901760
      %2811 = vmatpush1.msra.mxu0 %v2810
      %2812 = vmatprep.subr.mxu0 0.0
      %v2813 = vand.u32 %v1844, 4294901760
      %v2814 = vsub.f32 %v1844, %v2813
      %v2815 = vand.u32 %v2814, 4294901760
      %2816 = vmatpush1.msra.mxu0 %v2815
      %2817 = vmatprep.subr.mxu0 0.0
      %v2818 = vand.u32 %v1843, 4294901760
      %v2819 = vsub.f32 %v1843, %v2818
      %v2820 = vand.u32 %v2819, 4294901760
      %2821 = vmatpush1.msra.mxu0 %v2820
      %2822 = vmatprep.subr.mxu0 0.0
      %v2823 = vand.u32 %v1842, 4294901760
      %v2824 = vsub.f32 %v1842, %v2823
      %v2825 = vand.u32 %v2824, 4294901760
      %2826 = vmatpush1.msra.mxu0 %v2825
      %2827 = vmatprep.subr.mxu0 0.0
      %v2828 = vand.u32 %v1841, 4294901760
      %v2829 = vsub.f32 %v1841, %v2828
      %v2830 = vand.u32 %v2829, 4294901760
      %2831 = vmatpush1.msra.mxu0 %v2830
      %2832 = vmatprep.subr.mxu0 0.0
      %v2833 = vand.u32 %v1840, 4294901760
      %v2834 = vsub.f32 %v1840, %v2833
      %v2835 = vand.u32 %v2834, 4294901760
      %2836 = vmatpush1.msra.mxu0 %v2835
      %2837 = vmatprep.subr.mxu0 0.0
      %v2838 = vand.u32 %v1839, 4294901760
      %v2839 = vsub.f32 %v1839, %v2838
      %v2840 = vand.u32 %v2839, 4294901760
      %2841 = vmatpush1.msra.mxu0 %v2840
      %2842 = vmatprep.subr.mxu0 0.0
      %2843 = vmatpush2.msra.mxu0 0.0
      %2844 = vmatprep.subr.mxu0 0.0
      %2845 = vmatpush2.msra.mxu0 0.0
      %2846 = vmatprep.subr.mxu0 0.0
      %2847 = vmatpush2.msra.mxu0 0.0
      %2848 = vmatprep.subr.mxu0 0.0
      %2849 = vmatpush2.msra.mxu0 0.0
      %2850 = vmatprep.subr.mxu0 0.0
      %2851 = vmatpush2.msra.mxu0 0.0
      %2852 = vmatprep.subr.mxu0 0.0
      %2853 = vmatpush2.msra.mxu0 0.0
      %2854 = vmatprep.subr.mxu0 0.0
      %2855 = vmatpush2.msra.mxu0 0.0
      %2856 = vmatprep.subr.mxu0 0.0
      %2857 = vmatpush2.msra.mxu0 0.0
      %2858 = vmatprep.subr.mxu0 0.0
      %2859 = vmatpush2.msra.mxu0 0.0
      %2860 = vmatprep.subr.mxu0 0.0
      %2861 = vmatpush2.msra.mxu0 0.0
      %2862 = vmatprep.subr.mxu0 0.0
      %2863 = vmatpush2.msra.mxu0 0.0
      %2864 = vmatprep.subr.mxu0 0.0
      %2865 = vmatpush2.msra.mxu0 0.0
      %2866 = vmatprep.subr.mxu0 0.0
      %2867 = vmatpush2.msra.mxu0 0.0
      %2868 = vmatprep.subr.mxu0 0.0
      %2869 = vmatpush2.msra.mxu0 0.0
      %2870 = vmatprep.subr.mxu0 0.0
      %2871 = vmatpush2.msra.mxu0 0.0
      %2872 = vmatprep.subr.mxu0 0.0
      %2873 = vmatpush2.msra.mxu0 0.0
      %2874 = vmatprep.mubr.f32.mxu0 0.0
      %v2875 = vand.u32 %v1665, 4294901760
      %2876 = vmatmul.mubr.f32.gmra.mxu0 %v2875
      %v2877 = vpop.f32.mrf.mxu0
      %v2878 = vadd.f32 %v2639, %v2877
      %v2879 = vpop.f32.mrf.mxu0
      %2880 = vmatprep.mubr.f32.mxu0 0.0
      %v2881 = vand.u32 %v1666, 4294901760
      %2882 = vmatmul.mubr.f32.gmra.mxu0 %v2881
      %v2883 = vpop.f32.mrf.mxu0
      %v2884 = vadd.f32 %v2647, %v2883
      %v2885 = vpop.f32.mrf.mxu0
      %2886 = vmatprep.mubr.f32.mxu0 0.0
      %v2887 = vand.u32 %v1667, 4294901760
      %2888 = vmatmul.mubr.f32.gmra.mxu0 %v2887
      %v2889 = vpop.f32.mrf.mxu0
      %v2890 = vadd.f32 %v2655, %v2889
      %v2891 = vpop.f32.mrf.mxu0
      %2892 = vmatprep.mubr.f32.mxu0 0.0
      %v2893 = vand.u32 %v1668, 4294901760
      %2894 = vmatmul.mubr.f32.gmra.mxu0 %v2893
      %v2895 = vpop.f32.mrf.mxu0
      %v2896 = vadd.f32 %v2663, %v2895
      %v2897 = vpop.f32.mrf.mxu0
      %2898 = vmatprep.mubr.f32.mxu0 0.0
      %v2899 = vand.u32 %v1669, 4294901760
      %2900 = vmatmul.mubr.f32.gmra.mxu0 %v2899
      %v2901 = vpop.f32.mrf.mxu0
      %v2902 = vadd.f32 %v2671, %v2901
      %v2903 = vpop.f32.mrf.mxu0
      %2904 = vmatprep.mubr.f32.mxu0 0.0
      %v2905 = vand.u32 %v1670, 4294901760
      %2906 = vmatmul.mubr.f32.gmra.mxu0 %v2905
      %v2907 = vpop.f32.mrf.mxu0
      %v2908 = vadd.f32 %v2679, %v2907
      %v2909 = vpop.f32.mrf.mxu0
      %2910 = vmatprep.mubr.f32.mxu0 0.0
      %v2911 = vand.u32 %v1671, 4294901760
      %2912 = vmatmul.mubr.f32.gmra.mxu0 %v2911
      %v2913 = vpop.f32.mrf.mxu0
      %v2914 = vadd.f32 %v2687, %v2913
      %v2915 = vpop.f32.mrf.mxu0
      %2916 = vmatprep.mubr.f32.mxu0 0.0
      %v2917 = vand.u32 %v1672, 4294901760
      %2918 = vmatmul.mubr.f32.gmra.mxu0 %v2917
      %v2919 = vpop.f32.mrf.mxu0
      %v2920 = vadd.f32 %v2695, %v2919
      %v2921 = vpop.f32.mrf.mxu0
      %2922 = vmatprep.mubr.f32.mxu0 0.0
      %v2923 = vand.u32 %v1673, 4294901760
      %2924 = vmatmul.mubr.f32.gmra.mxu0 %v2923
      %v2925 = vpop.f32.mrf.mxu0
      %v2926 = vadd.f32 %v2703, %v2925
      %v2927 = vpop.f32.mrf.mxu0
      %2928 = vmatprep.mubr.f32.mxu0 0.0
      %v2929 = vand.u32 %v1674, 4294901760
      %2930 = vmatmul.mubr.f32.gmra.mxu0 %v2929
      %v2931 = vpop.f32.mrf.mxu0
      %v2932 = vadd.f32 %v2711, %v2931
      %v2933 = vpop.f32.mrf.mxu0
      %2934 = vmatprep.mubr.f32.mxu0 0.0
      %v2935 = vand.u32 %v1675, 4294901760
      %2936 = vmatmul.mubr.f32.gmra.mxu0 %v2935
      %v2937 = vpop.f32.mrf.mxu0
      %v2938 = vadd.f32 %v2719, %v2937
      %v2939 = vpop.f32.mrf.mxu0
      %2940 = vmatprep.mubr.f32.mxu0 0.0
      %v2941 = vand.u32 %v1676, 4294901760
      %2942 = vmatmul.mubr.f32.gmra.mxu0 %v2941
      %v2943 = vpop.f32.mrf.mxu0
      %v2944 = vadd.f32 %v2727, %v2943
      %v2945 = vpop.f32.mrf.mxu0
      %2946 = vmatprep.mubr.f32.mxu0 0.0
      %v2947 = vand.u32 %v1677, 4294901760
      %2948 = vmatmul.mubr.f32.gmra.mxu0 %v2947
      %v2949 = vpop.f32.mrf.mxu0
      %v2950 = vadd.f32 %v2735, %v2949
      %v2951 = vpop.f32.mrf.mxu0
      %2952 = vmatprep.mubr.f32.mxu0 0.0
      %v2953 = vand.u32 %v1678, 4294901760
      %2954 = vmatmul.mubr.f32.gmra.mxu0 %v2953
      %v2955 = vpop.f32.mrf.mxu0
      %v2956 = vadd.f32 %v2743, %v2955
      %v2957 = vpop.f32.mrf.mxu0
      %2958 = vmatprep.mubr.f32.mxu0 0.0
      %v2959 = vand.u32 %v1679, 4294901760
      %2960 = vmatmul.mubr.f32.gmra.mxu0 %v2959
      %v2961 = vpop.f32.mrf.mxu0
      %v2962 = vadd.f32 %v2751, %v2961
      %v2963 = vpop.f32.mrf.mxu0
      %2964 = vmatprep.mubr.f32.mxu0 0.0
      %v2965 = vand.u32 %v1680, 4294901760
      %2966 = vmatmul.mubr.f32.gmra.mxu0 %v2965
      %v2967 = vpop.f32.mrf.mxu0
      %v2968 = vadd.f32 %v2759, %v2967
      %v2969 = vpop.f32.mrf.mxu0
      %2970 = vdwg.mxu0
      %2971 = vmatprep.subr.mxu0 0.0
      %v2972 = vand.u32 %v1854, 4294901760
      %2973 = vmatpush1.msra.mxu0 %v2972
      %2974 = vmatprep.subr.mxu0 0.0
      %v2975 = vand.u32 %v1853, 4294901760
      %2976 = vmatpush1.msra.mxu0 %v2975
      %2977 = vmatprep.subr.mxu0 0.0
      %v2978 = vand.u32 %v1852, 4294901760
      %2979 = vmatpush1.msra.mxu0 %v2978
      %2980 = vmatprep.subr.mxu0 0.0
      %v2981 = vand.u32 %v1851, 4294901760
      %2982 = vmatpush1.msra.mxu0 %v2981
      %2983 = vmatprep.subr.mxu0 0.0
      %v2984 = vand.u32 %v1850, 4294901760
      %2985 = vmatpush1.msra.mxu0 %v2984
      %2986 = vmatprep.subr.mxu0 0.0
      %v2987 = vand.u32 %v1849, 4294901760
      %2988 = vmatpush1.msra.mxu0 %v2987
      %2989 = vmatprep.subr.mxu0 0.0
      %v2990 = vand.u32 %v1848, 4294901760
      %2991 = vmatpush1.msra.mxu0 %v2990
      %2992 = vmatprep.subr.mxu0 0.0
      %v2993 = vand.u32 %v1847, 4294901760
      %2994 = vmatpush1.msra.mxu0 %v2993
      %2995 = vmatprep.subr.mxu0 0.0
      %v2996 = vand.u32 %v1846, 4294901760
      %2997 = vmatpush1.msra.mxu0 %v2996
      %2998 = vmatprep.subr.mxu0 0.0
      %v2999 = vand.u32 %v1845, 4294901760
      %3000 = vmatpush1.msra.mxu0 %v2999
      %3001 = vmatprep.subr.mxu0 0.0
      %v3002 = vand.u32 %v1844, 4294901760
      %3003 = vmatpush1.msra.mxu0 %v3002
      %3004 = vmatprep.subr.mxu0 0.0
      %v3005 = vand.u32 %v1843, 4294901760
      %3006 = vmatpush1.msra.mxu0 %v3005
      %3007 = vmatprep.subr.mxu0 0.0
      %v3008 = vand.u32 %v1842, 4294901760
      %3009 = vmatpush1.msra.mxu0 %v3008
      %3010 = vmatprep.subr.mxu0 0.0
      %v3011 = vand.u32 %v1841, 4294901760
      %3012 = vmatpush1.msra.mxu0 %v3011
      %3013 = vmatprep.subr.mxu0 0.0
      %v3014 = vand.u32 %v1840, 4294901760
      %3015 = vmatpush1.msra.mxu0 %v3014
      %3016 = vmatprep.subr.mxu0 0.0
      %v3017 = vand.u32 %v1839, 4294901760
      %3018 = vmatpush1.msra.mxu0 %v3017
      %3019 = vmatprep.subr.mxu0 0.0
      %3020 = vmatpush2.msra.mxu0 0.0
      %3021 = vmatprep.subr.mxu0 0.0
      %3022 = vmatpush2.msra.mxu0 0.0
      %3023 = vmatprep.subr.mxu0 0.0
      %3024 = vmatpush2.msra.mxu0 0.0
      %3025 = vmatprep.subr.mxu0 0.0
      %3026 = vmatpush2.msra.mxu0 0.0
      %3027 = vmatprep.subr.mxu0 0.0
      %3028 = vmatpush2.msra.mxu0 0.0
      %3029 = vmatprep.subr.mxu0 0.0
      %3030 = vmatpush2.msra.mxu0 0.0
      %3031 = vmatprep.subr.mxu0 0.0
      %3032 = vmatpush2.msra.mxu0 0.0
      %3033 = vmatprep.subr.mxu0 0.0
      %3034 = vmatpush2.msra.mxu0 0.0
      %3035 = vmatprep.subr.mxu0 0.0
      %3036 = vmatpush2.msra.mxu0 0.0
      %3037 = vmatprep.subr.mxu0 0.0
      %3038 = vmatpush2.msra.mxu0 0.0
      %3039 = vmatprep.subr.mxu0 0.0
      %3040 = vmatpush2.msra.mxu0 0.0
      %3041 = vmatprep.subr.mxu0 0.0
      %3042 = vmatpush2.msra.mxu0 0.0
      %3043 = vmatprep.subr.mxu0 0.0
      %3044 = vmatpush2.msra.mxu0 0.0
      %3045 = vmatprep.subr.mxu0 0.0
      %3046 = vmatpush2.msra.mxu0 0.0
      %3047 = vmatprep.subr.mxu0 0.0
      %3048 = vmatpush2.msra.mxu0 0.0
      %3049 = vmatprep.subr.mxu0 0.0
      %3050 = vmatpush2.msra.mxu0 0.0
      %3051 = vmatprep.mubr.f32.mxu0 0.0
      %v3052 = vand.u32 %v1665, 4294901760
      %3053 = vmatmul.mubr.f32.gmra.mxu0 %v3052
      %v3054 = vpop.f32.mrf.mxu0
      %v3055 = vadd.f32 %v2878, %v3054
      %v3056 = vpop.f32.mrf.mxu0
      %3057 = vmatprep.mubr.f32.mxu0 0.0
      %v3058 = vand.u32 %v1666, 4294901760
      %3059 = vmatmul.mubr.f32.gmra.mxu0 %v3058
      %v3060 = vpop.f32.mrf.mxu0
      %v3061 = vadd.f32 %v2884, %v3060
      %v3062 = vpop.f32.mrf.mxu0
      %3063 = vmatprep.mubr.f32.mxu0 0.0
      %v3064 = vand.u32 %v1667, 4294901760
      %3065 = vmatmul.mubr.f32.gmra.mxu0 %v3064
      %v3066 = vpop.f32.mrf.mxu0
      %v3067 = vadd.f32 %v2890, %v3066
      %v3068 = vpop.f32.mrf.mxu0
      %3069 = vmatprep.mubr.f32.mxu0 0.0
      %v3070 = vand.u32 %v1668, 4294901760
      %3071 = vmatmul.mubr.f32.gmra.mxu0 %v3070
      %v3072 = vpop.f32.mrf.mxu0
      %v3073 = vadd.f32 %v2896, %v3072
      %v3074 = vpop.f32.mrf.mxu0
      %3075 = vmatprep.mubr.f32.mxu0 0.0
      %v3076 = vand.u32 %v1669, 4294901760
      %3077 = vmatmul.mubr.f32.gmra.mxu0 %v3076
      %v3078 = vpop.f32.mrf.mxu0
      %v3079 = vadd.f32 %v2902, %v3078
      %v3080 = vpop.f32.mrf.mxu0
      %3081 = vmatprep.mubr.f32.mxu0 0.0
      %v3082 = vand.u32 %v1670, 4294901760
      %3083 = vmatmul.mubr.f32.gmra.mxu0 %v3082
      %v3084 = vpop.f32.mrf.mxu0
      %v3085 = vadd.f32 %v2908, %v3084
      %v3086 = vpop.f32.mrf.mxu0
      %3087 = vmatprep.mubr.f32.mxu0 0.0
      %v3088 = vand.u32 %v1671, 4294901760
      %3089 = vmatmul.mubr.f32.gmra.mxu0 %v3088
      %v3090 = vpop.f32.mrf.mxu0
      %v3091 = vadd.f32 %v2914, %v3090
      %v3092 = vpop.f32.mrf.mxu0
      %3093 = vmatprep.mubr.f32.mxu0 0.0
      %v3094 = vand.u32 %v1672, 4294901760
      %3095 = vmatmul.mubr.f32.gmra.mxu0 %v3094
      %v3096 = vpop.f32.mrf.mxu0
      %v3097 = vadd.f32 %v2920, %v3096
      %v3098 = vpop.f32.mrf.mxu0
      %3099 = vmatprep.mubr.f32.mxu0 0.0
      %v3100 = vand.u32 %v1673, 4294901760
      %3101 = vmatmul.mubr.f32.gmra.mxu0 %v3100
      %v3102 = vpop.f32.mrf.mxu0
      %v3103 = vadd.f32 %v2926, %v3102
      %v3104 = vpop.f32.mrf.mxu0
      %3105 = vmatprep.mubr.f32.mxu0 0.0
      %v3106 = vand.u32 %v1674, 4294901760
      %3107 = vmatmul.mubr.f32.gmra.mxu0 %v3106
      %v3108 = vpop.f32.mrf.mxu0
      %v3109 = vadd.f32 %v2932, %v3108
      %v3110 = vpop.f32.mrf.mxu0
      %3111 = vmatprep.mubr.f32.mxu0 0.0
      %v3112 = vand.u32 %v1675, 4294901760
      %3113 = vmatmul.mubr.f32.gmra.mxu0 %v3112
      %v3114 = vpop.f32.mrf.mxu0
      %v3115 = vadd.f32 %v2938, %v3114
      %v3116 = vpop.f32.mrf.mxu0
      %3117 = vmatprep.mubr.f32.mxu0 0.0
      %v3118 = vand.u32 %v1676, 4294901760
      %3119 = vmatmul.mubr.f32.gmra.mxu0 %v3118
      %v3120 = vpop.f32.mrf.mxu0
      %v3121 = vadd.f32 %v2944, %v3120
      %v3122 = vpop.f32.mrf.mxu0
      %3123 = vmatprep.mubr.f32.mxu0 0.0
      %v3124 = vand.u32 %v1677, 4294901760
      %3125 = vmatmul.mubr.f32.gmra.mxu0 %v3124
      %v3126 = vpop.f32.mrf.mxu0
      %v3127 = vadd.f32 %v2950, %v3126
      %v3128 = vpop.f32.mrf.mxu0
      %3129 = vmatprep.mubr.f32.mxu0 0.0
      %v3130 = vand.u32 %v1678, 4294901760
      %3131 = vmatmul.mubr.f32.gmra.mxu0 %v3130
      %v3132 = vpop.f32.mrf.mxu0
      %v3133 = vadd.f32 %v2956, %v3132
      %v3134 = vpop.f32.mrf.mxu0
      %3135 = vmatprep.mubr.f32.mxu0 0.0
      %v3136 = vand.u32 %v1679, 4294901760
      %3137 = vmatmul.mubr.f32.gmra.mxu0 %v3136
      %v3138 = vpop.f32.mrf.mxu0
      %v3139 = vadd.f32 %v2962, %v3138
      %v3140 = vpop.f32.mrf.mxu0
      %3141 = vmatprep.mubr.f32.mxu0 0.0
      %v3142 = vand.u32 %v1680, 4294901760
      %3143 = vmatmul.mubr.f32.gmra.mxu0 %v3142
      %v3144 = vpop.f32.mrf.mxu0
      %v3145 = vadd.f32 %v2968, %v3144
      %v3146 = vpop.f32.mrf.mxu0
      %3147 = vdwg.mxu0
      %vm3148 = vcmask 7168
      %3149 = vst.msk [vmem:[%s415] sm:$0xff] %vm3148, %v1823
      %3150 = vst.msk [vmem:[%s415 + $0x8] sm:$0xff] %vm3148, %v1824
      %3151 = vst.msk [vmem:[%s415 + $0x10] sm:$0xff] %vm3148, %v1825
      %3152 = vst.msk [vmem:[%s415 + $0x18] sm:$0xff] %vm3148, %v1826
      %3153 = vst.msk [vmem:[%s415 + $0x20] sm:$0xff] %vm3148, %v1827
      %3154 = vst.msk [vmem:[%s415 + $0x28] sm:$0xff] %vm3148, %v1828
      %3155 = vst.msk [vmem:[%s415 + $0x30] sm:$0xff] %vm3148, %v1829
      %3156 = vst.msk [vmem:[%s415 + $0x38] sm:$0xff] %vm3148, %v1830
      %3157 = vst.msk [vmem:[%s415 + $0x40] sm:$0xff] %vm3148, %v1831
      %3158 = vst.msk [vmem:[%s415 + $0x48] sm:$0xff] %vm3148, %v1832
      %3159 = vst.msk [vmem:[%s415 + $0x50] sm:$0xff] %vm3148, %v1833
      %3160 = vst.msk [vmem:[%s415 + $0x58] sm:$0xff] %vm3148, %v1834
      %3161 = vst.msk [vmem:[%s415 + $0x60] sm:$0xff] %vm3148, %v1835
      %3162 = vst.msk [vmem:[%s415 + $0x68] sm:$0xff] %vm3148, %v1836
      %3163 = vst.msk [vmem:[%s415 + $0x70] sm:$0xff] %vm3148, %v1837
      %3164 = vst.msk [vmem:[%s415 + $0x78] sm:$0xff] %vm3148, %v1838
      %3165 = vst [vmem:[%s421] sm:$0xff] %v3055
      %3166 = vst [vmem:[%s421 + $0x8] sm:$0xff] %v3061
      %3167 = vst [vmem:[%s421 + $0x10] sm:$0xff] %v3067
      %3168 = vst [vmem:[%s421 + $0x18] sm:$0xff] %v3073
      %3169 = vst [vmem:[%s421 + $0x20] sm:$0xff] %v3079
      %3170 = vst [vmem:[%s421 + $0x28] sm:$0xff] %v3085
      %3171 = vst [vmem:[%s421 + $0x30] sm:$0xff] %v3091
      %3172 = vst [vmem:[%s421 + $0x38] sm:$0xff] %v3097
      %3173 = vst [vmem:[%s421 + $0x40] sm:$0xff] %v3103
      %3174 = vst [vmem:[%s421 + $0x48] sm:$0xff] %v3109
      %3175 = vst [vmem:[%s421 + $0x50] sm:$0xff] %v3115
      %3176 = vst [vmem:[%s421 + $0x58] sm:$0xff] %v3121
      %3177 = vst [vmem:[%s421 + $0x60] sm:$0xff] %v3127
      %3178 = vst [vmem:[%s421 + $0x68] sm:$0xff] %v3133
      %3179 = vst [vmem:[%s421 + $0x70] sm:$0xff] %v3139
      %3180 = vst [vmem:[%s421 + $0x78] sm:$0xff] %v3145
      %s3181 = smul.u32 16, %s24
      %p3182 = scmp.lt.s32.totalorder %s3181, 31
      %s3183 = scalar_select %p3182, %s3181, 31
      %s3184 = smul.addr %s3183, 8
      %s3185 = scalar_lea.vmem %s9, %s3184
      %s3186 = smul.u32 16, %s24
      %p3187 = scmp.lt.s32.totalorder %s3186, 31
      %s3188 = scalar_select %p3187, %s3186, 31
      %s3189 = smul.addr %s3188, 8
      %s3190 = scalar_lea.vmem %s10, %s3189
      // Predicated region
      $region57: #{attentive_fp_forward.6} parent=55 // pred_check
        %p3191 = pneg %p246
      $region58: #{attentive_fp_forward.6} parent=55 // pred_check_branch
        %3193 = sbr.rel (%p3191) target = $region60
      $region59: #{attentive_fp_forward.6} parent=55 // pred_region
        %s3194 = smul.u32 16, %s24
      $region60: #{attentive_fp_forward.6} parent=55 // pred_fallthru
        _
      // Predicated region
      $region61: #{attentive_fp_forward.6} parent=55 // pred_check
        %p3195 = pneg %p272
      $region62: #{attentive_fp_forward.6} parent=55 // pred_check_branch
        %3197 = sbr.rel (%p3195) target = $region64
      $region63: #{attentive_fp_forward.6} parent=55 // pred_region
        %s3198 = smul.u32 16, %s24
      $region64: #{attentive_fp_forward.6} parent=55 // pred_fallthru
        _
    $region56: #{attentive_fp_forward.6} parent=5 // pred_fallthru
      _
    %p3199 = scmp.le.s32.totalorder 2, %s19
    // Predicated region
    $region65: #{attentive_fp_forward.6} parent=5 // pred_check
      %p3200 = pneg %p3199
    $region66: #{attentive_fp_forward.6} parent=5 // pred_check_branch
      %3202 = sbr.rel (%p3200) target = $region68
    $region67: #{attentive_fp_forward.6} parent=5 // pred_region
      %s3203 = ssub.s32 %s19, 2
      // Predicated region
      $region69: #{attentive_fp_forward.6} parent=67 // pred_check
        %p3204 = pneg %p252
      $region70: #{attentive_fp_forward.6} parent=67 // pred_check_branch
        %3206 = sbr.rel (%p3204) target = $region72
      $region71: #{attentive_fp_forward.6} parent=67 // pred_region
        %s3207 = smul.u32 16, %s25
        %p3208 = scmp.lt.s32.totalorder %s3207, 31
        %s3209 = scalar_select %p3208, %s3207, 31
        %s3210 = smul.addr %s3209, 8
        %s3211 = scalar_lea.vmem %s9, %s3210
      $region72: #{attentive_fp_forward.6} parent=67 // pred_fallthru
        _
      // Predicated region
      $region73: #{attentive_fp_forward.6} parent=67 // pred_check
        %p3212 = pneg %p278
      $region74: #{attentive_fp_forward.6} parent=67 // pred_check_branch
        %3214 = sbr.rel (%p3212) target = $region76
      $region75: #{attentive_fp_forward.6} parent=67 // pred_region
        %s3215 = smul.u32 16, %s25
        %p3216 = scmp.lt.s32.totalorder %s3215, 31
        %s3217 = scalar_select %p3216, %s3215, 31
        %s3218 = smul.addr %s3217, 8
        %s3219 = scalar_lea.vmem %s10, %s3218
      $region76: #{attentive_fp_forward.6} parent=67 // pred_fallthru
        _
    $region68: #{attentive_fp_forward.6} parent=5 // pred_fallthru
      _
  $region6: #{attentive_fp_forward.6} parent=0 // loop_footer
    %s23 = sadd.s32 1, %s19
  $region7: #{attentive_fp_forward.6} parent=0 // loop_footer_branch
    %18 = sbr.rel target = $region3
  $region8: #{attentive_fp_forward.6} parent=0 // loop_exit
    _

// kernel: attentive_fp_forward.7
$region0: #{attentive_fp_forward.7}
  #allocation0 [shape = 'u32[]', space=smem, size = 0x4, offset = 0x4, fixed_abs, tag = 'smem constant byte address 0x4 - core index']
  #allocation1 [shape = 'u32[144,128]{1,0:T(1,128)}', space=vmem, size = 0x12000, scoped, tag = 'internal scratch']
  %s0 = inlined_call_operand.vmem [shape: f32[64,128], index: 0, kind: input, shape index: {}]
  %s1 = inlined_call_operand.vmem [shape: f32[64,128], index: 1, kind: input, shape index: {}]
  %s2 = inlined_call_operand.vmem [shape: f32[256,512], index: 2, kind: input, shape index: {}]
  %s3 = inlined_call_operand.vmem [shape: f32[1,512], index: 3, kind: input, shape index: {}]
  %s4 = inlined_call_operand.vmem [shape: f32[64,128], index: 4, kind: output, shape index: {}]
  %s5 = sld [smem:[#allocation0]]
  $region49: #{attentive_fp_forward.7} parent=0
    _
  %s7 = ssub.s32 1, %s5
  %s8 = scalar_select 0, %s7, %s5
  loop: start=0, step=1, limit=4
  $region2: #{attentive_fp_forward.7} parent=0 // loop_pre_header
    _
  $region3: #{attentive_fp_forward.7} parent=0 // loop_header
    %s10 = sphi 0, %s14
    %p11 = scmp.ge.s32.totalorder %s10, 4
    %s20 = sphi 0, %s22
    %s23 = sphi 0, %s20
    %s24 = sphi 0, %s23
    %s40 = sphi 0, %s24
    %s46 = sphi 0, %s48
    %s49 = sphi 0, %s46
    %s50 = sphi 0, %s49
    %s66 = sphi 0, %s50
    %s70 = sphi 0, %s70
    %s72 = sphi 0, %s70
    %s73 = sphi 0, %s72
    %s87 = sphi 0, %s73
    %s91 = sphi 0, %s91
    %s93 = sphi 0, %s91
    %s94 = sphi 0, %s93
    %s108 = sphi 0, %s94
    %s114 = sphi 0, %s116
    %s117 = sphi 0, %s114
    %s118 = sphi 0, %s117
    %s134 = sphi 0, %s118
  $region4: #{attentive_fp_forward.7} parent=0 // loop_header_branch
    %13 = sbr.rel (%p11) target = $region8
  $region5: #{attentive_fp_forward.7} parent=0 // loop_body
    %s15 = ssub.s32 %s10, 1
    %s16 = ssub.s32 %s10, 2
    %s17 = sadd.s32 %s10, 1
    %s18 = ssub.s32 %s10, %s17
    %p19 = scmp.eq.s32.totalorder %s18, 0
    %s21 = sadd.s32 %s20, 1
    %s22 = scalar_select %p19, %s20, %s21
    %p25 = pneg %p19
    %p26 = scmp.eq.s32.totalorder %s10, 1
    %p27 = por %p25, %p26
    %p28 = scmp.ne.s32.totalorder %s20, %s23
    %p29 = scmp.eq.s32.totalorder %s10, 0
    %p30 = por %p28, %p29
    %p31 = scmp.ne.s32.totalorder %s20, %s23
    %p32 = scmp.eq.s32.totalorder %s15, 1
    %p33 = por %p31, %p32
    %p34 = scmp.ne.s32.totalorder %s23, %s24
    %p35 = scmp.eq.s32.totalorder %s15, 0
    %p36 = por %p34, %p35
    %p37 = scmp.ne.s32.totalorder %s23, %s24
    %p38 = scmp.eq.s32.totalorder %s16, 1
    %p39 = por %p37, %p38
    %p41 = scmp.ne.s32.totalorder %s24, %s40
    %p42 = scmp.eq.s32.totalorder %s16, 0
    %p43 = por %p41, %p42
    %s44 = ssub.s32 %s10, %s17
    %p45 = scmp.eq.s32.totalorder %s44, 0
    %s47 = sadd.s32 %s46, 1
    %s48 = scalar_select %p45, %s46, %s47
    %p51 = pneg %p45
    %p52 = scmp.eq.s32.totalorder %s10, 1
    %p53 = por %p51, %p52
    %p54 = scmp.ne.s32.totalorder %s46, %s49
    %p55 = scmp.eq.s32.totalorder %s10, 0
    %p56 = por %p54, %p55
    %p57 = scmp.ne.s32.totalorder %s46, %s49
    %p58 = scmp.eq.s32.totalorder %s15, 1
    %p59 = por %p57, %p58
    %p60 = scmp.ne.s32.totalorder %s49, %s50
    %p61 = scmp.eq.s32.totalorder %s15, 0
    %p62 = por %p60, %p61
    %p63 = scmp.ne.s32.totalorder %s49, %s50
    %p64 = scmp.eq.s32.totalorder %s16, 1
    %p65 = por %p63, %p64
    %p67 = scmp.ne.s32.totalorder %s50, %s66
    %p68 = scmp.eq.s32.totalorder %s16, 0
    %p69 = por %p67, %p68
    %s71 = sadd.s32 %s70, 1
    %p74 = scmp.eq.s32.totalorder %s10, 1
    %p75 = scmp.ne.s32.totalorder %s70, %s72
    %p76 = scmp.eq.s32.totalorder %s10, 0
    %p77 = por %p75, %p76
    %p78 = scmp.ne.s32.totalorder %s70, %s72
    %p79 = scmp.eq.s32.totalorder %s15, 1
    %p80 = por %p78, %p79
    %p81 = scmp.ne.s32.totalorder %s72, %s73
    %p82 = scmp.eq.s32.totalorder %s15, 0
    %p83 = por %p81, %p82
    %p84 = scmp.ne.s32.totalorder %s72, %s73
    %p85 = scmp.eq.s32.totalorder %s16, 1
    %p86 = por %p84, %p85
    %p88 = scmp.ne.s32.totalorder %s73, %s87
    %p89 = scmp.eq.s32.totalorder %s16, 0
    %p90 = por %p88, %p89
    %s92 = sadd.s32 %s91, 1
    %p95 = scmp.eq.s32.totalorder %s10, 1
    %p96 = scmp.ne.s32.totalorder %s91, %s93
    %p97 = scmp.eq.s32.totalorder %s10, 0
    %p98 = por %p96, %p97
    %p99 = scmp.ne.s32.totalorder %s91, %s93
    %p100 = scmp.eq.s32.totalorder %s15, 1
    %p101 = por %p99, %p100
    %p102 = scmp.ne.s32.totalorder %s93, %s94
    %p103 = scmp.eq.s32.totalorder %s15, 0
    %p104 = por %p102, %p103
    %p105 = scmp.ne.s32.totalorder %s93, %s94
    %p106 = scmp.eq.s32.totalorder %s16, 1
    %p107 = por %p105, %p106
    %p109 = scmp.ne.s32.totalorder %s94, %s108
    %p110 = scmp.eq.s32.totalorder %s16, 0
    %p111 = por %p109, %p110
    %s112 = ssub.s32 %s10, %s17
    %p113 = scmp.eq.s32.totalorder %s112, 0
    %s115 = sadd.s32 %s114, 1
    %s116 = scalar_select %p113, %s114, %s115
    %p119 = pneg %p113
    %p120 = scmp.eq.s32.totalorder %s10, 1
    %p121 = por %p119, %p120
    %p122 = scmp.ne.s32.totalorder %s114, %s117
    %p123 = scmp.eq.s32.totalorder %s10, 0
    %p124 = por %p122, %p123
    %p125 = scmp.ne.s32.totalorder %s114, %s117
    %p126 = scmp.eq.s32.totalorder %s15, 1
    %p127 = por %p125, %p126
    %p128 = scmp.ne.s32.totalorder %s117, %s118
    %p129 = scmp.eq.s32.totalorder %s15, 0
    %p130 = por %p128, %p129
    %p131 = scmp.ne.s32.totalorder %s117, %s118
    %p132 = scmp.eq.s32.totalorder %s16, 1
    %p133 = por %p131, %p132
    %p135 = scmp.ne.s32.totalorder %s118, %s134
    %p136 = scmp.eq.s32.totalorder %s16, 0
    %p137 = por %p135, %p136
    %p138 = scmp.le.s32.totalorder 1, %s10
    %p139 = scmp.lt.s32.totalorder %s10, 3
    %p140 = pnand %p138, %p139
    %p141 = pneg %p140
    // Predicated region
    $region9: #{attentive_fp_forward.7} parent=5 // pred_check
      _
    $region10: #{attentive_fp_forward.7} parent=5 // pred_check_branch
      %143 = sbr.rel (%p140) target = $region12
    $region11: #{attentive_fp_forward.7} parent=5 // pred_region
      %s144 = ssub.s32 %s10, 1
      // Predicated region
      $region13: #{attentive_fp_forward.7} parent=11 // pred_check
        %p145 = pneg %p83
      $region14: #{attentive_fp_forward.7} parent=11 // pred_check_branch
        %147 = sbr.rel (%p145) target = $region16
      $region15: #{attentive_fp_forward.7} parent=11 // pred_region
        _
      $region16: #{attentive_fp_forward.7} parent=11 // pred_fallthru
        _
      // Predicated region
      $region17: #{attentive_fp_forward.7} parent=11 // pred_check
        %p148 = pneg %p104
      $region18: #{attentive_fp_forward.7} parent=11 // pred_check_branch
        %150 = sbr.rel (%p148) target = $region20
      $region19: #{attentive_fp_forward.7} parent=11 // pred_region
        _
      $region20: #{attentive_fp_forward.7} parent=11 // pred_fallthru
        _
    $region12: #{attentive_fp_forward.7} parent=5 // pred_fallthru
      _
    %p151 = scmp.lt.s32.totalorder %s10, 2
    // Predicated region
    $region21: #{attentive_fp_forward.7} parent=5 // pred_check
      %p152 = pneg %p151
    $region22: #{attentive_fp_forward.7} parent=5 // pred_check_branch
      %154 = sbr.rel (%p152) target = $region24
    $region23: #{attentive_fp_forward.7} parent=5 // pred_region
      // Predicated region
      $region25: #{attentive_fp_forward.7} parent=23 // pred_check
        %p155 = pneg %p30
      $region26: #{attentive_fp_forward.7} parent=23 // pred_check_branch
        %157 = sbr.rel (%p155) target = $region28
      $region27: #{attentive_fp_forward.7} parent=23 // pred_region
        %s158 = smul.u32 4, %s10
        %p159 = scmp.lt.s32.totalorder %s158, 7
        %s160 = scalar_select %p159, %s158, 7
        %s161 = smul.addr %s160, 8
        %s162 = scalar_lea.vmem %s0, %s161
        %s163 = smul.u32 4, %s10
      $region28: #{attentive_fp_forward.7} parent=23 // pred_fallthru
        _
      // Predicated region
      $region29: #{attentive_fp_forward.7} parent=23 // pred_check
        %p164 = pneg %p56
      $region30: #{attentive_fp_forward.7} parent=23 // pred_check_branch
        %166 = sbr.rel (%p164) target = $region32
      $region31: #{attentive_fp_forward.7} parent=23 // pred_region
        %s167 = smul.u32 4, %s10
        %p168 = scmp.lt.s32.totalorder %s167, 7
        %s169 = scalar_select %p168, %s167, 7
        %s170 = smul.addr %s169, 8
        %s171 = scalar_lea.vmem %s1, %s170
        %s172 = smul.u32 4, %s10
      $region32: #{attentive_fp_forward.7} parent=23 // pred_fallthru
        _
    $region24: #{attentive_fp_forward.7} parent=5 // pred_fallthru
      _
    %p173 = scmp.le.s32.totalorder 1, %s10
    %p174 = scmp.lt.s32.totalorder %s10, 3
    %p175 = pnand %p173, %p174
    %p176 = pneg %p175
    // Predicated region
    $region33: #{attentive_fp_forward.7} parent=5 // pred_check
      _
    $region34: #{attentive_fp_forward.7} parent=5 // pred_check_branch
      %178 = sbr.rel (%p175) target = $region36
    $region35: #{attentive_fp_forward.7} parent=5 // pred_region
      %s179 = ssub.s32 %s10, 1
      %s180 = smul.u32 4, %s15
      %p181 = scmp.lt.s32.totalorder %s180, 7
      %s182 = scalar_select %p181, %s180, 7
      %s183 = smul.addr %s182, 8
      %s184 = scalar_lea.vmem %s0, %s183
      %p185 = pneg %p36
      %p186 = pneg %p33
      %s187 = smul.u32 4, %s15
      %p188 = scmp.lt.s32.totalorder %s187, 7
      %s189 = scalar_select %p188, %s187, 7
      %s190 = smul.addr %s189, 8
      %s191 = scalar_lea.vmem %s1, %s190
      %p192 = pneg %p62
      %p193 = pneg %p59
      %p194 = pneg %p83
      %p195 = pneg %p80
      %p196 = pneg %p104
      %p197 = pneg %p101
      %p198 = pneg %p130
      %p199 = pneg %p127
      %s200 = smul.u32 4, %s15
      %p201 = scmp.lt.s32.totalorder %s200, 7
      %s202 = scalar_select %p201, %s200, 7
      %s203 = smul.addr %s202, 8
      %s204 = scalar_lea.vmem %s4, %s203
      %s205 = smul.u32 4, %s15
      %p206 = scmp.lt.s32.totalorder %s205, 7
      %s207 = scalar_select %p206, %s205, 7
      %s208 = smul.addr %s207, 8
      %s209 = scalar_lea.vmem %s0, %s208
      %s210 = smul.u32 4, %s15
      %s211 = smul.u32 4, %s15
      %p212 = scmp.lt.s32.totalorder %s211, 7
      %s213 = scalar_select %p212, %s211, 7
      %s214 = smul.addr %s213, 8
      %s215 = scalar_lea.vmem %s1, %s214
      %s216 = smul.u32 4, %s15
      %s217 = smul.u32 4, %s15
      %p218 = scmp.lt.s32.totalorder %s217, 7
      %s219 = scalar_select %p218, %s217, 7
      %s220 = smul.addr %s219, 8
      %s221 = scalar_lea.vmem %s4, %s220
      %s222 = smul.u32 4, %s15
      %v223 = vld [vmem:[%s209] sm:$0xff]
      %v224 = vld [vmem:[%s209 + $0x8] sm:$0xff]
      %v225 = vld [vmem:[%s209 + $0x10] sm:$0xff]
      %v226 = vld [vmem:[%s209 + $0x18] sm:$0xff]
      %vm227 = vcmp.gt.f32.partialorder %v223, 0.0
      %vm228 = vcmp.gt.f32.partialorder %v224, 0.0
      %vm229 = vcmp.gt.f32.partialorder %v225, 0.0
      %vm230 = vcmp.gt.f32.partialorder %v226, 0.0
      %v231 = vmin.f32 %v223, 0.0
      %v232 = vmin.f32 %v224, 0.0
      %v233 = vmin.f32 %v225, 0.0
      %v234 = vmin.f32 %v226, 0.0
      %v235 = vmul.f32 %v231, 1.442695
      %v236 = vpow.pop %v235
      %v237 = vmul.f32 %v232, 1.442695
      %v238 = vpow.pop %v237
      %v239 = vmul.f32 %v233, 1.442695
      %v240 = vpow.pop %v239
      %v241 = vmul.f32 %v234, 1.442695
      %v242 = vpow.pop %v241
      %v243 = vsub.f32 %v236, 1.0
      %v244 = vsub.f32 %v238, 1.0
      %v245 = vsub.f32 %v240, 1.0
      %v246 = vsub.f32 %v242, 1.0
      %v247 = vsel %vm227, %v223, %v243
      %v248 = vsel %vm228, %v224, %v244
      %v249 = vsel %vm229, %v225, %v245
      %v250 = vsel %vm230, %v226, %v246
      %v251 = vld [vmem:[%s215] sm:$0xff]
      %v252 = vld [vmem:[%s215 + $0x8] sm:$0xff]
      %v253 = vld [vmem:[%s215 + $0x10] sm:$0xff]
      %v254 = vld [vmem:[%s215 + $0x18] sm:$0xff]
      %v255 = vld [vmem:[%s2] sm:$0xff]
      %v256 = vld [vmem:[%s2 + $0x8] sm:$0xff]
      %v257 = vld [vmem:[%s2 + $0x10] sm:$0xff]
      %v258 = vld [vmem:[%s2 + $0x18] sm:$0xff]
      %v259 = vld [vmem:[%s2 + $0x20] sm:$0xff]
      %v260 = vld [vmem:[%s2 + $0x28] sm:$0xff]
      %v261 = vld [vmem:[%s2 + $0x30] sm:$0xff]
      %v262 = vld [vmem:[%s2 + $0x38] sm:$0xff]
      %v263 = vld [vmem:[%s2 + $0x40] sm:$0xff]
      %v264 = vld [vmem:[%s2 + $0x48] sm:$0xff]
      %v265 = vld [vmem:[%s2 + $0x50] sm:$0xff]
      %v266 = vld [vmem:[%s2 + $0x58] sm:$0xff]
      %v267 = vld [vmem:[%s2 + $0x60] sm:$0xff]
      %v268 = vld [vmem:[%s2 + $0x68] sm:$0xff]
      %v269 = vld [vmem:[%s2 + $0x70] sm:$0xff]
      %v270 = vld [vmem:[%s2 + $0x78] sm:$0xff]
      %v271 = vld [vmem:[%s2 + $0x80] sm:$0xff]
      %v272 = vld [vmem:[%s2 + $0x88] sm:$0xff]
      %v273 = vld [vmem:[%s2 + $0x90] sm:$0xff]
      %v274 = vld [vmem:[%s2 + $0x98] sm:$0xff]
      %v275 = vld [vmem:[%s2 + $0xa0] sm:$0xff]
      %v276 = vld [vmem:[%s2 + $0xa8] sm:$0xff]
      %v277 = vld [vmem:[%s2 + $0xb0] sm:$0xff]
      %v278 = vld [vmem:[%s2 + $0xb8] sm:$0xff]
      %v279 = vld [vmem:[%s2 + $0xc0] sm:$0xff]
      %v280 = vld [vmem:[%s2 + $0xc8] sm:$0xff]
      %v281 = vld [vmem:[%s2 + $0xd0] sm:$0xff]
      %v282 = vld [vmem:[%s2 + $0xd8] sm:$0xff]
      %v283 = vld [vmem:[%s2 + $0xe0] sm:$0xff]
      %v284 = vld [vmem:[%s2 + $0xe8] sm:$0xff]
      %v285 = vld [vmem:[%s2 + $0xf0] sm:$0xff]
      %v286 = vld [vmem:[%s2 + $0xf8] sm:$0xff]
      %v287 = vld [vmem:[%s2 + $0x100] sm:$0xff]
      %v288 = vld [vmem:[%s2 + $0x108] sm:$0xff]
      %v289 = vld [vmem:[%s2 + $0x110] sm:$0xff]
      %v290 = vld [vmem:[%s2 + $0x118] sm:$0xff]
      %v291 = vld [vmem:[%s2 + $0x120] sm:$0xff]
      %v292 = vld [vmem:[%s2 + $0x128] sm:$0xff]
      %v293 = vld [vmem:[%s2 + $0x130] sm:$0xff]
      %v294 = vld [vmem:[%s2 + $0x138] sm:$0xff]
      %v295 = vld [vmem:[%s2 + $0x140] sm:$0xff]
      %v296 = vld [vmem:[%s2 + $0x148] sm:$0xff]
      %v297 = vld [vmem:[%s2 + $0x150] sm:$0xff]
      %v298 = vld [vmem:[%s2 + $0x158] sm:$0xff]
      %v299 = vld [vmem:[%s2 + $0x160] sm:$0xff]
      %v300 = vld [vmem:[%s2 + $0x168] sm:$0xff]
      %v301 = vld [vmem:[%s2 + $0x170] sm:$0xff]
      %v302 = vld [vmem:[%s2 + $0x178] sm:$0xff]
      %v303 = vld [vmem:[%s2 + $0x180] sm:$0xff]
      %v304 = vld [vmem:[%s2 + $0x188] sm:$0xff]
      %v305 = vld [vmem:[%s2 + $0x190] sm:$0xff]
      %v306 = vld [vmem:[%s2 + $0x198] sm:$0xff]
      %v307 = vld [vmem:[%s2 + $0x1a0] sm:$0xff]
      %v308 = vld [vmem:[%s2 + $0x1a8] sm:$0xff]
      %v309 = vld [vmem:[%s2 + $0x1b0] sm:$0xff]
      %v310 = vld [vmem:[%s2 + $0x1b8] sm:$0xff]
      %v311 = vld [vmem:[%s2 + $0x1c0] sm:$0xff]
      %v312 = vld [vmem:[%s2 + $0x1c8] sm:$0xff]
      %v313 = vld [vmem:[%s2 + $0x1d0] sm:$0xff]
      %v314 = vld [vmem:[%s2 + $0x1d8] sm:$0xff]
      %v315 = vld [vmem:[%s2 + $0x1e0] sm:$0xff]
      %v316 = vld [vmem:[%s2 + $0x1e8] sm:$0xff]
      %v317 = vld [vmem:[%s2 + $0x1f0] sm:$0xff]
      %v318 = vld [vmem:[%s2 + $0x1f8] sm:$0xff]
      %v319 = vld [vmem:[%s2 + $0x200] sm:$0xff]
      %v320 = vld [vmem:[%s2 + $0x208] sm:$0xff]
      %v321 = vld [vmem:[%s2 + $0x210] sm:$0xff]
      %v322 = vld [vmem:[%s2 + $0x218] sm:$0xff]
      %v323 = vld [vmem:[%s2 + $0x220] sm:$0xff]
      %v324 = vld [vmem:[%s2 + $0x228] sm:$0xff]
      %v325 = vld [vmem:[%s2 + $0x230] sm:$0xff]
      %v326 = vld [vmem:[%s2 + $0x238] sm:$0xff]
      %v327 = vld [vmem:[%s2 + $0x240] sm:$0xff]
      %v328 = vld [vmem:[%s2 + $0x248] sm:$0xff]
      %v329 = vld [vmem:[%s2 + $0x250] sm:$0xff]
      %v330 = vld [vmem:[%s2 + $0x258] sm:$0xff]
      %v331 = vld [vmem:[%s2 + $0x260] sm:$0xff]
      %v332 = vld [vmem:[%s2 + $0x268] sm:$0xff]
      %v333 = vld [vmem:[%s2 + $0x270] sm:$0xff]
      %v334 = vld [vmem:[%s2 + $0x278] sm:$0xff]
      %v335 = vld [vmem:[%s2 + $0x280] sm:$0xff]
      %v336 = vld [vmem:[%s2 + $0x288] sm:$0xff]
      %v337 = vld [vmem:[%s2 + $0x290] sm:$0xff]
      %v338 = vld [vmem:[%s2 + $0x298] sm:$0xff]
      %v339 = vld [vmem:[%s2 + $0x2a0] sm:$0xff]
      %v340 = vld [vmem:[%s2 + $0x2a8] sm:$0xff]
      %v341 = vld [vmem:[%s2 + $0x2b0] sm:$0xff]
      %v342 = vld [vmem:[%s2 + $0x2b8] sm:$0xff]
      %v343 = vld [vmem:[%s2 + $0x2c0] sm:$0xff]
      %v344 = vld [vmem:[%s2 + $0x2c8] sm:$0xff]
      %v345 = vld [vmem:[%s2 + $0x2d0] sm:$0xff]
      %v346 = vld [vmem:[%s2 + $0x2d8] sm:$0xff]
      %v347 = vld [vmem:[%s2 + $0x2e0] sm:$0xff]
      %v348 = vld [vmem:[%s2 + $0x2e8] sm:$0xff]
      %v349 = vld [vmem:[%s2 + $0x2f0] sm:$0xff]
      %v350 = vld [vmem:[%s2 + $0x2f8] sm:$0xff]
      %v351 = vld [vmem:[%s2 + $0x300] sm:$0xff]
      %v352 = vld [vmem:[%s2 + $0x308] sm:$0xff]
      %v353 = vld [vmem:[%s2 + $0x310] sm:$0xff]
      %v354 = vld [vmem:[%s2 + $0x318] sm:$0xff]
      %v355 = vld [vmem:[%s2 + $0x320] sm:$0xff]
      %v356 = vld [vmem:[%s2 + $0x328] sm:$0xff]
      %v357 = vld [vmem:[%s2 + $0x330] sm:$0xff]
      %v358 = vld [vmem:[%s2 + $0x338] sm:$0xff]
      %v359 = vld [vmem:[%s2 + $0x340] sm:$0xff]
      %v360 = vld [vmem:[%s2 + $0x348] sm:$0xff]
      %v361 = vld [vmem:[%s2 + $0x350] sm:$0xff]
      %v362 = vld [vmem:[%s2 + $0x358] sm:$0xff]
      %v363 = vld [vmem:[%s2 + $0x360] sm:$0xff]
      %v364 = vld [vmem:[%s2 + $0x368] sm:$0xff]
      %v365 = vld [vmem:[%s2 + $0x370] sm:$0xff]
      %v366 = vld [vmem:[%s2 + $0x378] sm:$0xff]
      %v367 = vld [vmem:[%s2 + $0x380] sm:$0xff]
      %v368 = vld [vmem:[%s2 + $0x388] sm:$0xff]
      %v369 = vld [vmem:[%s2 + $0x390] sm:$0xff]
      %v370 = vld [vmem:[%s2 + $0x398] sm:$0xff]
      %v371 = vld [vmem:[%s2 + $0x3a0] sm:$0xff]
      %v372 = vld [vmem:[%s2 + $0x3a8] sm:$0xff]
      %v373 = vld [vmem:[%s2 + $0x3b0] sm:$0xff]
      %v374 = vld [vmem:[%s2 + $0x3b8] sm:$0xff]
      %v375 = vld [vmem:[%s2 + $0x3c0] sm:$0xff]
      %v376 = vld [vmem:[%s2 + $0x3c8] sm:$0xff]
      %v377 = vld [vmem:[%s2 + $0x3d0] sm:$0xff]
      %v378 = vld [vmem:[%s2 + $0x3d8] sm:$0xff]
      %v379 = vld [vmem:[%s2 + $0x3e0] sm:$0xff]
      %v380 = vld [vmem:[%s2 + $0x3e8] sm:$0xff]
      %v381 = vld [vmem:[%s2 + $0x3f0] sm:$0xff]
      %v382 = vld [vmem:[%s2 + $0x3f8] sm:$0xff]
      %v383 = vld [vmem:[%s3] sm:$0xf]
      %v385 = vlaneseq
      %v386 = vshrl.u32 %v385, 7
      %v387 = vsub.s32 0, %v386
      %v388 = vrot.slane %v383, %v387
      %v389 = vlaneseq
      %v390 = vshrl.u32 %v389, 7
      %v391 = vsub.s32 1, %v390
      %v392 = vrot.slane %v383, %v391
      %v393 = vlaneseq
      %v394 = vshrl.u32 %v393, 7
      %v395 = vsub.s32 2, %v394
      %v396 = vrot.slane %v383, %v395
      %v397 = vlaneseq
      %v398 = vshrl.u32 %v397, 7
      %v399 = vsub.s32 3, %v398
      %v400 = vrot.slane %v383, %v399
      %v405 = vand.u32 %v316, 4294901760
      %406 = vmatprep.subr.mxu0 %v405
      %v407 = vand.u32 %v315, 4294901760
      %408 = vmatpush1.msra.mxu0 %v407
      %v409 = vand.u32 %v312, 4294901760
      %410 = vmatprep.subr.mxu0 %v409
      %v411 = vand.u32 %v311, 4294901760
      %412 = vmatpush1.msra.mxu0 %v411
      %v413 = vand.u32 %v308, 4294901760
      %414 = vmatprep.subr.mxu0 %v413
      %v415 = vand.u32 %v307, 4294901760
      %416 = vmatpush1.msra.mxu0 %v415
      %v417 = vand.u32 %v304, 4294901760
      %418 = vmatprep.subr.mxu0 %v417
      %v419 = vand.u32 %v303, 4294901760
      %420 = vmatpush1.msra.mxu0 %v419
      %v421 = vand.u32 %v300, 4294901760
      %422 = vmatprep.subr.mxu0 %v421
      %v423 = vand.u32 %v299, 4294901760
      %424 = vmatpush1.msra.mxu0 %v423
      %v425 = vand.u32 %v296, 4294901760
      %426 = vmatprep.subr.mxu0 %v425
      %v427 = vand.u32 %v295, 4294901760
      %428 = vmatpush1.msra.mxu0 %v427
      %v429 = vand.u32 %v292, 4294901760
      %430 = vmatprep.subr.mxu0 %v429
      %v431 = vand.u32 %v291, 4294901760
      %432 = vmatpush1.msra.mxu0 %v431
      %v433 = vand.u32 %v288, 4294901760
      %434 = vmatprep.subr.mxu0 %v433
      %v435 = vand.u32 %v287, 4294901760
      %436 = vmatpush1.msra.mxu0 %v435
      %v437 = vand.u32 %v284, 4294901760
      %438 = vmatprep.subr.mxu0 %v437
      %v439 = vand.u32 %v283, 4294901760
      %440 = vmatpush1.msra.mxu0 %v439
      %v441 = vand.u32 %v280, 4294901760
      %442 = vmatprep.subr.mxu0 %v441
      %v443 = vand.u32 %v279, 4294901760
      %444 = vmatpush1.msra.mxu0 %v443
      %v445 = vand.u32 %v276, 4294901760
      %446 = vmatprep.subr.mxu0 %v445
      %v447 = vand.u32 %v275, 4294901760
      %448 = vmatpush1.msra.mxu0 %v447
      %v449 = vand.u32 %v272, 4294901760
      %450 = vmatprep.subr.mxu0 %v449
      %v451 = vand.u32 %v271, 4294901760
      %452 = vmatpush1.msra.mxu0 %v451
      %v453 = vand.u32 %v268, 4294901760
      %454 = vmatprep.subr.mxu0 %v453
      %v455 = vand.u32 %v267, 4294901760
      %456 = vmatpush1.msra.mxu0 %v455
      %v457 = vand.u32 %v264, 4294901760
      %458 = vmatprep.subr.mxu0 %v457
      %v459 = vand.u32 %v263, 4294901760
      %460 = vmatpush1.msra.mxu0 %v459
      %v461 = vand.u32 %v260, 4294901760
      %462 = vmatprep.subr.mxu0 %v461
      %v463 = vand.u32 %v259, 4294901760
      %464 = vmatpush1.msra.mxu0 %v463
      %v465 = vand.u32 %v256, 4294901760
      %466 = vmatprep.subr.mxu0 %v465
      %v467 = vand.u32 %v255, 4294901760
      %468 = vmatpush1.msra.mxu0 %v467
      %v469 = vand.u32 %v380, 4294901760
      %470 = vmatprep.subr.mxu0 %v469
      %v471 = vand.u32 %v379, 4294901760
      %472 = vmatpush2.msra.mxu0 %v471
      %v473 = vand.u32 %v376, 4294901760
      %474 = vmatprep.subr.mxu0 %v473
      %v475 = vand.u32 %v375, 4294901760
      %476 = vmatpush2.msra.mxu0 %v475
      %v477 = vand.u32 %v372, 4294901760
      %478 = vmatprep.subr.mxu0 %v477
      %v479 = vand.u32 %v371, 4294901760
      %480 = vmatpush2.msra.mxu0 %v479
      %v481 = vand.u32 %v368, 4294901760
      %482 = vmatprep.subr.mxu0 %v481
      %v483 = vand.u32 %v367, 4294901760
      %484 = vmatpush2.msra.mxu0 %v483
      %v485 = vand.u32 %v364, 4294901760
      %486 = vmatprep.subr.mxu0 %v485
      %v487 = vand.u32 %v363, 4294901760
      %488 = vmatpush2.msra.mxu0 %v487
      %v489 = vand.u32 %v360, 4294901760
      %490 = vmatprep.subr.mxu0 %v489
      %v491 = vand.u32 %v359, 4294901760
      %492 = vmatpush2.msra.mxu0 %v491
      %v493 = vand.u32 %v356, 4294901760
      %494 = vmatprep.subr.mxu0 %v493
      %v495 = vand.u32 %v355, 4294901760
      %496 = vmatpush2.msra.mxu0 %v495
      %v497 = vand.u32 %v352, 4294901760
      %498 = vmatprep.subr.mxu0 %v497
      %v499 = vand.u32 %v351, 4294901760
      %500 = vmatpush2.msra.mxu0 %v499
      %v501 = vand.u32 %v348, 4294901760
      %502 = vmatprep.subr.mxu0 %v501
      %v503 = vand.u32 %v347, 4294901760
      %504 = vmatpush2.msra.mxu0 %v503
      %v505 = vand.u32 %v344, 4294901760
      %506 = vmatprep.subr.mxu0 %v505
      %v507 = vand.u32 %v343, 4294901760
      %508 = vmatpush2.msra.mxu0 %v507
      %v509 = vand.u32 %v340, 4294901760
      %510 = vmatprep.subr.mxu0 %v509
      %v511 = vand.u32 %v339, 4294901760
      %512 = vmatpush2.msra.mxu0 %v511
      %v513 = vand.u32 %v336, 4294901760
      %514 = vmatprep.subr.mxu0 %v513
      %v515 = vand.u32 %v335, 4294901760
      %516 = vmatpush2.msra.mxu0 %v515
      %v517 = vand.u32 %v332, 4294901760
      %518 = vmatprep.subr.mxu0 %v517
      %v519 = vand.u32 %v331, 4294901760
      %520 = vmatpush2.msra.mxu0 %v519
      %v521 = vand.u32 %v328, 4294901760
      %522 = vmatprep.subr.mxu0 %v521
      %v523 = vand.u32 %v327, 4294901760
      %524 = vmatpush2.msra.mxu0 %v523
      %v525 = vand.u32 %v324, 4294901760
      %526 = vmatprep.subr.mxu0 %v525
      %v527 = vand.u32 %v323, 4294901760
      %528 = vmatpush2.msra.mxu0 %v527
      %v529 = vand.u32 %v320, 4294901760
      %530 = vmatprep.subr.mxu0 %v529
      %v531 = vand.u32 %v319, 4294901760
      %532 = vmatpush2.msra.mxu0 %v531
      %v533 = vand.u32 %v251, 4294901760
      %v534 = vsub.f32 %v251, %v533
      %v535 = vand.u32 %v534, 4294901760
      %v536 = vsub.f32 %v534, %v535
      %v537 = vand.u32 %v536, 4294901760
      %538 = vmatprep.mubr.f32.mxu0 %v537
      %v539 = vand.u32 %v247, 4294901760
      %v540 = vsub.f32 %v247, %v539
      %v541 = vand.u32 %v540, 4294901760
      %v542 = vsub.f32 %v540, %v541
      %v543 = vand.u32 %v542, 4294901760
      %544 = vmatmul.mubr.f32.gmra.mxu0 %v543
      %v545 = vpop.f32.mrf.mxu0
      %v546 = vadd.f32 %v388, %v545
      %v547 = vpop.f32.mrf.mxu0
      %v548 = vadd.f32 %v392, %v547
      %v549 = vand.u32 %v252, 4294901760
      %v550 = vsub.f32 %v252, %v549
      %v551 = vand.u32 %v550, 4294901760
      %v552 = vsub.f32 %v550, %v551
      %v553 = vand.u32 %v552, 4294901760
      %554 = vmatprep.mubr.f32.mxu0 %v553
      %v555 = vand.u32 %v248, 4294901760
      %v556 = vsub.f32 %v248, %v555
      %v557 = vand.u32 %v556, 4294901760
      %v558 = vsub.f32 %v556, %v557
      %v559 = vand.u32 %v558, 4294901760
      %560 = vmatmul.mubr.f32.gmra.mxu0 %v559
      %v561 = vpop.f32.mrf.mxu0
      %v562 = vadd.f32 %v388, %v561
      %v563 = vpop.f32.mrf.mxu0
      %v564 = vadd.f32 %v392, %v563
      %v565 = vand.u32 %v253, 4294901760
      %v566 = vsub.f32 %v253, %v565
      %v567 = vand.u32 %v566, 4294901760
      %v568 = vsub.f32 %v566, %v567
      %v569 = vand.u32 %v568, 4294901760
      %570 = vmatprep.mubr.f32.mxu0 %v569
      %v571 = vand.u32 %v249, 4294901760
      %v572 = vsub.f32 %v249, %v571
      %v573 = vand.u32 %v572, 4294901760
      %v574 = vsub.f32 %v572, %v573
      %v575 = vand.u32 %v574, 4294901760
      %576 = vmatmul.mubr.f32.gmra.mxu0 %v575
      %v577 = vpop.f32.mrf.mxu0
      %v578 = vadd.f32 %v388, %v577
      %v579 = vpop.f32.mrf.mxu0
      %v580 = vadd.f32 %v392, %v579
      %v581 = vand.u32 %v254, 4294901760
      %v582 = vsub.f32 %v254, %v581
      %v583 = vand.u32 %v582, 4294901760
      %v584 = vsub.f32 %v582, %v583
      %v585 = vand.u32 %v584, 4294901760
      %586 = vmatprep.mubr.f32.mxu0 %v585
      %v587 = vand.u32 %v250, 4294901760
      %v588 = vsub.f32 %v250, %v587
      %v589 = vand.u32 %v588, 4294901760
      %v590 = vsub.f32 %v588, %v589
      %v591 = vand.u32 %v590, 4294901760
      %592 = vmatmul.mubr.f32.gmra.mxu0 %v591
      %v593 = vpop.f32.mrf.mxu0
      %v594 = vadd.f32 %v388, %v593
      %v595 = vpop.f32.mrf.mxu0
      %v596 = vadd.f32 %v392, %v595
      %597 = vdwg.mxu0
      %v598 = vand.u32 %v316, 4294901760
      %v599 = vsub.f32 %v316, %v598
      %v600 = vand.u32 %v599, 4294901760
      %v601 = vsub.f32 %v599, %v600
      %v602 = vand.u32 %v601, 4294901760
      %603 = vmatprep.subr.mxu0 %v602
      %v604 = vand.u32 %v315, 4294901760
      %v605 = vsub.f32 %v315, %v604
      %v606 = vand.u32 %v605, 4294901760
      %v607 = vsub.f32 %v605, %v606
      %v608 = vand.u32 %v607, 4294901760
      %609 = vmatpush1.msra.mxu0 %v608
      %v610 = vand.u32 %v312, 4294901760
      %v611 = vsub.f32 %v312, %v610
      %v612 = vand.u32 %v611, 4294901760
      %v613 = vsub.f32 %v611, %v612
      %v614 = vand.u32 %v613, 4294901760
      %615 = vmatprep.subr.mxu0 %v614
      %v616 = vand.u32 %v311, 4294901760
      %v617 = vsub.f32 %v311, %v616
      %v618 = vand.u32 %v617, 4294901760
      %v619 = vsub.f32 %v617, %v618
      %v620 = vand.u32 %v619, 4294901760
      %621 = vmatpush1.msra.mxu0 %v620
      %v622 = vand.u32 %v308, 4294901760
      %v623 = vsub.f32 %v308, %v622
      %v624 = vand.u32 %v623, 4294901760
      %v625 = vsub.f32 %v623, %v624
      %v626 = vand.u32 %v625, 4294901760
      %627 = vmatprep.subr.mxu0 %v626
      %v628 = vand.u32 %v307, 4294901760
      %v629 = vsub.f32 %v307, %v628
      %v630 = vand.u32 %v629, 4294901760
      %v631 = vsub.f32 %v629, %v630
      %v632 = vand.u32 %v631, 4294901760
      %633 = vmatpush1.msra.mxu0 %v632
      %v634 = vand.u32 %v304, 4294901760
      %v635 = vsub.f32 %v304, %v634
      %v636 = vand.u32 %v635, 4294901760
      %v637 = vsub.f32 %v635, %v636
      %v638 = vand.u32 %v637, 4294901760
      %639 = vmatprep.subr.mxu0 %v638
      %v640 = vand.u32 %v303, 4294901760
      %v641 = vsub.f32 %v303, %v640
      %v642 = vand.u32 %v641, 4294901760
      %v643 = vsub.f32 %v641, %v642
      %v644 = vand.u32 %v643, 4294901760
      %645 = vmatpush1.msra.mxu0 %v644
      %v646 = vand.u32 %v300, 4294901760
      %v647 = vsub.f32 %v300, %v646
      %v648 = vand.u32 %v647, 4294901760
      %v649 = vsub.f32 %v647, %v648
      %v650 = vand.u32 %v649, 4294901760
      %651 = vmatprep.subr.mxu0 %v650
      %v652 = vand.u32 %v299, 4294901760
      %v653 = vsub.f32 %v299, %v652
      %v654 = vand.u32 %v653, 4294901760
      %v655 = vsub.f32 %v653, %v654
      %v656 = vand.u32 %v655, 4294901760
      %657 = vmatpush1.msra.mxu0 %v656
      %v658 = vand.u32 %v296, 4294901760
      %v659 = vsub.f32 %v296, %v658
      %v660 = vand.u32 %v659, 4294901760
      %v661 = vsub.f32 %v659, %v660
      %v662 = vand.u32 %v661, 4294901760
      %663 = vmatprep.subr.mxu0 %v662
      %v664 = vand.u32 %v295, 4294901760
      %v665 = vsub.f32 %v295, %v664
      %v666 = vand.u32 %v665, 4294901760
      %v667 = vsub.f32 %v665, %v666
      %v668 = vand.u32 %v667, 4294901760
      %669 = vmatpush1.msra.mxu0 %v668
      %v670 = vand.u32 %v292, 4294901760
      %v671 = vsub.f32 %v292, %v670
      %v672 = vand.u32 %v671, 4294901760
      %v673 = vsub.f32 %v671, %v672
      %v674 = vand.u32 %v673, 4294901760
      %675 = vmatprep.subr.mxu0 %v674
      %v676 = vand.u32 %v291, 4294901760
      %v677 = vsub.f32 %v291, %v676
      %v678 = vand.u32 %v677, 4294901760
      %v679 = vsub.f32 %v677, %v678
      %v680 = vand.u32 %v679, 4294901760
      %681 = vmatpush1.msra.mxu0 %v680
      %v682 = vand.u32 %v288, 4294901760
      %v683 = vsub.f32 %v288, %v682
      %v684 = vand.u32 %v683, 4294901760
      %v685 = vsub.f32 %v683, %v684
      %v686 = vand.u32 %v685, 4294901760
      %687 = vmatprep.subr.mxu0 %v686
      %v688 = vand.u32 %v287, 4294901760
      %v689 = vsub.f32 %v287, %v688
      %v690 = vand.u32 %v689, 4294901760
      %v691 = vsub.f32 %v689, %v690
      %v692 = vand.u32 %v691, 4294901760
      %693 = vmatpush1.msra.mxu0 %v692
      %v694 = vand.u32 %v284, 4294901760
      %v695 = vsub.f32 %v284, %v694
      %v696 = vand.u32 %v695, 4294901760
      %v697 = vsub.f32 %v695, %v696
      %v698 = vand.u32 %v697, 4294901760
      %699 = vmatprep.subr.mxu0 %v698
      %v700 = vand.u32 %v283, 4294901760
      %v701 = vsub.f32 %v283, %v700
      %v702 = vand.u32 %v701, 4294901760
      %v703 = vsub.f32 %v701, %v702
      %v704 = vand.u32 %v703, 4294901760
      %705 = vmatpush1.msra.mxu0 %v704
      %v706 = vand.u32 %v280, 4294901760
      %v707 = vsub.f32 %v280, %v706
      %v708 = vand.u32 %v707, 4294901760
      %v709 = vsub.f32 %v707, %v708
      %v710 = vand.u32 %v709, 4294901760
      %711 = vmatprep.subr.mxu0 %v710
      %v712 = vand.u32 %v279, 4294901760
      %v713 = vsub.f32 %v279, %v712
      %v714 = vand.u32 %v713, 4294901760
      %v715 = vsub.f32 %v713, %v714
      %v716 = vand.u32 %v715, 4294901760
      %717 = vmatpush1.msra.mxu0 %v716
      %v718 = vand.u32 %v276, 4294901760
      %v719 = vsub.f32 %v276, %v718
      %v720 = vand.u32 %v719, 4294901760
      %v721 = vsub.f32 %v719, %v720
      %v722 = vand.u32 %v721, 4294901760
      %723 = vmatprep.subr.mxu0 %v722
      %v724 = vand.u32 %v275, 4294901760
      %v725 = vsub.f32 %v275, %v724
      %v726 = vand.u32 %v725, 4294901760
      %v727 = vsub.f32 %v725, %v726
      %v728 = vand.u32 %v727, 4294901760
      %729 = vmatpush1.msra.mxu0 %v728
      %v730 = vand.u32 %v272, 4294901760
      %v731 = vsub.f32 %v272, %v730
      %v732 = vand.u32 %v731, 4294901760
      %v733 = vsub.f32 %v731, %v732
      %v734 = vand.u32 %v733, 4294901760
      %735 = vmatprep.subr.mxu0 %v734
      %v736 = vand.u32 %v271, 4294901760
      %v737 = vsub.f32 %v271, %v736
      %v738 = vand.u32 %v737, 4294901760
      %v739 = vsub.f32 %v737, %v738
      %v740 = vand.u32 %v739, 4294901760
      %741 = vmatpush1.msra.mxu0 %v740
      %v742 = vand.u32 %v268, 4294901760
      %v743 = vsub.f32 %v268, %v742
      %v744 = vand.u32 %v743, 4294901760
      %v745 = vsub.f32 %v743, %v744
      %v746 = vand.u32 %v745, 4294901760
      %747 = vmatprep.subr.mxu0 %v746
      %v748 = vand.u32 %v267, 4294901760
      %v749 = vsub.f32 %v267, %v748
      %v750 = vand.u32 %v749, 4294901760
      %v751 = vsub.f32 %v749, %v750
      %v752 = vand.u32 %v751, 4294901760
      %753 = vmatpush1.msra.mxu0 %v752
      %v754 = vand.u32 %v264, 4294901760
      %v755 = vsub.f32 %v264, %v754
      %v756 = vand.u32 %v755, 4294901760
      %v757 = vsub.f32 %v755, %v756
      %v758 = vand.u32 %v757, 4294901760
      %759 = vmatprep.subr.mxu0 %v758
      %v760 = vand.u32 %v263, 4294901760
      %v761 = vsub.f32 %v263, %v760
      %v762 = vand.u32 %v761, 4294901760
      %v763 = vsub.f32 %v761, %v762
      %v764 = vand.u32 %v763, 4294901760
      %765 = vmatpush1.msra.mxu0 %v764
      %v766 = vand.u32 %v260, 4294901760
      %v767 = vsub.f32 %v260, %v766
      %v768 = vand.u32 %v767, 4294901760
      %v769 = vsub.f32 %v767, %v768
      %v770 = vand.u32 %v769, 4294901760
      %771 = vmatprep.subr.mxu0 %v770
      %v772 = vand.u32 %v259, 4294901760
      %v773 = vsub.f32 %v259, %v772
      %v774 = vand.u32 %v773, 4294901760
      %v775 = vsub.f32 %v773, %v774
      %v776 = vand.u32 %v775, 4294901760
      %777 = vmatpush1.msra.mxu0 %v776
      %v778 = vand.u32 %v256, 4294901760
      %v779 = vsub.f32 %v256, %v778
      %v780 = vand.u32 %v779, 4294901760
      %v781 = vsub.f32 %v779, %v780
      %v782 = vand.u32 %v781, 4294901760
      %783 = vmatprep.subr.mxu0 %v782
      %v784 = vand.u32 %v255, 4294901760
      %v785 = vsub.f32 %v255, %v784
      %v786 = vand.u32 %v785, 4294901760
      %v787 = vsub.f32 %v785, %v786
      %v788 = vand.u32 %v787, 4294901760
      %789 = vmatpush1.msra.mxu0 %v788
      %v790 = vand.u32 %v380, 4294901760
      %v791 = vsub.f32 %v380, %v790
      %v792 = vand.u32 %v791, 4294901760
      %v793 = vsub.f32 %v791, %v792
      %v794 = vand.u32 %v793, 4294901760
      %795 = vmatprep.subr.mxu0 %v794
      %v796 = vand.u32 %v379, 4294901760
      %v797 = vsub.f32 %v379, %v796
      %v798 = vand.u32 %v797, 4294901760
      %v799 = vsub.f32 %v797, %v798
      %v800 = vand.u32 %v799, 4294901760
      %801 = vmatpush2.msra.mxu0 %v800
      %v802 = vand.u32 %v376, 4294901760
      %v803 = vsub.f32 %v376, %v802
      %v804 = vand.u32 %v803, 4294901760
      %v805 = vsub.f32 %v803, %v804
      %v806 = vand.u32 %v805, 4294901760
      %807 = vmatprep.subr.mxu0 %v806
      %v808 = vand.u32 %v375, 4294901760
      %v809 = vsub.f32 %v375, %v808
      %v810 = vand.u32 %v809, 4294901760
      %v811 = vsub.f32 %v809, %v810
      %v812 = vand.u32 %v811, 4294901760
      %813 = vmatpush2.msra.mxu0 %v812
      %v814 = vand.u32 %v372, 4294901760
      %v815 = vsub.f32 %v372, %v814
      %v816 = vand.u32 %v815, 4294901760
      %v817 = vsub.f32 %v815, %v816
      %v818 = vand.u32 %v817, 4294901760
      %819 = vmatprep.subr.mxu0 %v818
      %v820 = vand.u32 %v371, 4294901760
      %v821 = vsub.f32 %v371, %v820
      %v822 = vand.u32 %v821, 4294901760
      %v823 = vsub.f32 %v821, %v822
      %v824 = vand.u32 %v823, 4294901760
      %825 = vmatpush2.msra.mxu0 %v824
      %v826 = vand.u32 %v368, 4294901760
      %v827 = vsub.f32 %v368, %v826
      %v828 = vand.u32 %v827, 4294901760
      %v829 = vsub.f32 %v827, %v828
      %v830 = vand.u32 %v829, 4294901760
      %831 = vmatprep.subr.mxu0 %v830
      %v832 = vand.u32 %v367, 4294901760
      %v833 = vsub.f32 %v367, %v832
      %v834 = vand.u32 %v833, 4294901760
      %v835 = vsub.f32 %v833, %v834
      %v836 = vand.u32 %v835, 4294901760
      %837 = vmatpush2.msra.mxu0 %v836
      %v838 = vand.u32 %v364, 4294901760
      %v839 = vsub.f32 %v364, %v838
      %v840 = vand.u32 %v839, 4294901760
      %v841 = vsub.f32 %v839, %v840
      %v842 = vand.u32 %v841, 4294901760
      %843 = vmatprep.subr.mxu0 %v842
      %v844 = vand.u32 %v363, 4294901760
      %v845 = vsub.f32 %v363, %v844
      %v846 = vand.u32 %v845, 4294901760
      %v847 = vsub.f32 %v845, %v846
      %v848 = vand.u32 %v847, 4294901760
      %849 = vmatpush2.msra.mxu0 %v848
      %v850 = vand.u32 %v360, 4294901760
      %v851 = vsub.f32 %v360, %v850
      %v852 = vand.u32 %v851, 4294901760
      %v853 = vsub.f32 %v851, %v852
      %v854 = vand.u32 %v853, 4294901760
      %855 = vmatprep.subr.mxu0 %v854
      %v856 = vand.u32 %v359, 4294901760
      %v857 = vsub.f32 %v359, %v856
      %v858 = vand.u32 %v857, 4294901760
      %v859 = vsub.f32 %v857, %v858
      %v860 = vand.u32 %v859, 4294901760
      %861 = vmatpush2.msra.mxu0 %v860
      %v862 = vand.u32 %v356, 4294901760
      %v863 = vsub.f32 %v356, %v862
      %v864 = vand.u32 %v863, 4294901760
      %v865 = vsub.f32 %v863, %v864
      %v866 = vand.u32 %v865, 4294901760
      %867 = vmatprep.subr.mxu0 %v866
      %v868 = vand.u32 %v355, 4294901760
      %v869 = vsub.f32 %v355, %v868
      %v870 = vand.u32 %v869, 4294901760
      %v871 = vsub.f32 %v869, %v870
      %v872 = vand.u32 %v871, 4294901760
      %873 = vmatpush2.msra.mxu0 %v872
      %v874 = vand.u32 %v352, 4294901760
      %v875 = vsub.f32 %v352, %v874
      %v876 = vand.u32 %v875, 4294901760
      %v877 = vsub.f32 %v875, %v876
      %v878 = vand.u32 %v877, 4294901760
      %879 = vmatprep.subr.mxu0 %v878
      %v880 = vand.u32 %v351, 4294901760
      %v881 = vsub.f32 %v351, %v880
      %v882 = vand.u32 %v881, 4294901760
      %v883 = vsub.f32 %v881, %v882
      %v884 = vand.u32 %v883, 4294901760
      %885 = vmatpush2.msra.mxu0 %v884
      %v886 = vand.u32 %v348, 4294901760
      %v887 = vsub.f32 %v348, %v886
      %v888 = vand.u32 %v887, 4294901760
      %v889 = vsub.f32 %v887, %v888
      %v890 = vand.u32 %v889, 4294901760
      %891 = vmatprep.subr.mxu0 %v890
      %v892 = vand.u32 %v347, 4294901760
      %v893 = vsub.f32 %v347, %v892
      %v894 = vand.u32 %v893, 4294901760
      %v895 = vsub.f32 %v893, %v894
      %v896 = vand.u32 %v895, 4294901760
      %897 = vmatpush2.msra.mxu0 %v896
      %v898 = vand.u32 %v344, 4294901760
      %v899 = vsub.f32 %v344, %v898
      %v900 = vand.u32 %v899, 4294901760
      %v901 = vsub.f32 %v899, %v900
      %v902 = vand.u32 %v901, 4294901760
      %903 = vmatprep.subr.mxu0 %v902
      %v904 = vand.u32 %v343, 4294901760
      %v905 = vsub.f32 %v343, %v904
      %v906 = vand.u32 %v905, 4294901760
      %v907 = vsub.f32 %v905, %v906
      %v908 = vand.u32 %v907, 4294901760
      %909 = vmatpush2.msra.mxu0 %v908
      %v910 = vand.u32 %v340, 4294901760
      %v911 = vsub.f32 %v340, %v910
      %v912 = vand.u32 %v911, 4294901760
      %v913 = vsub.f32 %v911, %v912
      %v914 = vand.u32 %v913, 4294901760
      %915 = vmatprep.subr.mxu0 %v914
      %v916 = vand.u32 %v339, 4294901760
      %v917 = vsub.f32 %v339, %v916
      %v918 = vand.u32 %v917, 4294901760
      %v919 = vsub.f32 %v917, %v918
      %v920 = vand.u32 %v919, 4294901760
      %921 = vmatpush2.msra.mxu0 %v920
      %v922 = vand.u32 %v336, 4294901760
      %v923 = vsub.f32 %v336, %v922
      %v924 = vand.u32 %v923, 4294901760
      %v925 = vsub.f32 %v923, %v924
      %v926 = vand.u32 %v925, 4294901760
      %927 = vmatprep.subr.mxu0 %v926
      %v928 = vand.u32 %v335, 4294901760
      %v929 = vsub.f32 %v335, %v928
      %v930 = vand.u32 %v929, 4294901760
      %v931 = vsub.f32 %v929, %v930
      %v932 = vand.u32 %v931, 4294901760
      %933 = vmatpush2.msra.mxu0 %v932
      %v934 = vand.u32 %v332, 4294901760
      %v935 = vsub.f32 %v332, %v934
      %v936 = vand.u32 %v935, 4294901760
      %v937 = vsub.f32 %v935, %v936
      %v938 = vand.u32 %v937, 4294901760
      %939 = vmatprep.subr.mxu0 %v938
      %v940 = vand.u32 %v331, 4294901760
      %v941 = vsub.f32 %v331, %v940
      %v942 = vand.u32 %v941, 4294901760
      %v943 = vsub.f32 %v941, %v942
      %v944 = vand.u32 %v943, 4294901760
      %945 = vmatpush2.msra.mxu0 %v944
      %v946 = vand.u32 %v328, 4294901760
      %v947 = vsub.f32 %v328, %v946
      %v948 = vand.u32 %v947, 4294901760
      %v949 = vsub.f32 %v947, %v948
      %v950 = vand.u32 %v949, 4294901760
      %951 = vmatprep.subr.mxu0 %v950
      %v952 = vand.u32 %v327, 4294901760
      %v953 = vsub.f32 %v327, %v952
      %v954 = vand.u32 %v953, 4294901760
      %v955 = vsub.f32 %v953, %v954
      %v956 = vand.u32 %v955, 4294901760
      %957 = vmatpush2.msra.mxu0 %v956
      %v958 = vand.u32 %v324, 4294901760
      %v959 = vsub.f32 %v324, %v958
      %v960 = vand.u32 %v959, 4294901760
      %v961 = vsub.f32 %v959, %v960
      %v962 = vand.u32 %v961, 4294901760
      %963 = vmatprep.subr.mxu0 %v962
      %v964 = vand.u32 %v323, 4294901760
      %v965 = vsub.f32 %v323, %v964
      %v966 = vand.u32 %v965, 4294901760
      %v967 = vsub.f32 %v965, %v966
      %v968 = vand.u32 %v967, 4294901760
      %969 = vmatpush2.msra.mxu0 %v968
      %v970 = vand.u32 %v320, 4294901760
      %v971 = vsub.f32 %v320, %v970
      %v972 = vand.u32 %v971, 4294901760
      %v973 = vsub.f32 %v971, %v972
      %v974 = vand.u32 %v973, 4294901760
      %975 = vmatprep.subr.mxu0 %v974
      %v976 = vand.u32 %v319, 4294901760
      %v977 = vsub.f32 %v319, %v976
      %v978 = vand.u32 %v977, 4294901760
      %v979 = vsub.f32 %v977, %v978
      %v980 = vand.u32 %v979, 4294901760
      %981 = vmatpush2.msra.mxu0 %v980
      %v982 = vand.u32 %v251, 4294901760
      %983 = vmatprep.mubr.f32.mxu0 %v982
      %v984 = vand.u32 %v247, 4294901760
      %985 = vmatmul.mubr.f32.gmra.mxu0 %v984
      %v986 = vpop.f32.mrf.mxu0
      %v987 = vadd.f32 %v546, %v986
      %v988 = vpop.f32.mrf.mxu0
      %v989 = vadd.f32 %v548, %v988
      %v990 = vand.u32 %v252, 4294901760
      %991 = vmatprep.mubr.f32.mxu0 %v990
      %v992 = vand.u32 %v248, 4294901760
      %993 = vmatmul.mubr.f32.gmra.mxu0 %v992
      %v994 = vpop.f32.mrf.mxu0
      %v995 = vadd.f32 %v562, %v994
      %v996 = vpop.f32.mrf.mxu0
      %v997 = vadd.f32 %v564, %v996
      %v998 = vand.u32 %v253, 4294901760
      %999 = vmatprep.mubr.f32.mxu0 %v998
      %v1000 = vand.u32 %v249, 4294901760
      %1001 = vmatmul.mubr.f32.gmra.mxu0 %v1000
      %v1002 = vpop.f32.mrf.mxu0
      %v1003 = vadd.f32 %v578, %v1002
      %v1004 = vpop.f32.mrf.mxu0
      %v1005 = vadd.f32 %v580, %v1004
      %v1006 = vand.u32 %v254, 4294901760
      %1007 = vmatprep.mubr.f32.mxu0 %v1006
      %v1008 = vand.u32 %v250, 4294901760
      %1009 = vmatmul.mubr.f32.gmra.mxu0 %v1008
      %v1010 = vpop.f32.mrf.mxu0
      %v1011 = vadd.f32 %v594, %v1010
      %v1012 = vpop.f32.mrf.mxu0
      %v1013 = vadd.f32 %v596, %v1012
      %1014 = vdwg.mxu0
      %v1015 = vand.u32 %v316, 4294901760
      %v1016 = vsub.f32 %v316, %v1015
      %1017 = vmatprep.subr.mxu0 %v1016
      %v1018 = vand.u32 %v315, 4294901760
      %v1019 = vsub.f32 %v315, %v1018
      %1020 = vmatpush1.msra.mxu0 %v1019
      %v1021 = vand.u32 %v312, 4294901760
      %v1022 = vsub.f32 %v312, %v1021
      %1023 = vmatprep.subr.mxu0 %v1022
      %v1024 = vand.u32 %v311, 4294901760
      %v1025 = vsub.f32 %v311, %v1024
      %1026 = vmatpush1.msra.mxu0 %v1025
      %v1027 = vand.u32 %v308, 4294901760
      %v1028 = vsub.f32 %v308, %v1027
      %1029 = vmatprep.subr.mxu0 %v1028
      %v1030 = vand.u32 %v307, 4294901760
      %v1031 = vsub.f32 %v307, %v1030
      %1032 = vmatpush1.msra.mxu0 %v1031
      %v1033 = vand.u32 %v304, 4294901760
      %v1034 = vsub.f32 %v304, %v1033
      %1035 = vmatprep.subr.mxu0 %v1034
      %v1036 = vand.u32 %v303, 4294901760
      %v1037 = vsub.f32 %v303, %v1036
      %1038 = vmatpush1.msra.mxu0 %v1037
      %v1039 = vand.u32 %v300, 4294901760
      %v1040 = vsub.f32 %v300, %v1039
      %1041 = vmatprep.subr.mxu0 %v1040
      %v1042 = vand.u32 %v299, 4294901760
      %v1043 = vsub.f32 %v299, %v1042
      %1044 = vmatpush1.msra.mxu0 %v1043
      %v1045 = vand.u32 %v296, 4294901760
      %v1046 = vsub.f32 %v296, %v1045
      %1047 = vmatprep.subr.mxu0 %v1046
      %v1048 = vand.u32 %v295, 4294901760
      %v1049 = vsub.f32 %v295, %v1048
      %1050 = vmatpush1.msra.mxu0 %v1049
      %v1051 = vand.u32 %v292, 4294901760
      %v1052 = vsub.f32 %v292, %v1051
      %1053 = vmatprep.subr.mxu0 %v1052
      %v1054 = vand.u32 %v291, 4294901760
      %v1055 = vsub.f32 %v291, %v1054
      %1056 = vmatpush1.msra.mxu0 %v1055
      %v1057 = vand.u32 %v288, 4294901760
      %v1058 = vsub.f32 %v288, %v1057
      %1059 = vmatprep.subr.mxu0 %v1058
      %v1060 = vand.u32 %v287, 4294901760
      %v1061 = vsub.f32 %v287, %v1060
      %1062 = vmatpush1.msra.mxu0 %v1061
      %v1063 = vand.u32 %v284, 4294901760
      %v1064 = vsub.f32 %v284, %v1063
      %1065 = vmatprep.subr.mxu0 %v1064
      %v1066 = vand.u32 %v283, 4294901760
      %v1067 = vsub.f32 %v283, %v1066
      %1068 = vmatpush1.msra.mxu0 %v1067
      %v1069 = vand.u32 %v280, 4294901760
      %v1070 = vsub.f32 %v280, %v1069
      %1071 = vmatprep.subr.mxu0 %v1070
      %v1072 = vand.u32 %v279, 4294901760
      %v1073 = vsub.f32 %v279, %v1072
      %1074 = vmatpush1.msra.mxu0 %v1073
      %v1075 = vand.u32 %v276, 4294901760
      %v1076 = vsub.f32 %v276, %v1075
      %1077 = vmatprep.subr.mxu0 %v1076
      %v1078 = vand.u32 %v275, 4294901760
      %v1079 = vsub.f32 %v275, %v1078
      %1080 = vmatpush1.msra.mxu0 %v1079
      %v1081 = vand.u32 %v272, 4294901760
      %v1082 = vsub.f32 %v272, %v1081
      %1083 = vmatprep.subr.mxu0 %v1082
      %v1084 = vand.u32 %v271, 4294901760
      %v1085 = vsub.f32 %v271, %v1084
      %1086 = vmatpush1.msra.mxu0 %v1085
      %v1087 = vand.u32 %v268, 4294901760
      %v1088 = vsub.f32 %v268, %v1087
      %1089 = vmatprep.subr.mxu0 %v1088
      %v1090 = vand.u32 %v267, 4294901760
      %v1091 = vsub.f32 %v267, %v1090
      %1092 = vmatpush1.msra.mxu0 %v1091
      %v1093 = vand.u32 %v264, 4294901760
      %v1094 = vsub.f32 %v264, %v1093
      %1095 = vmatprep.subr.mxu0 %v1094
      %v1096 = vand.u32 %v263, 4294901760
      %v1097 = vsub.f32 %v263, %v1096
      %1098 = vmatpush1.msra.mxu0 %v1097
      %v1099 = vand.u32 %v260, 4294901760
      %v1100 = vsub.f32 %v260, %v1099
      %1101 = vmatprep.subr.mxu0 %v1100
      %v1102 = vand.u32 %v259, 4294901760
      %v1103 = vsub.f32 %v259, %v1102
      %1104 = vmatpush1.msra.mxu0 %v1103
      %v1105 = vand.u32 %v256, 4294901760
      %v1106 = vsub.f32 %v256, %v1105
      %1107 = vmatprep.subr.mxu0 %v1106
      %v1108 = vand.u32 %v255, 4294901760
      %v1109 = vsub.f32 %v255, %v1108
      %1110 = vmatpush1.msra.mxu0 %v1109
      %v1111 = vand.u32 %v380, 4294901760
      %v1112 = vsub.f32 %v380, %v1111
      %1113 = vmatprep.subr.mxu0 %v1112
      %v1114 = vand.u32 %v379, 4294901760
      %v1115 = vsub.f32 %v379, %v1114
      %1116 = vmatpush2.msra.mxu0 %v1115
      %v1117 = vand.u32 %v376, 4294901760
      %v1118 = vsub.f32 %v376, %v1117
      %1119 = vmatprep.subr.mxu0 %v1118
      %v1120 = vand.u32 %v375, 4294901760
      %v1121 = vsub.f32 %v375, %v1120
      %1122 = vmatpush2.msra.mxu0 %v1121
      %v1123 = vand.u32 %v372, 4294901760
      %v1124 = vsub.f32 %v372, %v1123
      %1125 = vmatprep.subr.mxu0 %v1124
      %v1126 = vand.u32 %v371, 4294901760
      %v1127 = vsub.f32 %v371, %v1126
      %1128 = vmatpush2.msra.mxu0 %v1127
      %v1129 = vand.u32 %v368, 4294901760
      %v1130 = vsub.f32 %v368, %v1129
      %1131 = vmatprep.subr.mxu0 %v1130
      %v1132 = vand.u32 %v367, 4294901760
      %v1133 = vsub.f32 %v367, %v1132
      %1134 = vmatpush2.msra.mxu0 %v1133
      %v1135 = vand.u32 %v364, 4294901760
      %v1136 = vsub.f32 %v364, %v1135
      %1137 = vmatprep.subr.mxu0 %v1136
      %v1138 = vand.u32 %v363, 4294901760
      %v1139 = vsub.f32 %v363, %v1138
      %1140 = vmatpush2.msra.mxu0 %v1139
      %v1141 = vand.u32 %v360, 4294901760
      %v1142 = vsub.f32 %v360, %v1141
      %1143 = vmatprep.subr.mxu0 %v1142
      %v1144 = vand.u32 %v359, 4294901760
      %v1145 = vsub.f32 %v359, %v1144
      %1146 = vmatpush2.msra.mxu0 %v1145
      %v1147 = vand.u32 %v356, 4294901760
      %v1148 = vsub.f32 %v356, %v1147
      %1149 = vmatprep.subr.mxu0 %v1148
      %v1150 = vand.u32 %v355, 4294901760
      %v1151 = vsub.f32 %v355, %v1150
      %1152 = vmatpush2.msra.mxu0 %v1151
      %v1153 = vand.u32 %v352, 4294901760
      %v1154 = vsub.f32 %v352, %v1153
      %1155 = vmatprep.subr.mxu0 %v1154
      %v1156 = vand.u32 %v351, 4294901760
      %v1157 = vsub.f32 %v351, %v1156
      %1158 = vmatpush2.msra.mxu0 %v1157
      %v1159 = vand.u32 %v348, 4294901760
      %v1160 = vsub.f32 %v348, %v1159
      %1161 = vmatprep.subr.mxu0 %v1160
      %v1162 = vand.u32 %v347, 4294901760
      %v1163 = vsub.f32 %v347, %v1162
      %1164 = vmatpush2.msra.mxu0 %v1163
      %v1165 = vand.u32 %v344, 4294901760
      %v1166 = vsub.f32 %v344, %v1165
      %1167 = vmatprep.subr.mxu0 %v1166
      %v1168 = vand.u32 %v343, 4294901760
      %v1169 = vsub.f32 %v343, %v1168
      %1170 = vmatpush2.msra.mxu0 %v1169
      %v1171 = vand.u32 %v340, 4294901760
      %v1172 = vsub.f32 %v340, %v1171
      %1173 = vmatprep.subr.mxu0 %v1172
      %v1174 = vand.u32 %v339, 4294901760
      %v1175 = vsub.f32 %v339, %v1174
      %1176 = vmatpush2.msra.mxu0 %v1175
      %v1177 = vand.u32 %v336, 4294901760
      %v1178 = vsub.f32 %v336, %v1177
      %1179 = vmatprep.subr.mxu0 %v1178
      %v1180 = vand.u32 %v335, 4294901760
      %v1181 = vsub.f32 %v335, %v1180
      %1182 = vmatpush2.msra.mxu0 %v1181
      %v1183 = vand.u32 %v332, 4294901760
      %v1184 = vsub.f32 %v332, %v1183
      %1185 = vmatprep.subr.mxu0 %v1184
      %v1186 = vand.u32 %v331, 4294901760
      %v1187 = vsub.f32 %v331, %v1186
      %1188 = vmatpush2.msra.mxu0 %v1187
      %v1189 = vand.u32 %v328, 4294901760
      %v1190 = vsub.f32 %v328, %v1189
      %1191 = vmatprep.subr.mxu0 %v1190
      %v1192 = vand.u32 %v327, 4294901760
      %v1193 = vsub.f32 %v327, %v1192
      %1194 = vmatpush2.msra.mxu0 %v1193
      %v1195 = vand.u32 %v324, 4294901760
      %v1196 = vsub.f32 %v324, %v1195
      %1197 = vmatprep.subr.mxu0 %v1196
      %v1198 = vand.u32 %v323, 4294901760
      %v1199 = vsub.f32 %v323, %v1198
      %1200 = vmatpush2.msra.mxu0 %v1199
      %v1201 = vand.u32 %v320, 4294901760
      %v1202 = vsub.f32 %v320, %v1201
      %1203 = vmatprep.subr.mxu0 %v1202
      %v1204 = vand.u32 %v319, 4294901760
      %v1205 = vsub.f32 %v319, %v1204
      %1206 = vmatpush2.msra.mxu0 %v1205
      %v1207 = vand.u32 %v251, 4294901760
      %v1208 = vsub.f32 %v251, %v1207
      %1209 = vmatprep.mubr.f32.mxu0 %v1208
      %v1210 = vand.u32 %v247, 4294901760
      %v1211 = vsub.f32 %v247, %v1210
      %1212 = vmatmul.mubr.f32.gmra.mxu0 %v1211
      %v1213 = vpop.f32.mrf.mxu0
      %v1214 = vadd.f32 %v987, %v1213
      %v1215 = vpop.f32.mrf.mxu0
      %v1216 = vadd.f32 %v989, %v1215
      %v1217 = vand.u32 %v252, 4294901760
      %v1218 = vsub.f32 %v252, %v1217
      %1219 = vmatprep.mubr.f32.mxu0 %v1218
      %v1220 = vand.u32 %v248, 4294901760
      %v1221 = vsub.f32 %v248, %v1220
      %1222 = vmatmul.mubr.f32.gmra.mxu0 %v1221
      %v1223 = vpop.f32.mrf.mxu0
      %v1224 = vadd.f32 %v995, %v1223
      %v1225 = vpop.f32.mrf.mxu0
      %v1226 = vadd.f32 %v997, %v1225
      %v1227 = vand.u32 %v253, 4294901760
      %v1228 = vsub.f32 %v253, %v1227
      %1229 = vmatprep.mubr.f32.mxu0 %v1228
      %v1230 = vand.u32 %v249, 4294901760
      %v1231 = vsub.f32 %v249, %v1230
      %1232 = vmatmul.mubr.f32.gmra.mxu0 %v1231
      %v1233 = vpop.f32.mrf.mxu0
      %v1234 = vadd.f32 %v1003, %v1233
      %v1235 = vpop.f32.mrf.mxu0
      %v1236 = vadd.f32 %v1005, %v1235
      %v1237 = vand.u32 %v254, 4294901760
      %v1238 = vsub.f32 %v254, %v1237
      %1239 = vmatprep.mubr.f32.mxu0 %v1238
      %v1240 = vand.u32 %v250, 4294901760
      %v1241 = vsub.f32 %v250, %v1240
      %1242 = vmatmul.mubr.f32.gmra.mxu0 %v1241
      %v1243 = vpop.f32.mrf.mxu0
      %v1244 = vadd.f32 %v1011, %v1243
      %v1245 = vpop.f32.mrf.mxu0
      %v1246 = vadd.f32 %v1013, %v1245
      %1247 = vdwg.mxu0
      %v1248 = vand.u32 %v316, 4294901760
      %1249 = vmatprep.subr.mxu0 %v1248
      %v1250 = vand.u32 %v315, 4294901760
      %1251 = vmatpush1.msra.mxu0 %v1250
      %v1252 = vand.u32 %v312, 4294901760
      %1253 = vmatprep.subr.mxu0 %v1252
      %v1254 = vand.u32 %v311, 4294901760
      %1255 = vmatpush1.msra.mxu0 %v1254
      %v1256 = vand.u32 %v308, 4294901760
      %1257 = vmatprep.subr.mxu0 %v1256
      %v1258 = vand.u32 %v307, 4294901760
      %1259 = vmatpush1.msra.mxu0 %v1258
      %v1260 = vand.u32 %v304, 4294901760
      %1261 = vmatprep.subr.mxu0 %v1260
      %v1262 = vand.u32 %v303, 4294901760
      %1263 = vmatpush1.msra.mxu0 %v1262
      %v1264 = vand.u32 %v300, 4294901760
      %1265 = vmatprep.subr.mxu0 %v1264
      %v1266 = vand.u32 %v299, 4294901760
      %1267 = vmatpush1.msra.mxu0 %v1266
      %v1268 = vand.u32 %v296, 4294901760
      %1269 = vmatprep.subr.mxu0 %v1268
      %v1270 = vand.u32 %v295, 4294901760
      %1271 = vmatpush1.msra.mxu0 %v1270
      %v1272 = vand.u32 %v292, 4294901760
      %1273 = vmatprep.subr.mxu0 %v1272
      %v1274 = vand.u32 %v291, 4294901760
      %1275 = vmatpush1.msra.mxu0 %v1274
      %v1276 = vand.u32 %v288, 4294901760
      %1277 = vmatprep.subr.mxu0 %v1276
      %v1278 = vand.u32 %v287, 4294901760
      %1279 = vmatpush1.msra.mxu0 %v1278
      %v1280 = vand.u32 %v284, 4294901760
      %1281 = vmatprep.subr.mxu0 %v1280
      %v1282 = vand.u32 %v283, 4294901760
      %1283 = vmatpush1.msra.mxu0 %v1282
      %v1284 = vand.u32 %v280, 4294901760
      %1285 = vmatprep.subr.mxu0 %v1284
      %v1286 = vand.u32 %v279, 4294901760
      %1287 = vmatpush1.msra.mxu0 %v1286
      %v1288 = vand.u32 %v276, 4294901760
      %1289 = vmatprep.subr.mxu0 %v1288
      %v1290 = vand.u32 %v275, 4294901760
      %1291 = vmatpush1.msra.mxu0 %v1290
      %v1292 = vand.u32 %v272, 4294901760
      %1293 = vmatprep.subr.mxu0 %v1292
      %v1294 = vand.u32 %v271, 4294901760
      %1295 = vmatpush1.msra.mxu0 %v1294
      %v1296 = vand.u32 %v268, 4294901760
      %1297 = vmatprep.subr.mxu0 %v1296
      %v1298 = vand.u32 %v267, 4294901760
      %1299 = vmatpush1.msra.mxu0 %v1298
      %v1300 = vand.u32 %v264, 4294901760
      %1301 = vmatprep.subr.mxu0 %v1300
      %v1302 = vand.u32 %v263, 4294901760
      %1303 = vmatpush1.msra.mxu0 %v1302
      %v1304 = vand.u32 %v260, 4294901760
      %1305 = vmatprep.subr.mxu0 %v1304
      %v1306 = vand.u32 %v259, 4294901760
      %1307 = vmatpush1.msra.mxu0 %v1306
      %v1308 = vand.u32 %v256, 4294901760
      %1309 = vmatprep.subr.mxu0 %v1308
      %v1310 = vand.u32 %v255, 4294901760
      %1311 = vmatpush1.msra.mxu0 %v1310
      %v1312 = vand.u32 %v380, 4294901760
      %1313 = vmatprep.subr.mxu0 %v1312
      %v1314 = vand.u32 %v379, 4294901760
      %1315 = vmatpush2.msra.mxu0 %v1314
      %v1316 = vand.u32 %v376, 4294901760
      %1317 = vmatprep.subr.mxu0 %v1316
      %v1318 = vand.u32 %v375, 4294901760
      %1319 = vmatpush2.msra.mxu0 %v1318
      %v1320 = vand.u32 %v372, 4294901760
      %1321 = vmatprep.subr.mxu0 %v1320
      %v1322 = vand.u32 %v371, 4294901760
      %1323 = vmatpush2.msra.mxu0 %v1322
      %v1324 = vand.u32 %v368, 4294901760
      %1325 = vmatprep.subr.mxu0 %v1324
      %v1326 = vand.u32 %v367, 4294901760
      %1327 = vmatpush2.msra.mxu0 %v1326
      %v1328 = vand.u32 %v364, 4294901760
      %1329 = vmatprep.subr.mxu0 %v1328
      %v1330 = vand.u32 %v363, 4294901760
      %1331 = vmatpush2.msra.mxu0 %v1330
      %v1332 = vand.u32 %v360, 4294901760
      %1333 = vmatprep.subr.mxu0 %v1332
      %v1334 = vand.u32 %v359, 4294901760
      %1335 = vmatpush2.msra.mxu0 %v1334
      %v1336 = vand.u32 %v356, 4294901760
      %1337 = vmatprep.subr.mxu0 %v1336
      %v1338 = vand.u32 %v355, 4294901760
      %1339 = vmatpush2.msra.mxu0 %v1338
      %v1340 = vand.u32 %v352, 4294901760
      %1341 = vmatprep.subr.mxu0 %v1340
      %v1342 = vand.u32 %v351, 4294901760
      %1343 = vmatpush2.msra.mxu0 %v1342
      %v1344 = vand.u32 %v348, 4294901760
      %1345 = vmatprep.subr.mxu0 %v1344
      %v1346 = vand.u32 %v347, 4294901760
      %1347 = vmatpush2.msra.mxu0 %v1346
      %v1348 = vand.u32 %v344, 4294901760
      %1349 = vmatprep.subr.mxu0 %v1348
      %v1350 = vand.u32 %v343, 4294901760
      %1351 = vmatpush2.msra.mxu0 %v1350
      %v1352 = vand.u32 %v340, 4294901760
      %1353 = vmatprep.subr.mxu0 %v1352
      %v1354 = vand.u32 %v339, 4294901760
      %1355 = vmatpush2.msra.mxu0 %v1354
      %v1356 = vand.u32 %v336, 4294901760
      %1357 = vmatprep.subr.mxu0 %v1356
      %v1358 = vand.u32 %v335, 4294901760
      %1359 = vmatpush2.msra.mxu0 %v1358
      %v1360 = vand.u32 %v332, 4294901760
      %1361 = vmatprep.subr.mxu0 %v1360
      %v1362 = vand.u32 %v331, 4294901760
      %1363 = vmatpush2.msra.mxu0 %v1362
      %v1364 = vand.u32 %v328, 4294901760
      %1365 = vmatprep.subr.mxu0 %v1364
      %v1366 = vand.u32 %v327, 4294901760
      %1367 = vmatpush2.msra.mxu0 %v1366
      %v1368 = vand.u32 %v324, 4294901760
      %1369 = vmatprep.subr.mxu0 %v1368
      %v1370 = vand.u32 %v323, 4294901760
      %1371 = vmatpush2.msra.mxu0 %v1370
      %v1372 = vand.u32 %v320, 4294901760
      %1373 = vmatprep.subr.mxu0 %v1372
      %v1374 = vand.u32 %v319, 4294901760
      %1375 = vmatpush2.msra.mxu0 %v1374
      %v1376 = vand.u32 %v251, 4294901760
      %v1377 = vsub.f32 %v251, %v1376
      %v1378 = vand.u32 %v1377, 4294901760
      %1379 = vmatprep.mubr.f32.mxu0 %v1378
      %v1380 = vand.u32 %v247, 4294901760
      %v1381 = vsub.f32 %v247, %v1380
      %v1382 = vand.u32 %v1381, 4294901760
      %1383 = vmatmul.mubr.f32.gmra.mxu0 %v1382
      %v1384 = vpop.f32.mrf.mxu0
      %v1385 = vadd.f32 %v1214, %v1384
      %v1386 = vpop.f32.mrf.mxu0
      %v1387 = vadd.f32 %v1216, %v1386
      %v1388 = vand.u32 %v252, 4294901760
      %v1389 = vsub.f32 %v252, %v1388
      %v1390 = vand.u32 %v1389, 4294901760
      %1391 = vmatprep.mubr.f32.mxu0 %v1390
      %v1392 = vand.u32 %v248, 4294901760
      %v1393 = vsub.f32 %v248, %v1392
      %v1394 = vand.u32 %v1393, 4294901760
      %1395 = vmatmul.mubr.f32.gmra.mxu0 %v1394
      %v1396 = vpop.f32.mrf.mxu0
      %v1397 = vadd.f32 %v1224, %v1396
      %v1398 = vpop.f32.mrf.mxu0
      %v1399 = vadd.f32 %v1226, %v1398
      %v1400 = vand.u32 %v253, 4294901760
      %v1401 = vsub.f32 %v253, %v1400
      %v1402 = vand.u32 %v1401, 4294901760
      %1403 = vmatprep.mubr.f32.mxu0 %v1402
      %v1404 = vand.u32 %v249, 4294901760
      %v1405 = vsub.f32 %v249, %v1404
      %v1406 = vand.u32 %v1405, 4294901760
      %1407 = vmatmul.mubr.f32.gmra.mxu0 %v1406
      %v1408 = vpop.f32.mrf.mxu0
      %v1409 = vadd.f32 %v1234, %v1408
      %v1410 = vpop.f32.mrf.mxu0
      %v1411 = vadd.f32 %v1236, %v1410
      %v1412 = vand.u32 %v254, 4294901760
      %v1413 = vsub.f32 %v254, %v1412
      %v1414 = vand.u32 %v1413, 4294901760
      %1415 = vmatprep.mubr.f32.mxu0 %v1414
      %v1416 = vand.u32 %v250, 4294901760
      %v1417 = vsub.f32 %v250, %v1416
      %v1418 = vand.u32 %v1417, 4294901760
      %1419 = vmatmul.mubr.f32.gmra.mxu0 %v1418
      %v1420 = vpop.f32.mrf.mxu0
      %v1421 = vadd.f32 %v1244, %v1420
      %v1422 = vpop.f32.mrf.mxu0
      %v1423 = vadd.f32 %v1246, %v1422
      %1424 = vdwg.mxu0
      %v1425 = vand.u32 %v316, 4294901760
      %v1426 = vsub.f32 %v316, %v1425
      %v1427 = vand.u32 %v1426, 4294901760
      %1428 = vmatprep.subr.mxu0 %v1427
      %v1429 = vand.u32 %v315, 4294901760
      %v1430 = vsub.f32 %v315, %v1429
      %v1431 = vand.u32 %v1430, 4294901760
      %1432 = vmatpush1.msra.mxu0 %v1431
      %v1433 = vand.u32 %v312, 4294901760
      %v1434 = vsub.f32 %v312, %v1433
      %v1435 = vand.u32 %v1434, 4294901760
      %1436 = vmatprep.subr.mxu0 %v1435
      %v1437 = vand.u32 %v311, 4294901760
      %v1438 = vsub.f32 %v311, %v1437
      %v1439 = vand.u32 %v1438, 4294901760
      %1440 = vmatpush1.msra.mxu0 %v1439
      %v1441 = vand.u32 %v308, 4294901760
      %v1442 = vsub.f32 %v308, %v1441
      %v1443 = vand.u32 %v1442, 4294901760
      %1444 = vmatprep.subr.mxu0 %v1443
      %v1445 = vand.u32 %v307, 4294901760
      %v1446 = vsub.f32 %v307, %v1445
      %v1447 = vand.u32 %v1446, 4294901760
      %1448 = vmatpush1.msra.mxu0 %v1447
      %v1449 = vand.u32 %v304, 4294901760
      %v1450 = vsub.f32 %v304, %v1449
      %v1451 = vand.u32 %v1450, 4294901760
      %1452 = vmatprep.subr.mxu0 %v1451
      %v1453 = vand.u32 %v303, 4294901760
      %v1454 = vsub.f32 %v303, %v1453
      %v1455 = vand.u32 %v1454, 4294901760
      %1456 = vmatpush1.msra.mxu0 %v1455
      %v1457 = vand.u32 %v300, 4294901760
      %v1458 = vsub.f32 %v300, %v1457
      %v1459 = vand.u32 %v1458, 4294901760
      %1460 = vmatprep.subr.mxu0 %v1459
      %v1461 = vand.u32 %v299, 4294901760
      %v1462 = vsub.f32 %v299, %v1461
      %v1463 = vand.u32 %v1462, 4294901760
      %1464 = vmatpush1.msra.mxu0 %v1463
      %v1465 = vand.u32 %v296, 4294901760
      %v1466 = vsub.f32 %v296, %v1465
      %v1467 = vand.u32 %v1466, 4294901760
      %1468 = vmatprep.subr.mxu0 %v1467
      %v1469 = vand.u32 %v295, 4294901760
      %v1470 = vsub.f32 %v295, %v1469
      %v1471 = vand.u32 %v1470, 4294901760
      %1472 = vmatpush1.msra.mxu0 %v1471
      %v1473 = vand.u32 %v292, 4294901760
      %v1474 = vsub.f32 %v292, %v1473
      %v1475 = vand.u32 %v1474, 4294901760
      %1476 = vmatprep.subr.mxu0 %v1475
      %v1477 = vand.u32 %v291, 4294901760
      %v1478 = vsub.f32 %v291, %v1477
      %v1479 = vand.u32 %v1478, 4294901760
      %1480 = vmatpush1.msra.mxu0 %v1479
      %v1481 = vand.u32 %v288, 4294901760
      %v1482 = vsub.f32 %v288, %v1481
      %v1483 = vand.u32 %v1482, 4294901760
      %1484 = vmatprep.subr.mxu0 %v1483
      %v1485 = vand.u32 %v287, 4294901760
      %v1486 = vsub.f32 %v287, %v1485
      %v1487 = vand.u32 %v1486, 4294901760
      %1488 = vmatpush1.msra.mxu0 %v1487
      %v1489 = vand.u32 %v284, 4294901760
      %v1490 = vsub.f32 %v284, %v1489
      %v1491 = vand.u32 %v1490, 4294901760
      %1492 = vmatprep.subr.mxu0 %v1491
      %v1493 = vand.u32 %v283, 4294901760
      %v1494 = vsub.f32 %v283, %v1493
      %v1495 = vand.u32 %v1494, 4294901760
      %1496 = vmatpush1.msra.mxu0 %v1495
      %v1497 = vand.u32 %v280, 4294901760
      %v1498 = vsub.f32 %v280, %v1497
      %v1499 = vand.u32 %v1498, 4294901760
      %1500 = vmatprep.subr.mxu0 %v1499
      %v1501 = vand.u32 %v279, 4294901760
      %v1502 = vsub.f32 %v279, %v1501
      %v1503 = vand.u32 %v1502, 4294901760
      %1504 = vmatpush1.msra.mxu0 %v1503
      %v1505 = vand.u32 %v276, 4294901760
      %v1506 = vsub.f32 %v276, %v1505
      %v1507 = vand.u32 %v1506, 4294901760
      %1508 = vmatprep.subr.mxu0 %v1507
      %v1509 = vand.u32 %v275, 4294901760
      %v1510 = vsub.f32 %v275, %v1509
      %v1511 = vand.u32 %v1510, 4294901760
      %1512 = vmatpush1.msra.mxu0 %v1511
      %v1513 = vand.u32 %v272, 4294901760
      %v1514 = vsub.f32 %v272, %v1513
      %v1515 = vand.u32 %v1514, 4294901760
      %1516 = vmatprep.subr.mxu0 %v1515
      %v1517 = vand.u32 %v271, 4294901760
      %v1518 = vsub.f32 %v271, %v1517
      %v1519 = vand.u32 %v1518, 4294901760
      %1520 = vmatpush1.msra.mxu0 %v1519
      %v1521 = vand.u32 %v268, 4294901760
      %v1522 = vsub.f32 %v268, %v1521
      %v1523 = vand.u32 %v1522, 4294901760
      %1524 = vmatprep.subr.mxu0 %v1523
      %v1525 = vand.u32 %v267, 4294901760
      %v1526 = vsub.f32 %v267, %v1525
      %v1527 = vand.u32 %v1526, 4294901760
      %1528 = vmatpush1.msra.mxu0 %v1527
      %v1529 = vand.u32 %v264, 4294901760
      %v1530 = vsub.f32 %v264, %v1529
      %v1531 = vand.u32 %v1530, 4294901760
      %1532 = vmatprep.subr.mxu0 %v1531
      %v1533 = vand.u32 %v263, 4294901760
      %v1534 = vsub.f32 %v263, %v1533
      %v1535 = vand.u32 %v1534, 4294901760
      %1536 = vmatpush1.msra.mxu0 %v1535
      %v1537 = vand.u32 %v260, 4294901760
      %v1538 = vsub.f32 %v260, %v1537
      %v1539 = vand.u32 %v1538, 4294901760
      %1540 = vmatprep.subr.mxu0 %v1539
      %v1541 = vand.u32 %v259, 4294901760
      %v1542 = vsub.f32 %v259, %v1541
      %v1543 = vand.u32 %v1542, 4294901760
      %1544 = vmatpush1.msra.mxu0 %v1543
      %v1545 = vand.u32 %v256, 4294901760
      %v1546 = vsub.f32 %v256, %v1545
      %v1547 = vand.u32 %v1546, 4294901760
      %1548 = vmatprep.subr.mxu0 %v1547
      %v1549 = vand.u32 %v255, 4294901760
      %v1550 = vsub.f32 %v255, %v1549
      %v1551 = vand.u32 %v1550, 4294901760
      %1552 = vmatpush1.msra.mxu0 %v1551
      %v1553 = vand.u32 %v380, 4294901760
      %v1554 = vsub.f32 %v380, %v1553
      %v1555 = vand.u32 %v1554, 4294901760
      %1556 = vmatprep.subr.mxu0 %v1555
      %v1557 = vand.u32 %v379, 4294901760
      %v1558 = vsub.f32 %v379, %v1557
      %v1559 = vand.u32 %v1558, 4294901760
      %1560 = vmatpush2.msra.mxu0 %v1559
      %v1561 = vand.u32 %v376, 4294901760
      %v1562 = vsub.f32 %v376, %v1561
      %v1563 = vand.u32 %v1562, 4294901760
      %1564 = vmatprep.subr.mxu0 %v1563
      %v1565 = vand.u32 %v375, 4294901760
      %v1566 = vsub.f32 %v375, %v1565
      %v1567 = vand.u32 %v1566, 4294901760
      %1568 = vmatpush2.msra.mxu0 %v1567
      %v1569 = vand.u32 %v372, 4294901760
      %v1570 = vsub.f32 %v372, %v1569
      %v1571 = vand.u32 %v1570, 4294901760
      %1572 = vmatprep.subr.mxu0 %v1571
      %v1573 = vand.u32 %v371, 4294901760
      %v1574 = vsub.f32 %v371, %v1573
      %v1575 = vand.u32 %v1574, 4294901760
      %1576 = vmatpush2.msra.mxu0 %v1575
      %v1577 = vand.u32 %v368, 4294901760
      %v1578 = vsub.f32 %v368, %v1577
      %v1579 = vand.u32 %v1578, 4294901760
      %1580 = vmatprep.subr.mxu0 %v1579
      %v1581 = vand.u32 %v367, 4294901760
      %v1582 = vsub.f32 %v367, %v1581
      %v1583 = vand.u32 %v1582, 4294901760
      %1584 = vmatpush2.msra.mxu0 %v1583
      %v1585 = vand.u32 %v364, 4294901760
      %v1586 = vsub.f32 %v364, %v1585
      %v1587 = vand.u32 %v1586, 4294901760
      %1588 = vmatprep.subr.mxu0 %v1587
      %v1589 = vand.u32 %v363, 4294901760
      %v1590 = vsub.f32 %v363, %v1589
      %v1591 = vand.u32 %v1590, 4294901760
      %1592 = vmatpush2.msra.mxu0 %v1591
      %v1593 = vand.u32 %v360, 4294901760
      %v1594 = vsub.f32 %v360, %v1593
      %v1595 = vand.u32 %v1594, 4294901760
      %1596 = vmatprep.subr.mxu0 %v1595
      %v1597 = vand.u32 %v359, 4294901760
      %v1598 = vsub.f32 %v359, %v1597
      %v1599 = vand.u32 %v1598, 4294901760
      %1600 = vmatpush2.msra.mxu0 %v1599
      %v1601 = vand.u32 %v356, 4294901760
      %v1602 = vsub.f32 %v356, %v1601
      %v1603 = vand.u32 %v1602, 4294901760
      %1604 = vmatprep.subr.mxu0 %v1603
      %v1605 = vand.u32 %v355, 4294901760
      %v1606 = vsub.f32 %v355, %v1605
      %v1607 = vand.u32 %v1606, 4294901760
      %1608 = vmatpush2.msra.mxu0 %v1607
      %v1609 = vand.u32 %v352, 4294901760
      %v1610 = vsub.f32 %v352, %v1609
      %v1611 = vand.u32 %v1610, 4294901760
      %1612 = vmatprep.subr.mxu0 %v1611
      %v1613 = vand.u32 %v351, 4294901760
      %v1614 = vsub.f32 %v351, %v1613
      %v1615 = vand.u32 %v1614, 4294901760
      %1616 = vmatpush2.msra.mxu0 %v1615
      %v1617 = vand.u32 %v348, 4294901760
      %v1618 = vsub.f32 %v348, %v1617
      %v1619 = vand.u32 %v1618, 4294901760
      %1620 = vmatprep.subr.mxu0 %v1619
      %v1621 = vand.u32 %v347, 4294901760
      %v1622 = vsub.f32 %v347, %v1621
      %v1623 = vand.u32 %v1622, 4294901760
      %1624 = vmatpush2.msra.mxu0 %v1623
      %v1625 = vand.u32 %v344, 4294901760
      %v1626 = vsub.f32 %v344, %v1625
      %v1627 = vand.u32 %v1626, 4294901760
      %1628 = vmatprep.subr.mxu0 %v1627
      %v1629 = vand.u32 %v343, 4294901760
      %v1630 = vsub.f32 %v343, %v1629
      %v1631 = vand.u32 %v1630, 4294901760
      %1632 = vmatpush2.msra.mxu0 %v1631
      %v1633 = vand.u32 %v340, 4294901760
      %v1634 = vsub.f32 %v340, %v1633
      %v1635 = vand.u32 %v1634, 4294901760
      %1636 = vmatprep.subr.mxu0 %v1635
      %v1637 = vand.u32 %v339, 4294901760
      %v1638 = vsub.f32 %v339, %v1637
      %v1639 = vand.u32 %v1638, 4294901760
      %1640 = vmatpush2.msra.mxu0 %v1639
      %v1641 = vand.u32 %v336, 4294901760
      %v1642 = vsub.f32 %v336, %v1641
      %v1643 = vand.u32 %v1642, 4294901760
      %1644 = vmatprep.subr.mxu0 %v1643
      %v1645 = vand.u32 %v335, 4294901760
      %v1646 = vsub.f32 %v335, %v1645
      %v1647 = vand.u32 %v1646, 4294901760
      %1648 = vmatpush2.msra.mxu0 %v1647
      %v1649 = vand.u32 %v332, 4294901760
      %v1650 = vsub.f32 %v332, %v1649
      %v1651 = vand.u32 %v1650, 4294901760
      %1652 = vmatprep.subr.mxu0 %v1651
      %v1653 = vand.u32 %v331, 4294901760
      %v1654 = vsub.f32 %v331, %v1653
      %v1655 = vand.u32 %v1654, 4294901760
      %1656 = vmatpush2.msra.mxu0 %v1655
      %v1657 = vand.u32 %v328, 4294901760
      %v1658 = vsub.f32 %v328, %v1657
      %v1659 = vand.u32 %v1658, 4294901760
      %1660 = vmatprep.subr.mxu0 %v1659
      %v1661 = vand.u32 %v327, 4294901760
      %v1662 = vsub.f32 %v327, %v1661
      %v1663 = vand.u32 %v1662, 4294901760
      %1664 = vmatpush2.msra.mxu0 %v1663
      %v1665 = vand.u32 %v324, 4294901760
      %v1666 = vsub.f32 %v324, %v1665
      %v1667 = vand.u32 %v1666, 4294901760
      %1668 = vmatprep.subr.mxu0 %v1667
      %v1669 = vand.u32 %v323, 4294901760
      %v1670 = vsub.f32 %v323, %v1669
      %v1671 = vand.u32 %v1670, 4294901760
      %1672 = vmatpush2.msra.mxu0 %v1671
      %v1673 = vand.u32 %v320, 4294901760
      %v1674 = vsub.f32 %v320, %v1673
      %v1675 = vand.u32 %v1674, 4294901760
      %1676 = vmatprep.subr.mxu0 %v1675
      %v1677 = vand.u32 %v319, 4294901760
      %v1678 = vsub.f32 %v319, %v1677
      %v1679 = vand.u32 %v1678, 4294901760
      %1680 = vmatpush2.msra.mxu0 %v1679
      %v1681 = vand.u32 %v251, 4294901760
      %1682 = vmatprep.mubr.f32.mxu0 %v1681
      %v1683 = vand.u32 %v247, 4294901760
      %1684 = vmatmul.mubr.f32.gmra.mxu0 %v1683
      %v1685 = vpop.f32.mrf.mxu0
      %v1686 = vadd.f32 %v1385, %v1685
      %v1687 = vpop.f32.mrf.mxu0
      %v1688 = vadd.f32 %v1387, %v1687
      %v1689 = vand.u32 %v252, 4294901760
      %1690 = vmatprep.mubr.f32.mxu0 %v1689
      %v1691 = vand.u32 %v248, 4294901760
      %1692 = vmatmul.mubr.f32.gmra.mxu0 %v1691
      %v1693 = vpop.f32.mrf.mxu0
      %v1694 = vadd.f32 %v1397, %v1693
      %v1695 = vpop.f32.mrf.mxu0
      %v1696 = vadd.f32 %v1399, %v1695
      %v1697 = vand.u32 %v253, 4294901760
      %1698 = vmatprep.mubr.f32.mxu0 %v1697
      %v1699 = vand.u32 %v249, 4294901760
      %1700 = vmatmul.mubr.f32.gmra.mxu0 %v1699
      %v1701 = vpop.f32.mrf.mxu0
      %v1702 = vadd.f32 %v1409, %v1701
      %v1703 = vpop.f32.mrf.mxu0
      %v1704 = vadd.f32 %v1411, %v1703
      %v1705 = vand.u32 %v254, 4294901760
      %1706 = vmatprep.mubr.f32.mxu0 %v1705
      %v1707 = vand.u32 %v250, 4294901760
      %1708 = vmatmul.mubr.f32.gmra.mxu0 %v1707
      %v1709 = vpop.f32.mrf.mxu0
      %v1710 = vadd.f32 %v1421, %v1709
      %v1711 = vpop.f32.mrf.mxu0
      %v1712 = vadd.f32 %v1423, %v1711
      %1713 = vdwg.mxu0
      %v1714 = vand.u32 %v316, 4294901760
      %1715 = vmatprep.subr.mxu0 %v1714
      %v1716 = vand.u32 %v315, 4294901760
      %1717 = vmatpush1.msra.mxu0 %v1716
      %v1718 = vand.u32 %v312, 4294901760
      %1719 = vmatprep.subr.mxu0 %v1718
      %v1720 = vand.u32 %v311, 4294901760
      %1721 = vmatpush1.msra.mxu0 %v1720
      %v1722 = vand.u32 %v308, 4294901760
      %1723 = vmatprep.subr.mxu0 %v1722
      %v1724 = vand.u32 %v307, 4294901760
      %1725 = vmatpush1.msra.mxu0 %v1724
      %v1726 = vand.u32 %v304, 4294901760
      %1727 = vmatprep.subr.mxu0 %v1726
      %v1728 = vand.u32 %v303, 4294901760
      %1729 = vmatpush1.msra.mxu0 %v1728
      %v1730 = vand.u32 %v300, 4294901760
      %1731 = vmatprep.subr.mxu0 %v1730
      %v1732 = vand.u32 %v299, 4294901760
      %1733 = vmatpush1.msra.mxu0 %v1732
      %v1734 = vand.u32 %v296, 4294901760
      %1735 = vmatprep.subr.mxu0 %v1734
      %v1736 = vand.u32 %v295, 4294901760
      %1737 = vmatpush1.msra.mxu0 %v1736
      %v1738 = vand.u32 %v292, 4294901760
      %1739 = vmatprep.subr.mxu0 %v1738
      %v1740 = vand.u32 %v291, 4294901760
      %1741 = vmatpush1.msra.mxu0 %v1740
      %v1742 = vand.u32 %v288, 4294901760
      %1743 = vmatprep.subr.mxu0 %v1742
      %v1744 = vand.u32 %v287, 4294901760
      %1745 = vmatpush1.msra.mxu0 %v1744
      %v1746 = vand.u32 %v284, 4294901760
      %1747 = vmatprep.subr.mxu0 %v1746
      %v1748 = vand.u32 %v283, 4294901760
      %1749 = vmatpush1.msra.mxu0 %v1748
      %v1750 = vand.u32 %v280, 4294901760
      %1751 = vmatprep.subr.mxu0 %v1750
      %v1752 = vand.u32 %v279, 4294901760
      %1753 = vmatpush1.msra.mxu0 %v1752
      %v1754 = vand.u32 %v276, 4294901760
      %1755 = vmatprep.subr.mxu0 %v1754
      %v1756 = vand.u32 %v275, 4294901760
      %1757 = vmatpush1.msra.mxu0 %v1756
      %v1758 = vand.u32 %v272, 4294901760
      %1759 = vmatprep.subr.mxu0 %v1758
      %v1760 = vand.u32 %v271, 4294901760
      %1761 = vmatpush1.msra.mxu0 %v1760
      %v1762 = vand.u32 %v268, 4294901760
      %1763 = vmatprep.subr.mxu0 %v1762
      %v1764 = vand.u32 %v267, 4294901760
      %1765 = vmatpush1.msra.mxu0 %v1764
      %v1766 = vand.u32 %v264, 4294901760
      %1767 = vmatprep.subr.mxu0 %v1766
      %v1768 = vand.u32 %v263, 4294901760
      %1769 = vmatpush1.msra.mxu0 %v1768
      %v1770 = vand.u32 %v260, 4294901760
      %1771 = vmatprep.subr.mxu0 %v1770
      %v1772 = vand.u32 %v259, 4294901760
      %1773 = vmatpush1.msra.mxu0 %v1772
      %v1774 = vand.u32 %v256, 4294901760
      %1775 = vmatprep.subr.mxu0 %v1774
      %v1776 = vand.u32 %v255, 4294901760
      %1777 = vmatpush1.msra.mxu0 %v1776
      %v1778 = vand.u32 %v380, 4294901760
      %1779 = vmatprep.subr.mxu0 %v1778
      %v1780 = vand.u32 %v379, 4294901760
      %1781 = vmatpush2.msra.mxu0 %v1780
      %v1782 = vand.u32 %v376, 4294901760
      %1783 = vmatprep.subr.mxu0 %v1782
      %v1784 = vand.u32 %v375, 4294901760
      %1785 = vmatpush2.msra.mxu0 %v1784
      %v1786 = vand.u32 %v372, 4294901760
      %1787 = vmatprep.subr.mxu0 %v1786
      %v1788 = vand.u32 %v371, 4294901760
      %1789 = vmatpush2.msra.mxu0 %v1788
      %v1790 = vand.u32 %v368, 4294901760
      %1791 = vmatprep.subr.mxu0 %v1790
      %v1792 = vand.u32 %v367, 4294901760
      %1793 = vmatpush2.msra.mxu0 %v1792
      %v1794 = vand.u32 %v364, 4294901760
      %1795 = vmatprep.subr.mxu0 %v1794
      %v1796 = vand.u32 %v363, 4294901760
      %1797 = vmatpush2.msra.mxu0 %v1796
      %v1798 = vand.u32 %v360, 4294901760
      %1799 = vmatprep.subr.mxu0 %v1798
      %v1800 = vand.u32 %v359, 4294901760
      %1801 = vmatpush2.msra.mxu0 %v1800
      %v1802 = vand.u32 %v356, 4294901760
      %1803 = vmatprep.subr.mxu0 %v1802
      %v1804 = vand.u32 %v355, 4294901760
      %1805 = vmatpush2.msra.mxu0 %v1804
      %v1806 = vand.u32 %v352, 4294901760
      %1807 = vmatprep.subr.mxu0 %v1806
      %v1808 = vand.u32 %v351, 4294901760
      %1809 = vmatpush2.msra.mxu0 %v1808
      %v1810 = vand.u32 %v348, 4294901760
      %1811 = vmatprep.subr.mxu0 %v1810
      %v1812 = vand.u32 %v347, 4294901760
      %1813 = vmatpush2.msra.mxu0 %v1812
      %v1814 = vand.u32 %v344, 4294901760
      %1815 = vmatprep.subr.mxu0 %v1814
      %v1816 = vand.u32 %v343, 4294901760
      %1817 = vmatpush2.msra.mxu0 %v1816
      %v1818 = vand.u32 %v340, 4294901760
      %1819 = vmatprep.subr.mxu0 %v1818
      %v1820 = vand.u32 %v339, 4294901760
      %1821 = vmatpush2.msra.mxu0 %v1820
      %v1822 = vand.u32 %v336, 4294901760
      %1823 = vmatprep.subr.mxu0 %v1822
      %v1824 = vand.u32 %v335, 4294901760
      %1825 = vmatpush2.msra.mxu0 %v1824
      %v1826 = vand.u32 %v332, 4294901760
      %1827 = vmatprep.subr.mxu0 %v1826
      %v1828 = vand.u32 %v331, 4294901760
      %1829 = vmatpush2.msra.mxu0 %v1828
      %v1830 = vand.u32 %v328, 4294901760
      %1831 = vmatprep.subr.mxu0 %v1830
      %v1832 = vand.u32 %v327, 4294901760
      %1833 = vmatpush2.msra.mxu0 %v1832
      %v1834 = vand.u32 %v324, 4294901760
      %1835 = vmatprep.subr.mxu0 %v1834
      %v1836 = vand.u32 %v323, 4294901760
      %1837 = vmatpush2.msra.mxu0 %v1836
      %v1838 = vand.u32 %v320, 4294901760
      %1839 = vmatprep.subr.mxu0 %v1838
      %v1840 = vand.u32 %v319, 4294901760
      %1841 = vmatpush2.msra.mxu0 %v1840
      %v1842 = vand.u32 %v251, 4294901760
      %1843 = vmatprep.mubr.f32.mxu0 %v1842
      %v1844 = vand.u32 %v247, 4294901760
      %1845 = vmatmul.mubr.f32.gmra.mxu0 %v1844
      %v1846 = vpop.f32.mrf.mxu0
      %v1847 = vadd.f32 %v1686, %v1846
      %v1848 = vpop.f32.mrf.mxu0
      %v1849 = vadd.f32 %v1688, %v1848
      %v1850 = vand.u32 %v252, 4294901760
      %1851 = vmatprep.mubr.f32.mxu0 %v1850
      %v1852 = vand.u32 %v248, 4294901760
      %1853 = vmatmul.mubr.f32.gmra.mxu0 %v1852
      %v1854 = vpop.f32.mrf.mxu0
      %v1855 = vadd.f32 %v1694, %v1854
      %v1856 = vpop.f32.mrf.mxu0
      %v1857 = vadd.f32 %v1696, %v1856
      %v1858 = vand.u32 %v253, 4294901760
      %1859 = vmatprep.mubr.f32.mxu0 %v1858
      %v1860 = vand.u32 %v249, 4294901760
      %1861 = vmatmul.mubr.f32.gmra.mxu0 %v1860
      %v1862 = vpop.f32.mrf.mxu0
      %v1863 = vadd.f32 %v1702, %v1862
      %v1864 = vpop.f32.mrf.mxu0
      %v1865 = vadd.f32 %v1704, %v1864
      %v1866 = vand.u32 %v254, 4294901760
      %1867 = vmatprep.mubr.f32.mxu0 %v1866
      %v1868 = vand.u32 %v250, 4294901760
      %1869 = vmatmul.mubr.f32.gmra.mxu0 %v1868
      %v1870 = vpop.f32.mrf.mxu0
      %v1871 = vadd.f32 %v1710, %v1870
      %v1872 = vpop.f32.mrf.mxu0
      %v1873 = vadd.f32 %v1712, %v1872
      %1874 = vdwg.mxu0
      %v1875 = vand.u32 %v318, 4294901760
      %1876 = vmatprep.subr.mxu0 %v1875
      %v1877 = vand.u32 %v317, 4294901760
      %1878 = vmatpush1.msra.mxu0 %v1877
      %v1879 = vand.u32 %v314, 4294901760
      %1880 = vmatprep.subr.mxu0 %v1879
      %v1881 = vand.u32 %v313, 4294901760
      %1882 = vmatpush1.msra.mxu0 %v1881
      %v1883 = vand.u32 %v310, 4294901760
      %1884 = vmatprep.subr.mxu0 %v1883
      %v1885 = vand.u32 %v309, 4294901760
      %1886 = vmatpush1.msra.mxu0 %v1885
      %v1887 = vand.u32 %v306, 4294901760
      %1888 = vmatprep.subr.mxu0 %v1887
      %v1889 = vand.u32 %v305, 4294901760
      %1890 = vmatpush1.msra.mxu0 %v1889
      %v1891 = vand.u32 %v302, 4294901760
      %1892 = vmatprep.subr.mxu0 %v1891
      %v1893 = vand.u32 %v301, 4294901760
      %1894 = vmatpush1.msra.mxu0 %v1893
      %v1895 = vand.u32 %v298, 4294901760
      %1896 = vmatprep.subr.mxu0 %v1895
      %v1897 = vand.u32 %v297, 4294901760
      %1898 = vmatpush1.msra.mxu0 %v1897
      %v1899 = vand.u32 %v294, 4294901760
      %1900 = vmatprep.subr.mxu0 %v1899
      %v1901 = vand.u32 %v293, 4294901760
      %1902 = vmatpush1.msra.mxu0 %v1901
      %v1903 = vand.u32 %v290, 4294901760
      %1904 = vmatprep.subr.mxu0 %v1903
      %v1905 = vand.u32 %v289, 4294901760
      %1906 = vmatpush1.msra.mxu0 %v1905
      %v1907 = vand.u32 %v286, 4294901760
      %1908 = vmatprep.subr.mxu0 %v1907
      %v1909 = vand.u32 %v285, 4294901760
      %1910 = vmatpush1.msra.mxu0 %v1909
      %v1911 = vand.u32 %v282, 4294901760
      %1912 = vmatprep.subr.mxu0 %v1911
      %v1913 = vand.u32 %v281, 4294901760
      %1914 = vmatpush1.msra.mxu0 %v1913
      %v1915 = vand.u32 %v278, 4294901760
      %1916 = vmatprep.subr.mxu0 %v1915
      %v1917 = vand.u32 %v277, 4294901760
      %1918 = vmatpush1.msra.mxu0 %v1917
      %v1919 = vand.u32 %v274, 4294901760
      %1920 = vmatprep.subr.mxu0 %v1919
      %v1921 = vand.u32 %v273, 4294901760
      %1922 = vmatpush1.msra.mxu0 %v1921
      %v1923 = vand.u32 %v270, 4294901760
      %1924 = vmatprep.subr.mxu0 %v1923
      %v1925 = vand.u32 %v269, 4294901760
      %1926 = vmatpush1.msra.mxu0 %v1925
      %v1927 = vand.u32 %v266, 4294901760
      %1928 = vmatprep.subr.mxu0 %v1927
      %v1929 = vand.u32 %v265, 4294901760
      %1930 = vmatpush1.msra.mxu0 %v1929
      %v1931 = vand.u32 %v262, 4294901760
      %1932 = vmatprep.subr.mxu0 %v1931
      %v1933 = vand.u32 %v261, 4294901760
      %1934 = vmatpush1.msra.mxu0 %v1933
      %v1935 = vand.u32 %v258, 4294901760
      %1936 = vmatprep.subr.mxu0 %v1935
      %v1937 = vand.u32 %v257, 4294901760
      %1938 = vmatpush1.msra.mxu0 %v1937
      %v1939 = vand.u32 %v382, 4294901760
      %1940 = vmatprep.subr.mxu0 %v1939
      %v1941 = vand.u32 %v381, 4294901760
      %1942 = vmatpush2.msra.mxu0 %v1941
      %v1943 = vand.u32 %v378, 4294901760
      %1944 = vmatprep.subr.mxu0 %v1943
      %v1945 = vand.u32 %v377, 4294901760
      %1946 = vmatpush2.msra.mxu0 %v1945
      %v1947 = vand.u32 %v374, 4294901760
      %1948 = vmatprep.subr.mxu0 %v1947
      %v1949 = vand.u32 %v373, 4294901760
      %1950 = vmatpush2.msra.mxu0 %v1949
      %v1951 = vand.u32 %v370, 4294901760
      %1952 = vmatprep.subr.mxu0 %v1951
      %v1953 = vand.u32 %v369, 4294901760
      %1954 = vmatpush2.msra.mxu0 %v1953
      %v1955 = vand.u32 %v366, 4294901760
      %1956 = vmatprep.subr.mxu0 %v1955
      %v1957 = vand.u32 %v365, 4294901760
      %1958 = vmatpush2.msra.mxu0 %v1957
      %v1959 = vand.u32 %v362, 4294901760
      %1960 = vmatprep.subr.mxu0 %v1959
      %v1961 = vand.u32 %v361, 4294901760
      %1962 = vmatpush2.msra.mxu0 %v1961
      %v1963 = vand.u32 %v358, 4294901760
      %1964 = vmatprep.subr.mxu0 %v1963
      %v1965 = vand.u32 %v357, 4294901760
      %1966 = vmatpush2.msra.mxu0 %v1965
      %v1967 = vand.u32 %v354, 4294901760
      %1968 = vmatprep.subr.mxu0 %v1967
      %v1969 = vand.u32 %v353, 4294901760
      %1970 = vmatpush2.msra.mxu0 %v1969
      %v1971 = vand.u32 %v350, 4294901760
      %1972 = vmatprep.subr.mxu0 %v1971
      %v1973 = vand.u32 %v349, 4294901760
      %1974 = vmatpush2.msra.mxu0 %v1973
      %v1975 = vand.u32 %v346, 4294901760
      %1976 = vmatprep.subr.mxu0 %v1975
      %v1977 = vand.u32 %v345, 4294901760
      %1978 = vmatpush2.msra.mxu0 %v1977
      %v1979 = vand.u32 %v342, 4294901760
      %1980 = vmatprep.subr.mxu0 %v1979
      %v1981 = vand.u32 %v341, 4294901760
      %1982 = vmatpush2.msra.mxu0 %v1981
      %v1983 = vand.u32 %v338, 4294901760
      %1984 = vmatprep.subr.mxu0 %v1983
      %v1985 = vand.u32 %v337, 4294901760
      %1986 = vmatpush2.msra.mxu0 %v1985
      %v1987 = vand.u32 %v334, 4294901760
      %1988 = vmatprep.subr.mxu0 %v1987
      %v1989 = vand.u32 %v333, 4294901760
      %1990 = vmatpush2.msra.mxu0 %v1989
      %v1991 = vand.u32 %v330, 4294901760
      %1992 = vmatprep.subr.mxu0 %v1991
      %v1993 = vand.u32 %v329, 4294901760
      %1994 = vmatpush2.msra.mxu0 %v1993
      %v1995 = vand.u32 %v326, 4294901760
      %1996 = vmatprep.subr.mxu0 %v1995
      %v1997 = vand.u32 %v325, 4294901760
      %1998 = vmatpush2.msra.mxu0 %v1997
      %v1999 = vand.u32 %v322, 4294901760
      %2000 = vmatprep.subr.mxu0 %v1999
      %v2001 = vand.u32 %v321, 4294901760
      %2002 = vmatpush2.msra.mxu0 %v2001
      %v2003 = vand.u32 %v251, 4294901760
      %v2004 = vsub.f32 %v251, %v2003
      %v2005 = vand.u32 %v2004, 4294901760
      %v2006 = vsub.f32 %v2004, %v2005
      %v2007 = vand.u32 %v2006, 4294901760
      %2008 = vmatprep.mubr.f32.mxu0 %v2007
      %v2009 = vand.u32 %v247, 4294901760
      %v2010 = vsub.f32 %v247, %v2009
      %v2011 = vand.u32 %v2010, 4294901760
      %v2012 = vsub.f32 %v2010, %v2011
      %v2013 = vand.u32 %v2012, 4294901760
      %2014 = vmatmul.mubr.f32.gmra.mxu0 %v2013
      %v2015 = vpop.f32.mrf.mxu0
      %v2016 = vadd.f32 %v396, %v2015
      %v2017 = vpop.f32.mrf.mxu0
      %v2018 = vadd.f32 %v400, %v2017
      %v2019 = vand.u32 %v252, 4294901760
      %v2020 = vsub.f32 %v252, %v2019
      %v2021 = vand.u32 %v2020, 4294901760
      %v2022 = vsub.f32 %v2020, %v2021
      %v2023 = vand.u32 %v2022, 4294901760
      %2024 = vmatprep.mubr.f32.mxu0 %v2023
      %v2025 = vand.u32 %v248, 4294901760
      %v2026 = vsub.f32 %v248, %v2025
      %v2027 = vand.u32 %v2026, 4294901760
      %v2028 = vsub.f32 %v2026, %v2027
      %v2029 = vand.u32 %v2028, 4294901760
      %2030 = vmatmul.mubr.f32.gmra.mxu0 %v2029
      %v2031 = vpop.f32.mrf.mxu0
      %v2032 = vadd.f32 %v396, %v2031
      %v2033 = vpop.f32.mrf.mxu0
      %v2034 = vadd.f32 %v400, %v2033
      %v2035 = vand.u32 %v253, 4294901760
      %v2036 = vsub.f32 %v253, %v2035
      %v2037 = vand.u32 %v2036, 4294901760
      %v2038 = vsub.f32 %v2036, %v2037
      %v2039 = vand.u32 %v2038, 4294901760
      %2040 = vmatprep.mubr.f32.mxu0 %v2039
      %v2041 = vand.u32 %v249, 4294901760
      %v2042 = vsub.f32 %v249, %v2041
      %v2043 = vand.u32 %v2042, 4294901760
      %v2044 = vsub.f32 %v2042, %v2043
      %v2045 = vand.u32 %v2044, 4294901760
      %2046 = vmatmul.mubr.f32.gmra.mxu0 %v2045
      %v2047 = vpop.f32.mrf.mxu0
      %v2048 = vadd.f32 %v396, %v2047
      %v2049 = vpop.f32.mrf.mxu0
      %v2050 = vadd.f32 %v400, %v2049
      %v2051 = vand.u32 %v254, 4294901760
      %v2052 = vsub.f32 %v254, %v2051
      %v2053 = vand.u32 %v2052, 4294901760
      %v2054 = vsub.f32 %v2052, %v2053
      %v2055 = vand.u32 %v2054, 4294901760
      %2056 = vmatprep.mubr.f32.mxu0 %v2055
      %v2057 = vand.u32 %v250, 4294901760
      %v2058 = vsub.f32 %v250, %v2057
      %v2059 = vand.u32 %v2058, 4294901760
      %v2060 = vsub.f32 %v2058, %v2059
      %v2061 = vand.u32 %v2060, 4294901760
      %2062 = vmatmul.mubr.f32.gmra.mxu0 %v2061
      %v2063 = vpop.f32.mrf.mxu0
      %v2064 = vadd.f32 %v396, %v2063
      %v2065 = vpop.f32.mrf.mxu0
      %v2066 = vadd.f32 %v400, %v2065
      %2067 = vdwg.mxu0
      %v2068 = vand.u32 %v318, 4294901760
      %v2069 = vsub.f32 %v318, %v2068
      %v2070 = vand.u32 %v2069, 4294901760
      %v2071 = vsub.f32 %v2069, %v2070
      %v2072 = vand.u32 %v2071, 4294901760
      %2073 = vmatprep.subr.mxu0 %v2072
      %v2074 = vand.u32 %v317, 4294901760
      %v2075 = vsub.f32 %v317, %v2074
      %v2076 = vand.u32 %v2075, 4294901760
      %v2077 = vsub.f32 %v2075, %v2076
      %v2078 = vand.u32 %v2077, 4294901760
      %2079 = vmatpush1.msra.mxu0 %v2078
      %v2080 = vand.u32 %v314, 4294901760
      %v2081 = vsub.f32 %v314, %v2080
      %v2082 = vand.u32 %v2081, 4294901760
      %v2083 = vsub.f32 %v2081, %v2082
      %v2084 = vand.u32 %v2083, 4294901760
      %2085 = vmatprep.subr.mxu0 %v2084
      %v2086 = vand.u32 %v313, 4294901760
      %v2087 = vsub.f32 %v313, %v2086
      %v2088 = vand.u32 %v2087, 4294901760
      %v2089 = vsub.f32 %v2087, %v2088
      %v2090 = vand.u32 %v2089, 4294901760
      %2091 = vmatpush1.msra.mxu0 %v2090
      %v2092 = vand.u32 %v310, 4294901760
      %v2093 = vsub.f32 %v310, %v2092
      %v2094 = vand.u32 %v2093, 4294901760
      %v2095 = vsub.f32 %v2093, %v2094
      %v2096 = vand.u32 %v2095, 4294901760
      %2097 = vmatprep.subr.mxu0 %v2096
      %v2098 = vand.u32 %v309, 4294901760
      %v2099 = vsub.f32 %v309, %v2098
      %v2100 = vand.u32 %v2099, 4294901760
      %v2101 = vsub.f32 %v2099, %v2100
      %v2102 = vand.u32 %v2101, 4294901760
      %2103 = vmatpush1.msra.mxu0 %v2102
      %v2104 = vand.u32 %v306, 4294901760
      %v2105 = vsub.f32 %v306, %v2104
      %v2106 = vand.u32 %v2105, 4294901760
      %v2107 = vsub.f32 %v2105, %v2106
      %v2108 = vand.u32 %v2107, 4294901760
      %2109 = vmatprep.subr.mxu0 %v2108
      %v2110 = vand.u32 %v305, 4294901760
      %v2111 = vsub.f32 %v305, %v2110
      %v2112 = vand.u32 %v2111, 4294901760
      %v2113 = vsub.f32 %v2111, %v2112
      %v2114 = vand.u32 %v2113, 4294901760
      %2115 = vmatpush1.msra.mxu0 %v2114
      %v2116 = vand.u32 %v302, 4294901760
      %v2117 = vsub.f32 %v302, %v2116
      %v2118 = vand.u32 %v2117, 4294901760
      %v2119 = vsub.f32 %v2117, %v2118
      %v2120 = vand.u32 %v2119, 4294901760
      %2121 = vmatprep.subr.mxu0 %v2120
      %v2122 = vand.u32 %v301, 4294901760
      %v2123 = vsub.f32 %v301, %v2122
      %v2124 = vand.u32 %v2123, 4294901760
      %v2125 = vsub.f32 %v2123, %v2124
      %v2126 = vand.u32 %v2125, 4294901760
      %2127 = vmatpush1.msra.mxu0 %v2126
      %v2128 = vand.u32 %v298, 4294901760
      %v2129 = vsub.f32 %v298, %v2128
      %v2130 = vand.u32 %v2129, 4294901760
      %v2131 = vsub.f32 %v2129, %v2130
      %v2132 = vand.u32 %v2131, 4294901760
      %2133 = vmatprep.subr.mxu0 %v2132
      %v2134 = vand.u32 %v297, 4294901760
      %v2135 = vsub.f32 %v297, %v2134
      %v2136 = vand.u32 %v2135, 4294901760
      %v2137 = vsub.f32 %v2135, %v2136
      %v2138 = vand.u32 %v2137, 4294901760
      %2139 = vmatpush1.msra.mxu0 %v2138
      %v2140 = vand.u32 %v294, 4294901760
      %v2141 = vsub.f32 %v294, %v2140
      %v2142 = vand.u32 %v2141, 4294901760
      %v2143 = vsub.f32 %v2141, %v2142
      %v2144 = vand.u32 %v2143, 4294901760
      %2145 = vmatprep.subr.mxu0 %v2144
      %v2146 = vand.u32 %v293, 4294901760
      %v2147 = vsub.f32 %v293, %v2146
      %v2148 = vand.u32 %v2147, 4294901760
      %v2149 = vsub.f32 %v2147, %v2148
      %v2150 = vand.u32 %v2149, 4294901760
      %2151 = vmatpush1.msra.mxu0 %v2150
      %v2152 = vand.u32 %v290, 4294901760
      %v2153 = vsub.f32 %v290, %v2152
      %v2154 = vand.u32 %v2153, 4294901760
      %v2155 = vsub.f32 %v2153, %v2154
      %v2156 = vand.u32 %v2155, 4294901760
      %2157 = vmatprep.subr.mxu0 %v2156
      %v2158 = vand.u32 %v289, 4294901760
      %v2159 = vsub.f32 %v289, %v2158
      %v2160 = vand.u32 %v2159, 4294901760
      %v2161 = vsub.f32 %v2159, %v2160
      %v2162 = vand.u32 %v2161, 4294901760
      %2163 = vmatpush1.msra.mxu0 %v2162
      %v2164 = vand.u32 %v286, 4294901760
      %v2165 = vsub.f32 %v286, %v2164
      %v2166 = vand.u32 %v2165, 4294901760
      %v2167 = vsub.f32 %v2165, %v2166
      %v2168 = vand.u32 %v2167, 4294901760
      %2169 = vmatprep.subr.mxu0 %v2168
      %v2170 = vand.u32 %v285, 4294901760
      %v2171 = vsub.f32 %v285, %v2170
      %v2172 = vand.u32 %v2171, 4294901760
      %v2173 = vsub.f32 %v2171, %v2172
      %v2174 = vand.u32 %v2173, 4294901760
      %2175 = vmatpush1.msra.mxu0 %v2174
      %v2176 = vand.u32 %v282, 4294901760
      %v2177 = vsub.f32 %v282, %v2176
      %v2178 = vand.u32 %v2177, 4294901760
      %v2179 = vsub.f32 %v2177, %v2178
      %v2180 = vand.u32 %v2179, 4294901760
      %2181 = vmatprep.subr.mxu0 %v2180
      %v2182 = vand.u32 %v281, 4294901760
      %v2183 = vsub.f32 %v281, %v2182
      %v2184 = vand.u32 %v2183, 4294901760
      %v2185 = vsub.f32 %v2183, %v2184
      %v2186 = vand.u32 %v2185, 4294901760
      %2187 = vmatpush1.msra.mxu0 %v2186
      %v2188 = vand.u32 %v278, 4294901760
      %v2189 = vsub.f32 %v278, %v2188
      %v2190 = vand.u32 %v2189, 4294901760
      %v2191 = vsub.f32 %v2189, %v2190
      %v2192 = vand.u32 %v2191, 4294901760
      %2193 = vmatprep.subr.mxu0 %v2192
      %v2194 = vand.u32 %v277, 4294901760
      %v2195 = vsub.f32 %v277, %v2194
      %v2196 = vand.u32 %v2195, 4294901760
      %v2197 = vsub.f32 %v2195, %v2196
      %v2198 = vand.u32 %v2197, 4294901760
      %2199 = vmatpush1.msra.mxu0 %v2198
      %v2200 = vand.u32 %v274, 4294901760
      %v2201 = vsub.f32 %v274, %v2200
      %v2202 = vand.u32 %v2201, 4294901760
      %v2203 = vsub.f32 %v2201, %v2202
      %v2204 = vand.u32 %v2203, 4294901760
      %2205 = vmatprep.subr.mxu0 %v2204
      %v2206 = vand.u32 %v273, 4294901760
      %v2207 = vsub.f32 %v273, %v2206
      %v2208 = vand.u32 %v2207, 4294901760
      %v2209 = vsub.f32 %v2207, %v2208
      %v2210 = vand.u32 %v2209, 4294901760
      %2211 = vmatpush1.msra.mxu0 %v2210
      %v2212 = vand.u32 %v270, 4294901760
      %v2213 = vsub.f32 %v270, %v2212
      %v2214 = vand.u32 %v2213, 4294901760
      %v2215 = vsub.f32 %v2213, %v2214
      %v2216 = vand.u32 %v2215, 4294901760
      %2217 = vmatprep.subr.mxu0 %v2216
      %v2218 = vand.u32 %v269, 4294901760
      %v2219 = vsub.f32 %v269, %v2218
      %v2220 = vand.u32 %v2219, 4294901760
      %v2221 = vsub.f32 %v2219, %v2220
      %v2222 = vand.u32 %v2221, 4294901760
      %2223 = vmatpush1.msra.mxu0 %v2222
      %v2224 = vand.u32 %v266, 4294901760
      %v2225 = vsub.f32 %v266, %v2224
      %v2226 = vand.u32 %v2225, 4294901760
      %v2227 = vsub.f32 %v2225, %v2226
      %v2228 = vand.u32 %v2227, 4294901760
      %2229 = vmatprep.subr.mxu0 %v2228
      %v2230 = vand.u32 %v265, 4294901760
      %v2231 = vsub.f32 %v265, %v2230
      %v2232 = vand.u32 %v2231, 4294901760
      %v2233 = vsub.f32 %v2231, %v2232
      %v2234 = vand.u32 %v2233, 4294901760
      %2235 = vmatpush1.msra.mxu0 %v2234
      %v2236 = vand.u32 %v262, 4294901760
      %v2237 = vsub.f32 %v262, %v2236
      %v2238 = vand.u32 %v2237, 4294901760
      %v2239 = vsub.f32 %v2237, %v2238
      %v2240 = vand.u32 %v2239, 4294901760
      %2241 = vmatprep.subr.mxu0 %v2240
      %v2242 = vand.u32 %v261, 4294901760
      %v2243 = vsub.f32 %v261, %v2242
      %v2244 = vand.u32 %v2243, 4294901760
      %v2245 = vsub.f32 %v2243, %v2244
      %v2246 = vand.u32 %v2245, 4294901760
      %2247 = vmatpush1.msra.mxu0 %v2246
      %v2248 = vand.u32 %v258, 4294901760
      %v2249 = vsub.f32 %v258, %v2248
      %v2250 = vand.u32 %v2249, 4294901760
      %v2251 = vsub.f32 %v2249, %v2250
      %v2252 = vand.u32 %v2251, 4294901760
      %2253 = vmatprep.subr.mxu0 %v2252
      %v2254 = vand.u32 %v257, 4294901760
      %v2255 = vsub.f32 %v257, %v2254
      %v2256 = vand.u32 %v2255, 4294901760
      %v2257 = vsub.f32 %v2255, %v2256
      %v2258 = vand.u32 %v2257, 4294901760
      %2259 = vmatpush1.msra.mxu0 %v2258
      %v2260 = vand.u32 %v382, 4294901760
      %v2261 = vsub.f32 %v382, %v2260
      %v2262 = vand.u32 %v2261, 4294901760
      %v2263 = vsub.f32 %v2261, %v2262
      %v2264 = vand.u32 %v2263, 4294901760
      %2265 = vmatprep.subr.mxu0 %v2264
      %v2266 = vand.u32 %v381, 4294901760
      %v2267 = vsub.f32 %v381, %v2266
      %v2268 = vand.u32 %v2267, 4294901760
      %v2269 = vsub.f32 %v2267, %v2268
      %v2270 = vand.u32 %v2269, 4294901760
      %2271 = vmatpush2.msra.mxu0 %v2270
      %v2272 = vand.u32 %v378, 4294901760
      %v2273 = vsub.f32 %v378, %v2272
      %v2274 = vand.u32 %v2273, 4294901760
      %v2275 = vsub.f32 %v2273, %v2274
      %v2276 = vand.u32 %v2275, 4294901760
      %2277 = vmatprep.subr.mxu0 %v2276
      %v2278 = vand.u32 %v377, 4294901760
      %v2279 = vsub.f32 %v377, %v2278
      %v2280 = vand.u32 %v2279, 4294901760
      %v2281 = vsub.f32 %v2279, %v2280
      %v2282 = vand.u32 %v2281, 4294901760
      %2283 = vmatpush2.msra.mxu0 %v2282
      %v2284 = vand.u32 %v374, 4294901760
      %v2285 = vsub.f32 %v374, %v2284
      %v2286 = vand.u32 %v2285, 4294901760
      %v2287 = vsub.f32 %v2285, %v2286
      %v2288 = vand.u32 %v2287, 4294901760
      %2289 = vmatprep.subr.mxu0 %v2288
      %v2290 = vand.u32 %v373, 4294901760
      %v2291 = vsub.f32 %v373, %v2290
      %v2292 = vand.u32 %v2291, 4294901760
      %v2293 = vsub.f32 %v2291, %v2292
      %v2294 = vand.u32 %v2293, 4294901760
      %2295 = vmatpush2.msra.mxu0 %v2294
      %v2296 = vand.u32 %v370, 4294901760
      %v2297 = vsub.f32 %v370, %v2296
      %v2298 = vand.u32 %v2297, 4294901760
      %v2299 = vsub.f32 %v2297, %v2298
      %v2300 = vand.u32 %v2299, 4294901760
      %2301 = vmatprep.subr.mxu0 %v2300
      %v2302 = vand.u32 %v369, 4294901760
      %v2303 = vsub.f32 %v369, %v2302
      %v2304 = vand.u32 %v2303, 4294901760
      %v2305 = vsub.f32 %v2303, %v2304
      %v2306 = vand.u32 %v2305, 4294901760
      %2307 = vmatpush2.msra.mxu0 %v2306
      %v2308 = vand.u32 %v366, 4294901760
      %v2309 = vsub.f32 %v366, %v2308
      %v2310 = vand.u32 %v2309, 4294901760
      %v2311 = vsub.f32 %v2309, %v2310
      %v2312 = vand.u32 %v2311, 4294901760
      %2313 = vmatprep.subr.mxu0 %v2312
      %v2314 = vand.u32 %v365, 4294901760
      %v2315 = vsub.f32 %v365, %v2314
      %v2316 = vand.u32 %v2315, 4294901760
      %v2317 = vsub.f32 %v2315, %v2316
      %v2318 = vand.u32 %v2317, 4294901760
      %2319 = vmatpush2.msra.mxu0 %v2318
      %v2320 = vand.u32 %v362, 4294901760
      %v2321 = vsub.f32 %v362, %v2320
      %v2322 = vand.u32 %v2321, 4294901760
      %v2323 = vsub.f32 %v2321, %v2322
      %v2324 = vand.u32 %v2323, 4294901760
      %2325 = vmatprep.subr.mxu0 %v2324
      %v2326 = vand.u32 %v361, 4294901760
      %v2327 = vsub.f32 %v361, %v2326
      %v2328 = vand.u32 %v2327, 4294901760
      %v2329 = vsub.f32 %v2327, %v2328
      %v2330 = vand.u32 %v2329, 4294901760
      %2331 = vmatpush2.msra.mxu0 %v2330
      %v2332 = vand.u32 %v358, 4294901760
      %v2333 = vsub.f32 %v358, %v2332
      %v2334 = vand.u32 %v2333, 4294901760
      %v2335 = vsub.f32 %v2333, %v2334
      %v2336 = vand.u32 %v2335, 4294901760
      %2337 = vmatprep.subr.mxu0 %v2336
      %v2338 = vand.u32 %v357, 4294901760
      %v2339 = vsub.f32 %v357, %v2338
      %v2340 = vand.u32 %v2339, 4294901760
      %v2341 = vsub.f32 %v2339, %v2340
      %v2342 = vand.u32 %v2341, 4294901760
      %2343 = vmatpush2.msra.mxu0 %v2342
      %v2344 = vand.u32 %v354, 4294901760
      %v2345 = vsub.f32 %v354, %v2344
      %v2346 = vand.u32 %v2345, 4294901760
      %v2347 = vsub.f32 %v2345, %v2346
      %v2348 = vand.u32 %v2347, 4294901760
      %2349 = vmatprep.subr.mxu0 %v2348
      %v2350 = vand.u32 %v353, 4294901760
      %v2351 = vsub.f32 %v353, %v2350
      %v2352 = vand.u32 %v2351, 4294901760
      %v2353 = vsub.f32 %v2351, %v2352
      %v2354 = vand.u32 %v2353, 4294901760
      %2355 = vmatpush2.msra.mxu0 %v2354
      %v2356 = vand.u32 %v350, 4294901760
      %v2357 = vsub.f32 %v350, %v2356
      %v2358 = vand.u32 %v2357, 4294901760
      %v2359 = vsub.f32 %v2357, %v2358
      %v2360 = vand.u32 %v2359, 4294901760
      %2361 = vmatprep.subr.mxu0 %v2360
      %v2362 = vand.u32 %v349, 4294901760
      %v2363 = vsub.f32 %v349, %v2362
      %v2364 = vand.u32 %v2363, 4294901760
      %v2365 = vsub.f32 %v2363, %v2364
      %v2366 = vand.u32 %v2365, 4294901760
      %2367 = vmatpush2.msra.mxu0 %v2366
      %v2368 = vand.u32 %v346, 4294901760
      %v2369 = vsub.f32 %v346, %v2368
      %v2370 = vand.u32 %v2369, 4294901760
      %v2371 = vsub.f32 %v2369, %v2370
      %v2372 = vand.u32 %v2371, 4294901760
      %2373 = vmatprep.subr.mxu0 %v2372
      %v2374 = vand.u32 %v345, 4294901760
      %v2375 = vsub.f32 %v345, %v2374
      %v2376 = vand.u32 %v2375, 4294901760
      %v2377 = vsub.f32 %v2375, %v2376
      %v2378 = vand.u32 %v2377, 4294901760
      %2379 = vmatpush2.msra.mxu0 %v2378
      %v2380 = vand.u32 %v342, 4294901760
      %v2381 = vsub.f32 %v342, %v2380
      %v2382 = vand.u32 %v2381, 4294901760
      %v2383 = vsub.f32 %v2381, %v2382
      %v2384 = vand.u32 %v2383, 4294901760
      %2385 = vmatprep.subr.mxu0 %v2384
      %v2386 = vand.u32 %v341, 4294901760
      %v2387 = vsub.f32 %v341, %v2386
      %v2388 = vand.u32 %v2387, 4294901760
      %v2389 = vsub.f32 %v2387, %v2388
      %v2390 = vand.u32 %v2389, 4294901760
      %2391 = vmatpush2.msra.mxu0 %v2390
      %v2392 = vand.u32 %v338, 4294901760
      %v2393 = vsub.f32 %v338, %v2392
      %v2394 = vand.u32 %v2393, 4294901760
      %v2395 = vsub.f32 %v2393, %v2394
      %v2396 = vand.u32 %v2395, 4294901760
      %2397 = vmatprep.subr.mxu0 %v2396
      %v2398 = vand.u32 %v337, 4294901760
      %v2399 = vsub.f32 %v337, %v2398
      %v2400 = vand.u32 %v2399, 4294901760
      %v2401 = vsub.f32 %v2399, %v2400
      %v2402 = vand.u32 %v2401, 4294901760
      %2403 = vmatpush2.msra.mxu0 %v2402
      %v2404 = vand.u32 %v334, 4294901760
      %v2405 = vsub.f32 %v334, %v2404
      %v2406 = vand.u32 %v2405, 4294901760
      %v2407 = vsub.f32 %v2405, %v2406
      %v2408 = vand.u32 %v2407, 4294901760
      %2409 = vmatprep.subr.mxu0 %v2408
      %v2410 = vand.u32 %v333, 4294901760
      %v2411 = vsub.f32 %v333, %v2410
      %v2412 = vand.u32 %v2411, 4294901760
      %v2413 = vsub.f32 %v2411, %v2412
      %v2414 = vand.u32 %v2413, 4294901760
      %2415 = vmatpush2.msra.mxu0 %v2414
      %v2416 = vand.u32 %v330, 4294901760
      %v2417 = vsub.f32 %v330, %v2416
      %v2418 = vand.u32 %v2417, 4294901760
      %v2419 = vsub.f32 %v2417, %v2418
      %v2420 = vand.u32 %v2419, 4294901760
      %2421 = vmatprep.subr.mxu0 %v2420
      %v2422 = vand.u32 %v329, 4294901760
      %v2423 = vsub.f32 %v329, %v2422
      %v2424 = vand.u32 %v2423, 4294901760
      %v2425 = vsub.f32 %v2423, %v2424
      %v2426 = vand.u32 %v2425, 4294901760
      %2427 = vmatpush2.msra.mxu0 %v2426
      %v2428 = vand.u32 %v326, 4294901760
      %v2429 = vsub.f32 %v326, %v2428
      %v2430 = vand.u32 %v2429, 4294901760
      %v2431 = vsub.f32 %v2429, %v2430
      %v2432 = vand.u32 %v2431, 4294901760
      %2433 = vmatprep.subr.mxu0 %v2432
      %v2434 = vand.u32 %v325, 4294901760
      %v2435 = vsub.f32 %v325, %v2434
      %v2436 = vand.u32 %v2435, 4294901760
      %v2437 = vsub.f32 %v2435, %v2436
      %v2438 = vand.u32 %v2437, 4294901760
      %2439 = vmatpush2.msra.mxu0 %v2438
      %v2440 = vand.u32 %v322, 4294901760
      %v2441 = vsub.f32 %v322, %v2440
      %v2442 = vand.u32 %v2441, 4294901760
      %v2443 = vsub.f32 %v2441, %v2442
      %v2444 = vand.u32 %v2443, 4294901760
      %2445 = vmatprep.subr.mxu0 %v2444
      %v2446 = vand.u32 %v321, 4294901760
      %v2447 = vsub.f32 %v321, %v2446
      %v2448 = vand.u32 %v2447, 4294901760
      %v2449 = vsub.f32 %v2447, %v2448
      %v2450 = vand.u32 %v2449, 4294901760
      %2451 = vmatpush2.msra.mxu0 %v2450
      %v2452 = vand.u32 %v251, 4294901760
      %2453 = vmatprep.mubr.f32.mxu0 %v2452
      %v2454 = vand.u32 %v247, 4294901760
      %2455 = vmatmul.mubr.f32.gmra.mxu0 %v2454
      %v2456 = vpop.f32.mrf.mxu0
      %v2457 = vadd.f32 %v2016, %v2456
      %v2458 = vpop.f32.mrf.mxu0
      %v2459 = vadd.f32 %v2018, %v2458
      %v2460 = vand.u32 %v252, 4294901760
      %2461 = vmatprep.mubr.f32.mxu0 %v2460
      %v2462 = vand.u32 %v248, 4294901760
      %2463 = vmatmul.mubr.f32.gmra.mxu0 %v2462
      %v2464 = vpop.f32.mrf.mxu0
      %v2465 = vadd.f32 %v2032, %v2464
      %v2466 = vpop.f32.mrf.mxu0
      %v2467 = vadd.f32 %v2034, %v2466
      %v2468 = vand.u32 %v253, 4294901760
      %2469 = vmatprep.mubr.f32.mxu0 %v2468
      %v2470 = vand.u32 %v249, 4294901760
      %2471 = vmatmul.mubr.f32.gmra.mxu0 %v2470
      %v2472 = vpop.f32.mrf.mxu0
      %v2473 = vadd.f32 %v2048, %v2472
      %v2474 = vpop.f32.mrf.mxu0
      %v2475 = vadd.f32 %v2050, %v2474
      %v2476 = vand.u32 %v254, 4294901760
      %2477 = vmatprep.mubr.f32.mxu0 %v2476
      %v2478 = vand.u32 %v250, 4294901760
      %2479 = vmatmul.mubr.f32.gmra.mxu0 %v2478
      %v2480 = vpop.f32.mrf.mxu0
      %v2481 = vadd.f32 %v2064, %v2480
      %v2482 = vpop.f32.mrf.mxu0
      %v2483 = vadd.f32 %v2066, %v2482
      %2484 = vdwg.mxu0
      %v2485 = vand.u32 %v318, 4294901760
      %v2486 = vsub.f32 %v318, %v2485
      %2487 = vmatprep.subr.mxu0 %v2486
      %v2488 = vand.u32 %v317, 4294901760
      %v2489 = vsub.f32 %v317, %v2488
      %2490 = vmatpush1.msra.mxu0 %v2489
      %v2491 = vand.u32 %v314, 4294901760
      %v2492 = vsub.f32 %v314, %v2491
      %2493 = vmatprep.subr.mxu0 %v2492
      %v2494 = vand.u32 %v313, 4294901760
      %v2495 = vsub.f32 %v313, %v2494
      %2496 = vmatpush1.msra.mxu0 %v2495
      %v2497 = vand.u32 %v310, 4294901760
      %v2498 = vsub.f32 %v310, %v2497
      %2499 = vmatprep.subr.mxu0 %v2498
      %v2500 = vand.u32 %v309, 4294901760
      %v2501 = vsub.f32 %v309, %v2500
      %2502 = vmatpush1.msra.mxu0 %v2501
      %v2503 = vand.u32 %v306, 4294901760
      %v2504 = vsub.f32 %v306, %v2503
      %2505 = vmatprep.subr.mxu0 %v2504
      %v2506 = vand.u32 %v305, 4294901760
      %v2507 = vsub.f32 %v305, %v2506
      %2508 = vmatpush1.msra.mxu0 %v2507
      %v2509 = vand.u32 %v302, 4294901760
      %v2510 = vsub.f32 %v302, %v2509
      %2511 = vmatprep.subr.mxu0 %v2510
      %v2512 = vand.u32 %v301, 4294901760
      %v2513 = vsub.f32 %v301, %v2512
      %2514 = vmatpush1.msra.mxu0 %v2513
      %v2515 = vand.u32 %v298, 4294901760
      %v2516 = vsub.f32 %v298, %v2515
      %2517 = vmatprep.subr.mxu0 %v2516
      %v2518 = vand.u32 %v297, 4294901760
      %v2519 = vsub.f32 %v297, %v2518
      %2520 = vmatpush1.msra.mxu0 %v2519
      %v2521 = vand.u32 %v294, 4294901760
      %v2522 = vsub.f32 %v294, %v2521
      %2523 = vmatprep.subr.mxu0 %v2522
      %v2524 = vand.u32 %v293, 4294901760
      %v2525 = vsub.f32 %v293, %v2524
      %2526 = vmatpush1.msra.mxu0 %v2525
      %v2527 = vand.u32 %v290, 4294901760
      %v2528 = vsub.f32 %v290, %v2527
      %2529 = vmatprep.subr.mxu0 %v2528
      %v2530 = vand.u32 %v289, 4294901760
      %v2531 = vsub.f32 %v289, %v2530
      %2532 = vmatpush1.msra.mxu0 %v2531
      %v2533 = vand.u32 %v286, 4294901760
      %v2534 = vsub.f32 %v286, %v2533
      %2535 = vmatprep.subr.mxu0 %v2534
      %v2536 = vand.u32 %v285, 4294901760
      %v2537 = vsub.f32 %v285, %v2536
      %2538 = vmatpush1.msra.mxu0 %v2537
      %v2539 = vand.u32 %v282, 4294901760
      %v2540 = vsub.f32 %v282, %v2539
      %2541 = vmatprep.subr.mxu0 %v2540
      %v2542 = vand.u32 %v281, 4294901760
      %v2543 = vsub.f32 %v281, %v2542
      %2544 = vmatpush1.msra.mxu0 %v2543
      %v2545 = vand.u32 %v278, 4294901760
      %v2546 = vsub.f32 %v278, %v2545
      %2547 = vmatprep.subr.mxu0 %v2546
      %v2548 = vand.u32 %v277, 4294901760
      %v2549 = vsub.f32 %v277, %v2548
      %2550 = vmatpush1.msra.mxu0 %v2549
      %v2551 = vand.u32 %v274, 4294901760
      %v2552 = vsub.f32 %v274, %v2551
      %2553 = vmatprep.subr.mxu0 %v2552
      %v2554 = vand.u32 %v273, 4294901760
      %v2555 = vsub.f32 %v273, %v2554
      %2556 = vmatpush1.msra.mxu0 %v2555
      %v2557 = vand.u32 %v270, 4294901760
      %v2558 = vsub.f32 %v270, %v2557
      %2559 = vmatprep.subr.mxu0 %v2558
      %v2560 = vand.u32 %v269, 4294901760
      %v2561 = vsub.f32 %v269, %v2560
      %2562 = vmatpush1.msra.mxu0 %v2561
      %v2563 = vand.u32 %v266, 4294901760
      %v2564 = vsub.f32 %v266, %v2563
      %2565 = vmatprep.subr.mxu0 %v2564
      %v2566 = vand.u32 %v265, 4294901760
      %v2567 = vsub.f32 %v265, %v2566
      %2568 = vmatpush1.msra.mxu0 %v2567
      %v2569 = vand.u32 %v262, 4294901760
      %v2570 = vsub.f32 %v262, %v2569
      %2571 = vmatprep.subr.mxu0 %v2570
      %v2572 = vand.u32 %v261, 4294901760
      %v2573 = vsub.f32 %v261, %v2572
      %2574 = vmatpush1.msra.mxu0 %v2573
      %v2575 = vand.u32 %v258, 4294901760
      %v2576 = vsub.f32 %v258, %v2575
      %2577 = vmatprep.subr.mxu0 %v2576
      %v2578 = vand.u32 %v257, 4294901760
      %v2579 = vsub.f32 %v257, %v2578
      %2580 = vmatpush1.msra.mxu0 %v2579
      %v2581 = vand.u32 %v382, 4294901760
      %v2582 = vsub.f32 %v382, %v2581
      %2583 = vmatprep.subr.mxu0 %v2582
      %v2584 = vand.u32 %v381, 4294901760
      %v2585 = vsub.f32 %v381, %v2584
      %2586 = vmatpush2.msra.mxu0 %v2585
      %v2587 = vand.u32 %v378, 4294901760
      %v2588 = vsub.f32 %v378, %v2587
      %2589 = vmatprep.subr.mxu0 %v2588
      %v2590 = vand.u32 %v377, 4294901760
      %v2591 = vsub.f32 %v377, %v2590
      %2592 = vmatpush2.msra.mxu0 %v2591
      %v2593 = vand.u32 %v374, 4294901760
      %v2594 = vsub.f32 %v374, %v2593
      %2595 = vmatprep.subr.mxu0 %v2594
      %v2596 = vand.u32 %v373, 4294901760
      %v2597 = vsub.f32 %v373, %v2596
      %2598 = vmatpush2.msra.mxu0 %v2597
      %v2599 = vand.u32 %v370, 4294901760
      %v2600 = vsub.f32 %v370, %v2599
      %2601 = vmatprep.subr.mxu0 %v2600
      %v2602 = vand.u32 %v369, 4294901760
      %v2603 = vsub.f32 %v369, %v2602
      %2604 = vmatpush2.msra.mxu0 %v2603
      %v2605 = vand.u32 %v366, 4294901760
      %v2606 = vsub.f32 %v366, %v2605
      %2607 = vmatprep.subr.mxu0 %v2606
      %v2608 = vand.u32 %v365, 4294901760
      %v2609 = vsub.f32 %v365, %v2608
      %2610 = vmatpush2.msra.mxu0 %v2609
      %v2611 = vand.u32 %v362, 4294901760
      %v2612 = vsub.f32 %v362, %v2611
      %2613 = vmatprep.subr.mxu0 %v2612
      %v2614 = vand.u32 %v361, 4294901760
      %v2615 = vsub.f32 %v361, %v2614
      %2616 = vmatpush2.msra.mxu0 %v2615
      %v2617 = vand.u32 %v358, 4294901760
      %v2618 = vsub.f32 %v358, %v2617
      %2619 = vmatprep.subr.mxu0 %v2618
      %v2620 = vand.u32 %v357, 4294901760
      %v2621 = vsub.f32 %v357, %v2620
      %2622 = vmatpush2.msra.mxu0 %v2621
      %v2623 = vand.u32 %v354, 4294901760
      %v2624 = vsub.f32 %v354, %v2623
      %2625 = vmatprep.subr.mxu0 %v2624
      %v2626 = vand.u32 %v353, 4294901760
      %v2627 = vsub.f32 %v353, %v2626
      %2628 = vmatpush2.msra.mxu0 %v2627
      %v2629 = vand.u32 %v350, 4294901760
      %v2630 = vsub.f32 %v350, %v2629
      %2631 = vmatprep.subr.mxu0 %v2630
      %v2632 = vand.u32 %v349, 4294901760
      %v2633 = vsub.f32 %v349, %v2632
      %2634 = vmatpush2.msra.mxu0 %v2633
      %v2635 = vand.u32 %v346, 4294901760
      %v2636 = vsub.f32 %v346, %v2635
      %2637 = vmatprep.subr.mxu0 %v2636
      %v2638 = vand.u32 %v345, 4294901760
      %v2639 = vsub.f32 %v345, %v2638
      %2640 = vmatpush2.msra.mxu0 %v2639
      %v2641 = vand.u32 %v342, 4294901760
      %v2642 = vsub.f32 %v342, %v2641
      %2643 = vmatprep.subr.mxu0 %v2642
      %v2644 = vand.u32 %v341, 4294901760
      %v2645 = vsub.f32 %v341, %v2644
      %2646 = vmatpush2.msra.mxu0 %v2645
      %v2647 = vand.u32 %v338, 4294901760
      %v2648 = vsub.f32 %v338, %v2647
      %2649 = vmatprep.subr.mxu0 %v2648
      %v2650 = vand.u32 %v337, 4294901760
      %v2651 = vsub.f32 %v337, %v2650
      %2652 = vmatpush2.msra.mxu0 %v2651
      %v2653 = vand.u32 %v334, 4294901760
      %v2654 = vsub.f32 %v334, %v2653
      %2655 = vmatprep.subr.mxu0 %v2654
      %v2656 = vand.u32 %v333, 4294901760
      %v2657 = vsub.f32 %v333, %v2656
      %2658 = vmatpush2.msra.mxu0 %v2657
      %v2659 = vand.u32 %v330, 4294901760
      %v2660 = vsub.f32 %v330, %v2659
      %2661 = vmatprep.subr.mxu0 %v2660
      %v2662 = vand.u32 %v329, 4294901760
      %v2663 = vsub.f32 %v329, %v2662
      %2664 = vmatpush2.msra.mxu0 %v2663
      %v2665 = vand.u32 %v326, 4294901760
      %v2666 = vsub.f32 %v326, %v2665
      %2667 = vmatprep.subr.mxu0 %v2666
      %v2668 = vand.u32 %v325, 4294901760
      %v2669 = vsub.f32 %v325, %v2668
      %2670 = vmatpush2.msra.mxu0 %v2669
      %v2671 = vand.u32 %v322, 4294901760
      %v2672 = vsub.f32 %v322, %v2671
      %2673 = vmatprep.subr.mxu0 %v2672
      %v2674 = vand.u32 %v321, 4294901760
      %v2675 = vsub.f32 %v321, %v2674
      %2676 = vmatpush2.msra.mxu0 %v2675
      %v2677 = vand.u32 %v251, 4294901760
      %v2678 = vsub.f32 %v251, %v2677
      %2679 = vmatprep.mubr.f32.mxu0 %v2678
      %v2680 = vand.u32 %v247, 4294901760
      %v2681 = vsub.f32 %v247, %v2680
      %2682 = vmatmul.mubr.f32.gmra.mxu0 %v2681
      %v2683 = vpop.f32.mrf.mxu0
      %v2684 = vadd.f32 %v2457, %v2683
      %v2685 = vpop.f32.mrf.mxu0
      %v2686 = vadd.f32 %v2459, %v2685
      %v2687 = vand.u32 %v252, 4294901760
      %v2688 = vsub.f32 %v252, %v2687
      %2689 = vmatprep.mubr.f32.mxu0 %v2688
      %v2690 = vand.u32 %v248, 4294901760
      %v2691 = vsub.f32 %v248, %v2690
      %2692 = vmatmul.mubr.f32.gmra.mxu0 %v2691
      %v2693 = vpop.f32.mrf.mxu0
      %v2694 = vadd.f32 %v2465, %v2693
      %v2695 = vpop.f32.mrf.mxu0
      %v2696 = vadd.f32 %v2467, %v2695
      %v2697 = vand.u32 %v253, 4294901760
      %v2698 = vsub.f32 %v253, %v2697
      %2699 = vmatprep.mubr.f32.mxu0 %v2698
      %v2700 = vand.u32 %v249, 4294901760
      %v2701 = vsub.f32 %v249, %v2700
      %2702 = vmatmul.mubr.f32.gmra.mxu0 %v2701
      %v2703 = vpop.f32.mrf.mxu0
      %v2704 = vadd.f32 %v2473, %v2703
      %v2705 = vpop.f32.mrf.mxu0
      %v2706 = vadd.f32 %v2475, %v2705
      %v2707 = vand.u32 %v254, 4294901760
      %v2708 = vsub.f32 %v254, %v2707
      %2709 = vmatprep.mubr.f32.mxu0 %v2708
      %v2710 = vand.u32 %v250, 4294901760
      %v2711 = vsub.f32 %v250, %v2710
      %2712 = vmatmul.mubr.f32.gmra.mxu0 %v2711
      %v2713 = vpop.f32.mrf.mxu0
      %v2714 = vadd.f32 %v2481, %v2713
      %v2715 = vpop.f32.mrf.mxu0
      %v2716 = vadd.f32 %v2483, %v2715
      %2717 = vdwg.mxu0
      %v2718 = vand.u32 %v318, 4294901760
      %2719 = vmatprep.subr.mxu0 %v2718
      %v2720 = vand.u32 %v317, 4294901760
      %2721 = vmatpush1.msra.mxu0 %v2720
      %v2722 = vand.u32 %v314, 4294901760
      %2723 = vmatprep.subr.mxu0 %v2722
      %v2724 = vand.u32 %v313, 4294901760
      %2725 = vmatpush1.msra.mxu0 %v2724
      %v2726 = vand.u32 %v310, 4294901760
      %2727 = vmatprep.subr.mxu0 %v2726
      %v2728 = vand.u32 %v309, 4294901760
      %2729 = vmatpush1.msra.mxu0 %v2728
      %v2730 = vand.u32 %v306, 4294901760
      %2731 = vmatprep.subr.mxu0 %v2730
      %v2732 = vand.u32 %v305, 4294901760
      %2733 = vmatpush1.msra.mxu0 %v2732
      %v2734 = vand.u32 %v302, 4294901760
      %2735 = vmatprep.subr.mxu0 %v2734
      %v2736 = vand.u32 %v301, 4294901760
      %2737 = vmatpush1.msra.mxu0 %v2736
      %v2738 = vand.u32 %v298, 4294901760
      %2739 = vmatprep.subr.mxu0 %v2738
      %v2740 = vand.u32 %v297, 4294901760
      %2741 = vmatpush1.msra.mxu0 %v2740
      %v2742 = vand.u32 %v294, 4294901760
      %2743 = vmatprep.subr.mxu0 %v2742
      %v2744 = vand.u32 %v293, 4294901760
      %2745 = vmatpush1.msra.mxu0 %v2744
      %v2746 = vand.u32 %v290, 4294901760
      %2747 = vmatprep.subr.mxu0 %v2746
      %v2748 = vand.u32 %v289, 4294901760
      %2749 = vmatpush1.msra.mxu0 %v2748
      %v2750 = vand.u32 %v286, 4294901760
      %2751 = vmatprep.subr.mxu0 %v2750
      %v2752 = vand.u32 %v285, 4294901760
      %2753 = vmatpush1.msra.mxu0 %v2752
      %v2754 = vand.u32 %v282, 4294901760
      %2755 = vmatprep.subr.mxu0 %v2754
      %v2756 = vand.u32 %v281, 4294901760
      %2757 = vmatpush1.msra.mxu0 %v2756
      %v2758 = vand.u32 %v278, 4294901760
      %2759 = vmatprep.subr.mxu0 %v2758
      %v2760 = vand.u32 %v277, 4294901760
      %2761 = vmatpush1.msra.mxu0 %v2760
      %v2762 = vand.u32 %v274, 4294901760
      %2763 = vmatprep.subr.mxu0 %v2762
      %v2764 = vand.u32 %v273, 4294901760
      %2765 = vmatpush1.msra.mxu0 %v2764
      %v2766 = vand.u32 %v270, 4294901760
      %2767 = vmatprep.subr.mxu0 %v2766
      %v2768 = vand.u32 %v269, 4294901760
      %2769 = vmatpush1.msra.mxu0 %v2768
      %v2770 = vand.u32 %v266, 4294901760
      %2771 = vmatprep.subr.mxu0 %v2770
      %v2772 = vand.u32 %v265, 4294901760
      %2773 = vmatpush1.msra.mxu0 %v2772
      %v2774 = vand.u32 %v262, 4294901760
      %2775 = vmatprep.subr.mxu0 %v2774
      %v2776 = vand.u32 %v261, 4294901760
      %2777 = vmatpush1.msra.mxu0 %v2776
      %v2778 = vand.u32 %v258, 4294901760
      %2779 = vmatprep.subr.mxu0 %v2778
      %v2780 = vand.u32 %v257, 4294901760
      %2781 = vmatpush1.msra.mxu0 %v2780
      %v2782 = vand.u32 %v382, 4294901760
      %2783 = vmatprep.subr.mxu0 %v2782
      %v2784 = vand.u32 %v381, 4294901760
      %2785 = vmatpush2.msra.mxu0 %v2784
      %v2786 = vand.u32 %v378, 4294901760
      %2787 = vmatprep.subr.mxu0 %v2786
      %v2788 = vand.u32 %v377, 4294901760
      %2789 = vmatpush2.msra.mxu0 %v2788
      %v2790 = vand.u32 %v374, 4294901760
      %2791 = vmatprep.subr.mxu0 %v2790
      %v2792 = vand.u32 %v373, 4294901760
      %2793 = vmatpush2.msra.mxu0 %v2792
      %v2794 = vand.u32 %v370, 4294901760
      %2795 = vmatprep.subr.mxu0 %v2794
      %v2796 = vand.u32 %v369, 4294901760
      %2797 = vmatpush2.msra.mxu0 %v2796
      %v2798 = vand.u32 %v366, 4294901760
      %2799 = vmatprep.subr.mxu0 %v2798
      %v2800 = vand.u32 %v365, 4294901760
      %2801 = vmatpush2.msra.mxu0 %v2800
      %v2802 = vand.u32 %v362, 4294901760
      %2803 = vmatprep.subr.mxu0 %v2802
      %v2804 = vand.u32 %v361, 4294901760
      %2805 = vmatpush2.msra.mxu0 %v2804
      %v2806 = vand.u32 %v358, 4294901760
      %2807 = vmatprep.subr.mxu0 %v2806
      %v2808 = vand.u32 %v357, 4294901760
      %2809 = vmatpush2.msra.mxu0 %v2808
      %v2810 = vand.u32 %v354, 4294901760
      %2811 = vmatprep.subr.mxu0 %v2810
      %v2812 = vand.u32 %v353, 4294901760
      %2813 = vmatpush2.msra.mxu0 %v2812
      %v2814 = vand.u32 %v350, 4294901760
      %2815 = vmatprep.subr.mxu0 %v2814
      %v2816 = vand.u32 %v349, 4294901760
      %2817 = vmatpush2.msra.mxu0 %v2816
      %v2818 = vand.u32 %v346, 4294901760
      %2819 = vmatprep.subr.mxu0 %v2818
      %v2820 = vand.u32 %v345, 4294901760
      %2821 = vmatpush2.msra.mxu0 %v2820
      %v2822 = vand.u32 %v342, 4294901760
      %2823 = vmatprep.subr.mxu0 %v2822
      %v2824 = vand.u32 %v341, 4294901760
      %2825 = vmatpush2.msra.mxu0 %v2824
      %v2826 = vand.u32 %v338, 4294901760
      %2827 = vmatprep.subr.mxu0 %v2826
      %v2828 = vand.u32 %v337, 4294901760
      %2829 = vmatpush2.msra.mxu0 %v2828
      %v2830 = vand.u32 %v334, 4294901760
      %2831 = vmatprep.subr.mxu0 %v2830
      %v2832 = vand.u32 %v333, 4294901760
      %2833 = vmatpush2.msra.mxu0 %v2832
      %v2834 = vand.u32 %v330, 4294901760
      %2835 = vmatprep.subr.mxu0 %v2834
      %v2836 = vand.u32 %v329, 4294901760
      %2837 = vmatpush2.msra.mxu0 %v2836
      %v2838 = vand.u32 %v326, 4294901760
      %2839 = vmatprep.subr.mxu0 %v2838
      %v2840 = vand.u32 %v325, 4294901760
      %2841 = vmatpush2.msra.mxu0 %v2840
      %v2842 = vand.u32 %v322, 4294901760
      %2843 = vmatprep.subr.mxu0 %v2842
      %v2844 = vand.u32 %v321, 4294901760
      %2845 = vmatpush2.msra.mxu0 %v2844
      %v2846 = vand.u32 %v251, 4294901760
      %v2847 = vsub.f32 %v251, %v2846
      %v2848 = vand.u32 %v2847, 4294901760
      %2849 = vmatprep.mubr.f32.mxu0 %v2848
      %v2850 = vand.u32 %v247, 4294901760
      %v2851 = vsub.f32 %v247, %v2850
      %v2852 = vand.u32 %v2851, 4294901760
      %2853 = vmatmul.mubr.f32.gmra.mxu0 %v2852
      %v2854 = vpop.f32.mrf.mxu0
      %v2855 = vadd.f32 %v2684, %v2854
      %v2856 = vpop.f32.mrf.mxu0
      %v2857 = vadd.f32 %v2686, %v2856
      %v2858 = vand.u32 %v252, 4294901760
      %v2859 = vsub.f32 %v252, %v2858
      %v2860 = vand.u32 %v2859, 4294901760
      %2861 = vmatprep.mubr.f32.mxu0 %v2860
      %v2862 = vand.u32 %v248, 4294901760
      %v2863 = vsub.f32 %v248, %v2862
      %v2864 = vand.u32 %v2863, 4294901760
      %2865 = vmatmul.mubr.f32.gmra.mxu0 %v2864
      %v2866 = vpop.f32.mrf.mxu0
      %v2867 = vadd.f32 %v2694, %v2866
      %v2868 = vpop.f32.mrf.mxu0
      %v2869 = vadd.f32 %v2696, %v2868
      %v2870 = vand.u32 %v253, 4294901760
      %v2871 = vsub.f32 %v253, %v2870
      %v2872 = vand.u32 %v2871, 4294901760
      %2873 = vmatprep.mubr.f32.mxu0 %v2872
      %v2874 = vand.u32 %v249, 4294901760
      %v2875 = vsub.f32 %v249, %v2874
      %v2876 = vand.u32 %v2875, 4294901760
      %2877 = vmatmul.mubr.f32.gmra.mxu0 %v2876
      %v2878 = vpop.f32.mrf.mxu0
      %v2879 = vadd.f32 %v2704, %v2878
      %v2880 = vpop.f32.mrf.mxu0
      %v2881 = vadd.f32 %v2706, %v2880
      %v2882 = vand.u32 %v254, 4294901760
      %v2883 = vsub.f32 %v254, %v2882
      %v2884 = vand.u32 %v2883, 4294901760
      %2885 = vmatprep.mubr.f32.mxu0 %v2884
      %v2886 = vand.u32 %v250, 4294901760
      %v2887 = vsub.f32 %v250, %v2886
      %v2888 = vand.u32 %v2887, 4294901760
      %2889 = vmatmul.mubr.f32.gmra.mxu0 %v2888
      %v2890 = vpop.f32.mrf.mxu0
      %v2891 = vadd.f32 %v2714, %v2890
      %v2892 = vpop.f32.mrf.mxu0
      %v2893 = vadd.f32 %v2716, %v2892
      %2894 = vdwg.mxu0
      %v2895 = vand.u32 %v318, 4294901760
      %v2896 = vsub.f32 %v318, %v2895
      %v2897 = vand.u32 %v2896, 4294901760
      %2898 = vmatprep.subr.mxu0 %v2897
      %v2899 = vand.u32 %v317, 4294901760
      %v2900 = vsub.f32 %v317, %v2899
      %v2901 = vand.u32 %v2900, 4294901760
      %2902 = vmatpush1.msra.mxu0 %v2901
      %v2903 = vand.u32 %v314, 4294901760
      %v2904 = vsub.f32 %v314, %v2903
      %v2905 = vand.u32 %v2904, 4294901760
      %2906 = vmatprep.subr.mxu0 %v2905
      %v2907 = vand.u32 %v313, 4294901760
      %v2908 = vsub.f32 %v313, %v2907
      %v2909 = vand.u32 %v2908, 4294901760
      %2910 = vmatpush1.msra.mxu0 %v2909
      %v2911 = vand.u32 %v310, 4294901760
      %v2912 = vsub.f32 %v310, %v2911
      %v2913 = vand.u32 %v2912, 4294901760
      %2914 = vmatprep.subr.mxu0 %v2913
      %v2915 = vand.u32 %v309, 4294901760
      %v2916 = vsub.f32 %v309, %v2915
      %v2917 = vand.u32 %v2916, 4294901760
      %2918 = vmatpush1.msra.mxu0 %v2917
      %v2919 = vand.u32 %v306, 4294901760
      %v2920 = vsub.f32 %v306, %v2919
      %v2921 = vand.u32 %v2920, 4294901760
      %2922 = vmatprep.subr.mxu0 %v2921
      %v2923 = vand.u32 %v305, 4294901760
      %v2924 = vsub.f32 %v305, %v2923
      %v2925 = vand.u32 %v2924, 4294901760
      %2926 = vmatpush1.msra.mxu0 %v2925
      %v2927 = vand.u32 %v302, 4294901760
      %v2928 = vsub.f32 %v302, %v2927
      %v2929 = vand.u32 %v2928, 4294901760
      %2930 = vmatprep.subr.mxu0 %v2929
      %v2931 = vand.u32 %v301, 4294901760
      %v2932 = vsub.f32 %v301, %v2931
      %v2933 = vand.u32 %v2932, 4294901760
      %2934 = vmatpush1.msra.mxu0 %v2933
      %v2935 = vand.u32 %v298, 4294901760
      %v2936 = vsub.f32 %v298, %v2935
      %v2937 = vand.u32 %v2936, 4294901760
      %2938 = vmatprep.subr.mxu0 %v2937
      %v2939 = vand.u32 %v297, 4294901760
      %v2940 = vsub.f32 %v297, %v2939
      %v2941 = vand.u32 %v2940, 4294901760
      %2942 = vmatpush1.msra.mxu0 %v2941
      %v2943 = vand.u32 %v294, 4294901760
      %v2944 = vsub.f32 %v294, %v2943
      %v2945 = vand.u32 %v2944, 4294901760
      %2946 = vmatprep.subr.mxu0 %v2945
      %v2947 = vand.u32 %v293, 4294901760
      %v2948 = vsub.f32 %v293, %v2947
      %v2949 = vand.u32 %v2948, 4294901760
      %2950 = vmatpush1.msra.mxu0 %v2949
      %v2951 = vand.u32 %v290, 4294901760
      %v2952 = vsub.f32 %v290, %v2951
      %v2953 = vand.u32 %v2952, 4294901760
      %2954 = vmatprep.subr.mxu0 %v2953
      %v2955 = vand.u32 %v289, 4294901760
      %v2956 = vsub.f32 %v289, %v2955
      %v2957 = vand.u32 %v2956, 4294901760
      %2958 = vmatpush1.msra.mxu0 %v2957
      %v2959 = vand.u32 %v286, 4294901760
      %v2960 = vsub.f32 %v286, %v2959
      %v2961 = vand.u32 %v2960, 4294901760
      %2962 = vmatprep.subr.mxu0 %v2961
      %v2963 = vand.u32 %v285, 4294901760
      %v2964 = vsub.f32 %v285, %v2963
      %v2965 = vand.u32 %v2964, 4294901760
      %2966 = vmatpush1.msra.mxu0 %v2965
      %v2967 = vand.u32 %v282, 4294901760
      %v2968 = vsub.f32 %v282, %v2967
      %v2969 = vand.u32 %v2968, 4294901760
      %2970 = vmatprep.subr.mxu0 %v2969
      %v2971 = vand.u32 %v281, 4294901760
      %v2972 = vsub.f32 %v281, %v2971
      %v2973 = vand.u32 %v2972, 4294901760
      %2974 = vmatpush1.msra.mxu0 %v2973
      %v2975 = vand.u32 %v278, 4294901760
      %v2976 = vsub.f32 %v278, %v2975
      %v2977 = vand.u32 %v2976, 4294901760
      %2978 = vmatprep.subr.mxu0 %v2977
      %v2979 = vand.u32 %v277, 4294901760
      %v2980 = vsub.f32 %v277, %v2979
      %v2981 = vand.u32 %v2980, 4294901760
      %2982 = vmatpush1.msra.mxu0 %v2981
      %v2983 = vand.u32 %v274, 4294901760
      %v2984 = vsub.f32 %v274, %v2983
      %v2985 = vand.u32 %v2984, 4294901760
      %2986 = vmatprep.subr.mxu0 %v2985
      %v2987 = vand.u32 %v273, 4294901760
      %v2988 = vsub.f32 %v273, %v2987
      %v2989 = vand.u32 %v2988, 4294901760
      %2990 = vmatpush1.msra.mxu0 %v2989
      %v2991 = vand.u32 %v270, 4294901760
      %v2992 = vsub.f32 %v270, %v2991
      %v2993 = vand.u32 %v2992, 4294901760
      %2994 = vmatprep.subr.mxu0 %v2993
      %v2995 = vand.u32 %v269, 4294901760
      %v2996 = vsub.f32 %v269, %v2995
      %v2997 = vand.u32 %v2996, 4294901760
      %2998 = vmatpush1.msra.mxu0 %v2997
      %v2999 = vand.u32 %v266, 4294901760
      %v3000 = vsub.f32 %v266, %v2999
      %v3001 = vand.u32 %v3000, 4294901760
      %3002 = vmatprep.subr.mxu0 %v3001
      %v3003 = vand.u32 %v265, 4294901760
      %v3004 = vsub.f32 %v265, %v3003
      %v3005 = vand.u32 %v3004, 4294901760
      %3006 = vmatpush1.msra.mxu0 %v3005
      %v3007 = vand.u32 %v262, 4294901760
      %v3008 = vsub.f32 %v262, %v3007
      %v3009 = vand.u32 %v3008, 4294901760
      %3010 = vmatprep.subr.mxu0 %v3009
      %v3011 = vand.u32 %v261, 4294901760
      %v3012 = vsub.f32 %v261, %v3011
      %v3013 = vand.u32 %v3012, 4294901760
      %3014 = vmatpush1.msra.mxu0 %v3013
      %v3015 = vand.u32 %v258, 4294901760
      %v3016 = vsub.f32 %v258, %v3015
      %v3017 = vand.u32 %v3016, 4294901760
      %3018 = vmatprep.subr.mxu0 %v3017
      %v3019 = vand.u32 %v257, 4294901760
      %v3020 = vsub.f32 %v257, %v3019
      %v3021 = vand.u32 %v3020, 4294901760
      %3022 = vmatpush1.msra.mxu0 %v3021
      %v3023 = vand.u32 %v382, 4294901760
      %v3024 = vsub.f32 %v382, %v3023
      %v3025 = vand.u32 %v3024, 4294901760
      %3026 = vmatprep.subr.mxu0 %v3025
      %v3027 = vand.u32 %v381, 4294901760
      %v3028 = vsub.f32 %v381, %v3027
      %v3029 = vand.u32 %v3028, 4294901760
      %3030 = vmatpush2.msra.mxu0 %v3029
      %v3031 = vand.u32 %v378, 4294901760
      %v3032 = vsub.f32 %v378, %v3031
      %v3033 = vand.u32 %v3032, 4294901760
      %3034 = vmatprep.subr.mxu0 %v3033
      %v3035 = vand.u32 %v377, 4294901760
      %v3036 = vsub.f32 %v377, %v3035
      %v3037 = vand.u32 %v3036, 4294901760
      %3038 = vmatpush2.msra.mxu0 %v3037
      %v3039 = vand.u32 %v374, 4294901760
      %v3040 = vsub.f32 %v374, %v3039
      %v3041 = vand.u32 %v3040, 4294901760
      %3042 = vmatprep.subr.mxu0 %v3041
      %v3043 = vand.u32 %v373, 4294901760
      %v3044 = vsub.f32 %v373, %v3043
      %v3045 = vand.u32 %v3044, 4294901760
      %3046 = vmatpush2.msra.mxu0 %v3045
      %v3047 = vand.u32 %v370, 4294901760
      %v3048 = vsub.f32 %v370, %v3047
      %v3049 = vand.u32 %v3048, 4294901760
      %3050 = vmatprep.subr.mxu0 %v3049
      %v3051 = vand.u32 %v369, 4294901760
      %v3052 = vsub.f32 %v369, %v3051
      %v3053 = vand.u32 %v3052, 4294901760
      %3054 = vmatpush2.msra.mxu0 %v3053
      %v3055 = vand.u32 %v366, 4294901760
      %v3056 = vsub.f32 %v366, %v3055
      %v3057 = vand.u32 %v3056, 4294901760
      %3058 = vmatprep.subr.mxu0 %v3057
      %v3059 = vand.u32 %v365, 4294901760
      %v3060 = vsub.f32 %v365, %v3059
      %v3061 = vand.u32 %v3060, 4294901760
      %3062 = vmatpush2.msra.mxu0 %v3061
      %v3063 = vand.u32 %v362, 4294901760
      %v3064 = vsub.f32 %v362, %v3063
      %v3065 = vand.u32 %v3064, 4294901760
      %3066 = vmatprep.subr.mxu0 %v3065
      %v3067 = vand.u32 %v361, 4294901760
      %v3068 = vsub.f32 %v361, %v3067
      %v3069 = vand.u32 %v3068, 4294901760
      %3070 = vmatpush2.msra.mxu0 %v3069
      %v3071 = vand.u32 %v358, 4294901760
      %v3072 = vsub.f32 %v358, %v3071
      %v3073 = vand.u32 %v3072, 4294901760
      %3074 = vmatprep.subr.mxu0 %v3073
      %v3075 = vand.u32 %v357, 4294901760
      %v3076 = vsub.f32 %v357, %v3075
      %v3077 = vand.u32 %v3076, 4294901760
      %3078 = vmatpush2.msra.mxu0 %v3077
      %v3079 = vand.u32 %v354, 4294901760
      %v3080 = vsub.f32 %v354, %v3079
      %v3081 = vand.u32 %v3080, 4294901760
      %3082 = vmatprep.subr.mxu0 %v3081
      %v3083 = vand.u32 %v353, 4294901760
      %v3084 = vsub.f32 %v353, %v3083
      %v3085 = vand.u32 %v3084, 4294901760
      %3086 = vmatpush2.msra.mxu0 %v3085
      %v3087 = vand.u32 %v350, 4294901760
      %v3088 = vsub.f32 %v350, %v3087
      %v3089 = vand.u32 %v3088, 4294901760
      %3090 = vmatprep.subr.mxu0 %v3089
      %v3091 = vand.u32 %v349, 4294901760
      %v3092 = vsub.f32 %v349, %v3091
      %v3093 = vand.u32 %v3092, 4294901760
      %3094 = vmatpush2.msra.mxu0 %v3093
      %v3095 = vand.u32 %v346, 4294901760
      %v3096 = vsub.f32 %v346, %v3095
      %v3097 = vand.u32 %v3096, 4294901760
      %3098 = vmatprep.subr.mxu0 %v3097
      %v3099 = vand.u32 %v345, 4294901760
      %v3100 = vsub.f32 %v345, %v3099
      %v3101 = vand.u32 %v3100, 4294901760
      %3102 = vmatpush2.msra.mxu0 %v3101
      %v3103 = vand.u32 %v342, 4294901760
      %v3104 = vsub.f32 %v342, %v3103
      %v3105 = vand.u32 %v3104, 4294901760
      %3106 = vmatprep.subr.mxu0 %v3105
      %v3107 = vand.u32 %v341, 4294901760
      %v3108 = vsub.f32 %v341, %v3107
      %v3109 = vand.u32 %v3108, 4294901760
      %3110 = vmatpush2.msra.mxu0 %v3109
      %v3111 = vand.u32 %v338, 4294901760
      %v3112 = vsub.f32 %v338, %v3111
      %v3113 = vand.u32 %v3112, 4294901760
      %3114 = vmatprep.subr.mxu0 %v3113
      %v3115 = vand.u32 %v337, 4294901760
      %v3116 = vsub.f32 %v337, %v3115
      %v3117 = vand.u32 %v3116, 4294901760
      %3118 = vmatpush2.msra.mxu0 %v3117
      %v3119 = vand.u32 %v334, 4294901760
      %v3120 = vsub.f32 %v334, %v3119
      %v3121 = vand.u32 %v3120, 4294901760
      %3122 = vmatprep.subr.mxu0 %v3121
      %v3123 = vand.u32 %v333, 4294901760
      %v3124 = vsub.f32 %v333, %v3123
      %v3125 = vand.u32 %v3124, 4294901760
      %3126 = vmatpush2.msra.mxu0 %v3125
      %v3127 = vand.u32 %v330, 4294901760
      %v3128 = vsub.f32 %v330, %v3127
      %v3129 = vand.u32 %v3128, 4294901760
      %3130 = vmatprep.subr.mxu0 %v3129
      %v3131 = vand.u32 %v329, 4294901760
      %v3132 = vsub.f32 %v329, %v3131
      %v3133 = vand.u32 %v3132, 4294901760
      %3134 = vmatpush2.msra.mxu0 %v3133
      %v3135 = vand.u32 %v326, 4294901760
      %v3136 = vsub.f32 %v326, %v3135
      %v3137 = vand.u32 %v3136, 4294901760
      %3138 = vmatprep.subr.mxu0 %v3137
      %v3139 = vand.u32 %v325, 4294901760
      %v3140 = vsub.f32 %v325, %v3139
      %v3141 = vand.u32 %v3140, 4294901760
      %3142 = vmatpush2.msra.mxu0 %v3141
      %v3143 = vand.u32 %v322, 4294901760
      %v3144 = vsub.f32 %v322, %v3143
      %v3145 = vand.u32 %v3144, 4294901760
      %3146 = vmatprep.subr.mxu0 %v3145
      %v3147 = vand.u32 %v321, 4294901760
      %v3148 = vsub.f32 %v321, %v3147
      %v3149 = vand.u32 %v3148, 4294901760
      %3150 = vmatpush2.msra.mxu0 %v3149
      %v3151 = vand.u32 %v251, 4294901760
      %3152 = vmatprep.mubr.f32.mxu0 %v3151
      %v3153 = vand.u32 %v247, 4294901760
      %3154 = vmatmul.mubr.f32.gmra.mxu0 %v3153
      %v3155 = vpop.f32.mrf.mxu0
      %v3156 = vadd.f32 %v2855, %v3155
      %v3157 = vpop.f32.mrf.mxu0
      %v3158 = vadd.f32 %v2857, %v3157
      %v3159 = vand.u32 %v252, 4294901760
      %3160 = vmatprep.mubr.f32.mxu0 %v3159
      %v3161 = vand.u32 %v248, 4294901760
      %3162 = vmatmul.mubr.f32.gmra.mxu0 %v3161
      %v3163 = vpop.f32.mrf.mxu0
      %v3164 = vadd.f32 %v2867, %v3163
      %v3165 = vpop.f32.mrf.mxu0
      %v3166 = vadd.f32 %v2869, %v3165
      %v3167 = vand.u32 %v253, 4294901760
      %3168 = vmatprep.mubr.f32.mxu0 %v3167
      %v3169 = vand.u32 %v249, 4294901760
      %3170 = vmatmul.mubr.f32.gmra.mxu0 %v3169
      %v3171 = vpop.f32.mrf.mxu0
      %v3172 = vadd.f32 %v2879, %v3171
      %v3173 = vpop.f32.mrf.mxu0
      %v3174 = vadd.f32 %v2881, %v3173
      %v3175 = vand.u32 %v254, 4294901760
      %3176 = vmatprep.mubr.f32.mxu0 %v3175
      %v3177 = vand.u32 %v250, 4294901760
      %3178 = vmatmul.mubr.f32.gmra.mxu0 %v3177
      %v3179 = vpop.f32.mrf.mxu0
      %v3180 = vadd.f32 %v2891, %v3179
      %v3181 = vpop.f32.mrf.mxu0
      %v3182 = vadd.f32 %v2893, %v3181
      %3183 = vdwg.mxu0
      %v3184 = vand.u32 %v318, 4294901760
      %3185 = vmatprep.subr.mxu0 %v3184
      %v3186 = vand.u32 %v317, 4294901760
      %3187 = vmatpush1.msra.mxu0 %v3186
      %v3188 = vand.u32 %v314, 4294901760
      %3189 = vmatprep.subr.mxu0 %v3188
      %v3190 = vand.u32 %v313, 4294901760
      %3191 = vmatpush1.msra.mxu0 %v3190
      %v3192 = vand.u32 %v310, 4294901760
      %3193 = vmatprep.subr.mxu0 %v3192
      %v3194 = vand.u32 %v309, 4294901760
      %3195 = vmatpush1.msra.mxu0 %v3194
      %v3196 = vand.u32 %v306, 4294901760
      %3197 = vmatprep.subr.mxu0 %v3196
      %v3198 = vand.u32 %v305, 4294901760
      %3199 = vmatpush1.msra.mxu0 %v3198
      %v3200 = vand.u32 %v302, 4294901760
      %3201 = vmatprep.subr.mxu0 %v3200
      %v3202 = vand.u32 %v301, 4294901760
      %3203 = vmatpush1.msra.mxu0 %v3202
      %v3204 = vand.u32 %v298, 4294901760
      %3205 = vmatprep.subr.mxu0 %v3204
      %v3206 = vand.u32 %v297, 4294901760
      %3207 = vmatpush1.msra.mxu0 %v3206
      %v3208 = vand.u32 %v294, 4294901760
      %3209 = vmatprep.subr.mxu0 %v3208
      %v3210 = vand.u32 %v293, 4294901760
      %3211 = vmatpush1.msra.mxu0 %v3210
      %v3212 = vand.u32 %v290, 4294901760
      %3213 = vmatprep.subr.mxu0 %v3212
      %v3214 = vand.u32 %v289, 4294901760
      %3215 = vmatpush1.msra.mxu0 %v3214
      %v3216 = vand.u32 %v286, 4294901760
      %3217 = vmatprep.subr.mxu0 %v3216
      %v3218 = vand.u32 %v285, 4294901760
      %3219 = vmatpush1.msra.mxu0 %v3218
      %v3220 = vand.u32 %v282, 4294901760
      %3221 = vmatprep.subr.mxu0 %v3220
      %v3222 = vand.u32 %v281, 4294901760
      %3223 = vmatpush1.msra.mxu0 %v3222
      %v3224 = vand.u32 %v278, 4294901760
      %3225 = vmatprep.subr.mxu0 %v3224
      %v3226 = vand.u32 %v277, 4294901760
      %3227 = vmatpush1.msra.mxu0 %v3226
      %v3228 = vand.u32 %v274, 4294901760
      %3229 = vmatprep.subr.mxu0 %v3228
      %v3230 = vand.u32 %v273, 4294901760
      %3231 = vmatpush1.msra.mxu0 %v3230
      %v3232 = vand.u32 %v270, 4294901760
      %3233 = vmatprep.subr.mxu0 %v3232
      %v3234 = vand.u32 %v269, 4294901760
      %3235 = vmatpush1.msra.mxu0 %v3234
      %v3236 = vand.u32 %v266, 4294901760
      %3237 = vmatprep.subr.mxu0 %v3236
      %v3238 = vand.u32 %v265, 4294901760
      %3239 = vmatpush1.msra.mxu0 %v3238
      %v3240 = vand.u32 %v262, 4294901760
      %3241 = vmatprep.subr.mxu0 %v3240
      %v3242 = vand.u32 %v261, 4294901760
      %3243 = vmatpush1.msra.mxu0 %v3242
      %v3244 = vand.u32 %v258, 4294901760
      %3245 = vmatprep.subr.mxu0 %v3244
      %v3246 = vand.u32 %v257, 4294901760
      %3247 = vmatpush1.msra.mxu0 %v3246
      %v3248 = vand.u32 %v382, 4294901760
      %3249 = vmatprep.subr.mxu0 %v3248
      %v3250 = vand.u32 %v381, 4294901760
      %3251 = vmatpush2.msra.mxu0 %v3250
      %v3252 = vand.u32 %v378, 4294901760
      %3253 = vmatprep.subr.mxu0 %v3252
      %v3254 = vand.u32 %v377, 4294901760
      %3255 = vmatpush2.msra.mxu0 %v3254
      %v3256 = vand.u32 %v374, 4294901760
      %3257 = vmatprep.subr.mxu0 %v3256
      %v3258 = vand.u32 %v373, 4294901760
      %3259 = vmatpush2.msra.mxu0 %v3258
      %v3260 = vand.u32 %v370, 4294901760
      %3261 = vmatprep.subr.mxu0 %v3260
      %v3262 = vand.u32 %v369, 4294901760
      %3263 = vmatpush2.msra.mxu0 %v3262
      %v3264 = vand.u32 %v366, 4294901760
      %3265 = vmatprep.subr.mxu0 %v3264
      %v3266 = vand.u32 %v365, 4294901760
      %3267 = vmatpush2.msra.mxu0 %v3266
      %v3268 = vand.u32 %v362, 4294901760
      %3269 = vmatprep.subr.mxu0 %v3268
      %v3270 = vand.u32 %v361, 4294901760
      %3271 = vmatpush2.msra.mxu0 %v3270
      %v3272 = vand.u32 %v358, 4294901760
      %3273 = vmatprep.subr.mxu0 %v3272
      %v3274 = vand.u32 %v357, 4294901760
      %3275 = vmatpush2.msra.mxu0 %v3274
      %v3276 = vand.u32 %v354, 4294901760
      %3277 = vmatprep.subr.mxu0 %v3276
      %v3278 = vand.u32 %v353, 4294901760
      %3279 = vmatpush2.msra.mxu0 %v3278
      %v3280 = vand.u32 %v350, 4294901760
      %3281 = vmatprep.subr.mxu0 %v3280
      %v3282 = vand.u32 %v349, 4294901760
      %3283 = vmatpush2.msra.mxu0 %v3282
      %v3284 = vand.u32 %v346, 4294901760
      %3285 = vmatprep.subr.mxu0 %v3284
      %v3286 = vand.u32 %v345, 4294901760
      %3287 = vmatpush2.msra.mxu0 %v3286
      %v3288 = vand.u32 %v342, 4294901760
      %3289 = vmatprep.subr.mxu0 %v3288
      %v3290 = vand.u32 %v341, 4294901760
      %3291 = vmatpush2.msra.mxu0 %v3290
      %v3292 = vand.u32 %v338, 4294901760
      %3293 = vmatprep.subr.mxu0 %v3292
      %v3294 = vand.u32 %v337, 4294901760
      %3295 = vmatpush2.msra.mxu0 %v3294
      %v3296 = vand.u32 %v334, 4294901760
      %3297 = vmatprep.subr.mxu0 %v3296
      %v3298 = vand.u32 %v333, 4294901760
      %3299 = vmatpush2.msra.mxu0 %v3298
      %v3300 = vand.u32 %v330, 4294901760
      %3301 = vmatprep.subr.mxu0 %v3300
      %v3302 = vand.u32 %v329, 4294901760
      %3303 = vmatpush2.msra.mxu0 %v3302
      %v3304 = vand.u32 %v326, 4294901760
      %3305 = vmatprep.subr.mxu0 %v3304
      %v3306 = vand.u32 %v325, 4294901760
      %3307 = vmatpush2.msra.mxu0 %v3306
      %v3308 = vand.u32 %v322, 4294901760
      %3309 = vmatprep.subr.mxu0 %v3308
      %v3310 = vand.u32 %v321, 4294901760
      %3311 = vmatpush2.msra.mxu0 %v3310
      %v3312 = vand.u32 %v251, 4294901760
      %3313 = vmatprep.mubr.f32.mxu0 %v3312
      %v3314 = vand.u32 %v247, 4294901760
      %3315 = vmatmul.mubr.f32.gmra.mxu0 %v3314
      %v3316 = vpop.f32.mrf.mxu0
      %v3317 = vadd.f32 %v3156, %v3316
      %v3318 = vpop.f32.mrf.mxu0
      %v3319 = vadd.f32 %v3158, %v3318
      %v3320 = vand.u32 %v252, 4294901760
      %3321 = vmatprep.mubr.f32.mxu0 %v3320
      %v3322 = vand.u32 %v248, 4294901760
      %3323 = vmatmul.mubr.f32.gmra.mxu0 %v3322
      %v3324 = vpop.f32.mrf.mxu0
      %v3325 = vadd.f32 %v3164, %v3324
      %v3326 = vpop.f32.mrf.mxu0
      %v3327 = vadd.f32 %v3166, %v3326
      %v3328 = vand.u32 %v253, 4294901760
      %3329 = vmatprep.mubr.f32.mxu0 %v3328
      %v3330 = vand.u32 %v249, 4294901760
      %3331 = vmatmul.mubr.f32.gmra.mxu0 %v3330
      %v3332 = vpop.f32.mrf.mxu0
      %v3333 = vadd.f32 %v3172, %v3332
      %v3334 = vpop.f32.mrf.mxu0
      %v3335 = vadd.f32 %v3174, %v3334
      %v3336 = vand.u32 %v254, 4294901760
      %3337 = vmatprep.mubr.f32.mxu0 %v3336
      %v3338 = vand.u32 %v250, 4294901760
      %3339 = vmatmul.mubr.f32.gmra.mxu0 %v3338
      %v3340 = vpop.f32.mrf.mxu0
      %v3341 = vadd.f32 %v3180, %v3340
      %v3342 = vpop.f32.mrf.mxu0
      %v3343 = vadd.f32 %v3182, %v3342
      %3344 = vdwg.mxu0
      %v3345 = vsub.f32 0.0, %v1847
      %v3346 = vsub.f32 0.0, %v1855
      %v3347 = vsub.f32 0.0, %v1863
      %v3348 = vsub.f32 0.0, %v1871
      %v3349 = vmul.f32 %v3345, 1.442695
      %v3350 = vpow.pop %v3349
      %v3351 = vmul.f32 %v3346, 1.442695
      %v3352 = vpow.pop %v3351
      %v3353 = vmul.f32 %v3347, 1.442695
      %v3354 = vpow.pop %v3353
      %v3355 = vmul.f32 %v3348, 1.442695
      %v3356 = vpow.pop %v3355
      %v3357 = vadd.f32 %v3350, 1.0
      %v3358 = vadd.f32 %v3352, 1.0
      %v3359 = vadd.f32 %v3354, 1.0
      %v3360 = vadd.f32 %v3356, 1.0
      %v3361 = vrcp.pop %v3357
      %v3362 = vmul.f32 1.0, %v3361
      %v3363 = vrcp.pop %v3358
      %v3364 = vmul.f32 1.0, %v3363
      %v3365 = vrcp.pop %v3359
      %v3366 = vmul.f32 1.0, %v3365
      %v3367 = vrcp.pop %v3360
      %v3368 = vmul.f32 1.0, %v3367
      %v3369 = vsub.f32 0.0, %v1849
      %v3370 = vsub.f32 0.0, %v1857
      %v3371 = vsub.f32 0.0, %v1865
      %v3372 = vsub.f32 0.0, %v1873
      %v3373 = vmul.f32 %v3369, 1.442695
      %v3374 = vpow.pop %v3373
      %v3375 = vmul.f32 %v3370, 1.442695
      %v3376 = vpow.pop %v3375
      %v3377 = vmul.f32 %v3371, 1.442695
      %v3378 = vpow.pop %v3377
      %v3379 = vmul.f32 %v3372, 1.442695
      %v3380 = vpow.pop %v3379
      %v3381 = vadd.f32 %v3374, 1.0
      %v3382 = vadd.f32 %v3376, 1.0
      %v3383 = vadd.f32 %v3378, 1.0
      %v3384 = vadd.f32 %v3380, 1.0
      %v3385 = vrcp.pop %v3381
      %v3386 = vmul.f32 1.0, %v3385
      %v3387 = vrcp.pop %v3382
      %v3388 = vmul.f32 1.0, %v3387
      %v3389 = vrcp.pop %v3383
      %v3390 = vmul.f32 1.0, %v3389
      %v3391 = vrcp.pop %v3384
      %v3392 = vmul.f32 1.0, %v3391
      %v3393 = vmul.f32 %v3362, %v3319
      %v3394 = vmul.f32 %v3364, %v3327
      %v3395 = vmul.f32 %v3366, %v3335
      %v3396 = vmul.f32 %v3368, %v3343
      %v3397 = vadd.f32 %v3317, %v3393
      %v3398 = vadd.f32 %v3325, %v3394
      %v3399 = vadd.f32 %v3333, %v3395
      %v3400 = vadd.f32 %v3341, %v3396
      %v3401 = vtanh.pop %v3397
      %v3402 = vtanh.pop %v3398
      %v3403 = vtanh.pop %v3399
      %v3404 = vtanh.pop %v3400
      %v3405 = vsub.f32 1.0, %v3386
      %v3406 = vsub.f32 1.0, %v3388
      %v3407 = vsub.f32 1.0, %v3390
      %v3408 = vsub.f32 1.0, %v3392
      %v3409 = vmul.f32 %v3405, %v3401
      %v3410 = vmul.f32 %v3406, %v3402
      %v3411 = vmul.f32 %v3407, %v3403
      %v3412 = vmul.f32 %v3408, %v3404
      %v3413 = vmul.f32 %v3386, %v251
      %v3414 = vmul.f32 %v3388, %v252
      %v3415 = vmul.f32 %v3390, %v253
      %v3416 = vmul.f32 %v3392, %v254
      %v3417 = vadd.f32 %v3409, %v3413
      %v3418 = vadd.f32 %v3410, %v3414
      %v3419 = vadd.f32 %v3411, %v3415
      %v3420 = vadd.f32 %v3412, %v3416
      %v3421 = vmax.f32 %v3417, 0.0
      %v3422 = vmax.f32 %v3418, 0.0
      %v3423 = vmax.f32 %v3419, 0.0
      %v3424 = vmax.f32 %v3420, 0.0
      %3425 = vst [vmem:[%s221] sm:$0xff] %v3421
      %3426 = vst [vmem:[%s221 + $0x8] sm:$0xff] %v3422
      %3427 = vst [vmem:[%s221 + $0x10] sm:$0xff] %v3423
      %3428 = vst [vmem:[%s221 + $0x18] sm:$0xff] %v3424
      %s3429 = smul.u32 4, %s15
      %p3430 = scmp.lt.s32.totalorder %s3429, 7
      %s3431 = scalar_select %p3430, %s3429, 7
      %s3432 = smul.addr %s3431, 8
      %s3433 = scalar_lea.vmem %s4, %s3432
      // Predicated region
      $region37: #{attentive_fp_forward.7} parent=35 // pred_check
        %p3434 = pneg %p127
      $region38: #{attentive_fp_forward.7} parent=35 // pred_check_branch
        %3436 = sbr.rel (%p3434) target = $region40
      $region39: #{attentive_fp_forward.7} parent=35 // pred_region
        %s3437 = smul.u32 4, %s15
      $region40: #{attentive_fp_forward.7} parent=35 // pred_fallthru
        _
    $region36: #{attentive_fp_forward.7} parent=5 // pred_fallthru
      _
    %p3438 = scmp.le.s32.totalorder 2, %s10
    // Predicated region
    $region41: #{attentive_fp_forward.7} parent=5 // pred_check
      %p3439 = pneg %p3438
    $region42: #{attentive_fp_forward.7} parent=5 // pred_check_branch
      %3441 = sbr.rel (%p3439) target = $region44
    $region43: #{attentive_fp_forward.7} parent=5 // pred_region
      %s3442 = ssub.s32 %s10, 2
      // Predicated region
      $region45: #{attentive_fp_forward.7} parent=43 // pred_check
        %p3443 = pneg %p133
      $region46: #{attentive_fp_forward.7} parent=43 // pred_check_branch
        %3445 = sbr.rel (%p3443) target = $region48
      $region47: #{attentive_fp_forward.7} parent=43 // pred_region
        %s3446 = smul.u32 4, %s16
        %p3447 = scmp.lt.s32.totalorder %s3446, 7
        %s3448 = scalar_select %p3447, %s3446, 7
        %s3449 = smul.addr %s3448, 8
        %s3450 = scalar_lea.vmem %s4, %s3449
      $region48: #{attentive_fp_forward.7} parent=43 // pred_fallthru
        _
    $region44: #{attentive_fp_forward.7} parent=5 // pred_fallthru
      _
  $region6: #{attentive_fp_forward.7} parent=0 // loop_footer
    %s14 = sadd.s32 1, %s10
  $region7: #{attentive_fp_forward.7} parent=0 // loop_footer_branch
    %9 = sbr.rel target = $region3
  $region8: #{attentive_fp_forward.7} parent=0 // loop_exit
    _

// kernel: attentive_fp_forward.8
$region0: #{attentive_fp_forward.8}
  #allocation0 [shape = 'u32[]', space=smem, size = 0x4, offset = 0x4, fixed_abs, tag = 'smem constant byte address 0x4 - core index']
  #allocation1 [shape = 'u32[144,128]{1,0:T(1,128)}', space=vmem, size = 0x12000, scoped, tag = 'internal scratch']
  %s0 = inlined_call_operand.vmem [shape: f32[64,128], index: 0, kind: input, shape index: {}]
  %s1 = inlined_call_operand.vmem [shape: f32[128,128], index: 1, kind: input, shape index: {}]
  %s2 = inlined_call_operand.vmem [shape: f32[1,128], index: 2, kind: input, shape index: {}]
  %s3 = inlined_call_operand.vmem [shape: f32[1,128], index: 3, kind: input, shape index: {}]
  %s4 = inlined_call_operand.vmem [shape: f32[1,128], index: 4, kind: input, shape index: {}]
  %s5 = inlined_call_operand.vmem [shape: f32[64,128], index: 5, kind: output, shape index: {0}]
  %s6 = inlined_call_operand.vmem [shape: f32[64,1], index: 6, kind: output, shape index: {1}]
  %s7 = inlined_call_operand.vmem [shape: f32[64,1], index: 7, kind: output, shape index: {2}]
  %8 = xla_tuple %s5, %s6, %s7
  %s9 = sld [smem:[#allocation0]]
  $region69: #{attentive_fp_forward.8} parent=0
    _
  %s11 = ssub.s32 1, %s9
  %s12 = scalar_select 0, %s11, %s9
  loop: start=0, step=1, limit=4
  $region2: #{attentive_fp_forward.8} parent=0 // loop_pre_header
    _
  $region3: #{attentive_fp_forward.8} parent=0 // loop_header
    %s14 = sphi 0, %s18
    %p15 = scmp.ge.s32.totalorder %s14, 4
    %s24 = sphi 0, %s26
    %s27 = sphi 0, %s24
    %s28 = sphi 0, %s27
    %s44 = sphi 0, %s28
    %s48 = sphi 0, %s48
    %s50 = sphi 0, %s48
    %s51 = sphi 0, %s50
    %s65 = sphi 0, %s51
    %s69 = sphi 0, %s69
    %s71 = sphi 0, %s69
    %s72 = sphi 0, %s71
    %s86 = sphi 0, %s72
    %s90 = sphi 0, %s90
    %s92 = sphi 0, %s90
    %s93 = sphi 0, %s92
    %s107 = sphi 0, %s93
    %s111 = sphi 0, %s111
    %s113 = sphi 0, %s111
    %s114 = sphi 0, %s113
    %s128 = sphi 0, %s114
    %s134 = sphi 0, %s136
    %s137 = sphi 0, %s134
    %s138 = sphi 0, %s137
    %s154 = sphi 0, %s138
    %s160 = sphi 0, %s162
    %s163 = sphi 0, %s160
    %s164 = sphi 0, %s163
    %s180 = sphi 0, %s164
    %s186 = sphi 0, %s188
    %s189 = sphi 0, %s186
    %s190 = sphi 0, %s189
    %s206 = sphi 0, %s190
  $region4: #{attentive_fp_forward.8} parent=0 // loop_header_branch
    %17 = sbr.rel (%p15) target = $region8
  $region5: #{attentive_fp_forward.8} parent=0 // loop_body
    %s19 = ssub.s32 %s14, 1
    %s20 = ssub.s32 %s14, 2
    %s21 = sadd.s32 %s14, 1
    %s22 = ssub.s32 %s14, %s21
    %p23 = scmp.eq.s32.totalorder %s22, 0
    %s25 = sadd.s32 %s24, 1
    %s26 = scalar_select %p23, %s24, %s25
    %p29 = pneg %p23
    %p30 = scmp.eq.s32.totalorder %s14, 1
    %p31 = por %p29, %p30
    %p32 = scmp.ne.s32.totalorder %s24, %s27
    %p33 = scmp.eq.s32.totalorder %s14, 0
    %p34 = por %p32, %p33
    %p35 = scmp.ne.s32.totalorder %s24, %s27
    %p36 = scmp.eq.s32.totalorder %s19, 1
    %p37 = por %p35, %p36
    %p38 = scmp.ne.s32.totalorder %s27, %s28
    %p39 = scmp.eq.s32.totalorder %s19, 0
    %p40 = por %p38, %p39
    %p41 = scmp.ne.s32.totalorder %s27, %s28
    %p42 = scmp.eq.s32.totalorder %s20, 1
    %p43 = por %p41, %p42
    %p45 = scmp.ne.s32.totalorder %s28, %s44
    %p46 = scmp.eq.s32.totalorder %s20, 0
    %p47 = por %p45, %p46
    %s49 = sadd.s32 %s48, 1
    %p52 = scmp.eq.s32.totalorder %s14, 1
    %p53 = scmp.ne.s32.totalorder %s48, %s50
    %p54 = scmp.eq.s32.totalorder %s14, 0
    %p55 = por %p53, %p54
    %p56 = scmp.ne.s32.totalorder %s48, %s50
    %p57 = scmp.eq.s32.totalorder %s19, 1
    %p58 = por %p56, %p57
    %p59 = scmp.ne.s32.totalorder %s50, %s51
    %p60 = scmp.eq.s32.totalorder %s19, 0
    %p61 = por %p59, %p60
    %p62 = scmp.ne.s32.totalorder %s50, %s51
    %p63 = scmp.eq.s32.totalorder %s20, 1
    %p64 = por %p62, %p63
    %p66 = scmp.ne.s32.totalorder %s51, %s65
    %p67 = scmp.eq.s32.totalorder %s20, 0
    %p68 = por %p66, %p67
    %s70 = sadd.s32 %s69, 1
    %p73 = scmp.eq.s32.totalorder %s14, 1
    %p74 = scmp.ne.s32.totalorder %s69, %s71
    %p75 = scmp.eq.s32.totalorder %s14, 0
    %p76 = por %p74, %p75
    %p77 = scmp.ne.s32.totalorder %s69, %s71
    %p78 = scmp.eq.s32.totalorder %s19, 1
    %p79 = por %p77, %p78
    %p80 = scmp.ne.s32.totalorder %s71, %s72
    %p81 = scmp.eq.s32.totalorder %s19, 0
    %p82 = por %p80, %p81
    %p83 = scmp.ne.s32.totalorder %s71, %s72
    %p84 = scmp.eq.s32.totalorder %s20, 1
    %p85 = por %p83, %p84
    %p87 = scmp.ne.s32.totalorder %s72, %s86
    %p88 = scmp.eq.s32.totalorder %s20, 0
    %p89 = por %p87, %p88
    %s91 = sadd.s32 %s90, 1
    %p94 = scmp.eq.s32.totalorder %s14, 1
    %p95 = scmp.ne.s32.totalorder %s90, %s92
    %p96 = scmp.eq.s32.totalorder %s14, 0
    %p97 = por %p95, %p96
    %p98 = scmp.ne.s32.totalorder %s90, %s92
    %p99 = scmp.eq.s32.totalorder %s19, 1
    %p100 = por %p98, %p99
    %p101 = scmp.ne.s32.totalorder %s92, %s93
    %p102 = scmp.eq.s32.totalorder %s19, 0
    %p103 = por %p101, %p102
    %p104 = scmp.ne.s32.totalorder %s92, %s93
    %p105 = scmp.eq.s32.totalorder %s20, 1
    %p106 = por %p104, %p105
    %p108 = scmp.ne.s32.totalorder %s93, %s107
    %p109 = scmp.eq.s32.totalorder %s20, 0
    %p110 = por %p108, %p109
    %s112 = sadd.s32 %s111, 1
    %p115 = scmp.eq.s32.totalorder %s14, 1
    %p116 = scmp.ne.s32.totalorder %s111, %s113
    %p117 = scmp.eq.s32.totalorder %s14, 0
    %p118 = por %p116, %p117
    %p119 = scmp.ne.s32.totalorder %s111, %s113
    %p120 = scmp.eq.s32.totalorder %s19, 1
    %p121 = por %p119, %p120
    %p122 = scmp.ne.s32.totalorder %s113, %s114
    %p123 = scmp.eq.s32.totalorder %s19, 0
    %p124 = por %p122, %p123
    %p125 = scmp.ne.s32.totalorder %s113, %s114
    %p126 = scmp.eq.s32.totalorder %s20, 1
    %p127 = por %p125, %p126
    %p129 = scmp.ne.s32.totalorder %s114, %s128
    %p130 = scmp.eq.s32.totalorder %s20, 0
    %p131 = por %p129, %p130
    %s132 = ssub.s32 %s14, %s21
    %p133 = scmp.eq.s32.totalorder %s132, 0
    %s135 = sadd.s32 %s134, 1
    %s136 = scalar_select %p133, %s134, %s135
    %p139 = pneg %p133
    %p140 = scmp.eq.s32.totalorder %s14, 1
    %p141 = por %p139, %p140
    %p142 = scmp.ne.s32.totalorder %s134, %s137
    %p143 = scmp.eq.s32.totalorder %s14, 0
    %p144 = por %p142, %p143
    %p145 = scmp.ne.s32.totalorder %s134, %s137
    %p146 = scmp.eq.s32.totalorder %s19, 1
    %p147 = por %p145, %p146
    %p148 = scmp.ne.s32.totalorder %s137, %s138
    %p149 = scmp.eq.s32.totalorder %s19, 0
    %p150 = por %p148, %p149
    %p151 = scmp.ne.s32.totalorder %s137, %s138
    %p152 = scmp.eq.s32.totalorder %s20, 1
    %p153 = por %p151, %p152
    %p155 = scmp.ne.s32.totalorder %s138, %s154
    %p156 = scmp.eq.s32.totalorder %s20, 0
    %p157 = por %p155, %p156
    %s158 = ssub.s32 %s14, %s21
    %p159 = scmp.eq.s32.totalorder %s158, 0
    %s161 = sadd.s32 %s160, 1
    %s162 = scalar_select %p159, %s160, %s161
    %p165 = pneg %p159
    %p166 = scmp.eq.s32.totalorder %s14, 1
    %p167 = por %p165, %p166
    %p168 = scmp.ne.s32.totalorder %s160, %s163
    %p169 = scmp.eq.s32.totalorder %s14, 0
    %p170 = por %p168, %p169
    %p171 = scmp.ne.s32.totalorder %s160, %s163
    %p172 = scmp.eq.s32.totalorder %s19, 1
    %p173 = por %p171, %p172
    %p174 = scmp.ne.s32.totalorder %s163, %s164
    %p175 = scmp.eq.s32.totalorder %s19, 0
    %p176 = por %p174, %p175
    %p177 = scmp.ne.s32.totalorder %s163, %s164
    %p178 = scmp.eq.s32.totalorder %s20, 1
    %p179 = por %p177, %p178
    %p181 = scmp.ne.s32.totalorder %s164, %s180
    %p182 = scmp.eq.s32.totalorder %s20, 0
    %p183 = por %p181, %p182
    %s184 = ssub.s32 %s14, %s21
    %p185 = scmp.eq.s32.totalorder %s184, 0
    %s187 = sadd.s32 %s186, 1
    %s188 = scalar_select %p185, %s186, %s187
    %p191 = pneg %p185
    %p192 = scmp.eq.s32.totalorder %s14, 1
    %p193 = por %p191, %p192
    %p194 = scmp.ne.s32.totalorder %s186, %s189
    %p195 = scmp.eq.s32.totalorder %s14, 0
    %p196 = por %p194, %p195
    %p197 = scmp.ne.s32.totalorder %s186, %s189
    %p198 = scmp.eq.s32.totalorder %s19, 1
    %p199 = por %p197, %p198
    %p200 = scmp.ne.s32.totalorder %s189, %s190
    %p201 = scmp.eq.s32.totalorder %s19, 0
    %p202 = por %p200, %p201
    %p203 = scmp.ne.s32.totalorder %s189, %s190
    %p204 = scmp.eq.s32.totalorder %s20, 1
    %p205 = por %p203, %p204
    %p207 = scmp.ne.s32.totalorder %s190, %s206
    %p208 = scmp.eq.s32.totalorder %s20, 0
    %p209 = por %p207, %p208
    %p210 = scmp.le.s32.totalorder 1, %s14
    %p211 = scmp.lt.s32.totalorder %s14, 3
    %p212 = pnand %p210, %p211
    %p213 = pneg %p212
    // Predicated region
    $region9: #{attentive_fp_forward.8} parent=5 // pred_check
      _
    $region10: #{attentive_fp_forward.8} parent=5 // pred_check_branch
      %215 = sbr.rel (%p212) target = $region12
    $region11: #{attentive_fp_forward.8} parent=5 // pred_region
      %s216 = ssub.s32 %s14, 1
      // Predicated region
      $region13: #{attentive_fp_forward.8} parent=11 // pred_check
        %p217 = pneg %p61
      $region14: #{attentive_fp_forward.8} parent=11 // pred_check_branch
        %219 = sbr.rel (%p217) target = $region16
      $region15: #{attentive_fp_forward.8} parent=11 // pred_region
        _
      $region16: #{attentive_fp_forward.8} parent=11 // pred_fallthru
        _
      // Predicated region
      $region17: #{attentive_fp_forward.8} parent=11 // pred_check
        %p220 = pneg %p82
      $region18: #{attentive_fp_forward.8} parent=11 // pred_check_branch
        %222 = sbr.rel (%p220) target = $region20
      $region19: #{attentive_fp_forward.8} parent=11 // pred_region
        _
      $region20: #{attentive_fp_forward.8} parent=11 // pred_fallthru
        _
      // Predicated region
      $region21: #{attentive_fp_forward.8} parent=11 // pred_check
        %p223 = pneg %p103
      $region22: #{attentive_fp_forward.8} parent=11 // pred_check_branch
        %225 = sbr.rel (%p223) target = $region24
      $region23: #{attentive_fp_forward.8} parent=11 // pred_region
        _
      $region24: #{attentive_fp_forward.8} parent=11 // pred_fallthru
        _
      // Predicated region
      $region25: #{attentive_fp_forward.8} parent=11 // pred_check
        %p226 = pneg %p124
      $region26: #{attentive_fp_forward.8} parent=11 // pred_check_branch
        %228 = sbr.rel (%p226) target = $region28
      $region27: #{attentive_fp_forward.8} parent=11 // pred_region
        _
      $region28: #{attentive_fp_forward.8} parent=11 // pred_fallthru
        _
    $region12: #{attentive_fp_forward.8} parent=5 // pred_fallthru
      _
    %p229 = scmp.lt.s32.totalorder %s14, 2
    // Predicated region
    $region29: #{attentive_fp_forward.8} parent=5 // pred_check
      %p230 = pneg %p229
    $region30: #{attentive_fp_forward.8} parent=5 // pred_check_branch
      %232 = sbr.rel (%p230) target = $region32
    $region31: #{attentive_fp_forward.8} parent=5 // pred_region
      // Predicated region
      $region33: #{attentive_fp_forward.8} parent=31 // pred_check
        %p233 = pneg %p34
      $region34: #{attentive_fp_forward.8} parent=31 // pred_check_branch
        %235 = sbr.rel (%p233) target = $region36
      $region35: #{attentive_fp_forward.8} parent=31 // pred_region
        %s236 = smul.u32 4, %s14
        %p237 = scmp.lt.s32.totalorder %s236, 7
        %s238 = scalar_select %p237, %s236, 7
        %s239 = smul.addr %s238, 8
        %s240 = scalar_lea.vmem %s0, %s239
        %s241 = smul.u32 4, %s14
      $region36: #{attentive_fp_forward.8} parent=31 // pred_fallthru
        _
    $region32: #{attentive_fp_forward.8} parent=5 // pred_fallthru
      _
    %p242 = scmp.le.s32.totalorder 1, %s14
    %p243 = scmp.lt.s32.totalorder %s14, 3
    %p244 = pnand %p242, %p243
    %p245 = pneg %p244
    // Predicated region
    $region37: #{attentive_fp_forward.8} parent=5 // pred_check
      _
    $region38: #{attentive_fp_forward.8} parent=5 // pred_check_branch
      %247 = sbr.rel (%p244) target = $region40
    $region39: #{attentive_fp_forward.8} parent=5 // pred_region
      %s248 = ssub.s32 %s14, 1
      %s249 = smul.u32 4, %s19
      %p250 = scmp.lt.s32.totalorder %s249, 7
      %s251 = scalar_select %p250, %s249, 7
      %s252 = smul.addr %s251, 8
      %s253 = scalar_lea.vmem %s0, %s252
      %p254 = pneg %p40
      %p255 = pneg %p37
      %p256 = pneg %p61
      %p257 = pneg %p58
      %p258 = pneg %p82
      %p259 = pneg %p79
      %p260 = pneg %p103
      %p261 = pneg %p100
      %p262 = pneg %p124
      %p263 = pneg %p121
      %p264 = pneg %p150
      %p265 = pneg %p147
      %s266 = smul.u32 4, %s19
      %p267 = scmp.lt.s32.totalorder %s266, 7
      %s268 = scalar_select %p267, %s266, 7
      %s269 = smul.addr %s268, 8
      %s270 = scalar_lea.vmem %s5, %s269
      %p271 = pneg %p176
      %p272 = pneg %p173
      %s273 = smul.u32 4, %s19
      %p274 = scmp.lt.s32.totalorder %s273, 7
      %s275 = scalar_select %p274, %s273, 7
      %s276 = smul.addr %s275, 8
      %s277 = scalar_lea.vmem %s6, %s276
      %p278 = pneg %p202
      %p279 = pneg %p199
      %s280 = smul.u32 4, %s19
      %p281 = scmp.lt.s32.totalorder %s280, 7
      %s282 = scalar_select %p281, %s280, 7
      %s283 = smul.addr %s282, 8
      %s284 = scalar_lea.vmem %s7, %s283
      %s285 = smul.u32 4, %s19
      %p286 = scmp.lt.s32.totalorder %s285, 7
      %s287 = scalar_select %p286, %s285, 7
      %s288 = smul.addr %s287, 8
      %s289 = scalar_lea.vmem %s0, %s288
      %s290 = smul.u32 4, %s19
      %s291 = smul.u32 4, %s19
      %p292 = scmp.lt.s32.totalorder %s291, 7
      %s293 = scalar_select %p292, %s291, 7
      %s294 = smul.addr %s293, 8
      %s295 = scalar_lea.vmem %s5, %s294
      %s296 = smul.u32 4, %s19
      %s297 = smul.u32 4, %s19
      %p298 = scmp.lt.s32.totalorder %s297, 7
      %s299 = scalar_select %p298, %s297, 7
      %s300 = smul.addr %s299, 8
      %s301 = scalar_lea.vmem %s6, %s300
      %s302 = smul.u32 4, %s19
      %s303 = smul.u32 4, %s19
      %p304 = scmp.lt.s32.totalorder %s303, 7
      %s305 = scalar_select %p304, %s303, 7
      %s306 = smul.addr %s305, 8
      %s307 = scalar_lea.vmem %s7, %s306
      %s308 = smul.u32 4, %s19
      %v309 = vld [vmem:[%s289] sm:$0xff]
      %v310 = vld [vmem:[%s289 + $0x8] sm:$0xff]
      %v311 = vld [vmem:[%s289 + $0x10] sm:$0xff]
      %v312 = vld [vmem:[%s289 + $0x18] sm:$0xff]
      %v313 = vld [vmem:[%s1] sm:$0xff]
      %v314 = vld [vmem:[%s1 + $0x8] sm:$0xff]
      %v315 = vld [vmem:[%s1 + $0x10] sm:$0xff]
      %v316 = vld [vmem:[%s1 + $0x18] sm:$0xff]
      %v317 = vld [vmem:[%s1 + $0x20] sm:$0xff]
      %v318 = vld [vmem:[%s1 + $0x28] sm:$0xff]
      %v319 = vld [vmem:[%s1 + $0x30] sm:$0xff]
      %v320 = vld [vmem:[%s1 + $0x38] sm:$0xff]
      %v321 = vld [vmem:[%s1 + $0x40] sm:$0xff]
      %v322 = vld [vmem:[%s1 + $0x48] sm:$0xff]
      %v323 = vld [vmem:[%s1 + $0x50] sm:$0xff]
      %v324 = vld [vmem:[%s1 + $0x58] sm:$0xff]
      %v325 = vld [vmem:[%s1 + $0x60] sm:$0xff]
      %v326 = vld [vmem:[%s1 + $0x68] sm:$0xff]
      %v327 = vld [vmem:[%s1 + $0x70] sm:$0xff]
      %v328 = vld [vmem:[%s1 + $0x78] sm:$0xff]
      %v329 = vld [vmem:[%s2] sm:$0x1]
      %v331 = vlaneseq
      %v332 = vshrl.u32 %v331, 7
      %v333 = vsub.s32 0, %v332
      %v334 = vrot.slane %v329, %v333
      %336 = vmatprep.subr.mxu0 0.0
      %v337 = vand.u32 %v328, 4294901760
      %338 = vmatpush1.msra.mxu0 %v337
      %339 = vmatprep.subr.mxu0 0.0
      %v340 = vand.u32 %v327, 4294901760
      %341 = vmatpush1.msra.mxu0 %v340
      %342 = vmatprep.subr.mxu0 0.0
      %v343 = vand.u32 %v326, 4294901760
      %344 = vmatpush1.msra.mxu0 %v343
      %345 = vmatprep.subr.mxu0 0.0
      %v346 = vand.u32 %v325, 4294901760
      %347 = vmatpush1.msra.mxu0 %v346
      %348 = vmatprep.subr.mxu0 0.0
      %v349 = vand.u32 %v324, 4294901760
      %350 = vmatpush1.msra.mxu0 %v349
      %351 = vmatprep.subr.mxu0 0.0
      %v352 = vand.u32 %v323, 4294901760
      %353 = vmatpush1.msra.mxu0 %v352
      %354 = vmatprep.subr.mxu0 0.0
      %v355 = vand.u32 %v322, 4294901760
      %356 = vmatpush1.msra.mxu0 %v355
      %357 = vmatprep.subr.mxu0 0.0
      %v358 = vand.u32 %v321, 4294901760
      %359 = vmatpush1.msra.mxu0 %v358
      %360 = vmatprep.subr.mxu0 0.0
      %v361 = vand.u32 %v320, 4294901760
      %362 = vmatpush1.msra.mxu0 %v361
      %363 = vmatprep.subr.mxu0 0.0
      %v364 = vand.u32 %v319, 4294901760
      %365 = vmatpush1.msra.mxu0 %v364
      %366 = vmatprep.subr.mxu0 0.0
      %v367 = vand.u32 %v318, 4294901760
      %368 = vmatpush1.msra.mxu0 %v367
      %369 = vmatprep.subr.mxu0 0.0
      %v370 = vand.u32 %v317, 4294901760
      %371 = vmatpush1.msra.mxu0 %v370
      %372 = vmatprep.subr.mxu0 0.0
      %v373 = vand.u32 %v316, 4294901760
      %374 = vmatpush1.msra.mxu0 %v373
      %375 = vmatprep.subr.mxu0 0.0
      %v376 = vand.u32 %v315, 4294901760
      %377 = vmatpush1.msra.mxu0 %v376
      %378 = vmatprep.subr.mxu0 0.0
      %v379 = vand.u32 %v314, 4294901760
      %380 = vmatpush1.msra.mxu0 %v379
      %381 = vmatprep.subr.mxu0 0.0
      %v382 = vand.u32 %v313, 4294901760
      %383 = vmatpush1.msra.mxu0 %v382
      %384 = vmatprep.subr.mxu0 0.0
      %385 = vmatpush2.msra.mxu0 0.0
      %386 = vmatprep.subr.mxu0 0.0
      %387 = vmatpush2.msra.mxu0 0.0
      %388 = vmatprep.subr.mxu0 0.0
      %389 = vmatpush2.msra.mxu0 0.0
      %390 = vmatprep.subr.mxu0 0.0
      %391 = vmatpush2.msra.mxu0 0.0
      %392 = vmatprep.subr.mxu0 0.0
      %393 = vmatpush2.msra.mxu0 0.0
      %394 = vmatprep.subr.mxu0 0.0
      %395 = vmatpush2.msra.mxu0 0.0
      %396 = vmatprep.subr.mxu0 0.0
      %397 = vmatpush2.msra.mxu0 0.0
      %398 = vmatprep.subr.mxu0 0.0
      %399 = vmatpush2.msra.mxu0 0.0
      %400 = vmatprep.subr.mxu0 0.0
      %401 = vmatpush2.msra.mxu0 0.0
      %402 = vmatprep.subr.mxu0 0.0
      %403 = vmatpush2.msra.mxu0 0.0
      %404 = vmatprep.subr.mxu0 0.0
      %405 = vmatpush2.msra.mxu0 0.0
      %406 = vmatprep.subr.mxu0 0.0
      %407 = vmatpush2.msra.mxu0 0.0
      %408 = vmatprep.subr.mxu0 0.0
      %409 = vmatpush2.msra.mxu0 0.0
      %410 = vmatprep.subr.mxu0 0.0
      %411 = vmatpush2.msra.mxu0 0.0
      %412 = vmatprep.subr.mxu0 0.0
      %413 = vmatpush2.msra.mxu0 0.0
      %414 = vmatprep.subr.mxu0 0.0
      %415 = vmatpush2.msra.mxu0 0.0
      %416 = vmatprep.mubr.f32.mxu0 0.0
      %v417 = vand.u32 %v309, 4294901760
      %v418 = vsub.f32 %v309, %v417
      %v419 = vand.u32 %v418, 4294901760
      %v420 = vsub.f32 %v418, %v419
      %v421 = vand.u32 %v420, 4294901760
      %422 = vmatmul.mubr.f32.gmra.mxu0 %v421
      %v423 = vpop.f32.mrf.mxu0
      %v424 = vadd.f32 %v334, %v423
      %v425 = vpop.f32.mrf.mxu0
      %426 = vmatprep.mubr.f32.mxu0 0.0
      %v427 = vand.u32 %v310, 4294901760
      %v428 = vsub.f32 %v310, %v427
      %v429 = vand.u32 %v428, 4294901760
      %v430 = vsub.f32 %v428, %v429
      %v431 = vand.u32 %v430, 4294901760
      %432 = vmatmul.mubr.f32.gmra.mxu0 %v431
      %v433 = vpop.f32.mrf.mxu0
      %v434 = vadd.f32 %v334, %v433
      %v435 = vpop.f32.mrf.mxu0
      %436 = vmatprep.mubr.f32.mxu0 0.0
      %v437 = vand.u32 %v311, 4294901760
      %v438 = vsub.f32 %v311, %v437
      %v439 = vand.u32 %v438, 4294901760
      %v440 = vsub.f32 %v438, %v439
      %v441 = vand.u32 %v440, 4294901760
      %442 = vmatmul.mubr.f32.gmra.mxu0 %v441
      %v443 = vpop.f32.mrf.mxu0
      %v444 = vadd.f32 %v334, %v443
      %v445 = vpop.f32.mrf.mxu0
      %446 = vmatprep.mubr.f32.mxu0 0.0
      %v447 = vand.u32 %v312, 4294901760
      %v448 = vsub.f32 %v312, %v447
      %v449 = vand.u32 %v448, 4294901760
      %v450 = vsub.f32 %v448, %v449
      %v451 = vand.u32 %v450, 4294901760
      %452 = vmatmul.mubr.f32.gmra.mxu0 %v451
      %v453 = vpop.f32.mrf.mxu0
      %v454 = vadd.f32 %v334, %v453
      %v455 = vpop.f32.mrf.mxu0
      %456 = vdwg.mxu0
      %457 = vmatprep.subr.mxu0 0.0
      %v458 = vand.u32 %v328, 4294901760
      %v459 = vsub.f32 %v328, %v458
      %v460 = vand.u32 %v459, 4294901760
      %v461 = vsub.f32 %v459, %v460
      %v462 = vand.u32 %v461, 4294901760
      %463 = vmatpush1.msra.mxu0 %v462
      %464 = vmatprep.subr.mxu0 0.0
      %v465 = vand.u32 %v327, 4294901760
      %v466 = vsub.f32 %v327, %v465
      %v467 = vand.u32 %v466, 4294901760
      %v468 = vsub.f32 %v466, %v467
      %v469 = vand.u32 %v468, 4294901760
      %470 = vmatpush1.msra.mxu0 %v469
      %471 = vmatprep.subr.mxu0 0.0
      %v472 = vand.u32 %v326, 4294901760
      %v473 = vsub.f32 %v326, %v472
      %v474 = vand.u32 %v473, 4294901760
      %v475 = vsub.f32 %v473, %v474
      %v476 = vand.u32 %v475, 4294901760
      %477 = vmatpush1.msra.mxu0 %v476
      %478 = vmatprep.subr.mxu0 0.0
      %v479 = vand.u32 %v325, 4294901760
      %v480 = vsub.f32 %v325, %v479
      %v481 = vand.u32 %v480, 4294901760
      %v482 = vsub.f32 %v480, %v481
      %v483 = vand.u32 %v482, 4294901760
      %484 = vmatpush1.msra.mxu0 %v483
      %485 = vmatprep.subr.mxu0 0.0
      %v486 = vand.u32 %v324, 4294901760
      %v487 = vsub.f32 %v324, %v486
      %v488 = vand.u32 %v487, 4294901760
      %v489 = vsub.f32 %v487, %v488
      %v490 = vand.u32 %v489, 4294901760
      %491 = vmatpush1.msra.mxu0 %v490
      %492 = vmatprep.subr.mxu0 0.0
      %v493 = vand.u32 %v323, 4294901760
      %v494 = vsub.f32 %v323, %v493
      %v495 = vand.u32 %v494, 4294901760
      %v496 = vsub.f32 %v494, %v495
      %v497 = vand.u32 %v496, 4294901760
      %498 = vmatpush1.msra.mxu0 %v497
      %499 = vmatprep.subr.mxu0 0.0
      %v500 = vand.u32 %v322, 4294901760
      %v501 = vsub.f32 %v322, %v500
      %v502 = vand.u32 %v501, 4294901760
      %v503 = vsub.f32 %v501, %v502
      %v504 = vand.u32 %v503, 4294901760
      %505 = vmatpush1.msra.mxu0 %v504
      %506 = vmatprep.subr.mxu0 0.0
      %v507 = vand.u32 %v321, 4294901760
      %v508 = vsub.f32 %v321, %v507
      %v509 = vand.u32 %v508, 4294901760
      %v510 = vsub.f32 %v508, %v509
      %v511 = vand.u32 %v510, 4294901760
      %512 = vmatpush1.msra.mxu0 %v511
      %513 = vmatprep.subr.mxu0 0.0
      %v514 = vand.u32 %v320, 4294901760
      %v515 = vsub.f32 %v320, %v514
      %v516 = vand.u32 %v515, 4294901760
      %v517 = vsub.f32 %v515, %v516
      %v518 = vand.u32 %v517, 4294901760
      %519 = vmatpush1.msra.mxu0 %v518
      %520 = vmatprep.subr.mxu0 0.0
      %v521 = vand.u32 %v319, 4294901760
      %v522 = vsub.f32 %v319, %v521
      %v523 = vand.u32 %v522, 4294901760
      %v524 = vsub.f32 %v522, %v523
      %v525 = vand.u32 %v524, 4294901760
      %526 = vmatpush1.msra.mxu0 %v525
      %527 = vmatprep.subr.mxu0 0.0
      %v528 = vand.u32 %v318, 4294901760
      %v529 = vsub.f32 %v318, %v528
      %v530 = vand.u32 %v529, 4294901760
      %v531 = vsub.f32 %v529, %v530
      %v532 = vand.u32 %v531, 4294901760
      %533 = vmatpush1.msra.mxu0 %v532
      %534 = vmatprep.subr.mxu0 0.0
      %v535 = vand.u32 %v317, 4294901760
      %v536 = vsub.f32 %v317, %v535
      %v537 = vand.u32 %v536, 4294901760
      %v538 = vsub.f32 %v536, %v537
      %v539 = vand.u32 %v538, 4294901760
      %540 = vmatpush1.msra.mxu0 %v539
      %541 = vmatprep.subr.mxu0 0.0
      %v542 = vand.u32 %v316, 4294901760
      %v543 = vsub.f32 %v316, %v542
      %v544 = vand.u32 %v543, 4294901760
      %v545 = vsub.f32 %v543, %v544
      %v546 = vand.u32 %v545, 4294901760
      %547 = vmatpush1.msra.mxu0 %v546
      %548 = vmatprep.subr.mxu0 0.0
      %v549 = vand.u32 %v315, 4294901760
      %v550 = vsub.f32 %v315, %v549
      %v551 = vand.u32 %v550, 4294901760
      %v552 = vsub.f32 %v550, %v551
      %v553 = vand.u32 %v552, 4294901760
      %554 = vmatpush1.msra.mxu0 %v553
      %555 = vmatprep.subr.mxu0 0.0
      %v556 = vand.u32 %v314, 4294901760
      %v557 = vsub.f32 %v314, %v556
      %v558 = vand.u32 %v557, 4294901760
      %v559 = vsub.f32 %v557, %v558
      %v560 = vand.u32 %v559, 4294901760
      %561 = vmatpush1.msra.mxu0 %v560
      %562 = vmatprep.subr.mxu0 0.0
      %v563 = vand.u32 %v313, 4294901760
      %v564 = vsub.f32 %v313, %v563
      %v565 = vand.u32 %v564, 4294901760
      %v566 = vsub.f32 %v564, %v565
      %v567 = vand.u32 %v566, 4294901760
      %568 = vmatpush1.msra.mxu0 %v567
      %569 = vmatprep.subr.mxu0 0.0
      %570 = vmatpush2.msra.mxu0 0.0
      %571 = vmatprep.subr.mxu0 0.0
      %572 = vmatpush2.msra.mxu0 0.0
      %573 = vmatprep.subr.mxu0 0.0
      %574 = vmatpush2.msra.mxu0 0.0
      %575 = vmatprep.subr.mxu0 0.0
      %576 = vmatpush2.msra.mxu0 0.0
      %577 = vmatprep.subr.mxu0 0.0
      %578 = vmatpush2.msra.mxu0 0.0
      %579 = vmatprep.subr.mxu0 0.0
      %580 = vmatpush2.msra.mxu0 0.0
      %581 = vmatprep.subr.mxu0 0.0
      %582 = vmatpush2.msra.mxu0 0.0
      %583 = vmatprep.subr.mxu0 0.0
      %584 = vmatpush2.msra.mxu0 0.0
      %585 = vmatprep.subr.mxu0 0.0
      %586 = vmatpush2.msra.mxu0 0.0
      %587 = vmatprep.subr.mxu0 0.0
      %588 = vmatpush2.msra.mxu0 0.0
      %589 = vmatprep.subr.mxu0 0.0
      %590 = vmatpush2.msra.mxu0 0.0
      %591 = vmatprep.subr.mxu0 0.0
      %592 = vmatpush2.msra.mxu0 0.0
      %593 = vmatprep.subr.mxu0 0.0
      %594 = vmatpush2.msra.mxu0 0.0
      %595 = vmatprep.subr.mxu0 0.0
      %596 = vmatpush2.msra.mxu0 0.0
      %597 = vmatprep.subr.mxu0 0.0
      %598 = vmatpush2.msra.mxu0 0.0
      %599 = vmatprep.subr.mxu0 0.0
      %600 = vmatpush2.msra.mxu0 0.0
      %601 = vmatprep.mubr.f32.mxu0 0.0
      %v602 = vand.u32 %v309, 4294901760
      %603 = vmatmul.mubr.f32.gmra.mxu0 %v602
      %v604 = vpop.f32.mrf.mxu0
      %v605 = vadd.f32 %v424, %v604
      %v606 = vpop.f32.mrf.mxu0
      %607 = vmatprep.mubr.f32.mxu0 0.0
      %v608 = vand.u32 %v310, 4294901760
      %609 = vmatmul.mubr.f32.gmra.mxu0 %v608
      %v610 = vpop.f32.mrf.mxu0
      %v611 = vadd.f32 %v434, %v610
      %v612 = vpop.f32.mrf.mxu0
      %613 = vmatprep.mubr.f32.mxu0 0.0
      %v614 = vand.u32 %v311, 4294901760
      %615 = vmatmul.mubr.f32.gmra.mxu0 %v614
      %v616 = vpop.f32.mrf.mxu0
      %v617 = vadd.f32 %v444, %v616
      %v618 = vpop.f32.mrf.mxu0
      %619 = vmatprep.mubr.f32.mxu0 0.0
      %v620 = vand.u32 %v312, 4294901760
      %621 = vmatmul.mubr.f32.gmra.mxu0 %v620
      %v622 = vpop.f32.mrf.mxu0
      %v623 = vadd.f32 %v454, %v622
      %v624 = vpop.f32.mrf.mxu0
      %625 = vdwg.mxu0
      %626 = vmatprep.subr.mxu0 0.0
      %v627 = vand.u32 %v328, 4294901760
      %v628 = vsub.f32 %v328, %v627
      %629 = vmatpush1.msra.mxu0 %v628
      %630 = vmatprep.subr.mxu0 0.0
      %v631 = vand.u32 %v327, 4294901760
      %v632 = vsub.f32 %v327, %v631
      %633 = vmatpush1.msra.mxu0 %v632
      %634 = vmatprep.subr.mxu0 0.0
      %v635 = vand.u32 %v326, 4294901760
      %v636 = vsub.f32 %v326, %v635
      %637 = vmatpush1.msra.mxu0 %v636
      %638 = vmatprep.subr.mxu0 0.0
      %v639 = vand.u32 %v325, 4294901760
      %v640 = vsub.f32 %v325, %v639
      %641 = vmatpush1.msra.mxu0 %v640
      %642 = vmatprep.subr.mxu0 0.0
      %v643 = vand.u32 %v324, 4294901760
      %v644 = vsub.f32 %v324, %v643
      %645 = vmatpush1.msra.mxu0 %v644
      %646 = vmatprep.subr.mxu0 0.0
      %v647 = vand.u32 %v323, 4294901760
      %v648 = vsub.f32 %v323, %v647
      %649 = vmatpush1.msra.mxu0 %v648
      %650 = vmatprep.subr.mxu0 0.0
      %v651 = vand.u32 %v322, 4294901760
      %v652 = vsub.f32 %v322, %v651
      %653 = vmatpush1.msra.mxu0 %v652
      %654 = vmatprep.subr.mxu0 0.0
      %v655 = vand.u32 %v321, 4294901760
      %v656 = vsub.f32 %v321, %v655
      %657 = vmatpush1.msra.mxu0 %v656
      %658 = vmatprep.subr.mxu0 0.0
      %v659 = vand.u32 %v320, 4294901760
      %v660 = vsub.f32 %v320, %v659
      %661 = vmatpush1.msra.mxu0 %v660
      %662 = vmatprep.subr.mxu0 0.0
      %v663 = vand.u32 %v319, 4294901760
      %v664 = vsub.f32 %v319, %v663
      %665 = vmatpush1.msra.mxu0 %v664
      %666 = vmatprep.subr.mxu0 0.0
      %v667 = vand.u32 %v318, 4294901760
      %v668 = vsub.f32 %v318, %v667
      %669 = vmatpush1.msra.mxu0 %v668
      %670 = vmatprep.subr.mxu0 0.0
      %v671 = vand.u32 %v317, 4294901760
      %v672 = vsub.f32 %v317, %v671
      %673 = vmatpush1.msra.mxu0 %v672
      %674 = vmatprep.subr.mxu0 0.0
      %v675 = vand.u32 %v316, 4294901760
      %v676 = vsub.f32 %v316, %v675
      %677 = vmatpush1.msra.mxu0 %v676
      %678 = vmatprep.subr.mxu0 0.0
      %v679 = vand.u32 %v315, 4294901760
      %v680 = vsub.f32 %v315, %v679
      %681 = vmatpush1.msra.mxu0 %v680
      %682 = vmatprep.subr.mxu0 0.0
      %v683 = vand.u32 %v314, 4294901760
      %v684 = vsub.f32 %v314, %v683
      %685 = vmatpush1.msra.mxu0 %v684
      %686 = vmatprep.subr.mxu0 0.0
      %v687 = vand.u32 %v313, 4294901760
      %v688 = vsub.f32 %v313, %v687
      %689 = vmatpush1.msra.mxu0 %v688
      %690 = vmatprep.subr.mxu0 0.0
      %691 = vmatpush2.msra.mxu0 0.0
      %692 = vmatprep.subr.mxu0 0.0
      %693 = vmatpush2.msra.mxu0 0.0
      %694 = vmatprep.subr.mxu0 0.0
      %695 = vmatpush2.msra.mxu0 0.0
      %696 = vmatprep.subr.mxu0 0.0
      %697 = vmatpush2.msra.mxu0 0.0
      %698 = vmatprep.subr.mxu0 0.0
      %699 = vmatpush2.msra.mxu0 0.0
      %700 = vmatprep.subr.mxu0 0.0
      %701 = vmatpush2.msra.mxu0 0.0
      %702 = vmatprep.subr.mxu0 0.0
      %703 = vmatpush2.msra.mxu0 0.0
      %704 = vmatprep.subr.mxu0 0.0
      %705 = vmatpush2.msra.mxu0 0.0
      %706 = vmatprep.subr.mxu0 0.0
      %707 = vmatpush2.msra.mxu0 0.0
      %708 = vmatprep.subr.mxu0 0.0
      %709 = vmatpush2.msra.mxu0 0.0
      %710 = vmatprep.subr.mxu0 0.0
      %711 = vmatpush2.msra.mxu0 0.0
      %712 = vmatprep.subr.mxu0 0.0
      %713 = vmatpush2.msra.mxu0 0.0
      %714 = vmatprep.subr.mxu0 0.0
      %715 = vmatpush2.msra.mxu0 0.0
      %716 = vmatprep.subr.mxu0 0.0
      %717 = vmatpush2.msra.mxu0 0.0
      %718 = vmatprep.subr.mxu0 0.0
      %719 = vmatpush2.msra.mxu0 0.0
      %720 = vmatprep.subr.mxu0 0.0
      %721 = vmatpush2.msra.mxu0 0.0
      %722 = vmatprep.mubr.f32.mxu0 0.0
      %v723 = vand.u32 %v309, 4294901760
      %v724 = vsub.f32 %v309, %v723
      %725 = vmatmul.mubr.f32.gmra.mxu0 %v724
      %v726 = vpop.f32.mrf.mxu0
      %v727 = vadd.f32 %v605, %v726
      %v728 = vpop.f32.mrf.mxu0
      %729 = vmatprep.mubr.f32.mxu0 0.0
      %v730 = vand.u32 %v310, 4294901760
      %v731 = vsub.f32 %v310, %v730
      %732 = vmatmul.mubr.f32.gmra.mxu0 %v731
      %v733 = vpop.f32.mrf.mxu0
      %v734 = vadd.f32 %v611, %v733
      %v735 = vpop.f32.mrf.mxu0
      %736 = vmatprep.mubr.f32.mxu0 0.0
      %v737 = vand.u32 %v311, 4294901760
      %v738 = vsub.f32 %v311, %v737
      %739 = vmatmul.mubr.f32.gmra.mxu0 %v738
      %v740 = vpop.f32.mrf.mxu0
      %v741 = vadd.f32 %v617, %v740
      %v742 = vpop.f32.mrf.mxu0
      %743 = vmatprep.mubr.f32.mxu0 0.0
      %v744 = vand.u32 %v312, 4294901760
      %v745 = vsub.f32 %v312, %v744
      %746 = vmatmul.mubr.f32.gmra.mxu0 %v745
      %v747 = vpop.f32.mrf.mxu0
      %v748 = vadd.f32 %v623, %v747
      %v749 = vpop.f32.mrf.mxu0
      %750 = vdwg.mxu0
      %751 = vmatprep.subr.mxu0 0.0
      %v752 = vand.u32 %v328, 4294901760
      %753 = vmatpush1.msra.mxu0 %v752
      %754 = vmatprep.subr.mxu0 0.0
      %v755 = vand.u32 %v327, 4294901760
      %756 = vmatpush1.msra.mxu0 %v755
      %757 = vmatprep.subr.mxu0 0.0
      %v758 = vand.u32 %v326, 4294901760
      %759 = vmatpush1.msra.mxu0 %v758
      %760 = vmatprep.subr.mxu0 0.0
      %v761 = vand.u32 %v325, 4294901760
      %762 = vmatpush1.msra.mxu0 %v761
      %763 = vmatprep.subr.mxu0 0.0
      %v764 = vand.u32 %v324, 4294901760
      %765 = vmatpush1.msra.mxu0 %v764
      %766 = vmatprep.subr.mxu0 0.0
      %v767 = vand.u32 %v323, 4294901760
      %768 = vmatpush1.msra.mxu0 %v767
      %769 = vmatprep.subr.mxu0 0.0
      %v770 = vand.u32 %v322, 4294901760
      %771 = vmatpush1.msra.mxu0 %v770
      %772 = vmatprep.subr.mxu0 0.0
      %v773 = vand.u32 %v321, 4294901760
      %774 = vmatpush1.msra.mxu0 %v773
      %775 = vmatprep.subr.mxu0 0.0
      %v776 = vand.u32 %v320, 4294901760
      %777 = vmatpush1.msra.mxu0 %v776
      %778 = vmatprep.subr.mxu0 0.0
      %v779 = vand.u32 %v319, 4294901760
      %780 = vmatpush1.msra.mxu0 %v779
      %781 = vmatprep.subr.mxu0 0.0
      %v782 = vand.u32 %v318, 4294901760
      %783 = vmatpush1.msra.mxu0 %v782
      %784 = vmatprep.subr.mxu0 0.0
      %v785 = vand.u32 %v317, 4294901760
      %786 = vmatpush1.msra.mxu0 %v785
      %787 = vmatprep.subr.mxu0 0.0
      %v788 = vand.u32 %v316, 4294901760
      %789 = vmatpush1.msra.mxu0 %v788
      %790 = vmatprep.subr.mxu0 0.0
      %v791 = vand.u32 %v315, 4294901760
      %792 = vmatpush1.msra.mxu0 %v791
      %793 = vmatprep.subr.mxu0 0.0
      %v794 = vand.u32 %v314, 4294901760
      %795 = vmatpush1.msra.mxu0 %v794
      %796 = vmatprep.subr.mxu0 0.0
      %v797 = vand.u32 %v313, 4294901760
      %798 = vmatpush1.msra.mxu0 %v797
      %799 = vmatprep.subr.mxu0 0.0
      %800 = vmatpush2.msra.mxu0 0.0
      %801 = vmatprep.subr.mxu0 0.0
      %802 = vmatpush2.msra.mxu0 0.0
      %803 = vmatprep.subr.mxu0 0.0
      %804 = vmatpush2.msra.mxu0 0.0
      %805 = vmatprep.subr.mxu0 0.0
      %806 = vmatpush2.msra.mxu0 0.0
      %807 = vmatprep.subr.mxu0 0.0
      %808 = vmatpush2.msra.mxu0 0.0
      %809 = vmatprep.subr.mxu0 0.0
      %810 = vmatpush2.msra.mxu0 0.0
      %811 = vmatprep.subr.mxu0 0.0
      %812 = vmatpush2.msra.mxu0 0.0
      %813 = vmatprep.subr.mxu0 0.0
      %814 = vmatpush2.msra.mxu0 0.0
      %815 = vmatprep.subr.mxu0 0.0
      %816 = vmatpush2.msra.mxu0 0.0
      %817 = vmatprep.subr.mxu0 0.0
      %818 = vmatpush2.msra.mxu0 0.0
      %819 = vmatprep.subr.mxu0 0.0
      %820 = vmatpush2.msra.mxu0 0.0
      %821 = vmatprep.subr.mxu0 0.0
      %822 = vmatpush2.msra.mxu0 0.0
      %823 = vmatprep.subr.mxu0 0.0
      %824 = vmatpush2.msra.mxu0 0.0
      %825 = vmatprep.subr.mxu0 0.0
      %826 = vmatpush2.msra.mxu0 0.0
      %827 = vmatprep.subr.mxu0 0.0
      %828 = vmatpush2.msra.mxu0 0.0
      %829 = vmatprep.subr.mxu0 0.0
      %830 = vmatpush2.msra.mxu0 0.0
      %831 = vmatprep.mubr.f32.mxu0 0.0
      %v832 = vand.u32 %v309, 4294901760
      %v833 = vsub.f32 %v309, %v832
      %v834 = vand.u32 %v833, 4294901760
      %835 = vmatmul.mubr.f32.gmra.mxu0 %v834
      %v836 = vpop.f32.mrf.mxu0
      %v837 = vadd.f32 %v727, %v836
      %v838 = vpop.f32.mrf.mxu0
      %839 = vmatprep.mubr.f32.mxu0 0.0
      %v840 = vand.u32 %v310, 4294901760
      %v841 = vsub.f32 %v310, %v840
      %v842 = vand.u32 %v841, 4294901760
      %843 = vmatmul.mubr.f32.gmra.mxu0 %v842
      %v844 = vpop.f32.mrf.mxu0
      %v845 = vadd.f32 %v734, %v844
      %v846 = vpop.f32.mrf.mxu0
      %847 = vmatprep.mubr.f32.mxu0 0.0
      %v848 = vand.u32 %v311, 4294901760
      %v849 = vsub.f32 %v311, %v848
      %v850 = vand.u32 %v849, 4294901760
      %851 = vmatmul.mubr.f32.gmra.mxu0 %v850
      %v852 = vpop.f32.mrf.mxu0
      %v853 = vadd.f32 %v741, %v852
      %v854 = vpop.f32.mrf.mxu0
      %855 = vmatprep.mubr.f32.mxu0 0.0
      %v856 = vand.u32 %v312, 4294901760
      %v857 = vsub.f32 %v312, %v856
      %v858 = vand.u32 %v857, 4294901760
      %859 = vmatmul.mubr.f32.gmra.mxu0 %v858
      %v860 = vpop.f32.mrf.mxu0
      %v861 = vadd.f32 %v748, %v860
      %v862 = vpop.f32.mrf.mxu0
      %863 = vdwg.mxu0
      %864 = vmatprep.subr.mxu0 0.0
      %v865 = vand.u32 %v328, 4294901760
      %v866 = vsub.f32 %v328, %v865
      %v867 = vand.u32 %v866, 4294901760
      %868 = vmatpush1.msra.mxu0 %v867
      %869 = vmatprep.subr.mxu0 0.0
      %v870 = vand.u32 %v327, 4294901760
      %v871 = vsub.f32 %v327, %v870
      %v872 = vand.u32 %v871, 4294901760
      %873 = vmatpush1.msra.mxu0 %v872
      %874 = vmatprep.subr.mxu0 0.0
      %v875 = vand.u32 %v326, 4294901760
      %v876 = vsub.f32 %v326, %v875
      %v877 = vand.u32 %v876, 4294901760
      %878 = vmatpush1.msra.mxu0 %v877
      %879 = vmatprep.subr.mxu0 0.0
      %v880 = vand.u32 %v325, 4294901760
      %v881 = vsub.f32 %v325, %v880
      %v882 = vand.u32 %v881, 4294901760
      %883 = vmatpush1.msra.mxu0 %v882
      %884 = vmatprep.subr.mxu0 0.0
      %v885 = vand.u32 %v324, 4294901760
      %v886 = vsub.f32 %v324, %v885
      %v887 = vand.u32 %v886, 4294901760
      %888 = vmatpush1.msra.mxu0 %v887
      %889 = vmatprep.subr.mxu0 0.0
      %v890 = vand.u32 %v323, 4294901760
      %v891 = vsub.f32 %v323, %v890
      %v892 = vand.u32 %v891, 4294901760
      %893 = vmatpush1.msra.mxu0 %v892
      %894 = vmatprep.subr.mxu0 0.0
      %v895 = vand.u32 %v322, 4294901760
      %v896 = vsub.f32 %v322, %v895
      %v897 = vand.u32 %v896, 4294901760
      %898 = vmatpush1.msra.mxu0 %v897
      %899 = vmatprep.subr.mxu0 0.0
      %v900 = vand.u32 %v321, 4294901760
      %v901 = vsub.f32 %v321, %v900
      %v902 = vand.u32 %v901, 4294901760
      %903 = vmatpush1.msra.mxu0 %v902
      %904 = vmatprep.subr.mxu0 0.0
      %v905 = vand.u32 %v320, 4294901760
      %v906 = vsub.f32 %v320, %v905
      %v907 = vand.u32 %v906, 4294901760
      %908 = vmatpush1.msra.mxu0 %v907
      %909 = vmatprep.subr.mxu0 0.0
      %v910 = vand.u32 %v319, 4294901760
      %v911 = vsub.f32 %v319, %v910
      %v912 = vand.u32 %v911, 4294901760
      %913 = vmatpush1.msra.mxu0 %v912
      %914 = vmatprep.subr.mxu0 0.0
      %v915 = vand.u32 %v318, 4294901760
      %v916 = vsub.f32 %v318, %v915
      %v917 = vand.u32 %v916, 4294901760
      %918 = vmatpush1.msra.mxu0 %v917
      %919 = vmatprep.subr.mxu0 0.0
      %v920 = vand.u32 %v317, 4294901760
      %v921 = vsub.f32 %v317, %v920
      %v922 = vand.u32 %v921, 4294901760
      %923 = vmatpush1.msra.mxu0 %v922
      %924 = vmatprep.subr.mxu0 0.0
      %v925 = vand.u32 %v316, 4294901760
      %v926 = vsub.f32 %v316, %v925
      %v927 = vand.u32 %v926, 4294901760
      %928 = vmatpush1.msra.mxu0 %v927
      %929 = vmatprep.subr.mxu0 0.0
      %v930 = vand.u32 %v315, 4294901760
      %v931 = vsub.f32 %v315, %v930
      %v932 = vand.u32 %v931, 4294901760
      %933 = vmatpush1.msra.mxu0 %v932
      %934 = vmatprep.subr.mxu0 0.0
      %v935 = vand.u32 %v314, 4294901760
      %v936 = vsub.f32 %v314, %v935
      %v937 = vand.u32 %v936, 4294901760
      %938 = vmatpush1.msra.mxu0 %v937
      %939 = vmatprep.subr.mxu0 0.0
      %v940 = vand.u32 %v313, 4294901760
      %v941 = vsub.f32 %v313, %v940
      %v942 = vand.u32 %v941, 4294901760
      %943 = vmatpush1.msra.mxu0 %v942
      %944 = vmatprep.subr.mxu0 0.0
      %945 = vmatpush2.msra.mxu0 0.0
      %946 = vmatprep.subr.mxu0 0.0
      %947 = vmatpush2.msra.mxu0 0.0
      %948 = vmatprep.subr.mxu0 0.0
      %949 = vmatpush2.msra.mxu0 0.0
      %950 = vmatprep.subr.mxu0 0.0
      %951 = vmatpush2.msra.mxu0 0.0
      %952 = vmatprep.subr.mxu0 0.0
      %953 = vmatpush2.msra.mxu0 0.0
      %954 = vmatprep.subr.mxu0 0.0
      %955 = vmatpush2.msra.mxu0 0.0
      %956 = vmatprep.subr.mxu0 0.0
      %957 = vmatpush2.msra.mxu0 0.0
      %958 = vmatprep.subr.mxu0 0.0
      %959 = vmatpush2.msra.mxu0 0.0
      %960 = vmatprep.subr.mxu0 0.0
      %961 = vmatpush2.msra.mxu0 0.0
      %962 = vmatprep.subr.mxu0 0.0
      %963 = vmatpush2.msra.mxu0 0.0
      %964 = vmatprep.subr.mxu0 0.0
      %965 = vmatpush2.msra.mxu0 0.0
      %966 = vmatprep.subr.mxu0 0.0
      %967 = vmatpush2.msra.mxu0 0.0
      %968 = vmatprep.subr.mxu0 0.0
      %969 = vmatpush2.msra.mxu0 0.0
      %970 = vmatprep.subr.mxu0 0.0
      %971 = vmatpush2.msra.mxu0 0.0
      %972 = vmatprep.subr.mxu0 0.0
      %973 = vmatpush2.msra.mxu0 0.0
      %974 = vmatprep.subr.mxu0 0.0
      %975 = vmatpush2.msra.mxu0 0.0
      %976 = vmatprep.mubr.f32.mxu0 0.0
      %v977 = vand.u32 %v309, 4294901760
      %978 = vmatmul.mubr.f32.gmra.mxu0 %v977
      %v979 = vpop.f32.mrf.mxu0
      %v980 = vadd.f32 %v837, %v979
      %v981 = vpop.f32.mrf.mxu0
      %982 = vmatprep.mubr.f32.mxu0 0.0
      %v983 = vand.u32 %v310, 4294901760
      %984 = vmatmul.mubr.f32.gmra.mxu0 %v983
      %v985 = vpop.f32.mrf.mxu0
      %v986 = vadd.f32 %v845, %v985
      %v987 = vpop.f32.mrf.mxu0
      %988 = vmatprep.mubr.f32.mxu0 0.0
      %v989 = vand.u32 %v311, 4294901760
      %990 = vmatmul.mubr.f32.gmra.mxu0 %v989
      %v991 = vpop.f32.mrf.mxu0
      %v992 = vadd.f32 %v853, %v991
      %v993 = vpop.f32.mrf.mxu0
      %994 = vmatprep.mubr.f32.mxu0 0.0
      %v995 = vand.u32 %v312, 4294901760
      %996 = vmatmul.mubr.f32.gmra.mxu0 %v995
      %v997 = vpop.f32.mrf.mxu0
      %v998 = vadd.f32 %v861, %v997
      %v999 = vpop.f32.mrf.mxu0
      %1000 = vdwg.mxu0
      %1001 = vmatprep.subr.mxu0 0.0
      %v1002 = vand.u32 %v328, 4294901760
      %1003 = vmatpush1.msra.mxu0 %v1002
      %1004 = vmatprep.subr.mxu0 0.0
      %v1005 = vand.u32 %v327, 4294901760
      %1006 = vmatpush1.msra.mxu0 %v1005
      %1007 = vmatprep.subr.mxu0 0.0
      %v1008 = vand.u32 %v326, 4294901760
      %1009 = vmatpush1.msra.mxu0 %v1008
      %1010 = vmatprep.subr.mxu0 0.0
      %v1011 = vand.u32 %v325, 4294901760
      %1012 = vmatpush1.msra.mxu0 %v1011
      %1013 = vmatprep.subr.mxu0 0.0
      %v1014 = vand.u32 %v324, 4294901760
      %1015 = vmatpush1.msra.mxu0 %v1014
      %1016 = vmatprep.subr.mxu0 0.0
      %v1017 = vand.u32 %v323, 4294901760
      %1018 = vmatpush1.msra.mxu0 %v1017
      %1019 = vmatprep.subr.mxu0 0.0
      %v1020 = vand.u32 %v322, 4294901760
      %1021 = vmatpush1.msra.mxu0 %v1020
      %1022 = vmatprep.subr.mxu0 0.0
      %v1023 = vand.u32 %v321, 4294901760
      %1024 = vmatpush1.msra.mxu0 %v1023
      %1025 = vmatprep.subr.mxu0 0.0
      %v1026 = vand.u32 %v320, 4294901760
      %1027 = vmatpush1.msra.mxu0 %v1026
      %1028 = vmatprep.subr.mxu0 0.0
      %v1029 = vand.u32 %v319, 4294901760
      %1030 = vmatpush1.msra.mxu0 %v1029
      %1031 = vmatprep.subr.mxu0 0.0
      %v1032 = vand.u32 %v318, 4294901760
      %1033 = vmatpush1.msra.mxu0 %v1032
      %1034 = vmatprep.subr.mxu0 0.0
      %v1035 = vand.u32 %v317, 4294901760
      %1036 = vmatpush1.msra.mxu0 %v1035
      %1037 = vmatprep.subr.mxu0 0.0
      %v1038 = vand.u32 %v316, 4294901760
      %1039 = vmatpush1.msra.mxu0 %v1038
      %1040 = vmatprep.subr.mxu0 0.0
      %v1041 = vand.u32 %v315, 4294901760
      %1042 = vmatpush1.msra.mxu0 %v1041
      %1043 = vmatprep.subr.mxu0 0.0
      %v1044 = vand.u32 %v314, 4294901760
      %1045 = vmatpush1.msra.mxu0 %v1044
      %1046 = vmatprep.subr.mxu0 0.0
      %v1047 = vand.u32 %v313, 4294901760
      %1048 = vmatpush1.msra.mxu0 %v1047
      %1049 = vmatprep.subr.mxu0 0.0
      %1050 = vmatpush2.msra.mxu0 0.0
      %1051 = vmatprep.subr.mxu0 0.0
      %1052 = vmatpush2.msra.mxu0 0.0
      %1053 = vmatprep.subr.mxu0 0.0
      %1054 = vmatpush2.msra.mxu0 0.0
      %1055 = vmatprep.subr.mxu0 0.0
      %1056 = vmatpush2.msra.mxu0 0.0
      %1057 = vmatprep.subr.mxu0 0.0
      %1058 = vmatpush2.msra.mxu0 0.0
      %1059 = vmatprep.subr.mxu0 0.0
      %1060 = vmatpush2.msra.mxu0 0.0
      %1061 = vmatprep.subr.mxu0 0.0
      %1062 = vmatpush2.msra.mxu0 0.0
      %1063 = vmatprep.subr.mxu0 0.0
      %1064 = vmatpush2.msra.mxu0 0.0
      %1065 = vmatprep.subr.mxu0 0.0
      %1066 = vmatpush2.msra.mxu0 0.0
      %1067 = vmatprep.subr.mxu0 0.0
      %1068 = vmatpush2.msra.mxu0 0.0
      %1069 = vmatprep.subr.mxu0 0.0
      %1070 = vmatpush2.msra.mxu0 0.0
      %1071 = vmatprep.subr.mxu0 0.0
      %1072 = vmatpush2.msra.mxu0 0.0
      %1073 = vmatprep.subr.mxu0 0.0
      %1074 = vmatpush2.msra.mxu0 0.0
      %1075 = vmatprep.subr.mxu0 0.0
      %1076 = vmatpush2.msra.mxu0 0.0
      %1077 = vmatprep.subr.mxu0 0.0
      %1078 = vmatpush2.msra.mxu0 0.0
      %1079 = vmatprep.subr.mxu0 0.0
      %1080 = vmatpush2.msra.mxu0 0.0
      %1081 = vmatprep.mubr.f32.mxu0 0.0
      %v1082 = vand.u32 %v309, 4294901760
      %1083 = vmatmul.mubr.f32.gmra.mxu0 %v1082
      %v1084 = vpop.f32.mrf.mxu0
      %v1085 = vadd.f32 %v980, %v1084
      %v1086 = vpop.f32.mrf.mxu0
      %1087 = vmatprep.mubr.f32.mxu0 0.0
      %v1088 = vand.u32 %v310, 4294901760
      %1089 = vmatmul.mubr.f32.gmra.mxu0 %v1088
      %v1090 = vpop.f32.mrf.mxu0
      %v1091 = vadd.f32 %v986, %v1090
      %v1092 = vpop.f32.mrf.mxu0
      %1093 = vmatprep.mubr.f32.mxu0 0.0
      %v1094 = vand.u32 %v311, 4294901760
      %1095 = vmatmul.mubr.f32.gmra.mxu0 %v1094
      %v1096 = vpop.f32.mrf.mxu0
      %v1097 = vadd.f32 %v992, %v1096
      %v1098 = vpop.f32.mrf.mxu0
      %1099 = vmatprep.mubr.f32.mxu0 0.0
      %v1100 = vand.u32 %v312, 4294901760
      %1101 = vmatmul.mubr.f32.gmra.mxu0 %v1100
      %v1102 = vpop.f32.mrf.mxu0
      %v1103 = vadd.f32 %v998, %v1102
      %v1104 = vpop.f32.mrf.mxu0
      %1105 = vdwg.mxu0
      %1106 = vst [vmem:[%s295] sm:$0xff] %v1085
      %1107 = vst [vmem:[%s295 + $0x8] sm:$0xff] %v1091
      %1108 = vst [vmem:[%s295 + $0x10] sm:$0xff] %v1097
      %1109 = vst [vmem:[%s295 + $0x18] sm:$0xff] %v1103
      %v1110 = vld [vmem:[%s3] sm:$0x1]
      %v1112 = vlaneseq
      %v1113 = vshrl.u32 %v1112, 7
      %v1114 = vsub.s32 0, %v1113
      %v1115 = vrot.slane %v1110, %v1114
      %v1117 = vmul.f32 %v309, %v1115
      %v1118 = vmul.f32 %v310, %v1115
      %v1119 = vmul.f32 %v311, %v1115
      %v1120 = vmul.f32 %v312, %v1115
      %1121 = vadd.xlane.f32.xlu0 %v1117
      %v1122 = vpop.xlane.xlu0 %1121
      %1123 = vadd.xlane.f32.xlu0 %v1118
      %v1124 = vpop.xlane.xlu0 %1123
      %1125 = vadd.xlane.f32.xlu0 %v1119
      %v1126 = vpop.xlane.xlu0 %1125
      %1127 = vadd.xlane.f32.xlu0 %v1120
      %v1128 = vpop.xlane.xlu0 %1127
      %vm1129 = vcmask 7168
      %1130 = vst.msk [vmem:[%s301] sm:$0xff] %vm1129, %v1122
      %1131 = vst.msk [vmem:[%s301 + $0x8] sm:$0xff] %vm1129, %v1124
      %1132 = vst.msk [vmem:[%s301 + $0x10] sm:$0xff] %vm1129, %v1126
      %1133 = vst.msk [vmem:[%s301 + $0x18] sm:$0xff] %vm1129, %v1128
      %v1134 = vld [vmem:[%s4] sm:$0x1]
      %v1136 = vlaneseq
      %v1137 = vshrl.u32 %v1136, 7
      %v1138 = vsub.s32 0, %v1137
      %v1139 = vrot.slane %v1134, %v1138
      %v1141 = vmul.f32 %v309, %v1139
      %v1142 = vmul.f32 %v310, %v1139
      %v1143 = vmul.f32 %v311, %v1139
      %v1144 = vmul.f32 %v312, %v1139
      %1145 = vadd.xlane.f32.xlu0 %v1141
      %v1146 = vpop.xlane.xlu0 %1145
      %1147 = vadd.xlane.f32.xlu0 %v1142
      %v1148 = vpop.xlane.xlu0 %1147
      %1149 = vadd.xlane.f32.xlu0 %v1143
      %v1150 = vpop.xlane.xlu0 %1149
      %1151 = vadd.xlane.f32.xlu0 %v1144
      %v1152 = vpop.xlane.xlu0 %1151
      %1153 = vst.msk [vmem:[%s307] sm:$0xff] %vm1129, %v1146
      %1154 = vst.msk [vmem:[%s307 + $0x8] sm:$0xff] %vm1129, %v1148
      %1155 = vst.msk [vmem:[%s307 + $0x10] sm:$0xff] %vm1129, %v1150
      %1156 = vst.msk [vmem:[%s307 + $0x18] sm:$0xff] %vm1129, %v1152
      %s1157 = smul.u32 4, %s19
      %p1158 = scmp.lt.s32.totalorder %s1157, 7
      %s1159 = scalar_select %p1158, %s1157, 7
      %s1160 = smul.addr %s1159, 8
      %s1161 = scalar_lea.vmem %s5, %s1160
      %s1162 = smul.u32 4, %s19
      %p1163 = scmp.lt.s32.totalorder %s1162, 7
      %s1164 = scalar_select %p1163, %s1162, 7
      %s1165 = smul.addr %s1164, 8
      %s1166 = scalar_lea.vmem %s6, %s1165
      %s1167 = smul.u32 4, %s19
      %p1168 = scmp.lt.s32.totalorder %s1167, 7
      %s1169 = scalar_select %p1168, %s1167, 7
      %s1170 = smul.addr %s1169, 8
      %s1171 = scalar_lea.vmem %s7, %s1170
      // Predicated region
      $region41: #{attentive_fp_forward.8} parent=39 // pred_check
        %p1172 = pneg %p147
      $region42: #{attentive_fp_forward.8} parent=39 // pred_check_branch
        %1174 = sbr.rel (%p1172) target = $region44
      $region43: #{attentive_fp_forward.8} parent=39 // pred_region
        %s1175 = smul.u32 4, %s19
      $region44: #{attentive_fp_forward.8} parent=39 // pred_fallthru
        _
      // Predicated region
      $region45: #{attentive_fp_forward.8} parent=39 // pred_check
        %p1176 = pneg %p173
      $region46: #{attentive_fp_forward.8} parent=39 // pred_check_branch
        %1178 = sbr.rel (%p1176) target = $region48
      $region47: #{attentive_fp_forward.8} parent=39 // pred_region
        %s1179 = smul.u32 4, %s19
      $region48: #{attentive_fp_forward.8} parent=39 // pred_fallthru
        _
      // Predicated region
      $region49: #{attentive_fp_forward.8} parent=39 // pred_check
        %p1180 = pneg %p199
      $region50: #{attentive_fp_forward.8} parent=39 // pred_check_branch
        %1182 = sbr.rel (%p1180) target = $region52
      $region51: #{attentive_fp_forward.8} parent=39 // pred_region
        %s1183 = smul.u32 4, %s19
      $region52: #{attentive_fp_forward.8} parent=39 // pred_fallthru
        _
    $region40: #{attentive_fp_forward.8} parent=5 // pred_fallthru
      _
    %p1184 = scmp.le.s32.totalorder 2, %s14
    // Predicated region
    $region53: #{attentive_fp_forward.8} parent=5 // pred_check
      %p1185 = pneg %p1184
    $region54: #{attentive_fp_forward.8} parent=5 // pred_check_branch
      %1187 = sbr.rel (%p1185) target = $region56
    $region55: #{attentive_fp_forward.8} parent=5 // pred_region
      %s1188 = ssub.s32 %s14, 2
      // Predicated region
      $region57: #{attentive_fp_forward.8} parent=55 // pred_check
        %p1189 = pneg %p153
      $region58: #{attentive_fp_forward.8} parent=55 // pred_check_branch
        %1191 = sbr.rel (%p1189) target = $region60
      $region59: #{attentive_fp_forward.8} parent=55 // pred_region
        %s1192 = smul.u32 4, %s20
        %p1193 = scmp.lt.s32.totalorder %s1192, 7
        %s1194 = scalar_select %p1193, %s1192, 7
        %s1195 = smul.addr %s1194, 8
        %s1196 = scalar_lea.vmem %s5, %s1195
      $region60: #{attentive_fp_forward.8} parent=55 // pred_fallthru
        _
      // Predicated region
      $region61: #{attentive_fp_forward.8} parent=55 // pred_check
        %p1197 = pneg %p179
      $region62: #{attentive_fp_forward.8} parent=55 // pred_check_branch
        %1199 = sbr.rel (%p1197) target = $region64
      $region63: #{attentive_fp_forward.8} parent=55 // pred_region
        %s1200 = smul.u32 4, %s20
        %p1201 = scmp.lt.s32.totalorder %s1200, 7
        %s1202 = scalar_select %p1201, %s1200, 7
        %s1203 = smul.addr %s1202, 8
        %s1204 = scalar_lea.vmem %s6, %s1203
      $region64: #{attentive_fp_forward.8} parent=55 // pred_fallthru
        _
      // Predicated region
      $region65: #{attentive_fp_forward.8} parent=55 // pred_check
        %p1205 = pneg %p205
      $region66: #{attentive_fp_forward.8} parent=55 // pred_check_branch
        %1207 = sbr.rel (%p1205) target = $region68
      $region67: #{attentive_fp_forward.8} parent=55 // pred_region
        %s1208 = smul.u32 4, %s20
        %p1209 = scmp.lt.s32.totalorder %s1208, 7
        %s1210 = scalar_select %p1209, %s1208, 7
        %s1211 = smul.addr %s1210, 8
        %s1212 = scalar_lea.vmem %s7, %s1211
      $region68: #{attentive_fp_forward.8} parent=55 // pred_fallthru
        _
    $region56: #{attentive_fp_forward.8} parent=5 // pred_fallthru
      _
  $region6: #{attentive_fp_forward.8} parent=0 // loop_footer
    %s18 = sadd.s32 1, %s14
  $region7: #{attentive_fp_forward.8} parent=0 // loop_footer_branch
    %13 = sbr.rel target = $region3
  $region8: #{attentive_fp_forward.8} parent=0 // loop_exit
    _

</llo_original>
